<compile_context>
chip_gen: v5e
topology: v5e:2x2
jax: 0.10.0
libtpu: 0.0.40
codegen_flags: <defaults>
</compile_context>

<pallas_src>
import numpy as np
import jax
import jax.numpy as jnp
from jax.experimental import pallas as pl
from jax.experimental.pallas import tpu as pltpu

DNA = "isBbiigsCcgsDagg|gg|hsBah|ee"   # docstring example architecture

LETTER_TO_SIZE = {'a': 1, 'b': 2, 'c': 4, 'd': 8, 'e': 16, 'f': 32,
                  'g': 64, 'h': 128, 'i': 256, 'j': 512, 'k': 1024}
LETTER_TO_NUM = {c: i for i, c in enumerate('abcdefghijk')}
LOOKUP = 'ABCDEFGHIJKLMNOP'

IN_FEATURES = 28 * 28                 # 784
LANE = 128
IN_PAD = ((IN_FEATURES + LANE - 1) // LANE) * LANE    # 896 (lane-dense input)
OUT_PAD = IN_PAD                                       # 896 (lane-dense output)


def _pad128(n):
    return ((n + LANE - 1) // LANE) * LANE


def _round_up(n, m):
    return ((n + m - 1) // m) * m


def parse_genes(chromosome):
    """Mirror of AutoEncoderBranching.parse_genes."""
    genes = []
    i = 0
    while i < len(chromosome):
        ch = chromosome[i]
        if ch in 'abcdefghijk':
            genes.append(ch)
            i += 1
        elif ch == 's':
            genes.append(chromosome[i:i + 3])
            i += 3
        else:
            i += 1
    return genes


def build_model(dna_string, key):
    """Mirror of AutoEncoderBranching.__init__ (JAX init; W stored as (in, out))."""
    chromosomes = dna_string.split('|')
    genes = [parse_genes(c) for c in chromosomes]

    io_dims = {}
    for i, chromo in enumerate(chromosomes):
        letter = LOOKUP[i]
        if chromo:
            try:
                io_dims[letter] = [LETTER_TO_SIZE[chromo[0]], LETTER_TO_SIZE[chromo[-1]]]
            except Exception:
                io_dims[letter] = [1, 1]
        else:
            io_dims[letter] = [1, 1]
    io_dims['A'] = [IN_FEATURES, 16]

    params_w, params_b = [], []

    def new_linear(in_size, out_size):
        nonlocal key
        key, kw, kb = jax.random.split(key, 3)
        bound = 1.0 / float(np.sqrt(in_size))
        w = jax.random.uniform(kw, (in_size, out_size), jnp.float32, -bound, bound)
        b = jax.random.uniform(kb, (1, out_size), jnp.float32, -bound, bound)
        params_w.append(w)
        params_b.append(b)
        return len(params_w) - 1

    layers = []
    for i, chromosome in enumerate(genes):
        layers.append([])
        in_size = io_dims.get(LOOKUP[i], [1])[0]
        current_count = 0
        sizes = [LETTER_TO_SIZE[g] for g in chromosome if len(g) == 1]
        for gene in chromosome:
            if len(gene) == 1:
                out_size = LETTER_TO_SIZE[gene]
                layers[-1].append(('forward', new_linear(in_size, out_size)))
                in_size = out_size
                current_count += 1
            else:
                _, chromo, skip = gene
                skip = LETTER_TO_NUM[skip]
                if current_count + skip >= len(sizes):
                    output = sizes[-1]
                else:
                    output = sizes[current_count + skip]
                layers[-1].append(('split', LOOKUP.index(chromo),
                                   new_linear(in_size, io_dims[chromo][0]),
                                   new_linear(io_dims[chromo][1], output),
                                   current_count + skip))
        if i == 0:
            layers[-1].append(('forward', new_linear(in_size, io_dims['A'][1])))

    decoder = [
        (new_linear(16, 16), 'relu'),
        (new_linear(16, 32), 'relu'),
        (new_linear(32, 64), 'relu'),
        (new_linear(64, 128), 'relu'),
        (new_linear(128, IN_FEATURES), 'sigmoid'),
    ]
    return layers, decoder, params_w, params_b


def trace_forward(layers, decoder, apply_linear, x, sigmoid):
    """Exact mirror of AutoEncoderBranching.run + decoder, on jnp values.

    Splits whose merge index can never be reached are skipped: the PyTorch
    reference computes and then discards them, so the output is identical, but
    skipping avoids DMAing / multiplying their weights (dead-branch pruning).
    """
    def run_chromo(num, y):
        memory = []
        n = len(layers[num])
        for i, data in enumerate(layers[num]):
            if data[0] == 'forward':
                y = apply_linear(data[1], y)
            else:                                    # 'split'
                merge = data[4]
                if i + 1 <= merge <= n:              # live: will merge at some j >= i
                    z = run_chromo(data[1], apply_linear(data[2], y))
                    z = apply_linear(data[3], z)
                    memory.append((merge, z))
                # else: dead branch -> pruned (output-identical to the reference)
            for merge, value in memory:
                if merge == i + 1:
                    y = y + value
        return y

    y = run_chromo(0, x)
    for idx, act in decoder:
        y = apply_linear(idx, y)
        y = jnp.maximum(y, 0.0) if act == 'relu' else sigmoid(y)
    return y


def pack_params(layers, decoder, params_w, params_b):
    """Pack all LIVE weights into one tile-aligned bf16 buffer per padded
    out-width class ({128, 256, 896} lanes) and the biases into one f32 buffer
    per class (full-lane-width rows).

    Returns (plan, class_order, wbufs, bbufs):
      plan[orig_idx] -> dict(row_off, bslot, in_pad, out_pad, ...)
    """
    plan, order = {}, []

    def record(idx, y):
        w = params_w[idx]
        if idx not in plan:
            plan[idx] = dict(in_actual=w.shape[0], out_actual=w.shape[1],
                             in_pad=_pad128(w.shape[0]), out_pad=_pad128(w.shape[1]))
            order.append(idx)
        return jnp.zeros((y.shape[0], w.shape[1]), jnp.float32)   # shape-only dry run

    trace_forward(layers, decoder, record,
                  jnp.zeros((1, IN_FEATURES), jnp.float32), sigmoid=lambda v: v)

    class_order = sorted({plan[i]['out_pad'] for i in order})     # e.g. [128, 256, 896]
    wrows = {c: 0 for c in class_order}
    bcount = {c: 0 for c in class_order}
    for idx in order:
        d = plan[idx]
        c = d['out_pad']
        d['row_off'] = wrows[c]
        wrows[c] += d['in_pad']
        d['bslot'] = bcount[c]
        bcount[c] += 1

    wbufs_np = {c: np.zeros((wrows[c], c), np.float32) for c in class_order}
    bbufs_np = {c: np.zeros((_round_up(bcount[c], 8), c), np.float32) for c in class_order}
    for idx in order:
        d = plan[idx]
        c = d['out_pad']
        wbufs_np[c][d['row_off']:d['row_off'] + d['in_actual'], :d['out_actual']] = \
            np.asarray(params_w[idx], np.float32)
        bbufs_np[c][d['bslot'], :d['out_actual']] = \
            np.asarray(params_b[idx], np.float32).reshape(-1)

    wbufs = {c: jnp.asarray(wbufs_np[c], jnp.bfloat16) for c in class_order}
    bbufs = {c: jnp.asarray(bbufs_np[c], jnp.float32) for c in class_order}
    return plan, class_order, wbufs, bbufs


def make_kernel(layers, decoder, plan, class_order):
    n_c = len(class_order)

    def kernel(*refs):
        x_ref = refs[0]                                  # bf16 (tile_m, 896)
        w_refs = {c: refs[1 + k] for k, c in enumerate(class_order)}
        b_refs = {c: refs[1 + n_c + k] for k, c in enumerate(class_order)}
        o_ref = refs[1 + 2 * n_c]                        # bf16 (tile_m, 896)

        def apply_linear(idx, y):
            d = plan[idx]
            # Tile-aligned static slices of the packed class buffers: free views.
            w = w_refs[d['out_pad']][d['row_off']:d['row_off'] + d['in_pad'], :]
            b = b_refs[d['out_pad']][d['bslot']:d['bslot'] + 1, :]
            # bf16 operands on the MXU, f32 accumulation; bias/residuals/act in f32.
            return jnp.dot(y.astype(jnp.bfloat16), w,
                           preferred_element_type=jnp.float32) + b

        y = trace_forward(
            layers, decoder, apply_linear, x_ref[...],
            # exp + approximate reciprocal both issue on the (otherwise idle) EUP slot.
            sigmoid=lambda v: pl.reciprocal(1.0 + jnp.exp(-v), approx=True))
        o_ref[...] = y.astype(o_ref.dtype)

    return kernel


def autoencoder_forward(x, layers, decoder, plan, class_order, wbufs, bbufs,
                        tile_m_max=512):
    batch = x.shape[0]
    batch8 = _round_up(max(batch, 1), 8)
    if batch8 >= 16:
        # >= 2 grid steps so ("parallel",) shards across both TensorCores on v7x.
        tile_m = min(tile_m_max, _round_up((batch8 + 1) // 2, 8))
    else:
        tile_m = batch8
    if tile_m >= 256:
        # Multiples of 256 rows: full push-train per RHS load on the 256-wide MXU.
        tile_m = (tile_m // 256) * 256
    b_pad = _round_up(batch, tile_m)
    grid = b_pad // tile_m

    # Lane-dense, row-tiled, bf16 input (zero padding propagates as exact zeros).
    x_p = jnp.pad(x.astype(jnp.float32),
                  ((0, b_pad - batch), (0, IN_PAD - x.shape[1]))).astype(jnp.bfloat16)

    kernel = make_kernel(layers, decoder, plan, class_order)

    w_bytes = sum(int(np.prod(wbufs[c].shape)) * 2 for c in class_order)
    b_bytes = sum(int(np.prod(bbufs[c].shape)) * 4 for c in class_order)
    flops = 2 * b_pad * sum(d['in_pad'] * d['out_pad'] for d in plan.values())
    cost = pl.CostEstimate(
        flops=int(flops),
        transcendentals=int(2 * b_pad * OUT_PAD),
        bytes_accessed=int(x_p.size * 2 + w_bytes + b_bytes + b_pad * OUT_PAD * 2))

    def call(single_buffer):
        wkw = {}
        if single_buffer and hasattr(pl, "Buffered"):
            # Constant index maps -> second pipeline buffer is never used.
            wkw = dict(pipeline_mode=pl.Buffered(1))
        in_specs = [pl.BlockSpec((tile_m, IN_PAD), lambda i: (i, 0))]
        for c in class_order:
            # Full-array block, constant index map: weights stay VMEM-resident.
            in_specs.append(pl.BlockSpec(wbufs[c].shape, lambda i: (0, 0), **wkw))
        for c in class_order:
            in_specs.append(pl.BlockSpec(bbufs[c].shape, lambda i: (0, 0), **wkw))
        return pl.pallas_call(
            kernel,
            out_shape=jax.ShapeDtypeStruct((b_pad, OUT_PAD), jnp.bfloat16),
            grid=(grid,),
            in_specs=in_specs,
            out_specs=pl.BlockSpec((tile_m, OUT_PAD), lambda i: (i, 0)),
            compiler_params=pltpu.CompilerParams(
                dimension_semantics=("parallel",)),   # batch tiles shard across TCs
            cost_estimate=cost,
        )(x_p, *[wbufs[c] for c in class_order], *[bbufs[c] for c in class_order])

    try:
        out = call(single_buffer=True)
    except Exception:
        # Fallback if this JAX build rejects pipeline_mode=pl.Buffered(1):
        # default double-buffered specs (identical numerics, slightly more VMEM).
        out = call(single_buffer=False)

    return out[:batch, :IN_FEATURES].astype(jnp.float32)


if __name__ == "__main__":
    root = jax.random.PRNGKey(0)
    pkey, xkey = jax.random.split(root)

    layers, decoder, params_w, params_b = build_model(DNA, pkey)
    plan, class_order, wbufs, bbufs = pack_params(layers, decoder, params_w, params_b)

    def ref_forward(xv):
        return trace_forward(layers, decoder,
                             lambda k, y: jnp.dot(y, params_w[k]) + params_b[k],
                             xv, sigmoid=lambda v: 1.0 / (1.0 + jnp.exp(-v)))

    # Small-batch run (grid = 1).
    batch = 8
    x = jax.random.uniform(xkey, (batch, IN_FEATURES), jnp.float32)
    out = jax.block_until_ready(
        autoencoder_forward(x, layers, decoder, plan, class_order, wbufs, bbufs))
    ref = jax.block_until_ready(ref_forward(x))
    assert out.shape == (batch, IN_FEATURES) and out.dtype == jnp.float32
    np.testing.assert_allclose(np.asarray(out), np.asarray(ref), rtol=2e-2, atol=2e-2)

    # Multi-tile sanity check (grid = 2, exercises the two-TC sharding path).
    x2 = jax.random.uniform(jax.random.PRNGKey(1), (48, IN_FEATURES), jnp.float32)
    out2 = jax.block_until_ready(
        autoencoder_forward(x2, layers, decoder, plan, class_order, wbufs, bbufs))
    ref2 = jax.block_until_ready(ref_forward(x2))
    np.testing.assert_allclose(np.asarray(out2), np.asarray(ref2), rtol=2e-2, atol=2e-2)

    print("KERNEL_OK")
</pallas_src>

<mosaic_0001>
module attributes {stable_mosaic.version = 11 : i64} {
  func.func @kernel(%arg0: i32, %arg1: memref<8x896xbf16, #tpu.memory_space<vmem>>, %arg2: memref<2304x128xbf16, #tpu.memory_space<vmem>>, %arg3: memref<1536x256xbf16, #tpu.memory_space<vmem>>, %arg4: memref<128x896xbf16, #tpu.memory_space<vmem>>, %arg5: memref<16x128xf32, #tpu.memory_space<vmem>>, %arg6: memref<8x256xf32, #tpu.memory_space<vmem>>, %arg7: memref<8x896xf32, #tpu.memory_space<vmem>>, %arg8: memref<8x896xbf16, #tpu.memory_space<vmem>>) attributes {dimension_semantics = [#tpu.dimension_semantics<parallel>], iteration_bounds = array<i64: 1>, scalar_prefetch = 0 : i64, scratch_operands = 0 : i64, tpu.core_type = #tpu.core_type<tc>, window_params = [{transform_indices = @transform_0, window_bounds = array<i64: 8, 896>}, {pipeline_mode = #tpu.pipeline_mode<synchronous>, transform_indices = @transform_1, window_bounds = array<i64: 2304, 128>}, {pipeline_mode = #tpu.pipeline_mode<synchronous>, transform_indices = @transform_2, window_bounds = array<i64: 1536, 256>}, {pipeline_mode = #tpu.pipeline_mode<synchronous>, transform_indices = @transform_3, window_bounds = array<i64: 128, 896>}, {pipeline_mode = #tpu.pipeline_mode<synchronous>, transform_indices = @transform_4, window_bounds = array<i64: 16, 128>}, {pipeline_mode = #tpu.pipeline_mode<synchronous>, transform_indices = @transform_5, window_bounds = array<i64: 8, 256>}, {pipeline_mode = #tpu.pipeline_mode<synchronous>, transform_indices = @transform_6, window_bounds = array<i64: 8, 896>}, {transform_indices = @transform_7, window_bounds = array<i64: 8, 896>}]} {
    %c0 = arith.constant 0 : index
    %c0_0 = arith.constant 0 : index
    %0 = vector.load %arg1[%c0, %c0_0] : memref<8x896xbf16, #tpu.memory_space<vmem>>, vector<8x896xbf16>
    %c0_1 = arith.constant 0 : index
    %c0_2 = arith.constant 0 : index
    %1 = vector.load %arg3[%c0_1, %c0_2] : memref<1536x256xbf16, #tpu.memory_space<vmem>>, vector<896x256xbf16>
    %c0_3 = arith.constant 0 : index
    %c0_4 = arith.constant 0 : index
    %2 = vector.load %arg6[%c0_3, %c0_4] : memref<8x256xf32, #tpu.memory_space<vmem>>, vector<1x256xf32>
    %cst = arith.constant dense<0.000000e+00> : vector<8x256xf32>
    %3 = tpu.matmul %0, %1, %cst {dimension_numbers = #tpu.dot_dimension_numbers<[1], [0], [0], [1], [0, 0, 1, 1], [], []>} : vector<8x896xbf16>, vector<896x256xbf16>, vector<8x256xf32> -> vector<8x256xf32>
    %4 = vector.broadcast %2 : vector<1x256xf32> to vector<8x256xf32>
    %5 = arith.addf %3, %4 : vector<8x256xf32>
    %c0_5 = arith.constant 0 : index
    %c0_6 = arith.constant 0 : index
    %6 = vector.load %arg2[%c0_5, %c0_6] : memref<2304x128xbf16, #tpu.memory_space<vmem>>, vector<256x128xbf16>
    %c0_7 = arith.constant 0 : index
    %c0_8 = arith.constant 0 : index
    %7 = vector.load %arg5[%c0_7, %c0_8] : memref<16x128xf32, #tpu.memory_space<vmem>>, vector<1x128xf32>
    %8 = arith.truncf %5 : vector<8x256xf32> to vector<8x256xbf16>
    %cst_9 = arith.constant dense<0.000000e+00> : vector<8x128xf32>
    %9 = tpu.matmul %8, %6, %cst_9 {dimension_numbers = #tpu.dot_dimension_numbers<[1], [0], [0], [1], [0, 0, 1, 1], [], []>} : vector<8x256xbf16>, vector<256x128xbf16>, vector<8x128xf32> -> vector<8x128xf32>
    %10 = vector.broadcast %7 : vector<1x128xf32> to vector<8x128xf32>
    %11 = arith.addf %9, %10 : vector<8x128xf32>
    %c256 = arith.constant 256 : index
    %c0_10 = arith.constant 0 : index
    %12 = vector.load %arg2[%c256, %c0_10] : memref<2304x128xbf16, #tpu.memory_space<vmem>>, vector<128x128xbf16>
    %c1 = arith.constant 1 : index
    %c0_11 = arith.constant 0 : index
    %13 = vector.load %arg5[%c1, %c0_11] : memref<16x128xf32, #tpu.memory_space<vmem>>, vector<1x128xf32>
    %14 = arith.truncf %11 : vector<8x128xf32> to vector<8x128xbf16>
    %cst_12 = arith.constant dense<0.000000e+00> : vector<8x128xf32>
    %15 = tpu.matmul %14, %12, %cst_12 {dimension_numbers = #tpu.dot_dimension_numbers<[1], [0], [0], [1], [0, 0, 1, 1], [], []>} : vector<8x128xbf16>, vector<128x128xbf16>, vector<8x128xf32> -> vector<8x128xf32>
    %16 = vector.broadcast %13 : vector<1x128xf32> to vector<8x128xf32>
    %17 = arith.addf %15, %16 : vector<8x128xf32>
    %c384 = arith.constant 384 : index
    %c0_13 = arith.constant 0 : index
    %18 = vector.load %arg2[%c384, %c0_13] : memref<2304x128xbf16, #tpu.memory_space<vmem>>, vector<128x128xbf16>
    %c2 = arith.constant 2 : index
    %c0_14 = arith.constant 0 : index
    %19 = vector.load %arg5[%c2, %c0_14] : memref<16x128xf32, #tpu.memory_space<vmem>>, vector<1x128xf32>
    %20 = arith.truncf %17 : vector<8x128xf32> to vector<8x128xbf16>
    %cst_15 = arith.constant dense<0.000000e+00> : vector<8x128xf32>
    %21 = tpu.matmul %20, %18, %cst_15 {dimension_numbers = #tpu.dot_dimension_numbers<[1], [0], [0], [1], [0, 0, 1, 1], [], []>} : vector<8x128xbf16>, vector<128x128xbf16>, vector<8x128xf32> -> vector<8x128xf32>
    %22 = vector.broadcast %19 : vector<1x128xf32> to vector<8x128xf32>
    %23 = arith.addf %21, %22 : vector<8x128xf32>
    %c896 = arith.constant 896 : index
    %c0_16 = arith.constant 0 : index
    %24 = vector.load %arg3[%c896, %c0_16] : memref<1536x256xbf16, #tpu.memory_space<vmem>>, vector<128x256xbf16>
    %c1_17 = arith.constant 1 : index
    %c0_18 = arith.constant 0 : index
    %25 = vector.load %arg6[%c1_17, %c0_18] : memref<8x256xf32, #tpu.memory_space<vmem>>, vector<1x256xf32>
    %26 = arith.truncf %23 : vector<8x128xf32> to vector<8x128xbf16>
    %cst_19 = arith.constant dense<0.000000e+00> : vector<8x256xf32>
    %27 = tpu.matmul %26, %24, %cst_19 {dimension_numbers = #tpu.dot_dimension_numbers<[1], [0], [0], [1], [0, 0, 1, 1], [], []>} : vector<8x128xbf16>, vector<128x256xbf16>, vector<8x256xf32> -> vector<8x256xf32>
    %28 = vector.broadcast %25 : vector<1x256xf32> to vector<8x256xf32>
    %29 = arith.addf %27, %28 : vector<8x256xf32>
    %30 = arith.addf %5, %29 : vector<8x256xf32>
    %c1024 = arith.constant 1024 : index
    %c0_20 = arith.constant 0 : index
    %31 = vector.load %arg3[%c1024, %c0_20] : memref<1536x256xbf16, #tpu.memory_space<vmem>>, vector<256x256xbf16>
    %c2_21 = arith.constant 2 : index
    %c0_22 = arith.constant 0 : index
    %32 = vector.load %arg6[%c2_21, %c0_22] : memref<8x256xf32, #tpu.memory_space<vmem>>, vector<1x256xf32>
    %33 = arith.truncf %30 : vector<8x256xf32> to vector<8x256xbf16>
    %cst_23 = arith.constant dense<0.000000e+00> : vector<8x256xf32>
    %34 = tpu.matmul %33, %31, %cst_23 {dimension_numbers = #tpu.dot_dimension_numbers<[1], [0], [0], [1], [0, 0, 1, 1], [], []>} : vector<8x256xbf16>, vector<256x256xbf16>, vector<8x256xf32> -> vector<8x256xf32>
    %35 = vector.broadcast %32 : vector<1x256xf32> to vector<8x256xf32>
    %36 = arith.addf %34, %35 : vector<8x256xf32>
    %c1280 = arith.constant 1280 : index
    %c0_24 = arith.constant 0 : index
    %37 = vector.load %arg3[%c1280, %c0_24] : memref<1536x256xbf16, #tpu.memory_space<vmem>>, vector<256x256xbf16>
    %c3 = arith.constant 3 : index
    %c0_25 = arith.constant 0 : index
    %38 = vector.load %arg6[%c3, %c0_25] : memref<8x256xf32, #tpu.memory_space<vmem>>, vector<1x256xf32>
    %39 = arith.truncf %36 : vector<8x256xf32> to vector<8x256xbf16>
    %cst_26 = arith.constant dense<0.000000e+00> : vector<8x256xf32>
    %40 = tpu.matmul %39, %37, %cst_26 {dimension_numbers = #tpu.dot_dimension_numbers<[1], [0], [0], [1], [0, 0, 1, 1], [], []>} : vector<8x256xbf16>, vector<256x256xbf16>, vector<8x256xf32> -> vector<8x256xf32>
    %41 = vector.broadcast %38 : vector<1x256xf32> to vector<8x256xf32>
    %42 = arith.addf %40, %41 : vector<8x256xf32>
    %c512 = arith.constant 512 : index
    %c0_27 = arith.constant 0 : index
    %43 = vector.load %arg2[%c512, %c0_27] : memref<2304x128xbf16, #tpu.memory_space<vmem>>, vector<256x128xbf16>
    %c3_28 = arith.constant 3 : index
    %c0_29 = arith.constant 0 : index
    %44 = vector.load %arg5[%c3_28, %c0_29] : memref<16x128xf32, #tpu.memory_space<vmem>>, vector<1x128xf32>
    %45 = arith.truncf %42 : vector<8x256xf32> to vector<8x256xbf16>
    %cst_30 = arith.constant dense<0.000000e+00> : vector<8x128xf32>
    %46 = tpu.matmul %45, %43, %cst_30 {dimension_numbers = #tpu.dot_dimension_numbers<[1], [0], [0], [1], [0, 0, 1, 1], [], []>} : vector<8x256xbf16>, vector<256x128xbf16>, vector<8x128xf32> -> vector<8x128xf32>
    %47 = vector.broadcast %44 : vector<1x128xf32> to vector<8x128xf32>
    %48 = arith.addf %46, %47 : vector<8x128xf32>
    %c768 = arith.constant 768 : index
    %c0_31 = arith.constant 0 : index
    %49 = vector.load %arg2[%c768, %c0_31] : memref<2304x128xbf16, #tpu.memory_space<vmem>>, vector<128x128xbf16>
    %c4 = arith.constant 4 : index
    %c0_32 = arith.constant 0 : index
    %50 = vector.load %arg5[%c4, %c0_32] : memref<16x128xf32, #tpu.memory_space<vmem>>, vector<1x128xf32>
    %51 = arith.truncf %48 : vector<8x128xf32> to vector<8x128xbf16>
    %cst_33 = arith.constant dense<0.000000e+00> : vector<8x128xf32>
    %52 = tpu.matmul %51, %49, %cst_33 {dimension_numbers = #tpu.dot_dimension_numbers<[1], [0], [0], [1], [0, 0, 1, 1], [], []>} : vector<8x128xbf16>, vector<128x128xbf16>, vector<8x128xf32> -> vector<8x128xf32>
    %53 = vector.broadcast %50 : vector<1x128xf32> to vector<8x128xf32>
    %54 = arith.addf %52, %53 : vector<8x128xf32>
    %c896_34 = arith.constant 896 : index
    %c0_35 = arith.constant 0 : index
    %55 = vector.load %arg2[%c896_34, %c0_35] : memref<2304x128xbf16, #tpu.memory_space<vmem>>, vector<128x128xbf16>
    %c5 = arith.constant 5 : index
    %c0_36 = arith.constant 0 : index
    %56 = vector.load %arg5[%c5, %c0_36] : memref<16x128xf32, #tpu.memory_space<vmem>>, vector<1x128xf32>
    %57 = arith.truncf %54 : vector<8x128xf32> to vector<8x128xbf16>
    %cst_37 = arith.constant dense<0.000000e+00> : vector<8x128xf32>
    %58 = tpu.matmul %57, %55, %cst_37 {dimension_numbers = #tpu.dot_dimension_numbers<[1], [0], [0], [1], [0, 0, 1, 1], [], []>} : vector<8x128xbf16>, vector<128x128xbf16>, vector<8x128xf32> -> vector<8x128xf32>
    %59 = vector.broadcast %56 : vector<1x128xf32> to vector<8x128xf32>
    %60 = arith.addf %58, %59 : vector<8x128xf32>
    %c1024_38 = arith.constant 1024 : index
    %c0_39 = arith.constant 0 : index
    %61 = vector.load %arg2[%c1024_38, %c0_39] : memref<2304x128xbf16, #tpu.memory_space<vmem>>, vector<128x128xbf16>
    %c6 = arith.constant 6 : index
    %c0_40 = arith.constant 0 : index
    %62 = vector.load %arg5[%c6, %c0_40] : memref<16x128xf32, #tpu.memory_space<vmem>>, vector<1x128xf32>
    %63 = arith.truncf %60 : vector<8x128xf32> to vector<8x128xbf16>
    %cst_41 = arith.constant dense<0.000000e+00> : vector<8x128xf32>
    %64 = tpu.matmul %63, %61, %cst_41 {dimension_numbers = #tpu.dot_dimension_numbers<[1], [0], [0], [1], [0, 0, 1, 1], [], []>} : vector<8x128xbf16>, vector<128x128xbf16>, vector<8x128xf32> -> vector<8x128xf32>
    %65 = vector.broadcast %62 : vector<1x128xf32> to vector<8x128xf32>
    %66 = arith.addf %64, %65 : vector<8x128xf32>
    %c1152 = arith.constant 1152 : index
    %c0_42 = arith.constant 0 : index
    %67 = vector.load %arg2[%c1152, %c0_42] : memref<2304x128xbf16, #tpu.memory_space<vmem>>, vector<128x128xbf16>
    %c7 = arith.constant 7 : index
    %c0_43 = arith.constant 0 : index
    %68 = vector.load %arg5[%c7, %c0_43] : memref<16x128xf32, #tpu.memory_space<vmem>>, vector<1x128xf32>
    %69 = arith.truncf %66 : vector<8x128xf32> to vector<8x128xbf16>
    %cst_44 = arith.constant dense<0.000000e+00> : vector<8x128xf32>
    %70 = tpu.matmul %69, %67, %cst_44 {dimension_numbers = #tpu.dot_dimension_numbers<[1], [0], [0], [1], [0, 0, 1, 1], [], []>} : vector<8x128xbf16>, vector<128x128xbf16>, vector<8x128xf32> -> vector<8x128xf32>
    %71 = vector.broadcast %68 : vector<1x128xf32> to vector<8x128xf32>
    %72 = arith.addf %70, %71 : vector<8x128xf32>
    %73 = arith.addf %48, %72 : vector<8x128xf32>
    %c1280_45 = arith.constant 1280 : index
    %c0_46 = arith.constant 0 : index
    %74 = vector.load %arg2[%c1280_45, %c0_46] : memref<2304x128xbf16, #tpu.memory_space<vmem>>, vector<128x128xbf16>
    %c8 = arith.constant 8 : index
    %c0_47 = arith.constant 0 : index
    %75 = vector.load %arg5[%c8, %c0_47] : memref<16x128xf32, #tpu.memory_space<vmem>>, vector<1x128xf32>
    %76 = arith.truncf %73 : vector<8x128xf32> to vector<8x128xbf16>
    %cst_48 = arith.constant dense<0.000000e+00> : vector<8x128xf32>
    %77 = tpu.matmul %76, %74, %cst_48 {dimension_numbers = #tpu.dot_dimension_numbers<[1], [0], [0], [1], [0, 0, 1, 1], [], []>} : vector<8x128xbf16>, vector<128x128xbf16>, vector<8x128xf32> -> vector<8x128xf32>
    %78 = vector.broadcast %75 : vector<1x128xf32> to vector<8x128xf32>
    %79 = arith.addf %77, %78 : vector<8x128xf32>
    %c1408 = arith.constant 1408 : index
    %c0_49 = arith.constant 0 : index
    %80 = vector.load %arg2[%c1408, %c0_49] : memref<2304x128xbf16, #tpu.memory_space<vmem>>, vector<128x128xbf16>
    %c9 = arith.constant 9 : index
    %c0_50 = arith.constant 0 : index
    %81 = vector.load %arg5[%c9, %c0_50] : memref<16x128xf32, #tpu.memory_space<vmem>>, vector<1x128xf32>
    %82 = arith.truncf %79 : vector<8x128xf32> to vector<8x128xbf16>
    %cst_51 = arith.constant dense<0.000000e+00> : vector<8x128xf32>
    %83 = tpu.matmul %82, %80, %cst_51 {dimension_numbers = #tpu.dot_dimension_numbers<[1], [0], [0], [1], [0, 0, 1, 1], [], []>} : vector<8x128xbf16>, vector<128x128xbf16>, vector<8x128xf32> -> vector<8x128xf32>
    %84 = vector.broadcast %81 : vector<1x128xf32> to vector<8x128xf32>
    %85 = arith.addf %83, %84 : vector<8x128xf32>
    %c1536 = arith.constant 1536 : index
    %c0_52 = arith.constant 0 : index
    %86 = vector.load %arg2[%c1536, %c0_52] : memref<2304x128xbf16, #tpu.memory_space<vmem>>, vector<128x128xbf16>
    %c10 = arith.constant 10 : index
    %c0_53 = arith.constant 0 : index
    %87 = vector.load %arg5[%c10, %c0_53] : memref<16x128xf32, #tpu.memory_space<vmem>>, vector<1x128xf32>
    %88 = arith.truncf %85 : vector<8x128xf32> to vector<8x128xbf16>
    %cst_54 = arith.constant dense<0.000000e+00> : vector<8x128xf32>
    %89 = tpu.matmul %88, %86, %cst_54 {dimension_numbers = #tpu.dot_dimension_numbers<[1], [0], [0], [1], [0, 0, 1, 1], [], []>} : vector<8x128xbf16>, vector<128x128xbf16>, vector<8x128xf32> -> vector<8x128xf32>
    %90 = vector.broadcast %87 : vector<1x128xf32> to vector<8x128xf32>
    %91 = arith.addf %89, %90 : vector<8x128xf32>
    %c1664 = arith.constant 1664 : index
    %c0_55 = arith.constant 0 : index
    %92 = vector.load %arg2[%c1664, %c0_55] : memref<2304x128xbf16, #tpu.memory_space<vmem>>, vector<128x128xbf16>
    %c11 = arith.constant 11 : index
    %c0_56 = arith.constant 0 : index
    %93 = vector.load %arg5[%c11, %c0_56] : memref<16x128xf32, #tpu.memory_space<vmem>>, vector<1x128xf32>
    %94 = arith.truncf %91 : vector<8x128xf32> to vector<8x128xbf16>
    %cst_57 = arith.constant dense<0.000000e+00> : vector<8x128xf32>
    %95 = tpu.matmul %94, %92, %cst_57 {dimension_numbers = #tpu.dot_dimension_numbers<[1], [0], [0], [1], [0, 0, 1, 1], [], []>} : vector<8x128xbf16>, vector<128x128xbf16>, vector<8x128xf32> -> vector<8x128xf32>
    %96 = vector.broadcast %93 : vector<1x128xf32> to vector<8x128xf32>
    %97 = arith.addf %95, %96 : vector<8x128xf32>
    %c1792 = arith.constant 1792 : index
    %c0_58 = arith.constant 0 : index
    %98 = vector.load %arg2[%c1792, %c0_58] : memref<2304x128xbf16, #tpu.memory_space<vmem>>, vector<128x128xbf16>
    %c12 = arith.constant 12 : index
    %c0_59 = arith.constant 0 : index
    %99 = vector.load %arg5[%c12, %c0_59] : memref<16x128xf32, #tpu.memory_space<vmem>>, vector<1x128xf32>
    %100 = arith.truncf %97 : vector<8x128xf32> to vector<8x128xbf16>
    %cst_60 = arith.constant dense<0.000000e+00> : vector<8x128xf32>
    %101 = tpu.matmul %100, %98, %cst_60 {dimension_numbers = #tpu.dot_dimension_numbers<[1], [0], [0], [1], [0, 0, 1, 1], [], []>} : vector<8x128xbf16>, vector<128x128xbf16>, vector<8x128xf32> -> vector<8x128xf32>
    %102 = vector.broadcast %99 : vector<1x128xf32> to vector<8x128xf32>
    %103 = arith.addf %101, %102 : vector<8x128xf32>
    %cst_61 = arith.constant 0.000000e+00 : f32
    %104 = vector.broadcast %cst_61 : f32 to vector<8x128xf32>
    %105 = arith.maximumf %103, %104 : vector<8x128xf32>
    %c1920 = arith.constant 1920 : index
    %c0_62 = arith.constant 0 : index
    %106 = vector.load %arg2[%c1920, %c0_62] : memref<2304x128xbf16, #tpu.memory_space<vmem>>, vector<128x128xbf16>
    %c13 = arith.constant 13 : index
    %c0_63 = arith.constant 0 : index
    %107 = vector.load %arg5[%c13, %c0_63] : memref<16x128xf32, #tpu.memory_space<vmem>>, vector<1x128xf32>
    %108 = arith.truncf %105 : vector<8x128xf32> to vector<8x128xbf16>
    %cst_64 = arith.constant dense<0.000000e+00> : vector<8x128xf32>
    %109 = tpu.matmul %108, %106, %cst_64 {dimension_numbers = #tpu.dot_dimension_numbers<[1], [0], [0], [1], [0, 0, 1, 1], [], []>} : vector<8x128xbf16>, vector<128x128xbf16>, vector<8x128xf32> -> vector<8x128xf32>
    %110 = vector.broadcast %107 : vector<1x128xf32> to vector<8x128xf32>
    %111 = arith.addf %109, %110 : vector<8x128xf32>
    %cst_65 = arith.constant 0.000000e+00 : f32
    %112 = vector.broadcast %cst_65 : f32 to vector<8x128xf32>
    %113 = arith.maximumf %111, %112 : vector<8x128xf32>
    %c2048 = arith.constant 2048 : index
    %c0_66 = arith.constant 0 : index
    %114 = vector.load %arg2[%c2048, %c0_66] : memref<2304x128xbf16, #tpu.memory_space<vmem>>, vector<128x128xbf16>
    %c14 = arith.constant 14 : index
    %c0_67 = arith.constant 0 : index
    %115 = vector.load %arg5[%c14, %c0_67] : memref<16x128xf32, #tpu.memory_space<vmem>>, vector<1x128xf32>
    %116 = arith.truncf %113 : vector<8x128xf32> to vector<8x128xbf16>
    %cst_68 = arith.constant dense<0.000000e+00> : vector<8x128xf32>
    %117 = tpu.matmul %116, %114, %cst_68 {dimension_numbers = #tpu.dot_dimension_numbers<[1], [0], [0], [1], [0, 0, 1, 1], [], []>} : vector<8x128xbf16>, vector<128x128xbf16>, vector<8x128xf32> -> vector<8x128xf32>
    %118 = vector.broadcast %115 : vector<1x128xf32> to vector<8x128xf32>
    %119 = arith.addf %117, %118 : vector<8x128xf32>
    %cst_69 = arith.constant 0.000000e+00 : f32
    %120 = vector.broadcast %cst_69 : f32 to vector<8x128xf32>
    %121 = arith.maximumf %119, %120 : vector<8x128xf32>
    %c2176 = arith.constant 2176 : index
    %c0_70 = arith.constant 0 : index
    %122 = vector.load %arg2[%c2176, %c0_70] : memref<2304x128xbf16, #tpu.memory_space<vmem>>, vector<128x128xbf16>
    %c15 = arith.constant 15 : index
    %c0_71 = arith.constant 0 : index
    %123 = vector.load %arg5[%c15, %c0_71] : memref<16x128xf32, #tpu.memory_space<vmem>>, vector<1x128xf32>
    %124 = arith.truncf %121 : vector<8x128xf32> to vector<8x128xbf16>
    %cst_72 = arith.constant dense<0.000000e+00> : vector<8x128xf32>
    %125 = tpu.matmul %124, %122, %cst_72 {dimension_numbers = #tpu.dot_dimension_numbers<[1], [0], [0], [1], [0, 0, 1, 1], [], []>} : vector<8x128xbf16>, vector<128x128xbf16>, vector<8x128xf32> -> vector<8x128xf32>
    %126 = vector.broadcast %123 : vector<1x128xf32> to vector<8x128xf32>
    %127 = arith.addf %125, %126 : vector<8x128xf32>
    %cst_73 = arith.constant 0.000000e+00 : f32
    %128 = vector.broadcast %cst_73 : f32 to vector<8x128xf32>
    %129 = arith.maximumf %127, %128 : vector<8x128xf32>
    %c0_74 = arith.constant 0 : index
    %c0_75 = arith.constant 0 : index
    %130 = vector.load %arg4[%c0_74, %c0_75] : memref<128x896xbf16, #tpu.memory_space<vmem>>, vector<128x896xbf16>
    %c0_76 = arith.constant 0 : index
    %c0_77 = arith.constant 0 : index
    %131 = vector.load %arg7[%c0_76, %c0_77] : memref<8x896xf32, #tpu.memory_space<vmem>>, vector<1x896xf32>
    %132 = arith.truncf %129 : vector<8x128xf32> to vector<8x128xbf16>
    %cst_78 = arith.constant dense<0.000000e+00> : vector<8x896xf32>
    %133 = tpu.matmul %132, %130, %cst_78 {dimension_numbers = #tpu.dot_dimension_numbers<[1], [0], [0], [1], [0, 0, 1, 1], [], []>} : vector<8x128xbf16>, vector<128x896xbf16>, vector<8x896xf32> -> vector<8x896xf32>
    %134 = vector.broadcast %131 : vector<1x896xf32> to vector<8x896xf32>
    %135 = arith.addf %133, %134 : vector<8x896xf32>
    %cst_79 = arith.constant 0.000000e+00 : f32
    %136 = vector.broadcast %cst_79 : f32 to vector<8x896xf32>
    %137 = arith.subf %136, %135 : vector<8x896xf32>
    %138 = math.exp %137 : vector<8x896xf32>
    %cst_80 = arith.constant 1.000000e+00 : f32
    %139 = vector.broadcast %cst_80 : f32 to vector<8x896xf32>
    %140 = arith.addf %139, %138 : vector<8x896xf32>
    %141 = tpu.reciprocal %140 {approx = true} : vector<8x896xf32> -> vector<8x896xf32>
    %142 = arith.truncf %141 : vector<8x896xf32> to vector<8x896xbf16>
    %c0_81 = arith.constant 0 : index
    %c0_82 = arith.constant 0 : index
    %143 = vector.load %arg8[%c0_81, %c0_82] : memref<8x896xbf16, #tpu.memory_space<vmem>>, vector<8x896xbf16>
    tpu.vector_store %arg8[%c0_81, %c0_82], %142 {strides = array<i32>} : memref<8x896xbf16, #tpu.memory_space<vmem>>, vector<8x896xbf16>,
    return
  }
  func.func @transform_0(%arg0: i32) -> (i32, i32) {
    %c0_i32 = arith.constant 0 : i32
    %c0_i32_0 = arith.constant 0 : i32
    return %arg0, %c0_i32 : i32, i32
  }
  func.func @transform_1(%arg0: i32) -> (i32, i32) {
    %c0_i32 = arith.constant 0 : i32
    %c0_i32_0 = arith.constant 0 : i32
    %c0_i32_1 = arith.constant 0 : i32
    return %c0_i32, %c0_i32_0 : i32, i32
  }
  func.func @transform_2(%arg0: i32) -> (i32, i32) {
    %c0_i32 = arith.constant 0 : i32
    %c0_i32_0 = arith.constant 0 : i32
    %c0_i32_1 = arith.constant 0 : i32
    return %c0_i32, %c0_i32_0 : i32, i32
  }
  func.func @transform_3(%arg0: i32) -> (i32, i32) {
    %c0_i32 = arith.constant 0 : i32
    %c0_i32_0 = arith.constant 0 : i32
    %c0_i32_1 = arith.constant 0 : i32
    return %c0_i32, %c0_i32_0 : i32, i32
  }
  func.func @transform_4(%arg0: i32) -> (i32, i32) {
    %c0_i32 = arith.constant 0 : i32
    %c0_i32_0 = arith.constant 0 : i32
    %c0_i32_1 = arith.constant 0 : i32
    return %c0_i32, %c0_i32_0 : i32, i32
  }
  func.func @transform_5(%arg0: i32) -> (i32, i32) {
    %c0_i32 = arith.constant 0 : i32
    %c0_i32_0 = arith.constant 0 : i32
    %c0_i32_1 = arith.constant 0 : i32
    return %c0_i32, %c0_i32_0 : i32, i32
  }
  func.func @transform_6(%arg0: i32) -> (i32, i32) {
    %c0_i32 = arith.constant 0 : i32
    %c0_i32_0 = arith.constant 0 : i32
    %c0_i32_1 = arith.constant 0 : i32
    return %c0_i32, %c0_i32_0 : i32, i32
  }
  func.func @transform_7(%arg0: i32) -> (i32, i32) {
    %c0_i32 = arith.constant 0 : i32
    %c0_i32_0 = arith.constant 0 : i32
    return %arg0, %c0_i32 : i32, i32
  }
}

module attributes {stable_mosaic.version = 11 : i64} {
  func.func @kernel(%arg0: i32, %arg1: memref<8x896xbf16, #tpu.memory_space<vmem>>, %arg2: memref<2304x128xbf16, #tpu.memory_space<vmem>>, %arg3: memref<1536x256xbf16, #tpu.memory_space<vmem>>, %arg4: memref<128x896xbf16, #tpu.memory_space<vmem>>, %arg5: memref<16x128xf32, #tpu.memory_space<vmem>>, %arg6: memref<8x256xf32, #tpu.memory_space<vmem>>, %arg7: memref<8x896xf32, #tpu.memory_space<vmem>>, %arg8: memref<8x896xbf16, #tpu.memory_space<vmem>>) attributes {dimension_semantics = [#tpu.dimension_semantics<parallel>], iteration_bounds = array<i64: 1>, scalar_prefetch = 0 : i64, scratch_operands = 0 : i64, tpu.core_type = #tpu.core_type<tc>, window_params = [{transform_indices = @transform_0, window_bounds = array<i64: 8, 896>}, {pipeline_mode = #tpu.pipeline_mode<synchronous>, transform_indices = @transform_1, window_bounds = array<i64: 2304, 128>}, {pipeline_mode = #tpu.pipeline_mode<synchronous>, transform_indices = @transform_2, window_bounds = array<i64: 1536, 256>}, {pipeline_mode = #tpu.pipeline_mode<synchronous>, transform_indices = @transform_3, window_bounds = array<i64: 128, 896>}, {pipeline_mode = #tpu.pipeline_mode<synchronous>, transform_indices = @transform_4, window_bounds = array<i64: 16, 128>}, {pipeline_mode = #tpu.pipeline_mode<synchronous>, transform_indices = @transform_5, window_bounds = array<i64: 8, 256>}, {pipeline_mode = #tpu.pipeline_mode<synchronous>, transform_indices = @transform_6, window_bounds = array<i64: 8, 896>}, {transform_indices = @transform_7, window_bounds = array<i64: 8, 896>}]} {
    %c0 = arith.constant 0 : index
    %c0_0 = arith.constant 0 : index
    %0 = vector.load %arg1[%c0, %c0_0] : memref<8x896xbf16, #tpu.memory_space<vmem>>, vector<8x896xbf16>
    %c0_1 = arith.constant 0 : index
    %c0_2 = arith.constant 0 : index
    %1 = vector.load %arg3[%c0_1, %c0_2] : memref<1536x256xbf16, #tpu.memory_space<vmem>>, vector<896x256xbf16>
    %c0_3 = arith.constant 0 : index
    %c0_4 = arith.constant 0 : index
    %2 = vector.load %arg6[%c0_3, %c0_4] : memref<8x256xf32, #tpu.memory_space<vmem>>, vector<1x256xf32>
    %cst = arith.constant dense<0.000000e+00> : vector<8x256xf32>
    %3 = tpu.matmul %0, %1, %cst {dimension_numbers = #tpu.dot_dimension_numbers<[1], [0], [0], [1], [0, 0, 1, 1], [], []>} : vector<8x896xbf16>, vector<896x256xbf16>, vector<8x256xf32> -> vector<8x256xf32>
    %4 = vector.broadcast %2 : vector<1x256xf32> to vector<8x256xf32>
    %5 = arith.addf %3, %4 : vector<8x256xf32>
    %c0_5 = arith.constant 0 : index
    %c0_6 = arith.constant 0 : index
    %6 = vector.load %arg2[%c0_5, %c0_6] : memref<2304x128xbf16, #tpu.memory_space<vmem>>, vector<256x128xbf16>
    %c0_7 = arith.constant 0 : index
    %c0_8 = arith.constant 0 : index
    %7 = vector.load %arg5[%c0_7, %c0_8] : memref<16x128xf32, #tpu.memory_space<vmem>>, vector<1x128xf32>
    %8 = arith.truncf %5 : vector<8x256xf32> to vector<8x256xbf16>
    %cst_9 = arith.constant dense<0.000000e+00> : vector<8x128xf32>
    %9 = tpu.matmul %8, %6, %cst_9 {dimension_numbers = #tpu.dot_dimension_numbers<[1], [0], [0], [1], [0, 0, 1, 1], [], []>} : vector<8x256xbf16>, vector<256x128xbf16>, vector<8x128xf32> -> vector<8x128xf32>
    %10 = vector.broadcast %7 : vector<1x128xf32> to vector<8x128xf32>
    %11 = arith.addf %9, %10 : vector<8x128xf32>
    %c256 = arith.constant 256 : index
    %c0_10 = arith.constant 0 : index
    %12 = vector.load %arg2[%c256, %c0_10] : memref<2304x128xbf16, #tpu.memory_space<vmem>>, vector<128x128xbf16>
    %c1 = arith.constant 1 : index
    %c0_11 = arith.constant 0 : index
    %13 = vector.load %arg5[%c1, %c0_11] : memref<16x128xf32, #tpu.memory_space<vmem>>, vector<1x128xf32>
    %14 = arith.truncf %11 : vector<8x128xf32> to vector<8x128xbf16>
    %cst_12 = arith.constant dense<0.000000e+00> : vector<8x128xf32>
    %15 = tpu.matmul %14, %12, %cst_12 {dimension_numbers = #tpu.dot_dimension_numbers<[1], [0], [0], [1], [0, 0, 1, 1], [], []>} : vector<8x128xbf16>, vector<128x128xbf16>, vector<8x128xf32> -> vector<8x128xf32>
    %16 = vector.broadcast %13 : vector<1x128xf32> to vector<8x128xf32>
    %17 = arith.addf %15, %16 : vector<8x128xf32>
    %c384 = arith.constant 384 : index
    %c0_13 = arith.constant 0 : index
    %18 = vector.load %arg2[%c384, %c0_13] : memref<2304x128xbf16, #tpu.memory_space<vmem>>, vector<128x128xbf16>
    %c2 = arith.constant 2 : index
    %c0_14 = arith.constant 0 : index
    %19 = vector.load %arg5[%c2, %c0_14] : memref<16x128xf32, #tpu.memory_space<vmem>>, vector<1x128xf32>
    %20 = arith.truncf %17 : vector<8x128xf32> to vector<8x128xbf16>
    %cst_15 = arith.constant dense<0.000000e+00> : vector<8x128xf32>
    %21 = tpu.matmul %20, %18, %cst_15 {dimension_numbers = #tpu.dot_dimension_numbers<[1], [0], [0], [1], [0, 0, 1, 1], [], []>} : vector<8x128xbf16>, vector<128x128xbf16>, vector<8x128xf32> -> vector<8x128xf32>
    %22 = vector.broadcast %19 : vector<1x128xf32> to vector<8x128xf32>
    %23 = arith.addf %21, %22 : vector<8x128xf32>
    %c896 = arith.constant 896 : index
    %c0_16 = arith.constant 0 : index
    %24 = vector.load %arg3[%c896, %c0_16] : memref<1536x256xbf16, #tpu.memory_space<vmem>>, vector<128x256xbf16>
    %c1_17 = arith.constant 1 : index
    %c0_18 = arith.constant 0 : index
    %25 = vector.load %arg6[%c1_17, %c0_18] : memref<8x256xf32, #tpu.memory_space<vmem>>, vector<1x256xf32>
    %26 = arith.truncf %23 : vector<8x128xf32> to vector<8x128xbf16>
    %cst_19 = arith.constant dense<0.000000e+00> : vector<8x256xf32>
    %27 = tpu.matmul %26, %24, %cst_19 {dimension_numbers = #tpu.dot_dimension_numbers<[1], [0], [0], [1], [0, 0, 1, 1], [], []>} : vector<8x128xbf16>, vector<128x256xbf16>, vector<8x256xf32> -> vector<8x256xf32>
    %28 = vector.broadcast %25 : vector<1x256xf32> to vector<8x256xf32>
    %29 = arith.addf %27, %28 : vector<8x256xf32>
    %30 = arith.addf %5, %29 : vector<8x256xf32>
    %c1024 = arith.constant 1024 : index
    %c0_20 = arith.constant 0 : index
    %31 = vector.load %arg3[%c1024, %c0_20] : memref<1536x256xbf16, #tpu.memory_space<vmem>>, vector<256x256xbf16>
    %c2_21 = arith.constant 2 : index
    %c0_22 = arith.constant 0 : index
    %32 = vector.load %arg6[%c2_21, %c0_22] : memref<8x256xf32, #tpu.memory_space<vmem>>, vector<1x256xf32>
    %33 = arith.truncf %30 : vector<8x256xf32> to vector<8x256xbf16>
    %cst_23 = arith.constant dense<0.000000e+00> : vector<8x256xf32>
    %34 = tpu.matmul %33, %31, %cst_23 {dimension_numbers = #tpu.dot_dimension_numbers<[1], [0], [0], [1], [0, 0, 1, 1], [], []>} : vector<8x256xbf16>, vector<256x256xbf16>, vector<8x256xf32> -> vector<8x256xf32>
    %35 = vector.broadcast %32 : vector<1x256xf32> to vector<8x256xf32>
    %36 = arith.addf %34, %35 : vector<8x256xf32>
    %c1280 = arith.constant 1280 : index
    %c0_24 = arith.constant 0 : index
    %37 = vector.load %arg3[%c1280, %c0_24] : memref<1536x256xbf16, #tpu.memory_space<vmem>>, vector<256x256xbf16>
    %c3 = arith.constant 3 : index
    %c0_25 = arith.constant 0 : index
    %38 = vector.load %arg6[%c3, %c0_25] : memref<8x256xf32, #tpu.memory_space<vmem>>, vector<1x256xf32>
    %39 = arith.truncf %36 : vector<8x256xf32> to vector<8x256xbf16>
    %cst_26 = arith.constant dense<0.000000e+00> : vector<8x256xf32>
    %40 = tpu.matmul %39, %37, %cst_26 {dimension_numbers = #tpu.dot_dimension_numbers<[1], [0], [0], [1], [0, 0, 1, 1], [], []>} : vector<8x256xbf16>, vector<256x256xbf16>, vector<8x256xf32> -> vector<8x256xf32>
    %41 = vector.broadcast %38 : vector<1x256xf32> to vector<8x256xf32>
    %42 = arith.addf %40, %41 : vector<8x256xf32>
    %c512 = arith.constant 512 : index
    %c0_27 = arith.constant 0 : index
    %43 = vector.load %arg2[%c512, %c0_27] : memref<2304x128xbf16, #tpu.memory_space<vmem>>, vector<256x128xbf16>
    %c3_28 = arith.constant 3 : index
    %c0_29 = arith.constant 0 : index
    %44 = vector.load %arg5[%c3_28, %c0_29] : memref<16x128xf32, #tpu.memory_space<vmem>>, vector<1x128xf32>
    %45 = arith.truncf %42 : vector<8x256xf32> to vector<8x256xbf16>
    %cst_30 = arith.constant dense<0.000000e+00> : vector<8x128xf32>
    %46 = tpu.matmul %45, %43, %cst_30 {dimension_numbers = #tpu.dot_dimension_numbers<[1], [0], [0], [1], [0, 0, 1, 1], [], []>} : vector<8x256xbf16>, vector<256x128xbf16>, vector<8x128xf32> -> vector<8x128xf32>
    %47 = vector.broadcast %44 : vector<1x128xf32> to vector<8x128xf32>
    %48 = arith.addf %46, %47 : vector<8x128xf32>
    %c768 = arith.constant 768 : index
    %c0_31 = arith.constant 0 : index
    %49 = vector.load %arg2[%c768, %c0_31] : memref<2304x128xbf16, #tpu.memory_space<vmem>>, vector<128x128xbf16>
    %c4 = arith.constant 4 : index
    %c0_32 = arith.constant 0 : index
    %50 = vector.load %arg5[%c4, %c0_32] : memref<16x128xf32, #tpu.memory_space<vmem>>, vector<1x128xf32>
    %51 = arith.truncf %48 : vector<8x128xf32> to vector<8x128xbf16>
    %cst_33 = arith.constant dense<0.000000e+00> : vector<8x128xf32>
    %52 = tpu.matmul %51, %49, %cst_33 {dimension_numbers = #tpu.dot_dimension_numbers<[1], [0], [0], [1], [0, 0, 1, 1], [], []>} : vector<8x128xbf16>, vector<128x128xbf16>, vector<8x128xf32> -> vector<8x128xf32>
    %53 = vector.broadcast %50 : vector<1x128xf32> to vector<8x128xf32>
    %54 = arith.addf %52, %53 : vector<8x128xf32>
    %c896_34 = arith.constant 896 : index
    %c0_35 = arith.constant 0 : index
    %55 = vector.load %arg2[%c896_34, %c0_35] : memref<2304x128xbf16, #tpu.memory_space<vmem>>, vector<128x128xbf16>
    %c5 = arith.constant 5 : index
    %c0_36 = arith.constant 0 : index
    %56 = vector.load %arg5[%c5, %c0_36] : memref<16x128xf32, #tpu.memory_space<vmem>>, vector<1x128xf32>
    %57 = arith.truncf %54 : vector<8x128xf32> to vector<8x128xbf16>
    %cst_37 = arith.constant dense<0.000000e+00> : vector<8x128xf32>
    %58 = tpu.matmul %57, %55, %cst_37 {dimension_numbers = #tpu.dot_dimension_numbers<[1], [0], [0], [1], [0, 0, 1, 1], [], []>} : vector<8x128xbf16>, vector<128x128xbf16>, vector<8x128xf32> -> vector<8x128xf32>
    %59 = vector.broadcast %56 : vector<1x128xf32> to vector<8x128xf32>
    %60 = arith.addf %58, %59 : vector<8x128xf32>
    %c1024_38 = arith.constant 1024 : index
    %c0_39 = arith.constant 0 : index
    %61 = vector.load %arg2[%c1024_38, %c0_39] : memref<2304x128xbf16, #tpu.memory_space<vmem>>, vector<128x128xbf16>
    %c6 = arith.constant 6 : index
    %c0_40 = arith.constant 0 : index
    %62 = vector.load %arg5[%c6, %c0_40] : memref<16x128xf32, #tpu.memory_space<vmem>>, vector<1x128xf32>
    %63 = arith.truncf %60 : vector<8x128xf32> to vector<8x128xbf16>
    %cst_41 = arith.constant dense<0.000000e+00> : vector<8x128xf32>
    %64 = tpu.matmul %63, %61, %cst_41 {dimension_numbers = #tpu.dot_dimension_numbers<[1], [0], [0], [1], [0, 0, 1, 1], [], []>} : vector<8x128xbf16>, vector<128x128xbf16>, vector<8x128xf32> -> vector<8x128xf32>
    %65 = vector.broadcast %62 : vector<1x128xf32> to vector<8x128xf32>
    %66 = arith.addf %64, %65 : vector<8x128xf32>
    %c1152 = arith.constant 1152 : index
    %c0_42 = arith.constant 0 : index
    %67 = vector.load %arg2[%c1152, %c0_42] : memref<2304x128xbf16, #tpu.memory_space<vmem>>, vector<128x128xbf16>
    %c7 = arith.constant 7 : index
    %c0_43 = arith.constant 0 : index
    %68 = vector.load %arg5[%c7, %c0_43] : memref<16x128xf32, #tpu.memory_space<vmem>>, vector<1x128xf32>
    %69 = arith.truncf %66 : vector<8x128xf32> to vector<8x128xbf16>
    %cst_44 = arith.constant dense<0.000000e+00> : vector<8x128xf32>
    %70 = tpu.matmul %69, %67, %cst_44 {dimension_numbers = #tpu.dot_dimension_numbers<[1], [0], [0], [1], [0, 0, 1, 1], [], []>} : vector<8x128xbf16>, vector<128x128xbf16>, vector<8x128xf32> -> vector<8x128xf32>
    %71 = vector.broadcast %68 : vector<1x128xf32> to vector<8x128xf32>
    %72 = arith.addf %70, %71 : vector<8x128xf32>
    %73 = arith.addf %48, %72 : vector<8x128xf32>
    %c1280_45 = arith.constant 1280 : index
    %c0_46 = arith.constant 0 : index
    %74 = vector.load %arg2[%c1280_45, %c0_46] : memref<2304x128xbf16, #tpu.memory_space<vmem>>, vector<128x128xbf16>
    %c8 = arith.constant 8 : index
    %c0_47 = arith.constant 0 : index
    %75 = vector.load %arg5[%c8, %c0_47] : memref<16x128xf32, #tpu.memory_space<vmem>>, vector<1x128xf32>
    %76 = arith.truncf %73 : vector<8x128xf32> to vector<8x128xbf16>
    %cst_48 = arith.constant dense<0.000000e+00> : vector<8x128xf32>
    %77 = tpu.matmul %76, %74, %cst_48 {dimension_numbers = #tpu.dot_dimension_numbers<[1], [0], [0], [1], [0, 0, 1, 1], [], []>} : vector<8x128xbf16>, vector<128x128xbf16>, vector<8x128xf32> -> vector<8x128xf32>
    %78 = vector.broadcast %75 : vector<1x128xf32> to vector<8x128xf32>
    %79 = arith.addf %77, %78 : vector<8x128xf32>
    %c1408 = arith.constant 1408 : index
    %c0_49 = arith.constant 0 : index
    %80 = vector.load %arg2[%c1408, %c0_49] : memref<2304x128xbf16, #tpu.memory_space<vmem>>, vector<128x128xbf16>
    %c9 = arith.constant 9 : index
    %c0_50 = arith.constant 0 : index
    %81 = vector.load %arg5[%c9, %c0_50] : memref<16x128xf32, #tpu.memory_space<vmem>>, vector<1x128xf32>
    %82 = arith.truncf %79 : vector<8x128xf32> to vector<8x128xbf16>
    %cst_51 = arith.constant dense<0.000000e+00> : vector<8x128xf32>
    %83 = tpu.matmul %82, %80, %cst_51 {dimension_numbers = #tpu.dot_dimension_numbers<[1], [0], [0], [1], [0, 0, 1, 1], [], []>} : vector<8x128xbf16>, vector<128x128xbf16>, vector<8x128xf32> -> vector<8x128xf32>
    %84 = vector.broadcast %81 : vector<1x128xf32> to vector<8x128xf32>
    %85 = arith.addf %83, %84 : vector<8x128xf32>
    %c1536 = arith.constant 1536 : index
    %c0_52 = arith.constant 0 : index
    %86 = vector.load %arg2[%c1536, %c0_52] : memref<2304x128xbf16, #tpu.memory_space<vmem>>, vector<128x128xbf16>
    %c10 = arith.constant 10 : index
    %c0_53 = arith.constant 0 : index
    %87 = vector.load %arg5[%c10, %c0_53] : memref<16x128xf32, #tpu.memory_space<vmem>>, vector<1x128xf32>
    %88 = arith.truncf %85 : vector<8x128xf32> to vector<8x128xbf16>
    %cst_54 = arith.constant dense<0.000000e+00> : vector<8x128xf32>
    %89 = tpu.matmul %88, %86, %cst_54 {dimension_numbers = #tpu.dot_dimension_numbers<[1], [0], [0], [1], [0, 0, 1, 1], [], []>} : vector<8x128xbf16>, vector<128x128xbf16>, vector<8x128xf32> -> vector<8x128xf32>
    %90 = vector.broadcast %87 : vector<1x128xf32> to vector<8x128xf32>
    %91 = arith.addf %89, %90 : vector<8x128xf32>
    %c1664 = arith.constant 1664 : index
    %c0_55 = arith.constant 0 : index
    %92 = vector.load %arg2[%c1664, %c0_55] : memref<2304x128xbf16, #tpu.memory_space<vmem>>, vector<128x128xbf16>
    %c11 = arith.constant 11 : index
    %c0_56 = arith.constant 0 : index
    %93 = vector.load %arg5[%c11, %c0_56] : memref<16x128xf32, #tpu.memory_space<vmem>>, vector<1x128xf32>
    %94 = arith.truncf %91 : vector<8x128xf32> to vector<8x128xbf16>
    %cst_57 = arith.constant dense<0.000000e+00> : vector<8x128xf32>
    %95 = tpu.matmul %94, %92, %cst_57 {dimension_numbers = #tpu.dot_dimension_numbers<[1], [0], [0], [1], [0, 0, 1, 1], [], []>} : vector<8x128xbf16>, vector<128x128xbf16>, vector<8x128xf32> -> vector<8x128xf32>
    %96 = vector.broadcast %93 : vector<1x128xf32> to vector<8x128xf32>
    %97 = arith.addf %95, %96 : vector<8x128xf32>
    %c1792 = arith.constant 1792 : index
    %c0_58 = arith.constant 0 : index
    %98 = vector.load %arg2[%c1792, %c0_58] : memref<2304x128xbf16, #tpu.memory_space<vmem>>, vector<128x128xbf16>
    %c12 = arith.constant 12 : index
    %c0_59 = arith.constant 0 : index
    %99 = vector.load %arg5[%c12, %c0_59] : memref<16x128xf32, #tpu.memory_space<vmem>>, vector<1x128xf32>
    %100 = arith.truncf %97 : vector<8x128xf32> to vector<8x128xbf16>
    %cst_60 = arith.constant dense<0.000000e+00> : vector<8x128xf32>
    %101 = tpu.matmul %100, %98, %cst_60 {dimension_numbers = #tpu.dot_dimension_numbers<[1], [0], [0], [1], [0, 0, 1, 1], [], []>} : vector<8x128xbf16>, vector<128x128xbf16>, vector<8x128xf32> -> vector<8x128xf32>
    %102 = vector.broadcast %99 : vector<1x128xf32> to vector<8x128xf32>
    %103 = arith.addf %101, %102 : vector<8x128xf32>
    %cst_61 = arith.constant 0.000000e+00 : f32
    %104 = vector.broadcast %cst_61 : f32 to vector<8x128xf32>
    %105 = arith.maximumf %103, %104 : vector<8x128xf32>
    %c1920 = arith.constant 1920 : index
    %c0_62 = arith.constant 0 : index
    %106 = vector.load %arg2[%c1920, %c0_62] : memref<2304x128xbf16, #tpu.memory_space<vmem>>, vector<128x128xbf16>
    %c13 = arith.constant 13 : index
    %c0_63 = arith.constant 0 : index
    %107 = vector.load %arg5[%c13, %c0_63] : memref<16x128xf32, #tpu.memory_space<vmem>>, vector<1x128xf32>
    %108 = arith.truncf %105 : vector<8x128xf32> to vector<8x128xbf16>
    %cst_64 = arith.constant dense<0.000000e+00> : vector<8x128xf32>
    %109 = tpu.matmul %108, %106, %cst_64 {dimension_numbers = #tpu.dot_dimension_numbers<[1], [0], [0], [1], [0, 0, 1, 1], [], []>} : vector<8x128xbf16>, vector<128x128xbf16>, vector<8x128xf32> -> vector<8x128xf32>
    %110 = vector.broadcast %107 : vector<1x128xf32> to vector<8x128xf32>
    %111 = arith.addf %109, %110 : vector<8x128xf32>
    %cst_65 = arith.constant 0.000000e+00 : f32
    %112 = vector.broadcast %cst_65 : f32 to vector<8x128xf32>
    %113 = arith.maximumf %111, %112 : vector<8x128xf32>
    %c2048 = arith.constant 2048 : index
    %c0_66 = arith.constant 0 : index
    %114 = vector.load %arg2[%c2048, %c0_66] : memref<2304x128xbf16, #tpu.memory_space<vmem>>, vector<128x128xbf16>
    %c14 = arith.constant 14 : index
    %c0_67 = arith.constant 0 : index
    %115 = vector.load %arg5[%c14, %c0_67] : memref<16x128xf32, #tpu.memory_space<vmem>>, vector<1x128xf32>
    %116 = arith.truncf %113 : vector<8x128xf32> to vector<8x128xbf16>
    %cst_68 = arith.constant dense<0.000000e+00> : vector<8x128xf32>
    %117 = tpu.matmul %116, %114, %cst_68 {dimension_numbers = #tpu.dot_dimension_numbers<[1], [0], [0], [1], [0, 0, 1, 1], [], []>} : vector<8x128xbf16>, vector<128x128xbf16>, vector<8x128xf32> -> vector<8x128xf32>
    %118 = vector.broadcast %115 : vector<1x128xf32> to vector<8x128xf32>
    %119 = arith.addf %117, %118 : vector<8x128xf32>
    %cst_69 = arith.constant 0.000000e+00 : f32
    %120 = vector.broadcast %cst_69 : f32 to vector<8x128xf32>
    %121 = arith.maximumf %119, %120 : vector<8x128xf32>
    %c2176 = arith.constant 2176 : index
    %c0_70 = arith.constant 0 : index
    %122 = vector.load %arg2[%c2176, %c0_70] : memref<2304x128xbf16, #tpu.memory_space<vmem>>, vector<128x128xbf16>
    %c15 = arith.constant 15 : index
    %c0_71 = arith.constant 0 : index
    %123 = vector.load %arg5[%c15, %c0_71] : memref<16x128xf32, #tpu.memory_space<vmem>>, vector<1x128xf32>
    %124 = arith.truncf %121 : vector<8x128xf32> to vector<8x128xbf16>
    %cst_72 = arith.constant dense<0.000000e+00> : vector<8x128xf32>
    %125 = tpu.matmul %124, %122, %cst_72 {dimension_numbers = #tpu.dot_dimension_numbers<[1], [0], [0], [1], [0, 0, 1, 1], [], []>} : vector<8x128xbf16>, vector<128x128xbf16>, vector<8x128xf32> -> vector<8x128xf32>
    %126 = vector.broadcast %123 : vector<1x128xf32> to vector<8x128xf32>
    %127 = arith.addf %125, %126 : vector<8x128xf32>
    %cst_73 = arith.constant 0.000000e+00 : f32
    %128 = vector.broadcast %cst_73 : f32 to vector<8x128xf32>
    %129 = arith.maximumf %127, %128 : vector<8x128xf32>
    %c0_74 = arith.constant 0 : index
    %c0_75 = arith.constant 0 : index
    %130 = vector.load %arg4[%c0_74, %c0_75] : memref<128x896xbf16, #tpu.memory_space<vmem>>, vector<128x896xbf16>
    %c0_76 = arith.constant 0 : index
    %c0_77 = arith.constant 0 : index
    %131 = vector.load %arg7[%c0_76, %c0_77] : memref<8x896xf32, #tpu.memory_space<vmem>>, vector<1x896xf32>
    %132 = arith.truncf %129 : vector<8x128xf32> to vector<8x128xbf16>
    %cst_78 = arith.constant dense<0.000000e+00> : vector<8x896xf32>
    %133 = tpu.matmul %132, %130, %cst_78 {dimension_numbers = #tpu.dot_dimension_numbers<[1], [0], [0], [1], [0, 0, 1, 1], [], []>} : vector<8x128xbf16>, vector<128x896xbf16>, vector<8x896xf32> -> vector<8x896xf32>
    %134 = vector.broadcast %131 : vector<1x896xf32> to vector<8x896xf32>
    %135 = arith.addf %133, %134 : vector<8x896xf32>
    %cst_79 = arith.constant 0.000000e+00 : f32
    %136 = vector.broadcast %cst_79 : f32 to vector<8x896xf32>
    %137 = arith.subf %136, %135 : vector<8x896xf32>
    %138 = math.exp %137 : vector<8x896xf32>
    %cst_80 = arith.constant 1.000000e+00 : f32
    %139 = vector.broadcast %cst_80 : f32 to vector<8x896xf32>
    %140 = arith.addf %139, %138 : vector<8x896xf32>
    %141 = tpu.reciprocal %140 {approx = true} : vector<8x896xf32> -> vector<8x896xf32>
    %142 = arith.truncf %141 : vector<8x896xf32> to vector<8x896xbf16>
    %c0_81 = arith.constant 0 : index
    %c0_82 = arith.constant 0 : index
    %143 = vector.load %arg8[%c0_81, %c0_82] : memref<8x896xbf16, #tpu.memory_space<vmem>>, vector<8x896xbf16>
    tpu.vector_store %arg8[%c0_81, %c0_82], %142 {strides = array<i32>} : memref<8x896xbf16, #tpu.memory_space<vmem>>, vector<8x896xbf16>,
    return
  }
  func.func @transform_0(%arg0: i32) -> (i32, i32) {
    %c0_i32 = arith.constant 0 : i32
    %c0_i32_0 = arith.constant 0 : i32
    return %arg0, %c0_i32 : i32, i32
  }
  func.func @transform_1(%arg0: i32) -> (i32, i32) {
    %c0_i32 = arith.constant 0 : i32
    %c0_i32_0 = arith.constant 0 : i32
    %c0_i32_1 = arith.constant 0 : i32
    return %c0_i32, %c0_i32_0 : i32, i32
  }
  func.func @transform_2(%arg0: i32) -> (i32, i32) {
    %c0_i32 = arith.constant 0 : i32
    %c0_i32_0 = arith.constant 0 : i32
    %c0_i32_1 = arith.constant 0 : i32
    return %c0_i32, %c0_i32_0 : i32, i32
  }
  func.func @transform_3(%arg0: i32) -> (i32, i32) {
    %c0_i32 = arith.constant 0 : i32
    %c0_i32_0 = arith.constant 0 : i32
    %c0_i32_1 = arith.constant 0 : i32
    return %c0_i32, %c0_i32_0 : i32, i32
  }
  func.func @transform_4(%arg0: i32) -> (i32, i32) {
    %c0_i32 = arith.constant 0 : i32
    %c0_i32_0 = arith.constant 0 : i32
    %c0_i32_1 = arith.constant 0 : i32
    return %c0_i32, %c0_i32_0 : i32, i32
  }
  func.func @transform_5(%arg0: i32) -> (i32, i32) {
    %c0_i32 = arith.constant 0 : i32
    %c0_i32_0 = arith.constant 0 : i32
    %c0_i32_1 = arith.constant 0 : i32
    return %c0_i32, %c0_i32_0 : i32, i32
  }
  func.func @transform_6(%arg0: i32) -> (i32, i32) {
    %c0_i32 = arith.constant 0 : i32
    %c0_i32_0 = arith.constant 0 : i32
    %c0_i32_1 = arith.constant 0 : i32
    return %c0_i32, %c0_i32_0 : i32, i32
  }
  func.func @transform_7(%arg0: i32) -> (i32, i32) {
    %c0_i32 = arith.constant 0 : i32
    %c0_i32_0 = arith.constant 0 : i32
    return %arg0, %c0_i32 : i32, i32
  }
}

</mosaic_0001>

<llo_original>
// kernel: tpu_custom_call.1
$region0: #{tpu_custom_call.1}
  #allocation0 [shape = 'u32[]', space=smem, size = 0x4, offset = 0x4, fixed_abs, tag = 'smem constant byte address 0x4 - core index']
  #allocation1 [shape = 'u32[72,128]{1,0:T(1,128)}', space=vmem, size = 0x9000, scoped, tag = 'internal scratch']
  %s0 = inlined_call_operand.hbm [shape: bf16[8,896], index: 0, kind: input, shape index: {}]
  %s1 = inlined_call_operand.hbm [shape: bf16[2304,128], index: 1, kind: input, shape index: {}]
  %s2 = inlined_call_operand.hbm [shape: bf16[1536,256], index: 2, kind: input, shape index: {}]
  %s3 = inlined_call_operand.hbm [shape: bf16[128,896], index: 3, kind: input, shape index: {}]
  %s4 = inlined_call_operand.hbm [shape: f32[16,128], index: 4, kind: input, shape index: {}]
  %s5 = inlined_call_operand.hbm [shape: f32[8,256], index: 5, kind: input, shape index: {}]
  %s6 = inlined_call_operand.hbm [shape: f32[8,896], index: 6, kind: input, shape index: {}]
  %s7 = inlined_call_operand.hbm [shape: bf16[8,896], index: 7, kind: output, shape index: {}]
  %s8 = sld [smem:[#allocation0]]
  $region66: #{tpu_custom_call.1} parent=0
    _
  %s10 = ssub.s32 1, %s8
  %s11 = scalar_select 0, %s10, %s8
  $region1: #{tpu_custom_call.1} parent=0
    #allocation2 [shape = 'u8[14336]{0}', space=vmem, size = 0x3800, scoped, tag = 'input window, operand 0, single buffered']
    #allocation3 [shape = 's32[1]{0}', space=sflag, size = 0x4, scoped, tag = 'scoped memory for tpu_custom_call.1']
    #allocation4 [shape = 's32[1]{0}', space=sflag, size = 0x4, scoped, tag = 'scoped memory for tpu_custom_call.1']
    #allocation5 [shape = 'u8[589824]{0}', space=vmem, size = 0x90000, scoped, tag = 'input window, operand 1, single buffered']
    #allocation6 [shape = 's32[1]{0}', space=sflag, size = 0x4, scoped, tag = 'scoped memory for tpu_custom_call.1']
    #allocation7 [shape = 'u8[786432]{0}', space=vmem, size = 0xc0000, scoped, tag = 'input window, operand 2, single buffered']
    #allocation8 [shape = 'u8[229376]{0}', space=vmem, size = 0x38000, scoped, tag = 'input window, operand 3, single buffered']
    #allocation9 [shape = 's32[1]{0}', space=sflag, size = 0x4, scoped, tag = 'scoped memory for tpu_custom_call.1']
    #allocation10 [shape = 'u8[8192]{0}', space=vmem, size = 0x2000, scoped, tag = 'input window, operand 4, single buffered']
    #allocation11 [shape = 'u8[8192]{0}', space=vmem, size = 0x2000, scoped, tag = 'input window, operand 5, single buffered']
    #allocation12 [shape = 's32[1]{0}', space=sflag, size = 0x4, scoped, tag = 'scoped memory for tpu_custom_call.1']
    #allocation13 [shape = 'u8[28672]{0}', space=vmem, size = 0x7000, scoped, tag = 'input window, operand 6, single buffered']
    #allocation14 [shape = 'u8[14336]{0}', space=vmem, size = 0x3800, scoped, tag = 'output window, operand 0, single buffered']
    %12 = vsyncpa [#allocation3], 0
    %13 = vsyncpa [#allocation6], 0
    %14 = vsyncpa [#allocation9], 0
    %15 = vsyncpa [#allocation12], 0
    %16 = vsyncpa [#allocation4], 0
    // Predicated region
    $region2: #{tpu_custom_call.1} parent=1 // pred_check
      _
    $region3: #{tpu_custom_call.1} parent=1 // pred_check_branch
      %18 = sbr.rel (0) target = $region5
    $region4: #{tpu_custom_call.1} parent=1 // pred_region
      %20 = vsyncadd [#allocation3], 0
      %s22 = sshll.u32 %s0, 4
      %s23 = int_to_ptr.hbm [resolvable:$true] %s22
      %s24 = sshll.u32 [#allocation2], 4
      %s25 = int_to_ptr.vmem [resolvable:$true] %s24
      %27 = dma.hbm_to_vmem [thread:$0]  %s23, 448, %s25, [#allocation3]
    $region5: #{tpu_custom_call.1} parent=1 // pred_fallthru
      _
    // Predicated region
    $region6: #{tpu_custom_call.1} parent=1 // pred_check
      _
    $region7: #{tpu_custom_call.1} parent=1 // pred_check_branch
      %29 = sbr.rel (0) target = $region9
    $region8: #{tpu_custom_call.1} parent=1 // pred_region
      %31 = vsyncadd [#allocation6], 0
      %s32 = sshll.u32 %s1, 4
      %s33 = int_to_ptr.hbm [resolvable:$true] %s32
      %s34 = sshll.u32 [#allocation5], 4
      %s35 = int_to_ptr.vmem [resolvable:$true] %s34
      %40 = dma.hbm_to_vmem [thread:$0]  %s33, 18432, %s35, [#allocation6], 64, 64, 4
    $region9: #{tpu_custom_call.1} parent=1 // pred_fallthru
      _
    // Predicated region
    $region10: #{tpu_custom_call.1} parent=1 // pred_check
      _
    $region11: #{tpu_custom_call.1} parent=1 // pred_check_branch
      %42 = sbr.rel (0) target = $region13
    $region12: #{tpu_custom_call.1} parent=1 // pred_region
      %44 = vsyncadd [#allocation6], 0
      %s45 = sshll.u32 %s2, 4
      %s46 = int_to_ptr.hbm [resolvable:$true] %s45
      %s47 = sshll.u32 [#allocation7], 4
      %s48 = int_to_ptr.vmem [resolvable:$true] %s47
      %53 = dma.hbm_to_vmem [thread:$0]  %s46, 24576, %s48, [#allocation6], 128, 128, 8
    $region13: #{tpu_custom_call.1} parent=1 // pred_fallthru
      _
    // Predicated region
    $region14: #{tpu_custom_call.1} parent=1 // pred_check
      _
    $region15: #{tpu_custom_call.1} parent=1 // pred_check_branch
      %55 = sbr.rel (0) target = $region17
    $region16: #{tpu_custom_call.1} parent=1 // pred_region
      %57 = vsyncadd [#allocation9], 0
      %s58 = sshll.u32 %s3, 4
      %s59 = int_to_ptr.hbm [resolvable:$true] %s58
      %s60 = sshll.u32 [#allocation8], 4
      %s61 = int_to_ptr.vmem [resolvable:$true] %s60
      %66 = dma.hbm_to_vmem [thread:$0]  %s59, 7168, %s61, [#allocation9], 448, 448, 28
    $region17: #{tpu_custom_call.1} parent=1 // pred_fallthru
      _
    // Predicated region
    $region18: #{tpu_custom_call.1} parent=1 // pred_check
      _
    $region19: #{tpu_custom_call.1} parent=1 // pred_check_branch
      %68 = sbr.rel (0) target = $region21
    $region20: #{tpu_custom_call.1} parent=1 // pred_region
      %70 = vsyncadd [#allocation9], 0
      %s71 = sshll.u32 %s4, 4
      %s72 = int_to_ptr.hbm [resolvable:$true] %s71
      %s73 = sshll.u32 [#allocation10], 4
      %s74 = int_to_ptr.vmem [resolvable:$true] %s73
      %79 = dma.hbm_to_vmem [thread:$0]  %s72, 256, %s74, [#allocation9], 128, 128, 8
    $region21: #{tpu_custom_call.1} parent=1 // pred_fallthru
      _
    // Predicated region
    $region22: #{tpu_custom_call.1} parent=1 // pred_check
      _
    $region23: #{tpu_custom_call.1} parent=1 // pred_check_branch
      %81 = sbr.rel (0) target = $region25
    $region24: #{tpu_custom_call.1} parent=1 // pred_region
      %83 = vsyncadd [#allocation12], 0
      %s85 = sshll.u32 %s5, 4
      %s86 = int_to_ptr.hbm [resolvable:$true] %s85
      %s87 = sshll.u32 [#allocation11], 4
      %s88 = int_to_ptr.vmem [resolvable:$true] %s87
      %90 = dma.hbm_to_vmem [thread:$0]  %s86, 256, %s88, [#allocation12]
    $region25: #{tpu_custom_call.1} parent=1 // pred_fallthru
      _
    // Predicated region
    $region26: #{tpu_custom_call.1} parent=1 // pred_check
      _
    $region27: #{tpu_custom_call.1} parent=1 // pred_check_branch
      %92 = sbr.rel (0) target = $region29
    $region28: #{tpu_custom_call.1} parent=1 // pred_region
      %94 = vsyncadd [#allocation12], 0
      %s96 = sshll.u32 %s6, 4
      %s97 = int_to_ptr.hbm [resolvable:$true] %s96
      %s98 = sshll.u32 [#allocation13], 4
      %s99 = int_to_ptr.vmem [resolvable:$true] %s98
      %101 = dma.hbm_to_vmem [thread:$0]  %s97, 896, %s99, [#allocation12]
    $region29: #{tpu_custom_call.1} parent=1 // pred_fallthru
      _
    // Predicated region
    $region30: #{tpu_custom_call.1} parent=1 // pred_check
      _
    $region31: #{tpu_custom_call.1} parent=1 // pred_check_branch
      %103 = sbr.rel (0) target = $region33
    $region32: #{tpu_custom_call.1} parent=1 // pred_region
      %105 = dma.done [#allocation3], 448
    $region33: #{tpu_custom_call.1} parent=1 // pred_fallthru
      _
    // Predicated region
    $region34: #{tpu_custom_call.1} parent=1 // pred_check
      _
    $region35: #{tpu_custom_call.1} parent=1 // pred_check_branch
      %107 = sbr.rel (0) target = $region37
    $region36: #{tpu_custom_call.1} parent=1 // pred_region
      %109 = dma.done [#allocation6], 18432
    $region37: #{tpu_custom_call.1} parent=1 // pred_fallthru
      _
    // Predicated region
    $region38: #{tpu_custom_call.1} parent=1 // pred_check
      _
    $region39: #{tpu_custom_call.1} parent=1 // pred_check_branch
      %111 = sbr.rel (0) target = $region41
    $region40: #{tpu_custom_call.1} parent=1 // pred_region
      %113 = dma.done [#allocation6], 24576
    $region41: #{tpu_custom_call.1} parent=1 // pred_fallthru
      _
    // Predicated region
    $region42: #{tpu_custom_call.1} parent=1 // pred_check
      _
    $region43: #{tpu_custom_call.1} parent=1 // pred_check_branch
      %115 = sbr.rel (0) target = $region45
    $region44: #{tpu_custom_call.1} parent=1 // pred_region
      %117 = dma.done [#allocation9], 7168
    $region45: #{tpu_custom_call.1} parent=1 // pred_fallthru
      _
    // Predicated region
    $region46: #{tpu_custom_call.1} parent=1 // pred_check
      _
    $region47: #{tpu_custom_call.1} parent=1 // pred_check_branch
      %119 = sbr.rel (0) target = $region49
    $region48: #{tpu_custom_call.1} parent=1 // pred_region
      %121 = dma.done [#allocation9], 256
    $region49: #{tpu_custom_call.1} parent=1 // pred_fallthru
      _
    // Predicated region
    $region50: #{tpu_custom_call.1} parent=1 // pred_check
      _
    $region51: #{tpu_custom_call.1} parent=1 // pred_check_branch
      %123 = sbr.rel (0) target = $region53
    $region52: #{tpu_custom_call.1} parent=1 // pred_region
      %125 = dma.done [#allocation12], 256
    $region53: #{tpu_custom_call.1} parent=1 // pred_fallthru
      _
    // Predicated region
    $region54: #{tpu_custom_call.1} parent=1 // pred_check
      _
    $region55: #{tpu_custom_call.1} parent=1 // pred_check_branch
      %127 = sbr.rel (0) target = $region57
    $region56: #{tpu_custom_call.1} parent=1 // pred_region
      %129 = dma.done [#allocation12], 896
    $region57: #{tpu_custom_call.1} parent=1 // pred_fallthru
      _
    %v130 = vld [vmem:[#allocation2] sm:$0xff]
    %v131 = vld [vmem:[#allocation2 + $0x8] sm:$0xff]
    %v132 = vld [vmem:[#allocation2 + $0x10] sm:$0xff]
    %v133 = vld [vmem:[#allocation2 + $0x18] sm:$0xf]
    %v134 = vld [vmem:[#allocation7] sm:$0xff]
    %v135 = vld [vmem:[#allocation7 + $0x8] sm:$0xff]
    %v136 = vld [vmem:[#allocation7 + $0x10] sm:$0xff]
    %v137 = vld [vmem:[#allocation7 + $0x18] sm:$0xff]
    %v138 = vld [vmem:[#allocation7 + $0x20] sm:$0xff]
    %v139 = vld [vmem:[#allocation7 + $0x28] sm:$0xff]
    %v140 = vld [vmem:[#allocation7 + $0x30] sm:$0xff]
    %v141 = vld [vmem:[#allocation7 + $0x38] sm:$0xff]
    %v142 = vld [vmem:[#allocation7 + $0x40] sm:$0xff]
    %v143 = vld [vmem:[#allocation7 + $0x48] sm:$0xff]
    %v144 = vld [vmem:[#allocation7 + $0x50] sm:$0xff]
    %v145 = vld [vmem:[#allocation7 + $0x58] sm:$0xff]
    %v146 = vld [vmem:[#allocation7 + $0x60] sm:$0xff]
    %v147 = vld [vmem:[#allocation7 + $0x68] sm:$0xff]
    %v148 = vld [vmem:[#allocation7 + $0x70] sm:$0xff]
    %v149 = vld [vmem:[#allocation7 + $0x78] sm:$0xff]
    %v150 = vld [vmem:[#allocation7 + $0x80] sm:$0xff]
    %v151 = vld [vmem:[#allocation7 + $0x88] sm:$0xff]
    %v152 = vld [vmem:[#allocation7 + $0x90] sm:$0xff]
    %v153 = vld [vmem:[#allocation7 + $0x98] sm:$0xff]
    %v154 = vld [vmem:[#allocation7 + $0xa0] sm:$0xff]
    %v155 = vld [vmem:[#allocation7 + $0xa8] sm:$0xff]
    %v156 = vld [vmem:[#allocation7 + $0xb0] sm:$0xff]
    %v157 = vld [vmem:[#allocation7 + $0xb8] sm:$0xff]
    %v158 = vld [vmem:[#allocation7 + $0xc0] sm:$0xff]
    %v159 = vld [vmem:[#allocation7 + $0xc8] sm:$0xff]
    %v160 = vld [vmem:[#allocation7 + $0xd0] sm:$0xff]
    %v161 = vld [vmem:[#allocation7 + $0xd8] sm:$0xff]
    %v162 = vld [vmem:[#allocation7 + $0xe0] sm:$0xff]
    %v163 = vld [vmem:[#allocation7 + $0xe8] sm:$0xff]
    %v164 = vld [vmem:[#allocation7 + $0xf0] sm:$0xff]
    %v165 = vld [vmem:[#allocation7 + $0xf8] sm:$0xff]
    %v166 = vld [vmem:[#allocation7 + $0x100] sm:$0xff]
    %v167 = vld [vmem:[#allocation7 + $0x108] sm:$0xff]
    %v168 = vld [vmem:[#allocation7 + $0x110] sm:$0xff]
    %v169 = vld [vmem:[#allocation7 + $0x118] sm:$0xff]
    %v170 = vld [vmem:[#allocation7 + $0x120] sm:$0xff]
    %v171 = vld [vmem:[#allocation7 + $0x128] sm:$0xff]
    %v172 = vld [vmem:[#allocation7 + $0x130] sm:$0xff]
    %v173 = vld [vmem:[#allocation7 + $0x138] sm:$0xff]
    %v174 = vld [vmem:[#allocation7 + $0x140] sm:$0xff]
    %v175 = vld [vmem:[#allocation7 + $0x148] sm:$0xff]
    %v176 = vld [vmem:[#allocation7 + $0x150] sm:$0xff]
    %v177 = vld [vmem:[#allocation7 + $0x158] sm:$0xff]
    %v178 = vld [vmem:[#allocation7 + $0x160] sm:$0xff]
    %v179 = vld [vmem:[#allocation7 + $0x168] sm:$0xff]
    %v180 = vld [vmem:[#allocation7 + $0x170] sm:$0xff]
    %v181 = vld [vmem:[#allocation7 + $0x178] sm:$0xff]
    %v182 = vld [vmem:[#allocation7 + $0x180] sm:$0xff]
    %v183 = vld [vmem:[#allocation7 + $0x188] sm:$0xff]
    %v184 = vld [vmem:[#allocation7 + $0x190] sm:$0xff]
    %v185 = vld [vmem:[#allocation7 + $0x198] sm:$0xff]
    %v186 = vld [vmem:[#allocation7 + $0x1a0] sm:$0xff]
    %v187 = vld [vmem:[#allocation7 + $0x1a8] sm:$0xff]
    %v188 = vld [vmem:[#allocation7 + $0x1b0] sm:$0xff]
    %v189 = vld [vmem:[#allocation7 + $0x1b8] sm:$0xff]
    %v190 = vld [vmem:[#allocation7 + $0x1c0] sm:$0xff]
    %v191 = vld [vmem:[#allocation7 + $0x1c8] sm:$0xff]
    %v192 = vld [vmem:[#allocation7 + $0x1d0] sm:$0xff]
    %v193 = vld [vmem:[#allocation7 + $0x1d8] sm:$0xff]
    %v194 = vld [vmem:[#allocation7 + $0x1e0] sm:$0xff]
    %v195 = vld [vmem:[#allocation7 + $0x1e8] sm:$0xff]
    %v196 = vld [vmem:[#allocation7 + $0x1f0] sm:$0xff]
    %v197 = vld [vmem:[#allocation7 + $0x1f8] sm:$0xff]
    %v198 = vld [vmem:[#allocation7 + $0x200] sm:$0xff]
    %v199 = vld [vmem:[#allocation7 + $0x208] sm:$0xff]
    %v200 = vld [vmem:[#allocation7 + $0x210] sm:$0xff]
    %v201 = vld [vmem:[#allocation7 + $0x218] sm:$0xff]
    %v202 = vld [vmem:[#allocation7 + $0x220] sm:$0xff]
    %v203 = vld [vmem:[#allocation7 + $0x228] sm:$0xff]
    %v204 = vld [vmem:[#allocation7 + $0x230] sm:$0xff]
    %v205 = vld [vmem:[#allocation7 + $0x238] sm:$0xff]
    %v206 = vld [vmem:[#allocation7 + $0x240] sm:$0xff]
    %v207 = vld [vmem:[#allocation7 + $0x248] sm:$0xff]
    %v208 = vld [vmem:[#allocation7 + $0x250] sm:$0xff]
    %v209 = vld [vmem:[#allocation7 + $0x258] sm:$0xff]
    %v210 = vld [vmem:[#allocation7 + $0x260] sm:$0xff]
    %v211 = vld [vmem:[#allocation7 + $0x268] sm:$0xff]
    %v212 = vld [vmem:[#allocation7 + $0x270] sm:$0xff]
    %v213 = vld [vmem:[#allocation7 + $0x278] sm:$0xff]
    %v214 = vld [vmem:[#allocation7 + $0x280] sm:$0xff]
    %v215 = vld [vmem:[#allocation7 + $0x288] sm:$0xff]
    %v216 = vld [vmem:[#allocation7 + $0x290] sm:$0xff]
    %v217 = vld [vmem:[#allocation7 + $0x298] sm:$0xff]
    %v218 = vld [vmem:[#allocation7 + $0x2a0] sm:$0xff]
    %v219 = vld [vmem:[#allocation7 + $0x2a8] sm:$0xff]
    %v220 = vld [vmem:[#allocation7 + $0x2b0] sm:$0xff]
    %v221 = vld [vmem:[#allocation7 + $0x2b8] sm:$0xff]
    %v222 = vld [vmem:[#allocation7 + $0x2c0] sm:$0xff]
    %v223 = vld [vmem:[#allocation7 + $0x2c8] sm:$0xff]
    %v224 = vld [vmem:[#allocation7 + $0x2d0] sm:$0xff]
    %v225 = vld [vmem:[#allocation7 + $0x2d8] sm:$0xff]
    %v226 = vld [vmem:[#allocation7 + $0x2e0] sm:$0xff]
    %v227 = vld [vmem:[#allocation7 + $0x2e8] sm:$0xff]
    %v228 = vld [vmem:[#allocation7 + $0x2f0] sm:$0xff]
    %v229 = vld [vmem:[#allocation7 + $0x2f8] sm:$0xff]
    %v230 = vld [vmem:[#allocation7 + $0x300] sm:$0xff]
    %v231 = vld [vmem:[#allocation7 + $0x308] sm:$0xff]
    %v232 = vld [vmem:[#allocation7 + $0x310] sm:$0xff]
    %v233 = vld [vmem:[#allocation7 + $0x318] sm:$0xff]
    %v234 = vld [vmem:[#allocation7 + $0x320] sm:$0xff]
    %v235 = vld [vmem:[#allocation7 + $0x328] sm:$0xff]
    %v236 = vld [vmem:[#allocation7 + $0x330] sm:$0xff]
    %v237 = vld [vmem:[#allocation7 + $0x338] sm:$0xff]
    %v238 = vld [vmem:[#allocation7 + $0x340] sm:$0xff]
    %v239 = vld [vmem:[#allocation7 + $0x348] sm:$0xff]
    %v240 = vld [vmem:[#allocation7 + $0x350] sm:$0xff]
    %v241 = vld [vmem:[#allocation7 + $0x358] sm:$0xff]
    %v242 = vld [vmem:[#allocation7 + $0x360] sm:$0xff]
    %v243 = vld [vmem:[#allocation7 + $0x368] sm:$0xff]
    %v244 = vld [vmem:[#allocation7 + $0x370] sm:$0xff]
    %v245 = vld [vmem:[#allocation7 + $0x378] sm:$0xff]
    %v246 = vld [vmem:[#allocation11] ss:$8 sm:$0x3]
    %v248 = vperm.slane %v246, 0
    %v249 = vperm.slane %v246, 1
    %v256 = vunpack.c.l.b16 %v130
    %v257 = vunpack.c.h.b16 %v130
    %v258 = vunpack.c.l.b16 %v131
    %v259 = vunpack.c.h.b16 %v131
    %v260 = vunpack.c.l.b16 %v132
    %v261 = vunpack.c.h.b16 %v132
    %v262 = vunpack.c.l.b16 %v133
    %v263 = vpack.c.b16 %v256, %v256
    %v264 = vpack.c.b16 %v257, %v257
    %v265 = vpack.c.b16 %v258, %v258
    %v266 = vpack.c.b16 %v259, %v259
    %v267 = vpack.c.b16 %v260, %v260
    %v268 = vpack.c.b16 %v261, %v261
    %v269 = vpack.c.b16 %v262, %v262
    %v389 = vunpack.c.l.b16 %v134
    %v390 = vunpack.c.h.b16 %v134
    %v391 = vunpack.c.l.b16 %v135
    %v392 = vunpack.c.h.b16 %v135
    %v393 = vunpack.c.l.b16 %v136
    %v394 = vunpack.c.h.b16 %v136
    %v395 = vunpack.c.l.b16 %v137
    %v396 = vunpack.c.h.b16 %v137
    %v397 = vunpack.c.l.b16 %v138
    %v398 = vunpack.c.h.b16 %v138
    %v399 = vunpack.c.l.b16 %v139
    %v400 = vunpack.c.h.b16 %v139
    %v401 = vunpack.c.l.b16 %v140
    %v402 = vunpack.c.h.b16 %v140
    %v403 = vunpack.c.l.b16 %v141
    %v404 = vunpack.c.h.b16 %v141
    %v405 = vunpack.c.l.b16 %v142
    %v406 = vunpack.c.h.b16 %v142
    %v407 = vunpack.c.l.b16 %v143
    %v408 = vunpack.c.h.b16 %v143
    %v409 = vunpack.c.l.b16 %v144
    %v410 = vunpack.c.h.b16 %v144
    %v411 = vunpack.c.l.b16 %v145
    %v412 = vunpack.c.h.b16 %v145
    %v413 = vunpack.c.l.b16 %v146
    %v414 = vunpack.c.h.b16 %v146
    %v415 = vunpack.c.l.b16 %v147
    %v416 = vunpack.c.h.b16 %v147
    %v417 = vunpack.c.l.b16 %v148
    %v418 = vunpack.c.h.b16 %v148
    %v419 = vunpack.c.l.b16 %v149
    %v420 = vunpack.c.h.b16 %v149
    %v421 = vunpack.c.l.b16 %v150
    %v422 = vunpack.c.h.b16 %v150
    %v423 = vunpack.c.l.b16 %v151
    %v424 = vunpack.c.h.b16 %v151
    %v425 = vunpack.c.l.b16 %v152
    %v426 = vunpack.c.h.b16 %v152
    %v427 = vunpack.c.l.b16 %v153
    %v428 = vunpack.c.h.b16 %v153
    %v429 = vunpack.c.l.b16 %v154
    %v430 = vunpack.c.h.b16 %v154
    %v431 = vunpack.c.l.b16 %v155
    %v432 = vunpack.c.h.b16 %v155
    %v433 = vunpack.c.l.b16 %v156
    %v434 = vunpack.c.h.b16 %v156
    %v435 = vunpack.c.l.b16 %v157
    %v436 = vunpack.c.h.b16 %v157
    %v437 = vunpack.c.l.b16 %v158
    %v438 = vunpack.c.h.b16 %v158
    %v439 = vunpack.c.l.b16 %v159
    %v440 = vunpack.c.h.b16 %v159
    %v441 = vunpack.c.l.b16 %v160
    %v442 = vunpack.c.h.b16 %v160
    %v443 = vunpack.c.l.b16 %v161
    %v444 = vunpack.c.h.b16 %v161
    %v445 = vunpack.c.l.b16 %v162
    %v446 = vunpack.c.h.b16 %v162
    %v447 = vunpack.c.l.b16 %v163
    %v448 = vunpack.c.h.b16 %v163
    %v449 = vunpack.c.l.b16 %v164
    %v450 = vunpack.c.h.b16 %v164
    %v451 = vunpack.c.l.b16 %v165
    %v452 = vunpack.c.h.b16 %v165
    %v453 = vunpack.c.l.b16 %v166
    %v454 = vunpack.c.h.b16 %v166
    %v455 = vunpack.c.l.b16 %v167
    %v456 = vunpack.c.h.b16 %v167
    %v457 = vunpack.c.l.b16 %v168
    %v458 = vunpack.c.h.b16 %v168
    %v459 = vunpack.c.l.b16 %v169
    %v460 = vunpack.c.h.b16 %v169
    %v461 = vunpack.c.l.b16 %v170
    %v462 = vunpack.c.h.b16 %v170
    %v463 = vunpack.c.l.b16 %v171
    %v464 = vunpack.c.h.b16 %v171
    %v465 = vunpack.c.l.b16 %v172
    %v466 = vunpack.c.h.b16 %v172
    %v467 = vunpack.c.l.b16 %v173
    %v468 = vunpack.c.h.b16 %v173
    %v469 = vunpack.c.l.b16 %v174
    %v470 = vunpack.c.h.b16 %v174
    %v471 = vunpack.c.l.b16 %v175
    %v472 = vunpack.c.h.b16 %v175
    %v473 = vunpack.c.l.b16 %v176
    %v474 = vunpack.c.h.b16 %v176
    %v475 = vunpack.c.l.b16 %v177
    %v476 = vunpack.c.h.b16 %v177
    %v477 = vunpack.c.l.b16 %v178
    %v478 = vunpack.c.h.b16 %v178
    %v479 = vunpack.c.l.b16 %v179
    %v480 = vunpack.c.h.b16 %v179
    %v481 = vunpack.c.l.b16 %v180
    %v482 = vunpack.c.h.b16 %v180
    %v483 = vunpack.c.l.b16 %v181
    %v484 = vunpack.c.h.b16 %v181
    %v485 = vunpack.c.l.b16 %v182
    %v486 = vunpack.c.h.b16 %v182
    %v487 = vunpack.c.l.b16 %v183
    %v488 = vunpack.c.h.b16 %v183
    %v489 = vunpack.c.l.b16 %v184
    %v490 = vunpack.c.h.b16 %v184
    %v491 = vunpack.c.l.b16 %v185
    %v492 = vunpack.c.h.b16 %v185
    %v493 = vunpack.c.l.b16 %v186
    %v494 = vunpack.c.h.b16 %v186
    %v495 = vunpack.c.l.b16 %v187
    %v496 = vunpack.c.h.b16 %v187
    %v497 = vunpack.c.l.b16 %v188
    %v498 = vunpack.c.h.b16 %v188
    %v499 = vunpack.c.l.b16 %v189
    %v500 = vunpack.c.h.b16 %v189
    %v501 = vunpack.c.l.b16 %v190
    %v502 = vunpack.c.h.b16 %v190
    %v503 = vunpack.c.l.b16 %v191
    %v504 = vunpack.c.h.b16 %v191
    %v505 = vunpack.c.l.b16 %v192
    %v506 = vunpack.c.h.b16 %v192
    %v507 = vunpack.c.l.b16 %v193
    %v508 = vunpack.c.h.b16 %v193
    %v509 = vunpack.c.l.b16 %v194
    %v510 = vunpack.c.h.b16 %v194
    %v511 = vunpack.c.l.b16 %v195
    %v512 = vunpack.c.h.b16 %v195
    %v513 = vunpack.c.l.b16 %v196
    %v514 = vunpack.c.h.b16 %v196
    %v515 = vunpack.c.l.b16 %v197
    %v516 = vunpack.c.h.b16 %v197
    %v517 = vunpack.c.l.b16 %v198
    %v518 = vunpack.c.h.b16 %v198
    %v519 = vunpack.c.l.b16 %v199
    %v520 = vunpack.c.h.b16 %v199
    %v521 = vunpack.c.l.b16 %v200
    %v522 = vunpack.c.h.b16 %v200
    %v523 = vunpack.c.l.b16 %v201
    %v524 = vunpack.c.h.b16 %v201
    %v525 = vunpack.c.l.b16 %v202
    %v526 = vunpack.c.h.b16 %v202
    %v527 = vunpack.c.l.b16 %v203
    %v528 = vunpack.c.h.b16 %v203
    %v529 = vunpack.c.l.b16 %v204
    %v530 = vunpack.c.h.b16 %v204
    %v531 = vunpack.c.l.b16 %v205
    %v532 = vunpack.c.h.b16 %v205
    %v533 = vunpack.c.l.b16 %v206
    %v534 = vunpack.c.h.b16 %v206
    %v535 = vunpack.c.l.b16 %v207
    %v536 = vunpack.c.h.b16 %v207
    %v537 = vunpack.c.l.b16 %v208
    %v538 = vunpack.c.h.b16 %v208
    %v539 = vunpack.c.l.b16 %v209
    %v540 = vunpack.c.h.b16 %v209
    %v541 = vunpack.c.l.b16 %v210
    %v542 = vunpack.c.h.b16 %v210
    %v543 = vunpack.c.l.b16 %v211
    %v544 = vunpack.c.h.b16 %v211
    %v545 = vunpack.c.l.b16 %v212
    %v546 = vunpack.c.h.b16 %v212
    %v547 = vunpack.c.l.b16 %v213
    %v548 = vunpack.c.h.b16 %v213
    %v549 = vunpack.c.l.b16 %v214
    %v550 = vunpack.c.h.b16 %v214
    %v551 = vunpack.c.l.b16 %v215
    %v552 = vunpack.c.h.b16 %v215
    %v553 = vunpack.c.l.b16 %v216
    %v554 = vunpack.c.h.b16 %v216
    %v555 = vunpack.c.l.b16 %v217
    %v556 = vunpack.c.h.b16 %v217
    %v557 = vunpack.c.l.b16 %v218
    %v558 = vunpack.c.h.b16 %v218
    %v559 = vunpack.c.l.b16 %v219
    %v560 = vunpack.c.h.b16 %v219
    %v561 = vunpack.c.l.b16 %v220
    %v562 = vunpack.c.h.b16 %v220
    %v563 = vunpack.c.l.b16 %v221
    %v564 = vunpack.c.h.b16 %v221
    %v565 = vunpack.c.l.b16 %v222
    %v566 = vunpack.c.h.b16 %v222
    %v567 = vunpack.c.l.b16 %v223
    %v568 = vunpack.c.h.b16 %v223
    %v569 = vunpack.c.l.b16 %v224
    %v570 = vunpack.c.h.b16 %v224
    %v571 = vunpack.c.l.b16 %v225
    %v572 = vunpack.c.h.b16 %v225
    %v573 = vunpack.c.l.b16 %v226
    %v574 = vunpack.c.h.b16 %v226
    %v575 = vunpack.c.l.b16 %v227
    %v576 = vunpack.c.h.b16 %v227
    %v577 = vunpack.c.l.b16 %v228
    %v578 = vunpack.c.h.b16 %v228
    %v579 = vunpack.c.l.b16 %v229
    %v580 = vunpack.c.h.b16 %v229
    %v581 = vunpack.c.l.b16 %v230
    %v582 = vunpack.c.h.b16 %v230
    %v583 = vunpack.c.l.b16 %v231
    %v584 = vunpack.c.h.b16 %v231
    %v585 = vunpack.c.l.b16 %v232
    %v586 = vunpack.c.h.b16 %v232
    %v587 = vunpack.c.l.b16 %v233
    %v588 = vunpack.c.h.b16 %v233
    %v589 = vunpack.c.l.b16 %v234
    %v590 = vunpack.c.h.b16 %v234
    %v591 = vunpack.c.l.b16 %v235
    %v592 = vunpack.c.h.b16 %v235
    %v593 = vunpack.c.l.b16 %v236
    %v594 = vunpack.c.h.b16 %v236
    %v595 = vunpack.c.l.b16 %v237
    %v596 = vunpack.c.h.b16 %v237
    %v597 = vunpack.c.l.b16 %v238
    %v598 = vunpack.c.h.b16 %v238
    %v599 = vunpack.c.l.b16 %v239
    %v600 = vunpack.c.h.b16 %v239
    %v601 = vunpack.c.l.b16 %v240
    %v602 = vunpack.c.h.b16 %v240
    %v603 = vunpack.c.l.b16 %v241
    %v604 = vunpack.c.h.b16 %v241
    %v605 = vunpack.c.l.b16 %v242
    %v606 = vunpack.c.h.b16 %v242
    %v607 = vunpack.c.l.b16 %v243
    %v608 = vunpack.c.h.b16 %v243
    %v609 = vunpack.c.l.b16 %v244
    %v610 = vunpack.c.h.b16 %v244
    %v611 = vunpack.c.l.b16 %v245
    %v612 = vunpack.c.h.b16 %v245
    %v613 = vpack.c.b16 %v391, %v389
    %v614 = vpack.c.b16 %v392, %v390
    %v615 = vpack.c.b16 %v395, %v393
    %v616 = vpack.c.b16 %v396, %v394
    %v617 = vpack.c.b16 %v399, %v397
    %v618 = vpack.c.b16 %v400, %v398
    %v619 = vpack.c.b16 %v403, %v401
    %v620 = vpack.c.b16 %v404, %v402
    %v621 = vpack.c.b16 %v407, %v405
    %v622 = vpack.c.b16 %v408, %v406
    %v623 = vpack.c.b16 %v411, %v409
    %v624 = vpack.c.b16 %v412, %v410
    %v625 = vpack.c.b16 %v415, %v413
    %v626 = vpack.c.b16 %v416, %v414
    %v627 = vpack.c.b16 %v419, %v417
    %v628 = vpack.c.b16 %v420, %v418
    %v629 = vpack.c.b16 %v423, %v421
    %v630 = vpack.c.b16 %v424, %v422
    %v631 = vpack.c.b16 %v427, %v425
    %v632 = vpack.c.b16 %v428, %v426
    %v633 = vpack.c.b16 %v431, %v429
    %v634 = vpack.c.b16 %v432, %v430
    %v635 = vpack.c.b16 %v435, %v433
    %v636 = vpack.c.b16 %v436, %v434
    %v637 = vpack.c.b16 %v439, %v437
    %v638 = vpack.c.b16 %v440, %v438
    %v639 = vpack.c.b16 %v443, %v441
    %v640 = vpack.c.b16 %v444, %v442
    %v641 = vpack.c.b16 %v447, %v445
    %v642 = vpack.c.b16 %v448, %v446
    %v643 = vpack.c.b16 %v451, %v449
    %v644 = vpack.c.b16 %v452, %v450
    %v645 = vpack.c.b16 %v455, %v453
    %v646 = vpack.c.b16 %v456, %v454
    %v647 = vpack.c.b16 %v459, %v457
    %v648 = vpack.c.b16 %v460, %v458
    %v649 = vpack.c.b16 %v463, %v461
    %v650 = vpack.c.b16 %v464, %v462
    %v651 = vpack.c.b16 %v467, %v465
    %v652 = vpack.c.b16 %v468, %v466
    %v653 = vpack.c.b16 %v471, %v469
    %v654 = vpack.c.b16 %v472, %v470
    %v655 = vpack.c.b16 %v475, %v473
    %v656 = vpack.c.b16 %v476, %v474
    %v657 = vpack.c.b16 %v479, %v477
    %v658 = vpack.c.b16 %v480, %v478
    %v659 = vpack.c.b16 %v483, %v481
    %v660 = vpack.c.b16 %v484, %v482
    %v661 = vpack.c.b16 %v487, %v485
    %v662 = vpack.c.b16 %v488, %v486
    %v663 = vpack.c.b16 %v491, %v489
    %v664 = vpack.c.b16 %v492, %v490
    %v665 = vpack.c.b16 %v495, %v493
    %v666 = vpack.c.b16 %v496, %v494
    %v667 = vpack.c.b16 %v499, %v497
    %v668 = vpack.c.b16 %v500, %v498
    %v669 = vpack.c.b16 %v503, %v501
    %v670 = vpack.c.b16 %v504, %v502
    %v671 = vpack.c.b16 %v507, %v505
    %v672 = vpack.c.b16 %v508, %v506
    %v673 = vpack.c.b16 %v511, %v509
    %v674 = vpack.c.b16 %v512, %v510
    %v675 = vpack.c.b16 %v515, %v513
    %v676 = vpack.c.b16 %v516, %v514
    %v677 = vpack.c.b16 %v519, %v517
    %v678 = vpack.c.b16 %v520, %v518
    %v679 = vpack.c.b16 %v523, %v521
    %v680 = vpack.c.b16 %v524, %v522
    %v681 = vpack.c.b16 %v527, %v525
    %v682 = vpack.c.b16 %v528, %v526
    %v683 = vpack.c.b16 %v531, %v529
    %v684 = vpack.c.b16 %v532, %v530
    %v685 = vpack.c.b16 %v535, %v533
    %v686 = vpack.c.b16 %v536, %v534
    %v687 = vpack.c.b16 %v539, %v537
    %v688 = vpack.c.b16 %v540, %v538
    %v689 = vpack.c.b16 %v543, %v541
    %v690 = vpack.c.b16 %v544, %v542
    %v691 = vpack.c.b16 %v547, %v545
    %v692 = vpack.c.b16 %v548, %v546
    %v693 = vpack.c.b16 %v551, %v549
    %v694 = vpack.c.b16 %v552, %v550
    %v695 = vpack.c.b16 %v555, %v553
    %v696 = vpack.c.b16 %v556, %v554
    %v697 = vpack.c.b16 %v559, %v557
    %v698 = vpack.c.b16 %v560, %v558
    %v699 = vpack.c.b16 %v563, %v561
    %v700 = vpack.c.b16 %v564, %v562
    %v701 = vpack.c.b16 %v567, %v565
    %v702 = vpack.c.b16 %v568, %v566
    %v703 = vpack.c.b16 %v571, %v569
    %v704 = vpack.c.b16 %v572, %v570
    %v705 = vpack.c.b16 %v575, %v573
    %v706 = vpack.c.b16 %v576, %v574
    %v707 = vpack.c.b16 %v579, %v577
    %v708 = vpack.c.b16 %v580, %v578
    %v709 = vpack.c.b16 %v583, %v581
    %v710 = vpack.c.b16 %v584, %v582
    %v711 = vpack.c.b16 %v587, %v585
    %v712 = vpack.c.b16 %v588, %v586
    %v713 = vpack.c.b16 %v591, %v589
    %v714 = vpack.c.b16 %v592, %v590
    %v715 = vpack.c.b16 %v595, %v593
    %v716 = vpack.c.b16 %v596, %v594
    %v717 = vpack.c.b16 %v599, %v597
    %v718 = vpack.c.b16 %v600, %v598
    %v719 = vpack.c.b16 %v603, %v601
    %v720 = vpack.c.b16 %v604, %v602
    %v721 = vpack.c.b16 %v607, %v605
    %v722 = vpack.c.b16 %v608, %v606
    %v723 = vpack.c.b16 %v611, %v609
    %v724 = vpack.c.b16 %v612, %v610
    %837 = vmatpush.bf16.msra.mxu0 %v627
    %838 = vmatpush.bf16.msra.mxu0 %v625
    %839 = vmatpush.bf16.msra.mxu0 %v623
    %840 = vmatpush.bf16.msra.mxu0 %v621
    %841 = vmatpush.bf16.msra.mxu0 %v619
    %842 = vmatpush.bf16.msra.mxu0 %v617
    %843 = vmatpush.bf16.msra.mxu0 %v615
    %844 = vmatpush.bf16.msra.mxu0 %v613
    %845 = vmatmul.bf16.gmra.mxu0 %v263
    %v846 = vpop.f32.mrf.mxu0
    %v847 = vadd.f32 %v248, %v846
    %v848 = vpop.f32.mrf.mxu0
    %849 = vdwg.mxu0
    %850 = vmatpush.bf16.msra.mxu0 %v643
    %851 = vmatpush.bf16.msra.mxu0 %v641
    %852 = vmatpush.bf16.msra.mxu0 %v639
    %853 = vmatpush.bf16.msra.mxu0 %v637
    %854 = vmatpush.bf16.msra.mxu0 %v635
    %855 = vmatpush.bf16.msra.mxu0 %v633
    %856 = vmatpush.bf16.msra.mxu0 %v631
    %857 = vmatpush.bf16.msra.mxu0 %v629
    %858 = vmatmul.bf16.gmra.mxu0 %v264
    %v859 = vpop.f32.mrf.mxu0
    %v860 = vadd.f32 %v847, %v859
    %v861 = vpop.f32.mrf.mxu0
    %862 = vdwg.mxu0
    %863 = vmatpush.bf16.msra.mxu0 %v659
    %864 = vmatpush.bf16.msra.mxu0 %v657
    %865 = vmatpush.bf16.msra.mxu0 %v655
    %866 = vmatpush.bf16.msra.mxu0 %v653
    %867 = vmatpush.bf16.msra.mxu0 %v651
    %868 = vmatpush.bf16.msra.mxu0 %v649
    %869 = vmatpush.bf16.msra.mxu0 %v647
    %870 = vmatpush.bf16.msra.mxu0 %v645
    %871 = vmatmul.bf16.gmra.mxu0 %v265
    %v872 = vpop.f32.mrf.mxu0
    %v873 = vadd.f32 %v860, %v872
    %v874 = vpop.f32.mrf.mxu0
    %875 = vdwg.mxu0
    %876 = vmatpush.bf16.msra.mxu0 %v675
    %877 = vmatpush.bf16.msra.mxu0 %v673
    %878 = vmatpush.bf16.msra.mxu0 %v671
    %879 = vmatpush.bf16.msra.mxu0 %v669
    %880 = vmatpush.bf16.msra.mxu0 %v667
    %881 = vmatpush.bf16.msra.mxu0 %v665
    %882 = vmatpush.bf16.msra.mxu0 %v663
    %883 = vmatpush.bf16.msra.mxu0 %v661
    %884 = vmatmul.bf16.gmra.mxu0 %v266
    %v885 = vpop.f32.mrf.mxu0
    %v886 = vadd.f32 %v873, %v885
    %v887 = vpop.f32.mrf.mxu0
    %888 = vdwg.mxu0
    %889 = vmatpush.bf16.msra.mxu0 %v691
    %890 = vmatpush.bf16.msra.mxu0 %v689
    %891 = vmatpush.bf16.msra.mxu0 %v687
    %892 = vmatpush.bf16.msra.mxu0 %v685
    %893 = vmatpush.bf16.msra.mxu0 %v683
    %894 = vmatpush.bf16.msra.mxu0 %v681
    %895 = vmatpush.bf16.msra.mxu0 %v679
    %896 = vmatpush.bf16.msra.mxu0 %v677
    %897 = vmatmul.bf16.gmra.mxu0 %v267
    %v898 = vpop.f32.mrf.mxu0
    %v899 = vadd.f32 %v886, %v898
    %v900 = vpop.f32.mrf.mxu0
    %901 = vdwg.mxu0
    %902 = vmatpush.bf16.msra.mxu0 %v707
    %903 = vmatpush.bf16.msra.mxu0 %v705
    %904 = vmatpush.bf16.msra.mxu0 %v703
    %905 = vmatpush.bf16.msra.mxu0 %v701
    %906 = vmatpush.bf16.msra.mxu0 %v699
    %907 = vmatpush.bf16.msra.mxu0 %v697
    %908 = vmatpush.bf16.msra.mxu0 %v695
    %909 = vmatpush.bf16.msra.mxu0 %v693
    %910 = vmatmul.bf16.gmra.mxu0 %v268
    %v911 = vpop.f32.mrf.mxu0
    %v912 = vadd.f32 %v899, %v911
    %v913 = vpop.f32.mrf.mxu0
    %914 = vdwg.mxu0
    %915 = vmatpush.bf16.msra.mxu0 %v723
    %916 = vmatpush.bf16.msra.mxu0 %v721
    %917 = vmatpush.bf16.msra.mxu0 %v719
    %918 = vmatpush.bf16.msra.mxu0 %v717
    %919 = vmatpush.bf16.msra.mxu0 %v715
    %920 = vmatpush.bf16.msra.mxu0 %v713
    %921 = vmatpush.bf16.msra.mxu0 %v711
    %922 = vmatpush.bf16.msra.mxu0 %v709
    %923 = vmatmul.bf16.gmra.mxu0 %v269
    %v924 = vpop.f32.mrf.mxu0
    %v925 = vadd.f32 %v912, %v924
    %v926 = vpop.f32.mrf.mxu0
    %927 = vdwg.mxu0
    %928 = vmatpush.bf16.msra.mxu0 %v628
    %929 = vmatpush.bf16.msra.mxu0 %v626
    %930 = vmatpush.bf16.msra.mxu0 %v624
    %931 = vmatpush.bf16.msra.mxu0 %v622
    %932 = vmatpush.bf16.msra.mxu0 %v620
    %933 = vmatpush.bf16.msra.mxu0 %v618
    %934 = vmatpush.bf16.msra.mxu0 %v616
    %935 = vmatpush.bf16.msra.mxu0 %v614
    %936 = vmatmul.bf16.gmra.mxu0 %v263
    %v937 = vpop.f32.mrf.mxu0
    %v938 = vadd.f32 %v249, %v937
    %v939 = vpop.f32.mrf.mxu0
    %940 = vdwg.mxu0
    %941 = vmatpush.bf16.msra.mxu0 %v644
    %942 = vmatpush.bf16.msra.mxu0 %v642
    %943 = vmatpush.bf16.msra.mxu0 %v640
    %944 = vmatpush.bf16.msra.mxu0 %v638
    %945 = vmatpush.bf16.msra.mxu0 %v636
    %946 = vmatpush.bf16.msra.mxu0 %v634
    %947 = vmatpush.bf16.msra.mxu0 %v632
    %948 = vmatpush.bf16.msra.mxu0 %v630
    %949 = vmatmul.bf16.gmra.mxu0 %v264
    %v950 = vpop.f32.mrf.mxu0
    %v951 = vadd.f32 %v938, %v950
    %v952 = vpop.f32.mrf.mxu0
    %953 = vdwg.mxu0
    %954 = vmatpush.bf16.msra.mxu0 %v660
    %955 = vmatpush.bf16.msra.mxu0 %v658
    %956 = vmatpush.bf16.msra.mxu0 %v656
    %957 = vmatpush.bf16.msra.mxu0 %v654
    %958 = vmatpush.bf16.msra.mxu0 %v652
    %959 = vmatpush.bf16.msra.mxu0 %v650
    %960 = vmatpush.bf16.msra.mxu0 %v648
    %961 = vmatpush.bf16.msra.mxu0 %v646
    %962 = vmatmul.bf16.gmra.mxu0 %v265
    %v963 = vpop.f32.mrf.mxu0
    %v964 = vadd.f32 %v951, %v963
    %v965 = vpop.f32.mrf.mxu0
    %966 = vdwg.mxu0
    %967 = vmatpush.bf16.msra.mxu0 %v676
    %968 = vmatpush.bf16.msra.mxu0 %v674
    %969 = vmatpush.bf16.msra.mxu0 %v672
    %970 = vmatpush.bf16.msra.mxu0 %v670
    %971 = vmatpush.bf16.msra.mxu0 %v668
    %972 = vmatpush.bf16.msra.mxu0 %v666
    %973 = vmatpush.bf16.msra.mxu0 %v664
    %974 = vmatpush.bf16.msra.mxu0 %v662
    %975 = vmatmul.bf16.gmra.mxu0 %v266
    %v976 = vpop.f32.mrf.mxu0
    %v977 = vadd.f32 %v964, %v976
    %v978 = vpop.f32.mrf.mxu0
    %979 = vdwg.mxu0
    %980 = vmatpush.bf16.msra.mxu0 %v692
    %981 = vmatpush.bf16.msra.mxu0 %v690
    %982 = vmatpush.bf16.msra.mxu0 %v688
    %983 = vmatpush.bf16.msra.mxu0 %v686
    %984 = vmatpush.bf16.msra.mxu0 %v684
    %985 = vmatpush.bf16.msra.mxu0 %v682
    %986 = vmatpush.bf16.msra.mxu0 %v680
    %987 = vmatpush.bf16.msra.mxu0 %v678
    %988 = vmatmul.bf16.gmra.mxu0 %v267
    %v989 = vpop.f32.mrf.mxu0
    %v990 = vadd.f32 %v977, %v989
    %v991 = vpop.f32.mrf.mxu0
    %992 = vdwg.mxu0
    %993 = vmatpush.bf16.msra.mxu0 %v708
    %994 = vmatpush.bf16.msra.mxu0 %v706
    %995 = vmatpush.bf16.msra.mxu0 %v704
    %996 = vmatpush.bf16.msra.mxu0 %v702
    %997 = vmatpush.bf16.msra.mxu0 %v700
    %998 = vmatpush.bf16.msra.mxu0 %v698
    %999 = vmatpush.bf16.msra.mxu0 %v696
    %1000 = vmatpush.bf16.msra.mxu0 %v694
    %1001 = vmatmul.bf16.gmra.mxu0 %v268
    %v1002 = vpop.f32.mrf.mxu0
    %v1003 = vadd.f32 %v990, %v1002
    %v1004 = vpop.f32.mrf.mxu0
    %1005 = vdwg.mxu0
    %1006 = vmatpush.bf16.msra.mxu0 %v724
    %1007 = vmatpush.bf16.msra.mxu0 %v722
    %1008 = vmatpush.bf16.msra.mxu0 %v720
    %1009 = vmatpush.bf16.msra.mxu0 %v718
    %1010 = vmatpush.bf16.msra.mxu0 %v716
    %1011 = vmatpush.bf16.msra.mxu0 %v714
    %1012 = vmatpush.bf16.msra.mxu0 %v712
    %1013 = vmatpush.bf16.msra.mxu0 %v710
    %1014 = vmatmul.bf16.gmra.mxu0 %v269
    %v1015 = vpop.f32.mrf.mxu0
    %v1016 = vadd.f32 %v1003, %v1015
    %v1017 = vpop.f32.mrf.mxu0
    %1018 = vdwg.mxu0
    %v1019 = vld [vmem:[#allocation5] sm:$0xf]
    %v1020 = vld [vmem:[#allocation5 + $0x4] sm:$0xf]
    %v1021 = vld [vmem:[#allocation5 + $0x8] sm:$0xf]
    %v1022 = vld [vmem:[#allocation5 + $0xc] sm:$0xf]
    %v1023 = vld [vmem:[#allocation5 + $0x10] sm:$0xf]
    %v1024 = vld [vmem:[#allocation5 + $0x14] sm:$0xf]
    %v1025 = vld [vmem:[#allocation5 + $0x18] sm:$0xf]
    %v1026 = vld [vmem:[#allocation5 + $0x1c] sm:$0xf]
    %v1027 = vld [vmem:[#allocation5 + $0x20] sm:$0xf]
    %v1028 = vld [vmem:[#allocation5 + $0x24] sm:$0xf]
    %v1029 = vld [vmem:[#allocation5 + $0x28] sm:$0xf]
    %v1030 = vld [vmem:[#allocation5 + $0x2c] sm:$0xf]
    %v1031 = vld [vmem:[#allocation5 + $0x30] sm:$0xf]
    %v1032 = vld [vmem:[#allocation5 + $0x34] sm:$0xf]
    %v1033 = vld [vmem:[#allocation5 + $0x38] sm:$0xf]
    %v1034 = vld [vmem:[#allocation5 + $0x3c] sm:$0xf]
    %v1035 = vld [vmem:[#allocation5 + $0x40] sm:$0xf]
    %v1036 = vld [vmem:[#allocation5 + $0x44] sm:$0xf]
    %v1037 = vld [vmem:[#allocation5 + $0x48] sm:$0xf]
    %v1038 = vld [vmem:[#allocation5 + $0x4c] sm:$0xf]
    %v1039 = vld [vmem:[#allocation5 + $0x50] sm:$0xf]
    %v1040 = vld [vmem:[#allocation5 + $0x54] sm:$0xf]
    %v1041 = vld [vmem:[#allocation5 + $0x58] sm:$0xf]
    %v1042 = vld [vmem:[#allocation5 + $0x5c] sm:$0xf]
    %v1043 = vld [vmem:[#allocation5 + $0x60] sm:$0xf]
    %v1044 = vld [vmem:[#allocation5 + $0x64] sm:$0xf]
    %v1045 = vld [vmem:[#allocation5 + $0x68] sm:$0xf]
    %v1046 = vld [vmem:[#allocation5 + $0x6c] sm:$0xf]
    %v1047 = vld [vmem:[#allocation5 + $0x70] sm:$0xf]
    %v1048 = vld [vmem:[#allocation5 + $0x74] sm:$0xf]
    %v1049 = vld [vmem:[#allocation5 + $0x78] sm:$0xf]
    %v1050 = vld [vmem:[#allocation5 + $0x7c] sm:$0xf]
    %v1051 = vld [vmem:[#allocation10] sm:$0x1]
    %v1052 = vpack.c.bf16 %v925, %v925
    %v1053 = vpack.c.bf16 %v1016, %v1016
    %v1054 = vperm.slane %v1051, 0
    %v1087 = vunpack.c.l.b16 %v1019
    %v1088 = vunpack.c.l.b16 %v1020
    %v1089 = vunpack.c.l.b16 %v1021
    %v1090 = vunpack.c.l.b16 %v1022
    %v1091 = vunpack.c.l.b16 %v1023
    %v1092 = vunpack.c.l.b16 %v1024
    %v1093 = vunpack.c.l.b16 %v1025
    %v1094 = vunpack.c.l.b16 %v1026
    %v1095 = vunpack.c.l.b16 %v1027
    %v1096 = vunpack.c.l.b16 %v1028
    %v1097 = vunpack.c.l.b16 %v1029
    %v1098 = vunpack.c.l.b16 %v1030
    %v1099 = vunpack.c.l.b16 %v1031
    %v1100 = vunpack.c.l.b16 %v1032
    %v1101 = vunpack.c.l.b16 %v1033
    %v1102 = vunpack.c.l.b16 %v1034
    %v1103 = vunpack.c.l.b16 %v1035
    %v1104 = vunpack.c.l.b16 %v1036
    %v1105 = vunpack.c.l.b16 %v1037
    %v1106 = vunpack.c.l.b16 %v1038
    %v1107 = vunpack.c.l.b16 %v1039
    %v1108 = vunpack.c.l.b16 %v1040
    %v1109 = vunpack.c.l.b16 %v1041
    %v1110 = vunpack.c.l.b16 %v1042
    %v1111 = vunpack.c.l.b16 %v1043
    %v1112 = vunpack.c.l.b16 %v1044
    %v1113 = vunpack.c.l.b16 %v1045
    %v1114 = vunpack.c.l.b16 %v1046
    %v1115 = vunpack.c.l.b16 %v1047
    %v1116 = vunpack.c.l.b16 %v1048
    %v1117 = vunpack.c.l.b16 %v1049
    %v1118 = vunpack.c.l.b16 %v1050
    %v1119 = vpack.c.b16 %v1088, %v1087
    %v1120 = vpack.c.b16 %v1090, %v1089
    %v1121 = vpack.c.b16 %v1092, %v1091
    %v1122 = vpack.c.b16 %v1094, %v1093
    %v1123 = vpack.c.b16 %v1096, %v1095
    %v1124 = vpack.c.b16 %v1098, %v1097
    %v1125 = vpack.c.b16 %v1100, %v1099
    %v1126 = vpack.c.b16 %v1102, %v1101
    %v1127 = vpack.c.b16 %v1104, %v1103
    %v1128 = vpack.c.b16 %v1106, %v1105
    %v1129 = vpack.c.b16 %v1108, %v1107
    %v1130 = vpack.c.b16 %v1110, %v1109
    %v1131 = vpack.c.b16 %v1112, %v1111
    %v1132 = vpack.c.b16 %v1114, %v1113
    %v1133 = vpack.c.b16 %v1116, %v1115
    %v1134 = vpack.c.b16 %v1118, %v1117
    %1151 = vmatpush.bf16.msra.mxu0 %v1126
    %1152 = vmatpush.bf16.msra.mxu0 %v1125
    %1153 = vmatpush.bf16.msra.mxu0 %v1124
    %1154 = vmatpush.bf16.msra.mxu0 %v1123
    %1155 = vmatpush.bf16.msra.mxu0 %v1122
    %1156 = vmatpush.bf16.msra.mxu0 %v1121
    %1157 = vmatpush.bf16.msra.mxu0 %v1120
    %1158 = vmatpush.bf16.msra.mxu0 %v1119
    %1159 = vmatmul.bf16.gmra.mxu0 %v1052
    %v1160 = vpop.f32.mrf.mxu0
    %v1161 = vadd.f32 %v1054, %v1160
    %v1162 = vpop.f32.mrf.mxu0
    %1163 = vdwg.mxu0
    %1164 = vmatpush.bf16.msra.mxu0 %v1134
    %1165 = vmatpush.bf16.msra.mxu0 %v1133
    %1166 = vmatpush.bf16.msra.mxu0 %v1132
    %1167 = vmatpush.bf16.msra.mxu0 %v1131
    %1168 = vmatpush.bf16.msra.mxu0 %v1130
    %1169 = vmatpush.bf16.msra.mxu0 %v1129
    %1170 = vmatpush.bf16.msra.mxu0 %v1128
    %1171 = vmatpush.bf16.msra.mxu0 %v1127
    %1172 = vmatmul.bf16.gmra.mxu0 %v1053
    %v1173 = vpop.f32.mrf.mxu0
    %v1174 = vadd.f32 %v1161, %v1173
    %v1175 = vpop.f32.mrf.mxu0
    %1176 = vdwg.mxu0
    %v1177 = vld [vmem:[#allocation5 + $0x80] sm:$0xf]
    %v1178 = vld [vmem:[#allocation5 + $0x84] sm:$0xf]
    %v1179 = vld [vmem:[#allocation5 + $0x88] sm:$0xf]
    %v1180 = vld [vmem:[#allocation5 + $0x8c] sm:$0xf]
    %v1181 = vld [vmem:[#allocation5 + $0x90] sm:$0xf]
    %v1182 = vld [vmem:[#allocation5 + $0x94] sm:$0xf]
    %v1183 = vld [vmem:[#allocation5 + $0x98] sm:$0xf]
    %v1184 = vld [vmem:[#allocation5 + $0x9c] sm:$0xf]
    %v1185 = vld [vmem:[#allocation5 + $0xa0] sm:$0xf]
    %v1186 = vld [vmem:[#allocation5 + $0xa4] sm:$0xf]
    %v1187 = vld [vmem:[#allocation5 + $0xa8] sm:$0xf]
    %v1188 = vld [vmem:[#allocation5 + $0xac] sm:$0xf]
    %v1189 = vld [vmem:[#allocation5 + $0xb0] sm:$0xf]
    %v1190 = vld [vmem:[#allocation5 + $0xb4] sm:$0xf]
    %v1191 = vld [vmem:[#allocation5 + $0xb8] sm:$0xf]
    %v1192 = vld [vmem:[#allocation5 + $0xbc] sm:$0xf]
    %v1193 = vld [vmem:[#allocation10 + $0x1] sm:$0x1]
    %v1194 = vpack.c.bf16 %v1174, %v1174
    %v1195 = vperm.slane %v1193, 0
    %v1212 = vunpack.c.l.b16 %v1177
    %v1213 = vunpack.c.l.b16 %v1178
    %v1214 = vunpack.c.l.b16 %v1179
    %v1215 = vunpack.c.l.b16 %v1180
    %v1216 = vunpack.c.l.b16 %v1181
    %v1217 = vunpack.c.l.b16 %v1182
    %v1218 = vunpack.c.l.b16 %v1183
    %v1219 = vunpack.c.l.b16 %v1184
    %v1220 = vunpack.c.l.b16 %v1185
    %v1221 = vunpack.c.l.b16 %v1186
    %v1222 = vunpack.c.l.b16 %v1187
    %v1223 = vunpack.c.l.b16 %v1188
    %v1224 = vunpack.c.l.b16 %v1189
    %v1225 = vunpack.c.l.b16 %v1190
    %v1226 = vunpack.c.l.b16 %v1191
    %v1227 = vunpack.c.l.b16 %v1192
    %v1228 = vpack.c.b16 %v1213, %v1212
    %v1229 = vpack.c.b16 %v1215, %v1214
    %v1230 = vpack.c.b16 %v1217, %v1216
    %v1231 = vpack.c.b16 %v1219, %v1218
    %v1232 = vpack.c.b16 %v1221, %v1220
    %v1233 = vpack.c.b16 %v1223, %v1222
    %v1234 = vpack.c.b16 %v1225, %v1224
    %v1235 = vpack.c.b16 %v1227, %v1226
    %1244 = vmatpush.bf16.msra.mxu0 %v1235
    %1245 = vmatpush.bf16.msra.mxu0 %v1234
    %1246 = vmatpush.bf16.msra.mxu0 %v1233
    %1247 = vmatpush.bf16.msra.mxu0 %v1232
    %1248 = vmatpush.bf16.msra.mxu0 %v1231
    %1249 = vmatpush.bf16.msra.mxu0 %v1230
    %1250 = vmatpush.bf16.msra.mxu0 %v1229
    %1251 = vmatpush.bf16.msra.mxu0 %v1228
    %1252 = vmatmul.bf16.gmra.mxu0 %v1194
    %v1253 = vpop.f32.mrf.mxu0
    %v1254 = vadd.f32 %v1195, %v1253
    %v1255 = vpop.f32.mrf.mxu0
    %1256 = vdwg.mxu0
    %v1257 = vld [vmem:[#allocation5 + $0xc0] sm:$0xf]
    %v1258 = vld [vmem:[#allocation5 + $0xc4] sm:$0xf]
    %v1259 = vld [vmem:[#allocation5 + $0xc8] sm:$0xf]
    %v1260 = vld [vmem:[#allocation5 + $0xcc] sm:$0xf]
    %v1261 = vld [vmem:[#allocation5 + $0xd0] sm:$0xf]
    %v1262 = vld [vmem:[#allocation5 + $0xd4] sm:$0xf]
    %v1263 = vld [vmem:[#allocation5 + $0xd8] sm:$0xf]
    %v1264 = vld [vmem:[#allocation5 + $0xdc] sm:$0xf]
    %v1265 = vld [vmem:[#allocation5 + $0xe0] sm:$0xf]
    %v1266 = vld [vmem:[#allocation5 + $0xe4] sm:$0xf]
    %v1267 = vld [vmem:[#allocation5 + $0xe8] sm:$0xf]
    %v1268 = vld [vmem:[#allocation5 + $0xec] sm:$0xf]
    %v1269 = vld [vmem:[#allocation5 + $0xf0] sm:$0xf]
    %v1270 = vld [vmem:[#allocation5 + $0xf4] sm:$0xf]
    %v1271 = vld [vmem:[#allocation5 + $0xf8] sm:$0xf]
    %v1272 = vld [vmem:[#allocation5 + $0xfc] sm:$0xf]
    %v1273 = vld [vmem:[#allocation10 + $0x2] sm:$0x1]
    %v1274 = vpack.c.bf16 %v1254, %v1254
    %v1275 = vperm.slane %v1273, 0
    %v1292 = vunpack.c.l.b16 %v1257
    %v1293 = vunpack.c.l.b16 %v1258
    %v1294 = vunpack.c.l.b16 %v1259
    %v1295 = vunpack.c.l.b16 %v1260
    %v1296 = vunpack.c.l.b16 %v1261
    %v1297 = vunpack.c.l.b16 %v1262
    %v1298 = vunpack.c.l.b16 %v1263
    %v1299 = vunpack.c.l.b16 %v1264
    %v1300 = vunpack.c.l.b16 %v1265
    %v1301 = vunpack.c.l.b16 %v1266
    %v1302 = vunpack.c.l.b16 %v1267
    %v1303 = vunpack.c.l.b16 %v1268
    %v1304 = vunpack.c.l.b16 %v1269
    %v1305 = vunpack.c.l.b16 %v1270
    %v1306 = vunpack.c.l.b16 %v1271
    %v1307 = vunpack.c.l.b16 %v1272
    %v1308 = vpack.c.b16 %v1293, %v1292
    %v1309 = vpack.c.b16 %v1295, %v1294
    %v1310 = vpack.c.b16 %v1297, %v1296
    %v1311 = vpack.c.b16 %v1299, %v1298
    %v1312 = vpack.c.b16 %v1301, %v1300
    %v1313 = vpack.c.b16 %v1303, %v1302
    %v1314 = vpack.c.b16 %v1305, %v1304
    %v1315 = vpack.c.b16 %v1307, %v1306
    %1324 = vmatpush.bf16.msra.mxu0 %v1315
    %1325 = vmatpush.bf16.msra.mxu0 %v1314
    %1326 = vmatpush.bf16.msra.mxu0 %v1313
    %1327 = vmatpush.bf16.msra.mxu0 %v1312
    %1328 = vmatpush.bf16.msra.mxu0 %v1311
    %1329 = vmatpush.bf16.msra.mxu0 %v1310
    %1330 = vmatpush.bf16.msra.mxu0 %v1309
    %1331 = vmatpush.bf16.msra.mxu0 %v1308
    %1332 = vmatmul.bf16.gmra.mxu0 %v1274
    %v1333 = vpop.f32.mrf.mxu0
    %v1334 = vadd.f32 %v1275, %v1333
    %v1335 = vpop.f32.mrf.mxu0
    %1336 = vdwg.mxu0
    %v1337 = vld [vmem:[#allocation7 + $0x380] sm:$0xff]
    %v1338 = vld [vmem:[#allocation7 + $0x388] sm:$0xff]
    %v1339 = vld [vmem:[#allocation7 + $0x390] sm:$0xff]
    %v1340 = vld [vmem:[#allocation7 + $0x398] sm:$0xff]
    %v1341 = vld [vmem:[#allocation7 + $0x3a0] sm:$0xff]
    %v1342 = vld [vmem:[#allocation7 + $0x3a8] sm:$0xff]
    %v1343 = vld [vmem:[#allocation7 + $0x3b0] sm:$0xff]
    %v1344 = vld [vmem:[#allocation7 + $0x3b8] sm:$0xff]
    %v1345 = vld [vmem:[#allocation7 + $0x3c0] sm:$0xff]
    %v1346 = vld [vmem:[#allocation7 + $0x3c8] sm:$0xff]
    %v1347 = vld [vmem:[#allocation7 + $0x3d0] sm:$0xff]
    %v1348 = vld [vmem:[#allocation7 + $0x3d8] sm:$0xff]
    %v1349 = vld [vmem:[#allocation7 + $0x3e0] sm:$0xff]
    %v1350 = vld [vmem:[#allocation7 + $0x3e8] sm:$0xff]
    %v1351 = vld [vmem:[#allocation7 + $0x3f0] sm:$0xff]
    %v1352 = vld [vmem:[#allocation7 + $0x3f8] sm:$0xff]
    %s1353 = scalar_lea.vmem [#allocation11], 1
    %v1354 = vld [vmem:[%s1353] ss:$8 sm:$0x3]
    %v1355 = vpack.c.bf16 %v1334, %v1334
    %v1357 = vperm.slane %v1354, 0
    %v1358 = vperm.slane %v1354, 1
    %v1377 = vunpack.c.l.b16 %v1337
    %v1378 = vunpack.c.h.b16 %v1337
    %v1379 = vunpack.c.l.b16 %v1338
    %v1380 = vunpack.c.h.b16 %v1338
    %v1381 = vunpack.c.l.b16 %v1339
    %v1382 = vunpack.c.h.b16 %v1339
    %v1383 = vunpack.c.l.b16 %v1340
    %v1384 = vunpack.c.h.b16 %v1340
    %v1385 = vunpack.c.l.b16 %v1341
    %v1386 = vunpack.c.h.b16 %v1341
    %v1387 = vunpack.c.l.b16 %v1342
    %v1388 = vunpack.c.h.b16 %v1342
    %v1389 = vunpack.c.l.b16 %v1343
    %v1390 = vunpack.c.h.b16 %v1343
    %v1391 = vunpack.c.l.b16 %v1344
    %v1392 = vunpack.c.h.b16 %v1344
    %v1393 = vunpack.c.l.b16 %v1345
    %v1394 = vunpack.c.h.b16 %v1345
    %v1395 = vunpack.c.l.b16 %v1346
    %v1396 = vunpack.c.h.b16 %v1346
    %v1397 = vunpack.c.l.b16 %v1347
    %v1398 = vunpack.c.h.b16 %v1347
    %v1399 = vunpack.c.l.b16 %v1348
    %v1400 = vunpack.c.h.b16 %v1348
    %v1401 = vunpack.c.l.b16 %v1349
    %v1402 = vunpack.c.h.b16 %v1349
    %v1403 = vunpack.c.l.b16 %v1350
    %v1404 = vunpack.c.h.b16 %v1350
    %v1405 = vunpack.c.l.b16 %v1351
    %v1406 = vunpack.c.h.b16 %v1351
    %v1407 = vunpack.c.l.b16 %v1352
    %v1408 = vunpack.c.h.b16 %v1352
    %v1409 = vpack.c.b16 %v1379, %v1377
    %v1410 = vpack.c.b16 %v1380, %v1378
    %v1411 = vpack.c.b16 %v1383, %v1381
    %v1412 = vpack.c.b16 %v1384, %v1382
    %v1413 = vpack.c.b16 %v1387, %v1385
    %v1414 = vpack.c.b16 %v1388, %v1386
    %v1415 = vpack.c.b16 %v1391, %v1389
    %v1416 = vpack.c.b16 %v1392, %v1390
    %v1417 = vpack.c.b16 %v1395, %v1393
    %v1418 = vpack.c.b16 %v1396, %v1394
    %v1419 = vpack.c.b16 %v1399, %v1397
    %v1420 = vpack.c.b16 %v1400, %v1398
    %v1421 = vpack.c.b16 %v1403, %v1401
    %v1422 = vpack.c.b16 %v1404, %v1402
    %v1423 = vpack.c.b16 %v1407, %v1405
    %v1424 = vpack.c.b16 %v1408, %v1406
    %1441 = vmatpush.bf16.msra.mxu0 %v1423
    %1442 = vmatpush.bf16.msra.mxu0 %v1421
    %1443 = vmatpush.bf16.msra.mxu0 %v1419
    %1444 = vmatpush.bf16.msra.mxu0 %v1417
    %1445 = vmatpush.bf16.msra.mxu0 %v1415
    %1446 = vmatpush.bf16.msra.mxu0 %v1413
    %1447 = vmatpush.bf16.msra.mxu0 %v1411
    %1448 = vmatpush.bf16.msra.mxu0 %v1409
    %1449 = vmatmul.bf16.gmra.mxu0 %v1355
    %v1450 = vpop.f32.mrf.mxu0
    %v1451 = vadd.f32 %v1357, %v1450
    %v1452 = vpop.f32.mrf.mxu0
    %1453 = vdwg.mxu0
    %1454 = vmatpush.bf16.msra.mxu0 %v1424
    %1455 = vmatpush.bf16.msra.mxu0 %v1422
    %1456 = vmatpush.bf16.msra.mxu0 %v1420
    %1457 = vmatpush.bf16.msra.mxu0 %v1418
    %1458 = vmatpush.bf16.msra.mxu0 %v1416
    %1459 = vmatpush.bf16.msra.mxu0 %v1414
    %1460 = vmatpush.bf16.msra.mxu0 %v1412
    %1461 = vmatpush.bf16.msra.mxu0 %v1410
    %1462 = vmatmul.bf16.gmra.mxu0 %v1355
    %v1463 = vpop.f32.mrf.mxu0
    %v1464 = vadd.f32 %v1358, %v1463
    %v1465 = vpop.f32.mrf.mxu0
    %1466 = vdwg.mxu0
    %v1467 = vadd.f32 %v925, %v1451
    %v1468 = vadd.f32 %v1016, %v1464
    %v1469 = vld [vmem:[#allocation7 + $0x400] sm:$0xff]
    %v1470 = vld [vmem:[#allocation7 + $0x408] sm:$0xff]
    %v1471 = vld [vmem:[#allocation7 + $0x410] sm:$0xff]
    %v1472 = vld [vmem:[#allocation7 + $0x418] sm:$0xff]
    %v1473 = vld [vmem:[#allocation7 + $0x420] sm:$0xff]
    %v1474 = vld [vmem:[#allocation7 + $0x428] sm:$0xff]
    %v1475 = vld [vmem:[#allocation7 + $0x430] sm:$0xff]
    %v1476 = vld [vmem:[#allocation7 + $0x438] sm:$0xff]
    %v1477 = vld [vmem:[#allocation7 + $0x440] sm:$0xff]
    %v1478 = vld [vmem:[#allocation7 + $0x448] sm:$0xff]
    %v1479 = vld [vmem:[#allocation7 + $0x450] sm:$0xff]
    %v1480 = vld [vmem:[#allocation7 + $0x458] sm:$0xff]
    %v1481 = vld [vmem:[#allocation7 + $0x460] sm:$0xff]
    %v1482 = vld [vmem:[#allocation7 + $0x468] sm:$0xff]
    %v1483 = vld [vmem:[#allocation7 + $0x470] sm:$0xff]
    %v1484 = vld [vmem:[#allocation7 + $0x478] sm:$0xff]
    %v1485 = vld [vmem:[#allocation7 + $0x480] sm:$0xff]
    %v1486 = vld [vmem:[#allocation7 + $0x488] sm:$0xff]
    %v1487 = vld [vmem:[#allocation7 + $0x490] sm:$0xff]
    %v1488 = vld [vmem:[#allocation7 + $0x498] sm:$0xff]
    %v1489 = vld [vmem:[#allocation7 + $0x4a0] sm:$0xff]
    %v1490 = vld [vmem:[#allocation7 + $0x4a8] sm:$0xff]
    %v1491 = vld [vmem:[#allocation7 + $0x4b0] sm:$0xff]
    %v1492 = vld [vmem:[#allocation7 + $0x4b8] sm:$0xff]
    %v1493 = vld [vmem:[#allocation7 + $0x4c0] sm:$0xff]
    %v1494 = vld [vmem:[#allocation7 + $0x4c8] sm:$0xff]
    %v1495 = vld [vmem:[#allocation7 + $0x4d0] sm:$0xff]
    %v1496 = vld [vmem:[#allocation7 + $0x4d8] sm:$0xff]
    %v1497 = vld [vmem:[#allocation7 + $0x4e0] sm:$0xff]
    %v1498 = vld [vmem:[#allocation7 + $0x4e8] sm:$0xff]
    %v1499 = vld [vmem:[#allocation7 + $0x4f0] sm:$0xff]
    %v1500 = vld [vmem:[#allocation7 + $0x4f8] sm:$0xff]
    %s1501 = scalar_lea.vmem [#allocation11], 2
    %v1502 = vld [vmem:[%s1501] ss:$8 sm:$0x3]
    %v1503 = vpack.c.bf16 %v1467, %v1467
    %v1504 = vpack.c.bf16 %v1468, %v1468
    %v1506 = vperm.slane %v1502, 0
    %v1507 = vperm.slane %v1502, 1
    %v1542 = vunpack.c.l.b16 %v1469
    %v1543 = vunpack.c.h.b16 %v1469
    %v1544 = vunpack.c.l.b16 %v1470
    %v1545 = vunpack.c.h.b16 %v1470
    %v1546 = vunpack.c.l.b16 %v1471
    %v1547 = vunpack.c.h.b16 %v1471
    %v1548 = vunpack.c.l.b16 %v1472
    %v1549 = vunpack.c.h.b16 %v1472
    %v1550 = vunpack.c.l.b16 %v1473
    %v1551 = vunpack.c.h.b16 %v1473
    %v1552 = vunpack.c.l.b16 %v1474
    %v1553 = vunpack.c.h.b16 %v1474
    %v1554 = vunpack.c.l.b16 %v1475
    %v1555 = vunpack.c.h.b16 %v1475
    %v1556 = vunpack.c.l.b16 %v1476
    %v1557 = vunpack.c.h.b16 %v1476
    %v1558 = vunpack.c.l.b16 %v1477
    %v1559 = vunpack.c.h.b16 %v1477
    %v1560 = vunpack.c.l.b16 %v1478
    %v1561 = vunpack.c.h.b16 %v1478
    %v1562 = vunpack.c.l.b16 %v1479
    %v1563 = vunpack.c.h.b16 %v1479
    %v1564 = vunpack.c.l.b16 %v1480
    %v1565 = vunpack.c.h.b16 %v1480
    %v1566 = vunpack.c.l.b16 %v1481
    %v1567 = vunpack.c.h.b16 %v1481
    %v1568 = vunpack.c.l.b16 %v1482
    %v1569 = vunpack.c.h.b16 %v1482
    %v1570 = vunpack.c.l.b16 %v1483
    %v1571 = vunpack.c.h.b16 %v1483
    %v1572 = vunpack.c.l.b16 %v1484
    %v1573 = vunpack.c.h.b16 %v1484
    %v1574 = vunpack.c.l.b16 %v1485
    %v1575 = vunpack.c.h.b16 %v1485
    %v1576 = vunpack.c.l.b16 %v1486
    %v1577 = vunpack.c.h.b16 %v1486
    %v1578 = vunpack.c.l.b16 %v1487
    %v1579 = vunpack.c.h.b16 %v1487
    %v1580 = vunpack.c.l.b16 %v1488
    %v1581 = vunpack.c.h.b16 %v1488
    %v1582 = vunpack.c.l.b16 %v1489
    %v1583 = vunpack.c.h.b16 %v1489
    %v1584 = vunpack.c.l.b16 %v1490
    %v1585 = vunpack.c.h.b16 %v1490
    %v1586 = vunpack.c.l.b16 %v1491
    %v1587 = vunpack.c.h.b16 %v1491
    %v1588 = vunpack.c.l.b16 %v1492
    %v1589 = vunpack.c.h.b16 %v1492
    %v1590 = vunpack.c.l.b16 %v1493
    %v1591 = vunpack.c.h.b16 %v1493
    %v1592 = vunpack.c.l.b16 %v1494
    %v1593 = vunpack.c.h.b16 %v1494
    %v1594 = vunpack.c.l.b16 %v1495
    %v1595 = vunpack.c.h.b16 %v1495
    %v1596 = vunpack.c.l.b16 %v1496
    %v1597 = vunpack.c.h.b16 %v1496
    %v1598 = vunpack.c.l.b16 %v1497
    %v1599 = vunpack.c.h.b16 %v1497
    %v1600 = vunpack.c.l.b16 %v1498
    %v1601 = vunpack.c.h.b16 %v1498
    %v1602 = vunpack.c.l.b16 %v1499
    %v1603 = vunpack.c.h.b16 %v1499
    %v1604 = vunpack.c.l.b16 %v1500
    %v1605 = vunpack.c.h.b16 %v1500
    %v1606 = vpack.c.b16 %v1544, %v1542
    %v1607 = vpack.c.b16 %v1545, %v1543
    %v1608 = vpack.c.b16 %v1548, %v1546
    %v1609 = vpack.c.b16 %v1549, %v1547
    %v1610 = vpack.c.b16 %v1552, %v1550
    %v1611 = vpack.c.b16 %v1553, %v1551
    %v1612 = vpack.c.b16 %v1556, %v1554
    %v1613 = vpack.c.b16 %v1557, %v1555
    %v1614 = vpack.c.b16 %v1560, %v1558
    %v1615 = vpack.c.b16 %v1561, %v1559
    %v1616 = vpack.c.b16 %v1564, %v1562
    %v1617 = vpack.c.b16 %v1565, %v1563
    %v1618 = vpack.c.b16 %v1568, %v1566
    %v1619 = vpack.c.b16 %v1569, %v1567
    %v1620 = vpack.c.b16 %v1572, %v1570
    %v1621 = vpack.c.b16 %v1573, %v1571
    %v1622 = vpack.c.b16 %v1576, %v1574
    %v1623 = vpack.c.b16 %v1577, %v1575
    %v1624 = vpack.c.b16 %v1580, %v1578
    %v1625 = vpack.c.b16 %v1581, %v1579
    %v1626 = vpack.c.b16 %v1584, %v1582
    %v1627 = vpack.c.b16 %v1585, %v1583
    %v1628 = vpack.c.b16 %v1588, %v1586
    %v1629 = vpack.c.b16 %v1589, %v1587
    %v1630 = vpack.c.b16 %v1592, %v1590
    %v1631 = vpack.c.b16 %v1593, %v1591
    %v1632 = vpack.c.b16 %v1596, %v1594
    %v1633 = vpack.c.b16 %v1597, %v1595
    %v1634 = vpack.c.b16 %v1600, %v1598
    %v1635 = vpack.c.b16 %v1601, %v1599
    %v1636 = vpack.c.b16 %v1604, %v1602
    %v1637 = vpack.c.b16 %v1605, %v1603
    %1670 = vmatpush.bf16.msra.mxu0 %v1620
    %1671 = vmatpush.bf16.msra.mxu0 %v1618
    %1672 = vmatpush.bf16.msra.mxu0 %v1616
    %1673 = vmatpush.bf16.msra.mxu0 %v1614
    %1674 = vmatpush.bf16.msra.mxu0 %v1612
    %1675 = vmatpush.bf16.msra.mxu0 %v1610
    %1676 = vmatpush.bf16.msra.mxu0 %v1608
    %1677 = vmatpush.bf16.msra.mxu0 %v1606
    %1678 = vmatmul.bf16.gmra.mxu0 %v1503
    %v1679 = vpop.f32.mrf.mxu0
    %v1680 = vadd.f32 %v1506, %v1679
    %v1681 = vpop.f32.mrf.mxu0
    %1682 = vdwg.mxu0
    %1683 = vmatpush.bf16.msra.mxu0 %v1636
    %1684 = vmatpush.bf16.msra.mxu0 %v1634
    %1685 = vmatpush.bf16.msra.mxu0 %v1632
    %1686 = vmatpush.bf16.msra.mxu0 %v1630
    %1687 = vmatpush.bf16.msra.mxu0 %v1628
    %1688 = vmatpush.bf16.msra.mxu0 %v1626
    %1689 = vmatpush.bf16.msra.mxu0 %v1624
    %1690 = vmatpush.bf16.msra.mxu0 %v1622
    %1691 = vmatmul.bf16.gmra.mxu0 %v1504
    %v1692 = vpop.f32.mrf.mxu0
    %v1693 = vadd.f32 %v1680, %v1692
    %v1694 = vpop.f32.mrf.mxu0
    %1695 = vdwg.mxu0
    %1696 = vmatpush.bf16.msra.mxu0 %v1621
    %1697 = vmatpush.bf16.msra.mxu0 %v1619
    %1698 = vmatpush.bf16.msra.mxu0 %v1617
    %1699 = vmatpush.bf16.msra.mxu0 %v1615
    %1700 = vmatpush.bf16.msra.mxu0 %v1613
    %1701 = vmatpush.bf16.msra.mxu0 %v1611
    %1702 = vmatpush.bf16.msra.mxu0 %v1609
    %1703 = vmatpush.bf16.msra.mxu0 %v1607
    %1704 = vmatmul.bf16.gmra.mxu0 %v1503
    %v1705 = vpop.f32.mrf.mxu0
    %v1706 = vadd.f32 %v1507, %v1705
    %v1707 = vpop.f32.mrf.mxu0
    %1708 = vdwg.mxu0
    %1709 = vmatpush.bf16.msra.mxu0 %v1637
    %1710 = vmatpush.bf16.msra.mxu0 %v1635
    %1711 = vmatpush.bf16.msra.mxu0 %v1633
    %1712 = vmatpush.bf16.msra.mxu0 %v1631
    %1713 = vmatpush.bf16.msra.mxu0 %v1629
    %1714 = vmatpush.bf16.msra.mxu0 %v1627
    %1715 = vmatpush.bf16.msra.mxu0 %v1625
    %1716 = vmatpush.bf16.msra.mxu0 %v1623
    %1717 = vmatmul.bf16.gmra.mxu0 %v1504
    %v1718 = vpop.f32.mrf.mxu0
    %v1719 = vadd.f32 %v1706, %v1718
    %v1720 = vpop.f32.mrf.mxu0
    %1721 = vdwg.mxu0
    %v1722 = vld [vmem:[#allocation7 + $0x500] sm:$0xff]
    %v1723 = vld [vmem:[#allocation7 + $0x508] sm:$0xff]
    %v1724 = vld [vmem:[#allocation7 + $0x510] sm:$0xff]
    %v1725 = vld [vmem:[#allocation7 + $0x518] sm:$0xff]
    %v1726 = vld [vmem:[#allocation7 + $0x520] sm:$0xff]
    %v1727 = vld [vmem:[#allocation7 + $0x528] sm:$0xff]
    %v1728 = vld [vmem:[#allocation7 + $0x530] sm:$0xff]
    %v1729 = vld [vmem:[#allocation7 + $0x538] sm:$0xff]
    %v1730 = vld [vmem:[#allocation7 + $0x540] sm:$0xff]
    %v1731 = vld [vmem:[#allocation7 + $0x548] sm:$0xff]
    %v1732 = vld [vmem:[#allocation7 + $0x550] sm:$0xff]
    %v1733 = vld [vmem:[#allocation7 + $0x558] sm:$0xff]
    %v1734 = vld [vmem:[#allocation7 + $0x560] sm:$0xff]
    %v1735 = vld [vmem:[#allocation7 + $0x568] sm:$0xff]
    %v1736 = vld [vmem:[#allocation7 + $0x570] sm:$0xff]
    %v1737 = vld [vmem:[#allocation7 + $0x578] sm:$0xff]
    %v1738 = vld [vmem:[#allocation7 + $0x580] sm:$0xff]
    %v1739 = vld [vmem:[#allocation7 + $0x588] sm:$0xff]
    %v1740 = vld [vmem:[#allocation7 + $0x590] sm:$0xff]
    %v1741 = vld [vmem:[#allocation7 + $0x598] sm:$0xff]
    %v1742 = vld [vmem:[#allocation7 + $0x5a0] sm:$0xff]
    %v1743 = vld [vmem:[#allocation7 + $0x5a8] sm:$0xff]
    %v1744 = vld [vmem:[#allocation7 + $0x5b0] sm:$0xff]
    %v1745 = vld [vmem:[#allocation7 + $0x5b8] sm:$0xff]
    %v1746 = vld [vmem:[#allocation7 + $0x5c0] sm:$0xff]
    %v1747 = vld [vmem:[#allocation7 + $0x5c8] sm:$0xff]
    %v1748 = vld [vmem:[#allocation7 + $0x5d0] sm:$0xff]
    %v1749 = vld [vmem:[#allocation7 + $0x5d8] sm:$0xff]
    %v1750 = vld [vmem:[#allocation7 + $0x5e0] sm:$0xff]
    %v1751 = vld [vmem:[#allocation7 + $0x5e8] sm:$0xff]
    %v1752 = vld [vmem:[#allocation7 + $0x5f0] sm:$0xff]
    %v1753 = vld [vmem:[#allocation7 + $0x5f8] sm:$0xff]
    %s1754 = scalar_lea.vmem [#allocation11], 3
    %v1755 = vld [vmem:[%s1754] ss:$8 sm:$0x3]
    %v1756 = vpack.c.bf16 %v1693, %v1693
    %v1757 = vpack.c.bf16 %v1719, %v1719
    %v1759 = vperm.slane %v1755, 0
    %v1760 = vperm.slane %v1755, 1
    %v1795 = vunpack.c.l.b16 %v1722
    %v1796 = vunpack.c.h.b16 %v1722
    %v1797 = vunpack.c.l.b16 %v1723
    %v1798 = vunpack.c.h.b16 %v1723
    %v1799 = vunpack.c.l.b16 %v1724
    %v1800 = vunpack.c.h.b16 %v1724
    %v1801 = vunpack.c.l.b16 %v1725
    %v1802 = vunpack.c.h.b16 %v1725
    %v1803 = vunpack.c.l.b16 %v1726
    %v1804 = vunpack.c.h.b16 %v1726
    %v1805 = vunpack.c.l.b16 %v1727
    %v1806 = vunpack.c.h.b16 %v1727
    %v1807 = vunpack.c.l.b16 %v1728
    %v1808 = vunpack.c.h.b16 %v1728
    %v1809 = vunpack.c.l.b16 %v1729
    %v1810 = vunpack.c.h.b16 %v1729
    %v1811 = vunpack.c.l.b16 %v1730
    %v1812 = vunpack.c.h.b16 %v1730
    %v1813 = vunpack.c.l.b16 %v1731
    %v1814 = vunpack.c.h.b16 %v1731
    %v1815 = vunpack.c.l.b16 %v1732
    %v1816 = vunpack.c.h.b16 %v1732
    %v1817 = vunpack.c.l.b16 %v1733
    %v1818 = vunpack.c.h.b16 %v1733
    %v1819 = vunpack.c.l.b16 %v1734
    %v1820 = vunpack.c.h.b16 %v1734
    %v1821 = vunpack.c.l.b16 %v1735
    %v1822 = vunpack.c.h.b16 %v1735
    %v1823 = vunpack.c.l.b16 %v1736
    %v1824 = vunpack.c.h.b16 %v1736
    %v1825 = vunpack.c.l.b16 %v1737
    %v1826 = vunpack.c.h.b16 %v1737
    %v1827 = vunpack.c.l.b16 %v1738
    %v1828 = vunpack.c.h.b16 %v1738
    %v1829 = vunpack.c.l.b16 %v1739
    %v1830 = vunpack.c.h.b16 %v1739
    %v1831 = vunpack.c.l.b16 %v1740
    %v1832 = vunpack.c.h.b16 %v1740
    %v1833 = vunpack.c.l.b16 %v1741
    %v1834 = vunpack.c.h.b16 %v1741
    %v1835 = vunpack.c.l.b16 %v1742
    %v1836 = vunpack.c.h.b16 %v1742
    %v1837 = vunpack.c.l.b16 %v1743
    %v1838 = vunpack.c.h.b16 %v1743
    %v1839 = vunpack.c.l.b16 %v1744
    %v1840 = vunpack.c.h.b16 %v1744
    %v1841 = vunpack.c.l.b16 %v1745
    %v1842 = vunpack.c.h.b16 %v1745
    %v1843 = vunpack.c.l.b16 %v1746
    %v1844 = vunpack.c.h.b16 %v1746
    %v1845 = vunpack.c.l.b16 %v1747
    %v1846 = vunpack.c.h.b16 %v1747
    %v1847 = vunpack.c.l.b16 %v1748
    %v1848 = vunpack.c.h.b16 %v1748
    %v1849 = vunpack.c.l.b16 %v1749
    %v1850 = vunpack.c.h.b16 %v1749
    %v1851 = vunpack.c.l.b16 %v1750
    %v1852 = vunpack.c.h.b16 %v1750
    %v1853 = vunpack.c.l.b16 %v1751
    %v1854 = vunpack.c.h.b16 %v1751
    %v1855 = vunpack.c.l.b16 %v1752
    %v1856 = vunpack.c.h.b16 %v1752
    %v1857 = vunpack.c.l.b16 %v1753
    %v1858 = vunpack.c.h.b16 %v1753
    %v1859 = vpack.c.b16 %v1797, %v1795
    %v1860 = vpack.c.b16 %v1798, %v1796
    %v1861 = vpack.c.b16 %v1801, %v1799
    %v1862 = vpack.c.b16 %v1802, %v1800
    %v1863 = vpack.c.b16 %v1805, %v1803
    %v1864 = vpack.c.b16 %v1806, %v1804
    %v1865 = vpack.c.b16 %v1809, %v1807
    %v1866 = vpack.c.b16 %v1810, %v1808
    %v1867 = vpack.c.b16 %v1813, %v1811
    %v1868 = vpack.c.b16 %v1814, %v1812
    %v1869 = vpack.c.b16 %v1817, %v1815
    %v1870 = vpack.c.b16 %v1818, %v1816
    %v1871 = vpack.c.b16 %v1821, %v1819
    %v1872 = vpack.c.b16 %v1822, %v1820
    %v1873 = vpack.c.b16 %v1825, %v1823
    %v1874 = vpack.c.b16 %v1826, %v1824
    %v1875 = vpack.c.b16 %v1829, %v1827
    %v1876 = vpack.c.b16 %v1830, %v1828
    %v1877 = vpack.c.b16 %v1833, %v1831
    %v1878 = vpack.c.b16 %v1834, %v1832
    %v1879 = vpack.c.b16 %v1837, %v1835
    %v1880 = vpack.c.b16 %v1838, %v1836
    %v1881 = vpack.c.b16 %v1841, %v1839
    %v1882 = vpack.c.b16 %v1842, %v1840
    %v1883 = vpack.c.b16 %v1845, %v1843
    %v1884 = vpack.c.b16 %v1846, %v1844
    %v1885 = vpack.c.b16 %v1849, %v1847
    %v1886 = vpack.c.b16 %v1850, %v1848
    %v1887 = vpack.c.b16 %v1853, %v1851
    %v1888 = vpack.c.b16 %v1854, %v1852
    %v1889 = vpack.c.b16 %v1857, %v1855
    %v1890 = vpack.c.b16 %v1858, %v1856
    %1923 = vmatpush.bf16.msra.mxu0 %v1873
    %1924 = vmatpush.bf16.msra.mxu0 %v1871
    %1925 = vmatpush.bf16.msra.mxu0 %v1869
    %1926 = vmatpush.bf16.msra.mxu0 %v1867
    %1927 = vmatpush.bf16.msra.mxu0 %v1865
    %1928 = vmatpush.bf16.msra.mxu0 %v1863
    %1929 = vmatpush.bf16.msra.mxu0 %v1861
    %1930 = vmatpush.bf16.msra.mxu0 %v1859
    %1931 = vmatmul.bf16.gmra.mxu0 %v1756
    %v1932 = vpop.f32.mrf.mxu0
    %v1933 = vadd.f32 %v1759, %v1932
    %v1934 = vpop.f32.mrf.mxu0
    %1935 = vdwg.mxu0
    %1936 = vmatpush.bf16.msra.mxu0 %v1889
    %1937 = vmatpush.bf16.msra.mxu0 %v1887
    %1938 = vmatpush.bf16.msra.mxu0 %v1885
    %1939 = vmatpush.bf16.msra.mxu0 %v1883
    %1940 = vmatpush.bf16.msra.mxu0 %v1881
    %1941 = vmatpush.bf16.msra.mxu0 %v1879
    %1942 = vmatpush.bf16.msra.mxu0 %v1877
    %1943 = vmatpush.bf16.msra.mxu0 %v1875
    %1944 = vmatmul.bf16.gmra.mxu0 %v1757
    %v1945 = vpop.f32.mrf.mxu0
    %v1946 = vadd.f32 %v1933, %v1945
    %v1947 = vpop.f32.mrf.mxu0
    %1948 = vdwg.mxu0
    %1949 = vmatpush.bf16.msra.mxu0 %v1874
    %1950 = vmatpush.bf16.msra.mxu0 %v1872
    %1951 = vmatpush.bf16.msra.mxu0 %v1870
    %1952 = vmatpush.bf16.msra.mxu0 %v1868
    %1953 = vmatpush.bf16.msra.mxu0 %v1866
    %1954 = vmatpush.bf16.msra.mxu0 %v1864
    %1955 = vmatpush.bf16.msra.mxu0 %v1862
    %1956 = vmatpush.bf16.msra.mxu0 %v1860
    %1957 = vmatmul.bf16.gmra.mxu0 %v1756
    %v1958 = vpop.f32.mrf.mxu0
    %v1959 = vadd.f32 %v1760, %v1958
    %v1960 = vpop.f32.mrf.mxu0
    %1961 = vdwg.mxu0
    %1962 = vmatpush.bf16.msra.mxu0 %v1890
    %1963 = vmatpush.bf16.msra.mxu0 %v1888
    %1964 = vmatpush.bf16.msra.mxu0 %v1886
    %1965 = vmatpush.bf16.msra.mxu0 %v1884
    %1966 = vmatpush.bf16.msra.mxu0 %v1882
    %1967 = vmatpush.bf16.msra.mxu0 %v1880
    %1968 = vmatpush.bf16.msra.mxu0 %v1878
    %1969 = vmatpush.bf16.msra.mxu0 %v1876
    %1970 = vmatmul.bf16.gmra.mxu0 %v1757
    %v1971 = vpop.f32.mrf.mxu0
    %v1972 = vadd.f32 %v1959, %v1971
    %v1973 = vpop.f32.mrf.mxu0
    %1974 = vdwg.mxu0
    %v1975 = vld [vmem:[#allocation5 + $0x100] sm:$0xf]
    %v1976 = vld [vmem:[#allocation5 + $0x104] sm:$0xf]
    %v1977 = vld [vmem:[#allocation5 + $0x108] sm:$0xf]
    %v1978 = vld [vmem:[#allocation5 + $0x10c] sm:$0xf]
    %v1979 = vld [vmem:[#allocation5 + $0x110] sm:$0xf]
    %v1980 = vld [vmem:[#allocation5 + $0x114] sm:$0xf]
    %v1981 = vld [vmem:[#allocation5 + $0x118] sm:$0xf]
    %v1982 = vld [vmem:[#allocation5 + $0x11c] sm:$0xf]
    %v1983 = vld [vmem:[#allocation5 + $0x120] sm:$0xf]
    %v1984 = vld [vmem:[#allocation5 + $0x124] sm:$0xf]
    %v1985 = vld [vmem:[#allocation5 + $0x128] sm:$0xf]
    %v1986 = vld [vmem:[#allocation5 + $0x12c] sm:$0xf]
    %v1987 = vld [vmem:[#allocation5 + $0x130] sm:$0xf]
    %v1988 = vld [vmem:[#allocation5 + $0x134] sm:$0xf]
    %v1989 = vld [vmem:[#allocation5 + $0x138] sm:$0xf]
    %v1990 = vld [vmem:[#allocation5 + $0x13c] sm:$0xf]
    %v1991 = vld [vmem:[#allocation5 + $0x140] sm:$0xf]
    %v1992 = vld [vmem:[#allocation5 + $0x144] sm:$0xf]
    %v1993 = vld [vmem:[#allocation5 + $0x148] sm:$0xf]
    %v1994 = vld [vmem:[#allocation5 + $0x14c] sm:$0xf]
    %v1995 = vld [vmem:[#allocation5 + $0x150] sm:$0xf]
    %v1996 = vld [vmem:[#allocation5 + $0x154] sm:$0xf]
    %v1997 = vld [vmem:[#allocation5 + $0x158] sm:$0xf]
    %v1998 = vld [vmem:[#allocation5 + $0x15c] sm:$0xf]
    %v1999 = vld [vmem:[#allocation5 + $0x160] sm:$0xf]
    %v2000 = vld [vmem:[#allocation5 + $0x164] sm:$0xf]
    %v2001 = vld [vmem:[#allocation5 + $0x168] sm:$0xf]
    %v2002 = vld [vmem:[#allocation5 + $0x16c] sm:$0xf]
    %v2003 = vld [vmem:[#allocation5 + $0x170] sm:$0xf]
    %v2004 = vld [vmem:[#allocation5 + $0x174] sm:$0xf]
    %v2005 = vld [vmem:[#allocation5 + $0x178] sm:$0xf]
    %v2006 = vld [vmem:[#allocation5 + $0x17c] sm:$0xf]
    %v2007 = vld [vmem:[#allocation10 + $0x3] sm:$0x1]
    %v2008 = vpack.c.bf16 %v1946, %v1946
    %v2009 = vpack.c.bf16 %v1972, %v1972
    %v2010 = vperm.slane %v2007, 0
    %v2043 = vunpack.c.l.b16 %v1975
    %v2044 = vunpack.c.l.b16 %v1976
    %v2045 = vunpack.c.l.b16 %v1977
    %v2046 = vunpack.c.l.b16 %v1978
    %v2047 = vunpack.c.l.b16 %v1979
    %v2048 = vunpack.c.l.b16 %v1980
    %v2049 = vunpack.c.l.b16 %v1981
    %v2050 = vunpack.c.l.b16 %v1982
    %v2051 = vunpack.c.l.b16 %v1983
    %v2052 = vunpack.c.l.b16 %v1984
    %v2053 = vunpack.c.l.b16 %v1985
    %v2054 = vunpack.c.l.b16 %v1986
    %v2055 = vunpack.c.l.b16 %v1987
    %v2056 = vunpack.c.l.b16 %v1988
    %v2057 = vunpack.c.l.b16 %v1989
    %v2058 = vunpack.c.l.b16 %v1990
    %v2059 = vunpack.c.l.b16 %v1991
    %v2060 = vunpack.c.l.b16 %v1992
    %v2061 = vunpack.c.l.b16 %v1993
    %v2062 = vunpack.c.l.b16 %v1994
    %v2063 = vunpack.c.l.b16 %v1995
    %v2064 = vunpack.c.l.b16 %v1996
    %v2065 = vunpack.c.l.b16 %v1997
    %v2066 = vunpack.c.l.b16 %v1998
    %v2067 = vunpack.c.l.b16 %v1999
    %v2068 = vunpack.c.l.b16 %v2000
    %v2069 = vunpack.c.l.b16 %v2001
    %v2070 = vunpack.c.l.b16 %v2002
    %v2071 = vunpack.c.l.b16 %v2003
    %v2072 = vunpack.c.l.b16 %v2004
    %v2073 = vunpack.c.l.b16 %v2005
    %v2074 = vunpack.c.l.b16 %v2006
    %v2075 = vpack.c.b16 %v2044, %v2043
    %v2076 = vpack.c.b16 %v2046, %v2045
    %v2077 = vpack.c.b16 %v2048, %v2047
    %v2078 = vpack.c.b16 %v2050, %v2049
    %v2079 = vpack.c.b16 %v2052, %v2051
    %v2080 = vpack.c.b16 %v2054, %v2053
    %v2081 = vpack.c.b16 %v2056, %v2055
    %v2082 = vpack.c.b16 %v2058, %v2057
    %v2083 = vpack.c.b16 %v2060, %v2059
    %v2084 = vpack.c.b16 %v2062, %v2061
    %v2085 = vpack.c.b16 %v2064, %v2063
    %v2086 = vpack.c.b16 %v2066, %v2065
    %v2087 = vpack.c.b16 %v2068, %v2067
    %v2088 = vpack.c.b16 %v2070, %v2069
    %v2089 = vpack.c.b16 %v2072, %v2071
    %v2090 = vpack.c.b16 %v2074, %v2073
    %2107 = vmatpush.bf16.msra.mxu0 %v2082
    %2108 = vmatpush.bf16.msra.mxu0 %v2081
    %2109 = vmatpush.bf16.msra.mxu0 %v2080
    %2110 = vmatpush.bf16.msra.mxu0 %v2079
    %2111 = vmatpush.bf16.msra.mxu0 %v2078
    %2112 = vmatpush.bf16.msra.mxu0 %v2077
    %2113 = vmatpush.bf16.msra.mxu0 %v2076
    %2114 = vmatpush.bf16.msra.mxu0 %v2075
    %2115 = vmatmul.bf16.gmra.mxu0 %v2008
    %v2116 = vpop.f32.mrf.mxu0
    %v2117 = vadd.f32 %v2010, %v2116
    %v2118 = vpop.f32.mrf.mxu0
    %2119 = vdwg.mxu0
    %2120 = vmatpush.bf16.msra.mxu0 %v2090
    %2121 = vmatpush.bf16.msra.mxu0 %v2089
    %2122 = vmatpush.bf16.msra.mxu0 %v2088
    %2123 = vmatpush.bf16.msra.mxu0 %v2087
    %2124 = vmatpush.bf16.msra.mxu0 %v2086
    %2125 = vmatpush.bf16.msra.mxu0 %v2085
    %2126 = vmatpush.bf16.msra.mxu0 %v2084
    %2127 = vmatpush.bf16.msra.mxu0 %v2083
    %2128 = vmatmul.bf16.gmra.mxu0 %v2009
    %v2129 = vpop.f32.mrf.mxu0
    %v2130 = vadd.f32 %v2117, %v2129
    %v2131 = vpop.f32.mrf.mxu0
    %2132 = vdwg.mxu0
    %v2133 = vld [vmem:[#allocation5 + $0x180] sm:$0xf]
    %v2134 = vld [vmem:[#allocation5 + $0x184] sm:$0xf]
    %v2135 = vld [vmem:[#allocation5 + $0x188] sm:$0xf]
    %v2136 = vld [vmem:[#allocation5 + $0x18c] sm:$0xf]
    %v2137 = vld [vmem:[#allocation5 + $0x190] sm:$0xf]
    %v2138 = vld [vmem:[#allocation5 + $0x194] sm:$0xf]
    %v2139 = vld [vmem:[#allocation5 + $0x198] sm:$0xf]
    %v2140 = vld [vmem:[#allocation5 + $0x19c] sm:$0xf]
    %v2141 = vld [vmem:[#allocation5 + $0x1a0] sm:$0xf]
    %v2142 = vld [vmem:[#allocation5 + $0x1a4] sm:$0xf]
    %v2143 = vld [vmem:[#allocation5 + $0x1a8] sm:$0xf]
    %v2144 = vld [vmem:[#allocation5 + $0x1ac] sm:$0xf]
    %v2145 = vld [vmem:[#allocation5 + $0x1b0] sm:$0xf]
    %v2146 = vld [vmem:[#allocation5 + $0x1b4] sm:$0xf]
    %v2147 = vld [vmem:[#allocation5 + $0x1b8] sm:$0xf]
    %v2148 = vld [vmem:[#allocation5 + $0x1bc] sm:$0xf]
    %v2149 = vld [vmem:[#allocation10 + $0x4] sm:$0x1]
    %v2150 = vpack.c.bf16 %v2130, %v2130
    %v2151 = vperm.slane %v2149, 0
    %v2168 = vunpack.c.l.b16 %v2133
    %v2169 = vunpack.c.l.b16 %v2134
    %v2170 = vunpack.c.l.b16 %v2135
    %v2171 = vunpack.c.l.b16 %v2136
    %v2172 = vunpack.c.l.b16 %v2137
    %v2173 = vunpack.c.l.b16 %v2138
    %v2174 = vunpack.c.l.b16 %v2139
    %v2175 = vunpack.c.l.b16 %v2140
    %v2176 = vunpack.c.l.b16 %v2141
    %v2177 = vunpack.c.l.b16 %v2142
    %v2178 = vunpack.c.l.b16 %v2143
    %v2179 = vunpack.c.l.b16 %v2144
    %v2180 = vunpack.c.l.b16 %v2145
    %v2181 = vunpack.c.l.b16 %v2146
    %v2182 = vunpack.c.l.b16 %v2147
    %v2183 = vunpack.c.l.b16 %v2148
    %v2184 = vpack.c.b16 %v2169, %v2168
    %v2185 = vpack.c.b16 %v2171, %v2170
    %v2186 = vpack.c.b16 %v2173, %v2172
    %v2187 = vpack.c.b16 %v2175, %v2174
    %v2188 = vpack.c.b16 %v2177, %v2176
    %v2189 = vpack.c.b16 %v2179, %v2178
    %v2190 = vpack.c.b16 %v2181, %v2180
    %v2191 = vpack.c.b16 %v2183, %v2182
    %2200 = vmatpush.bf16.msra.mxu0 %v2191
    %2201 = vmatpush.bf16.msra.mxu0 %v2190
    %2202 = vmatpush.bf16.msra.mxu0 %v2189
    %2203 = vmatpush.bf16.msra.mxu0 %v2188
    %2204 = vmatpush.bf16.msra.mxu0 %v2187
    %2205 = vmatpush.bf16.msra.mxu0 %v2186
    %2206 = vmatpush.bf16.msra.mxu0 %v2185
    %2207 = vmatpush.bf16.msra.mxu0 %v2184
    %2208 = vmatmul.bf16.gmra.mxu0 %v2150
    %v2209 = vpop.f32.mrf.mxu0
    %v2210 = vadd.f32 %v2151, %v2209
    %v2211 = vpop.f32.mrf.mxu0
    %2212 = vdwg.mxu0
    %v2213 = vld [vmem:[#allocation5 + $0x1c0] sm:$0xf]
    %v2214 = vld [vmem:[#allocation5 + $0x1c4] sm:$0xf]
    %v2215 = vld [vmem:[#allocation5 + $0x1c8] sm:$0xf]
    %v2216 = vld [vmem:[#allocation5 + $0x1cc] sm:$0xf]
    %v2217 = vld [vmem:[#allocation5 + $0x1d0] sm:$0xf]
    %v2218 = vld [vmem:[#allocation5 + $0x1d4] sm:$0xf]
    %v2219 = vld [vmem:[#allocation5 + $0x1d8] sm:$0xf]
    %v2220 = vld [vmem:[#allocation5 + $0x1dc] sm:$0xf]
    %v2221 = vld [vmem:[#allocation5 + $0x1e0] sm:$0xf]
    %v2222 = vld [vmem:[#allocation5 + $0x1e4] sm:$0xf]
    %v2223 = vld [vmem:[#allocation5 + $0x1e8] sm:$0xf]
    %v2224 = vld [vmem:[#allocation5 + $0x1ec] sm:$0xf]
    %v2225 = vld [vmem:[#allocation5 + $0x1f0] sm:$0xf]
    %v2226 = vld [vmem:[#allocation5 + $0x1f4] sm:$0xf]
    %v2227 = vld [vmem:[#allocation5 + $0x1f8] sm:$0xf]
    %v2228 = vld [vmem:[#allocation5 + $0x1fc] sm:$0xf]
    %v2229 = vld [vmem:[#allocation10 + $0x5] sm:$0x1]
    %v2230 = vpack.c.bf16 %v2210, %v2210
    %v2231 = vperm.slane %v2229, 0
    %v2248 = vunpack.c.l.b16 %v2213
    %v2249 = vunpack.c.l.b16 %v2214
    %v2250 = vunpack.c.l.b16 %v2215
    %v2251 = vunpack.c.l.b16 %v2216
    %v2252 = vunpack.c.l.b16 %v2217
    %v2253 = vunpack.c.l.b16 %v2218
    %v2254 = vunpack.c.l.b16 %v2219
    %v2255 = vunpack.c.l.b16 %v2220
    %v2256 = vunpack.c.l.b16 %v2221
    %v2257 = vunpack.c.l.b16 %v2222
    %v2258 = vunpack.c.l.b16 %v2223
    %v2259 = vunpack.c.l.b16 %v2224
    %v2260 = vunpack.c.l.b16 %v2225
    %v2261 = vunpack.c.l.b16 %v2226
    %v2262 = vunpack.c.l.b16 %v2227
    %v2263 = vunpack.c.l.b16 %v2228
    %v2264 = vpack.c.b16 %v2249, %v2248
    %v2265 = vpack.c.b16 %v2251, %v2250
    %v2266 = vpack.c.b16 %v2253, %v2252
    %v2267 = vpack.c.b16 %v2255, %v2254
    %v2268 = vpack.c.b16 %v2257, %v2256
    %v2269 = vpack.c.b16 %v2259, %v2258
    %v2270 = vpack.c.b16 %v2261, %v2260
    %v2271 = vpack.c.b16 %v2263, %v2262
    %2280 = vmatpush.bf16.msra.mxu0 %v2271
    %2281 = vmatpush.bf16.msra.mxu0 %v2270
    %2282 = vmatpush.bf16.msra.mxu0 %v2269
    %2283 = vmatpush.bf16.msra.mxu0 %v2268
    %2284 = vmatpush.bf16.msra.mxu0 %v2267
    %2285 = vmatpush.bf16.msra.mxu0 %v2266
    %2286 = vmatpush.bf16.msra.mxu0 %v2265
    %2287 = vmatpush.bf16.msra.mxu0 %v2264
    %2288 = vmatmul.bf16.gmra.mxu0 %v2230
    %v2289 = vpop.f32.mrf.mxu0
    %v2290 = vadd.f32 %v2231, %v2289
    %v2291 = vpop.f32.mrf.mxu0
    %2292 = vdwg.mxu0
    %v2293 = vld [vmem:[#allocation5 + $0x200] sm:$0xf]
    %v2294 = vld [vmem:[#allocation5 + $0x204] sm:$0xf]
    %v2295 = vld [vmem:[#allocation5 + $0x208] sm:$0xf]
    %v2296 = vld [vmem:[#allocation5 + $0x20c] sm:$0xf]
    %v2297 = vld [vmem:[#allocation5 + $0x210] sm:$0xf]
    %v2298 = vld [vmem:[#allocation5 + $0x214] sm:$0xf]
    %v2299 = vld [vmem:[#allocation5 + $0x218] sm:$0xf]
    %v2300 = vld [vmem:[#allocation5 + $0x21c] sm:$0xf]
    %v2301 = vld [vmem:[#allocation5 + $0x220] sm:$0xf]
    %v2302 = vld [vmem:[#allocation5 + $0x224] sm:$0xf]
    %v2303 = vld [vmem:[#allocation5 + $0x228] sm:$0xf]
    %v2304 = vld [vmem:[#allocation5 + $0x22c] sm:$0xf]
    %v2305 = vld [vmem:[#allocation5 + $0x230] sm:$0xf]
    %v2306 = vld [vmem:[#allocation5 + $0x234] sm:$0xf]
    %v2307 = vld [vmem:[#allocation5 + $0x238] sm:$0xf]
    %v2308 = vld [vmem:[#allocation5 + $0x23c] sm:$0xf]
    %v2309 = vld [vmem:[#allocation10 + $0x6] sm:$0x1]
    %v2310 = vpack.c.bf16 %v2290, %v2290
    %v2311 = vperm.slane %v2309, 0
    %v2328 = vunpack.c.l.b16 %v2293
    %v2329 = vunpack.c.l.b16 %v2294
    %v2330 = vunpack.c.l.b16 %v2295
    %v2331 = vunpack.c.l.b16 %v2296
    %v2332 = vunpack.c.l.b16 %v2297
    %v2333 = vunpack.c.l.b16 %v2298
    %v2334 = vunpack.c.l.b16 %v2299
    %v2335 = vunpack.c.l.b16 %v2300
    %v2336 = vunpack.c.l.b16 %v2301
    %v2337 = vunpack.c.l.b16 %v2302
    %v2338 = vunpack.c.l.b16 %v2303
    %v2339 = vunpack.c.l.b16 %v2304
    %v2340 = vunpack.c.l.b16 %v2305
    %v2341 = vunpack.c.l.b16 %v2306
    %v2342 = vunpack.c.l.b16 %v2307
    %v2343 = vunpack.c.l.b16 %v2308
    %v2344 = vpack.c.b16 %v2329, %v2328
    %v2345 = vpack.c.b16 %v2331, %v2330
    %v2346 = vpack.c.b16 %v2333, %v2332
    %v2347 = vpack.c.b16 %v2335, %v2334
    %v2348 = vpack.c.b16 %v2337, %v2336
    %v2349 = vpack.c.b16 %v2339, %v2338
    %v2350 = vpack.c.b16 %v2341, %v2340
    %v2351 = vpack.c.b16 %v2343, %v2342
    %2360 = vmatpush.bf16.msra.mxu0 %v2351
    %2361 = vmatpush.bf16.msra.mxu0 %v2350
    %2362 = vmatpush.bf16.msra.mxu0 %v2349
    %2363 = vmatpush.bf16.msra.mxu0 %v2348
    %2364 = vmatpush.bf16.msra.mxu0 %v2347
    %2365 = vmatpush.bf16.msra.mxu0 %v2346
    %2366 = vmatpush.bf16.msra.mxu0 %v2345
    %2367 = vmatpush.bf16.msra.mxu0 %v2344
    %2368 = vmatmul.bf16.gmra.mxu0 %v2310
    %v2369 = vpop.f32.mrf.mxu0
    %v2370 = vadd.f32 %v2311, %v2369
    %v2371 = vpop.f32.mrf.mxu0
    %2372 = vdwg.mxu0
    %v2373 = vld [vmem:[#allocation5 + $0x240] sm:$0xf]
    %v2374 = vld [vmem:[#allocation5 + $0x244] sm:$0xf]
    %v2375 = vld [vmem:[#allocation5 + $0x248] sm:$0xf]
    %v2376 = vld [vmem:[#allocation5 + $0x24c] sm:$0xf]
    %v2377 = vld [vmem:[#allocation5 + $0x250] sm:$0xf]
    %v2378 = vld [vmem:[#allocation5 + $0x254] sm:$0xf]
    %v2379 = vld [vmem:[#allocation5 + $0x258] sm:$0xf]
    %v2380 = vld [vmem:[#allocation5 + $0x25c] sm:$0xf]
    %v2381 = vld [vmem:[#allocation5 + $0x260] sm:$0xf]
    %v2382 = vld [vmem:[#allocation5 + $0x264] sm:$0xf]
    %v2383 = vld [vmem:[#allocation5 + $0x268] sm:$0xf]
    %v2384 = vld [vmem:[#allocation5 + $0x26c] sm:$0xf]
    %v2385 = vld [vmem:[#allocation5 + $0x270] sm:$0xf]
    %v2386 = vld [vmem:[#allocation5 + $0x274] sm:$0xf]
    %v2387 = vld [vmem:[#allocation5 + $0x278] sm:$0xf]
    %v2388 = vld [vmem:[#allocation5 + $0x27c] sm:$0xf]
    %v2389 = vld [vmem:[#allocation10 + $0x7] sm:$0x1]
    %v2390 = vpack.c.bf16 %v2370, %v2370
    %v2391 = vperm.slane %v2389, 0
    %v2408 = vunpack.c.l.b16 %v2373
    %v2409 = vunpack.c.l.b16 %v2374
    %v2410 = vunpack.c.l.b16 %v2375
    %v2411 = vunpack.c.l.b16 %v2376
    %v2412 = vunpack.c.l.b16 %v2377
    %v2413 = vunpack.c.l.b16 %v2378
    %v2414 = vunpack.c.l.b16 %v2379
    %v2415 = vunpack.c.l.b16 %v2380
    %v2416 = vunpack.c.l.b16 %v2381
    %v2417 = vunpack.c.l.b16 %v2382
    %v2418 = vunpack.c.l.b16 %v2383
    %v2419 = vunpack.c.l.b16 %v2384
    %v2420 = vunpack.c.l.b16 %v2385
    %v2421 = vunpack.c.l.b16 %v2386
    %v2422 = vunpack.c.l.b16 %v2387
    %v2423 = vunpack.c.l.b16 %v2388
    %v2424 = vpack.c.b16 %v2409, %v2408
    %v2425 = vpack.c.b16 %v2411, %v2410
    %v2426 = vpack.c.b16 %v2413, %v2412
    %v2427 = vpack.c.b16 %v2415, %v2414
    %v2428 = vpack.c.b16 %v2417, %v2416
    %v2429 = vpack.c.b16 %v2419, %v2418
    %v2430 = vpack.c.b16 %v2421, %v2420
    %v2431 = vpack.c.b16 %v2423, %v2422
    %2440 = vmatpush.bf16.msra.mxu0 %v2431
    %2441 = vmatpush.bf16.msra.mxu0 %v2430
    %2442 = vmatpush.bf16.msra.mxu0 %v2429
    %2443 = vmatpush.bf16.msra.mxu0 %v2428
    %2444 = vmatpush.bf16.msra.mxu0 %v2427
    %2445 = vmatpush.bf16.msra.mxu0 %v2426
    %2446 = vmatpush.bf16.msra.mxu0 %v2425
    %2447 = vmatpush.bf16.msra.mxu0 %v2424
    %2448 = vmatmul.bf16.gmra.mxu0 %v2390
    %v2449 = vpop.f32.mrf.mxu0
    %v2450 = vadd.f32 %v2391, %v2449
    %v2451 = vpop.f32.mrf.mxu0
    %2452 = vdwg.mxu0
    %v2453 = vadd.f32 %v2130, %v2450
    %v2454 = vld [vmem:[#allocation5 + $0x280] sm:$0xf]
    %v2455 = vld [vmem:[#allocation5 + $0x284] sm:$0xf]
    %v2456 = vld [vmem:[#allocation5 + $0x288] sm:$0xf]
    %v2457 = vld [vmem:[#allocation5 + $0x28c] sm:$0xf]
    %v2458 = vld [vmem:[#allocation5 + $0x290] sm:$0xf]
    %v2459 = vld [vmem:[#allocation5 + $0x294] sm:$0xf]
    %v2460 = vld [vmem:[#allocation5 + $0x298] sm:$0xf]
    %v2461 = vld [vmem:[#allocation5 + $0x29c] sm:$0xf]
    %v2462 = vld [vmem:[#allocation5 + $0x2a0] sm:$0xf]
    %v2463 = vld [vmem:[#allocation5 + $0x2a4] sm:$0xf]
    %v2464 = vld [vmem:[#allocation5 + $0x2a8] sm:$0xf]
    %v2465 = vld [vmem:[#allocation5 + $0x2ac] sm:$0xf]
    %v2466 = vld [vmem:[#allocation5 + $0x2b0] sm:$0xf]
    %v2467 = vld [vmem:[#allocation5 + $0x2b4] sm:$0xf]
    %v2468 = vld [vmem:[#allocation5 + $0x2b8] sm:$0xf]
    %v2469 = vld [vmem:[#allocation5 + $0x2bc] sm:$0xf]
    %v2470 = vld [vmem:[#allocation10 + $0x8] sm:$0x1]
    %v2471 = vpack.c.bf16 %v2453, %v2453
    %v2472 = vperm.slane %v2470, 0
    %v2489 = vunpack.c.l.b16 %v2454
    %v2490 = vunpack.c.l.b16 %v2455
    %v2491 = vunpack.c.l.b16 %v2456
    %v2492 = vunpack.c.l.b16 %v2457
    %v2493 = vunpack.c.l.b16 %v2458
    %v2494 = vunpack.c.l.b16 %v2459
    %v2495 = vunpack.c.l.b16 %v2460
    %v2496 = vunpack.c.l.b16 %v2461
    %v2497 = vunpack.c.l.b16 %v2462
    %v2498 = vunpack.c.l.b16 %v2463
    %v2499 = vunpack.c.l.b16 %v2464
    %v2500 = vunpack.c.l.b16 %v2465
    %v2501 = vunpack.c.l.b16 %v2466
    %v2502 = vunpack.c.l.b16 %v2467
    %v2503 = vunpack.c.l.b16 %v2468
    %v2504 = vunpack.c.l.b16 %v2469
    %v2505 = vpack.c.b16 %v2490, %v2489
    %v2506 = vpack.c.b16 %v2492, %v2491
    %v2507 = vpack.c.b16 %v2494, %v2493
    %v2508 = vpack.c.b16 %v2496, %v2495
    %v2509 = vpack.c.b16 %v2498, %v2497
    %v2510 = vpack.c.b16 %v2500, %v2499
    %v2511 = vpack.c.b16 %v2502, %v2501
    %v2512 = vpack.c.b16 %v2504, %v2503
    %2521 = vmatpush.bf16.msra.mxu0 %v2512
    %2522 = vmatpush.bf16.msra.mxu0 %v2511
    %2523 = vmatpush.bf16.msra.mxu0 %v2510
    %2524 = vmatpush.bf16.msra.mxu0 %v2509
    %2525 = vmatpush.bf16.msra.mxu0 %v2508
    %2526 = vmatpush.bf16.msra.mxu0 %v2507
    %2527 = vmatpush.bf16.msra.mxu0 %v2506
    %2528 = vmatpush.bf16.msra.mxu0 %v2505
    %2529 = vmatmul.bf16.gmra.mxu0 %v2471
    %v2530 = vpop.f32.mrf.mxu0
    %v2531 = vadd.f32 %v2472, %v2530
    %v2532 = vpop.f32.mrf.mxu0
    %2533 = vdwg.mxu0
    %v2534 = vld [vmem:[#allocation5 + $0x2c0] sm:$0xf]
    %v2535 = vld [vmem:[#allocation5 + $0x2c4] sm:$0xf]
    %v2536 = vld [vmem:[#allocation5 + $0x2c8] sm:$0xf]
    %v2537 = vld [vmem:[#allocation5 + $0x2cc] sm:$0xf]
    %v2538 = vld [vmem:[#allocation5 + $0x2d0] sm:$0xf]
    %v2539 = vld [vmem:[#allocation5 + $0x2d4] sm:$0xf]
    %v2540 = vld [vmem:[#allocation5 + $0x2d8] sm:$0xf]
    %v2541 = vld [vmem:[#allocation5 + $0x2dc] sm:$0xf]
    %v2542 = vld [vmem:[#allocation5 + $0x2e0] sm:$0xf]
    %v2543 = vld [vmem:[#allocation5 + $0x2e4] sm:$0xf]
    %v2544 = vld [vmem:[#allocation5 + $0x2e8] sm:$0xf]
    %v2545 = vld [vmem:[#allocation5 + $0x2ec] sm:$0xf]
    %v2546 = vld [vmem:[#allocation5 + $0x2f0] sm:$0xf]
    %v2547 = vld [vmem:[#allocation5 + $0x2f4] sm:$0xf]
    %v2548 = vld [vmem:[#allocation5 + $0x2f8] sm:$0xf]
    %v2549 = vld [vmem:[#allocation5 + $0x2fc] sm:$0xf]
    %v2550 = vld [vmem:[#allocation10 + $0x9] sm:$0x1]
    %v2551 = vpack.c.bf16 %v2531, %v2531
    %v2552 = vperm.slane %v2550, 0
    %v2569 = vunpack.c.l.b16 %v2534
    %v2570 = vunpack.c.l.b16 %v2535
    %v2571 = vunpack.c.l.b16 %v2536
    %v2572 = vunpack.c.l.b16 %v2537
    %v2573 = vunpack.c.l.b16 %v2538
    %v2574 = vunpack.c.l.b16 %v2539
    %v2575 = vunpack.c.l.b16 %v2540
    %v2576 = vunpack.c.l.b16 %v2541
    %v2577 = vunpack.c.l.b16 %v2542
    %v2578 = vunpack.c.l.b16 %v2543
    %v2579 = vunpack.c.l.b16 %v2544
    %v2580 = vunpack.c.l.b16 %v2545
    %v2581 = vunpack.c.l.b16 %v2546
    %v2582 = vunpack.c.l.b16 %v2547
    %v2583 = vunpack.c.l.b16 %v2548
    %v2584 = vunpack.c.l.b16 %v2549
    %v2585 = vpack.c.b16 %v2570, %v2569
    %v2586 = vpack.c.b16 %v2572, %v2571
    %v2587 = vpack.c.b16 %v2574, %v2573
    %v2588 = vpack.c.b16 %v2576, %v2575
    %v2589 = vpack.c.b16 %v2578, %v2577
    %v2590 = vpack.c.b16 %v2580, %v2579
    %v2591 = vpack.c.b16 %v2582, %v2581
    %v2592 = vpack.c.b16 %v2584, %v2583
    %2601 = vmatpush.bf16.msra.mxu0 %v2592
    %2602 = vmatpush.bf16.msra.mxu0 %v2591
    %2603 = vmatpush.bf16.msra.mxu0 %v2590
    %2604 = vmatpush.bf16.msra.mxu0 %v2589
    %2605 = vmatpush.bf16.msra.mxu0 %v2588
    %2606 = vmatpush.bf16.msra.mxu0 %v2587
    %2607 = vmatpush.bf16.msra.mxu0 %v2586
    %2608 = vmatpush.bf16.msra.mxu0 %v2585
    %2609 = vmatmul.bf16.gmra.mxu0 %v2551
    %v2610 = vpop.f32.mrf.mxu0
    %v2611 = vadd.f32 %v2552, %v2610
    %v2612 = vpop.f32.mrf.mxu0
    %2613 = vdwg.mxu0
    %v2614 = vld [vmem:[#allocation5 + $0x300] sm:$0xf]
    %v2615 = vld [vmem:[#allocation5 + $0x304] sm:$0xf]
    %v2616 = vld [vmem:[#allocation5 + $0x308] sm:$0xf]
    %v2617 = vld [vmem:[#allocation5 + $0x30c] sm:$0xf]
    %v2618 = vld [vmem:[#allocation5 + $0x310] sm:$0xf]
    %v2619 = vld [vmem:[#allocation5 + $0x314] sm:$0xf]
    %v2620 = vld [vmem:[#allocation5 + $0x318] sm:$0xf]
    %v2621 = vld [vmem:[#allocation5 + $0x31c] sm:$0xf]
    %v2622 = vld [vmem:[#allocation5 + $0x320] sm:$0xf]
    %v2623 = vld [vmem:[#allocation5 + $0x324] sm:$0xf]
    %v2624 = vld [vmem:[#allocation5 + $0x328] sm:$0xf]
    %v2625 = vld [vmem:[#allocation5 + $0x32c] sm:$0xf]
    %v2626 = vld [vmem:[#allocation5 + $0x330] sm:$0xf]
    %v2627 = vld [vmem:[#allocation5 + $0x334] sm:$0xf]
    %v2628 = vld [vmem:[#allocation5 + $0x338] sm:$0xf]
    %v2629 = vld [vmem:[#allocation5 + $0x33c] sm:$0xf]
    %v2630 = vld [vmem:[#allocation10 + $0xa] sm:$0x1]
    %v2631 = vpack.c.bf16 %v2611, %v2611
    %v2632 = vperm.slane %v2630, 0
    %v2649 = vunpack.c.l.b16 %v2614
    %v2650 = vunpack.c.l.b16 %v2615
    %v2651 = vunpack.c.l.b16 %v2616
    %v2652 = vunpack.c.l.b16 %v2617
    %v2653 = vunpack.c.l.b16 %v2618
    %v2654 = vunpack.c.l.b16 %v2619
    %v2655 = vunpack.c.l.b16 %v2620
    %v2656 = vunpack.c.l.b16 %v2621
    %v2657 = vunpack.c.l.b16 %v2622
    %v2658 = vunpack.c.l.b16 %v2623
    %v2659 = vunpack.c.l.b16 %v2624
    %v2660 = vunpack.c.l.b16 %v2625
    %v2661 = vunpack.c.l.b16 %v2626
    %v2662 = vunpack.c.l.b16 %v2627
    %v2663 = vunpack.c.l.b16 %v2628
    %v2664 = vunpack.c.l.b16 %v2629
    %v2665 = vpack.c.b16 %v2650, %v2649
    %v2666 = vpack.c.b16 %v2652, %v2651
    %v2667 = vpack.c.b16 %v2654, %v2653
    %v2668 = vpack.c.b16 %v2656, %v2655
    %v2669 = vpack.c.b16 %v2658, %v2657
    %v2670 = vpack.c.b16 %v2660, %v2659
    %v2671 = vpack.c.b16 %v2662, %v2661
    %v2672 = vpack.c.b16 %v2664, %v2663
    %2681 = vmatpush.bf16.msra.mxu0 %v2672
    %2682 = vmatpush.bf16.msra.mxu0 %v2671
    %2683 = vmatpush.bf16.msra.mxu0 %v2670
    %2684 = vmatpush.bf16.msra.mxu0 %v2669
    %2685 = vmatpush.bf16.msra.mxu0 %v2668
    %2686 = vmatpush.bf16.msra.mxu0 %v2667
    %2687 = vmatpush.bf16.msra.mxu0 %v2666
    %2688 = vmatpush.bf16.msra.mxu0 %v2665
    %2689 = vmatmul.bf16.gmra.mxu0 %v2631
    %v2690 = vpop.f32.mrf.mxu0
    %v2691 = vadd.f32 %v2632, %v2690
    %v2692 = vpop.f32.mrf.mxu0
    %2693 = vdwg.mxu0
    %v2694 = vld [vmem:[#allocation5 + $0x340] sm:$0xf]
    %v2695 = vld [vmem:[#allocation5 + $0x344] sm:$0xf]
    %v2696 = vld [vmem:[#allocation5 + $0x348] sm:$0xf]
    %v2697 = vld [vmem:[#allocation5 + $0x34c] sm:$0xf]
    %v2698 = vld [vmem:[#allocation5 + $0x350] sm:$0xf]
    %v2699 = vld [vmem:[#allocation5 + $0x354] sm:$0xf]
    %v2700 = vld [vmem:[#allocation5 + $0x358] sm:$0xf]
    %v2701 = vld [vmem:[#allocation5 + $0x35c] sm:$0xf]
    %v2702 = vld [vmem:[#allocation5 + $0x360] sm:$0xf]
    %v2703 = vld [vmem:[#allocation5 + $0x364] sm:$0xf]
    %v2704 = vld [vmem:[#allocation5 + $0x368] sm:$0xf]
    %v2705 = vld [vmem:[#allocation5 + $0x36c] sm:$0xf]
    %v2706 = vld [vmem:[#allocation5 + $0x370] sm:$0xf]
    %v2707 = vld [vmem:[#allocation5 + $0x374] sm:$0xf]
    %v2708 = vld [vmem:[#allocation5 + $0x378] sm:$0xf]
    %v2709 = vld [vmem:[#allocation5 + $0x37c] sm:$0xf]
    %v2710 = vld [vmem:[#allocation10 + $0xb] sm:$0x1]
    %v2711 = vpack.c.bf16 %v2691, %v2691
    %v2712 = vperm.slane %v2710, 0
    %v2729 = vunpack.c.l.b16 %v2694
    %v2730 = vunpack.c.l.b16 %v2695
    %v2731 = vunpack.c.l.b16 %v2696
    %v2732 = vunpack.c.l.b16 %v2697
    %v2733 = vunpack.c.l.b16 %v2698
    %v2734 = vunpack.c.l.b16 %v2699
    %v2735 = vunpack.c.l.b16 %v2700
    %v2736 = vunpack.c.l.b16 %v2701
    %v2737 = vunpack.c.l.b16 %v2702
    %v2738 = vunpack.c.l.b16 %v2703
    %v2739 = vunpack.c.l.b16 %v2704
    %v2740 = vunpack.c.l.b16 %v2705
    %v2741 = vunpack.c.l.b16 %v2706
    %v2742 = vunpack.c.l.b16 %v2707
    %v2743 = vunpack.c.l.b16 %v2708
    %v2744 = vunpack.c.l.b16 %v2709
    %v2745 = vpack.c.b16 %v2730, %v2729
    %v2746 = vpack.c.b16 %v2732, %v2731
    %v2747 = vpack.c.b16 %v2734, %v2733
    %v2748 = vpack.c.b16 %v2736, %v2735
    %v2749 = vpack.c.b16 %v2738, %v2737
    %v2750 = vpack.c.b16 %v2740, %v2739
    %v2751 = vpack.c.b16 %v2742, %v2741
    %v2752 = vpack.c.b16 %v2744, %v2743
    %2761 = vmatpush.bf16.msra.mxu0 %v2752
    %2762 = vmatpush.bf16.msra.mxu0 %v2751
    %2763 = vmatpush.bf16.msra.mxu0 %v2750
    %2764 = vmatpush.bf16.msra.mxu0 %v2749
    %2765 = vmatpush.bf16.msra.mxu0 %v2748
    %2766 = vmatpush.bf16.msra.mxu0 %v2747
    %2767 = vmatpush.bf16.msra.mxu0 %v2746
    %2768 = vmatpush.bf16.msra.mxu0 %v2745
    %2769 = vmatmul.bf16.gmra.mxu0 %v2711
    %v2770 = vpop.f32.mrf.mxu0
    %v2771 = vadd.f32 %v2712, %v2770
    %v2772 = vpop.f32.mrf.mxu0
    %2773 = vdwg.mxu0
    %v2774 = vld [vmem:[#allocation5 + $0x380] sm:$0xf]
    %v2775 = vld [vmem:[#allocation5 + $0x384] sm:$0xf]
    %v2776 = vld [vmem:[#allocation5 + $0x388] sm:$0xf]
    %v2777 = vld [vmem:[#allocation5 + $0x38c] sm:$0xf]
    %v2778 = vld [vmem:[#allocation5 + $0x390] sm:$0xf]
    %v2779 = vld [vmem:[#allocation5 + $0x394] sm:$0xf]
    %v2780 = vld [vmem:[#allocation5 + $0x398] sm:$0xf]
    %v2781 = vld [vmem:[#allocation5 + $0x39c] sm:$0xf]
    %v2782 = vld [vmem:[#allocation5 + $0x3a0] sm:$0xf]
    %v2783 = vld [vmem:[#allocation5 + $0x3a4] sm:$0xf]
    %v2784 = vld [vmem:[#allocation5 + $0x3a8] sm:$0xf]
    %v2785 = vld [vmem:[#allocation5 + $0x3ac] sm:$0xf]
    %v2786 = vld [vmem:[#allocation5 + $0x3b0] sm:$0xf]
    %v2787 = vld [vmem:[#allocation5 + $0x3b4] sm:$0xf]
    %v2788 = vld [vmem:[#allocation5 + $0x3b8] sm:$0xf]
    %v2789 = vld [vmem:[#allocation5 + $0x3bc] sm:$0xf]
    %v2790 = vld [vmem:[#allocation10 + $0xc] sm:$0x1]
    %v2791 = vpack.c.bf16 %v2771, %v2771
    %v2792 = vperm.slane %v2790, 0
    %v2809 = vunpack.c.l.b16 %v2774
    %v2810 = vunpack.c.l.b16 %v2775
    %v2811 = vunpack.c.l.b16 %v2776
    %v2812 = vunpack.c.l.b16 %v2777
    %v2813 = vunpack.c.l.b16 %v2778
    %v2814 = vunpack.c.l.b16 %v2779
    %v2815 = vunpack.c.l.b16 %v2780
    %v2816 = vunpack.c.l.b16 %v2781
    %v2817 = vunpack.c.l.b16 %v2782
    %v2818 = vunpack.c.l.b16 %v2783
    %v2819 = vunpack.c.l.b16 %v2784
    %v2820 = vunpack.c.l.b16 %v2785
    %v2821 = vunpack.c.l.b16 %v2786
    %v2822 = vunpack.c.l.b16 %v2787
    %v2823 = vunpack.c.l.b16 %v2788
    %v2824 = vunpack.c.l.b16 %v2789
    %v2825 = vpack.c.b16 %v2810, %v2809
    %v2826 = vpack.c.b16 %v2812, %v2811
    %v2827 = vpack.c.b16 %v2814, %v2813
    %v2828 = vpack.c.b16 %v2816, %v2815
    %v2829 = vpack.c.b16 %v2818, %v2817
    %v2830 = vpack.c.b16 %v2820, %v2819
    %v2831 = vpack.c.b16 %v2822, %v2821
    %v2832 = vpack.c.b16 %v2824, %v2823
    %2841 = vmatpush.bf16.msra.mxu0 %v2832
    %2842 = vmatpush.bf16.msra.mxu0 %v2831
    %2843 = vmatpush.bf16.msra.mxu0 %v2830
    %2844 = vmatpush.bf16.msra.mxu0 %v2829
    %2845 = vmatpush.bf16.msra.mxu0 %v2828
    %2846 = vmatpush.bf16.msra.mxu0 %v2827
    %2847 = vmatpush.bf16.msra.mxu0 %v2826
    %2848 = vmatpush.bf16.msra.mxu0 %v2825
    %2849 = vmatmul.bf16.gmra.mxu0 %v2791
    %v2850 = vpop.f32.mrf.mxu0
    %v2851 = vadd.f32 %v2792, %v2850
    %v2852 = vpop.f32.mrf.mxu0
    %2853 = vdwg.mxu0
    %v2854 = vmax.f32 %v2851, 0.0
    %v2855 = vld [vmem:[#allocation5 + $0x3c0] sm:$0xf]
    %v2856 = vld [vmem:[#allocation5 + $0x3c4] sm:$0xf]
    %v2857 = vld [vmem:[#allocation5 + $0x3c8] sm:$0xf]
    %v2858 = vld [vmem:[#allocation5 + $0x3cc] sm:$0xf]
    %v2859 = vld [vmem:[#allocation5 + $0x3d0] sm:$0xf]
    %v2860 = vld [vmem:[#allocation5 + $0x3d4] sm:$0xf]
    %v2861 = vld [vmem:[#allocation5 + $0x3d8] sm:$0xf]
    %v2862 = vld [vmem:[#allocation5 + $0x3dc] sm:$0xf]
    %v2863 = vld [vmem:[#allocation5 + $0x3e0] sm:$0xf]
    %v2864 = vld [vmem:[#allocation5 + $0x3e4] sm:$0xf]
    %v2865 = vld [vmem:[#allocation5 + $0x3e8] sm:$0xf]
    %v2866 = vld [vmem:[#allocation5 + $0x3ec] sm:$0xf]
    %v2867 = vld [vmem:[#allocation5 + $0x3f0] sm:$0xf]
    %v2868 = vld [vmem:[#allocation5 + $0x3f4] sm:$0xf]
    %v2869 = vld [vmem:[#allocation5 + $0x3f8] sm:$0xf]
    %v2870 = vld [vmem:[#allocation5 + $0x3fc] sm:$0xf]
    %v2871 = vld [vmem:[#allocation10 + $0xd] sm:$0x1]
    %v2872 = vpack.c.bf16 %v2854, %v2854
    %v2873 = vperm.slane %v2871, 0
    %v2890 = vunpack.c.l.b16 %v2855
    %v2891 = vunpack.c.l.b16 %v2856
    %v2892 = vunpack.c.l.b16 %v2857
    %v2893 = vunpack.c.l.b16 %v2858
    %v2894 = vunpack.c.l.b16 %v2859
    %v2895 = vunpack.c.l.b16 %v2860
    %v2896 = vunpack.c.l.b16 %v2861
    %v2897 = vunpack.c.l.b16 %v2862
    %v2898 = vunpack.c.l.b16 %v2863
    %v2899 = vunpack.c.l.b16 %v2864
    %v2900 = vunpack.c.l.b16 %v2865
    %v2901 = vunpack.c.l.b16 %v2866
    %v2902 = vunpack.c.l.b16 %v2867
    %v2903 = vunpack.c.l.b16 %v2868
    %v2904 = vunpack.c.l.b16 %v2869
    %v2905 = vunpack.c.l.b16 %v2870
    %v2906 = vpack.c.b16 %v2891, %v2890
    %v2907 = vpack.c.b16 %v2893, %v2892
    %v2908 = vpack.c.b16 %v2895, %v2894
    %v2909 = vpack.c.b16 %v2897, %v2896
    %v2910 = vpack.c.b16 %v2899, %v2898
    %v2911 = vpack.c.b16 %v2901, %v2900
    %v2912 = vpack.c.b16 %v2903, %v2902
    %v2913 = vpack.c.b16 %v2905, %v2904
    %2922 = vmatpush.bf16.msra.mxu0 %v2913
    %2923 = vmatpush.bf16.msra.mxu0 %v2912
    %2924 = vmatpush.bf16.msra.mxu0 %v2911
    %2925 = vmatpush.bf16.msra.mxu0 %v2910
    %2926 = vmatpush.bf16.msra.mxu0 %v2909
    %2927 = vmatpush.bf16.msra.mxu0 %v2908
    %2928 = vmatpush.bf16.msra.mxu0 %v2907
    %2929 = vmatpush.bf16.msra.mxu0 %v2906
    %2930 = vmatmul.bf16.gmra.mxu0 %v2872
    %v2931 = vpop.f32.mrf.mxu0
    %v2932 = vadd.f32 %v2873, %v2931
    %v2933 = vpop.f32.mrf.mxu0
    %2934 = vdwg.mxu0
    %v2935 = vmax.f32 %v2932, 0.0
    %v2936 = vld [vmem:[#allocation5 + $0x400] sm:$0xf]
    %v2937 = vld [vmem:[#allocation5 + $0x404] sm:$0xf]
    %v2938 = vld [vmem:[#allocation5 + $0x408] sm:$0xf]
    %v2939 = vld [vmem:[#allocation5 + $0x40c] sm:$0xf]
    %v2940 = vld [vmem:[#allocation5 + $0x410] sm:$0xf]
    %v2941 = vld [vmem:[#allocation5 + $0x414] sm:$0xf]
    %v2942 = vld [vmem:[#allocation5 + $0x418] sm:$0xf]
    %v2943 = vld [vmem:[#allocation5 + $0x41c] sm:$0xf]
    %v2944 = vld [vmem:[#allocation5 + $0x420] sm:$0xf]
    %v2945 = vld [vmem:[#allocation5 + $0x424] sm:$0xf]
    %v2946 = vld [vmem:[#allocation5 + $0x428] sm:$0xf]
    %v2947 = vld [vmem:[#allocation5 + $0x42c] sm:$0xf]
    %v2948 = vld [vmem:[#allocation5 + $0x430] sm:$0xf]
    %v2949 = vld [vmem:[#allocation5 + $0x434] sm:$0xf]
    %v2950 = vld [vmem:[#allocation5 + $0x438] sm:$0xf]
    %v2951 = vld [vmem:[#allocation5 + $0x43c] sm:$0xf]
    %v2952 = vld [vmem:[#allocation10 + $0xe] sm:$0x1]
    %v2953 = vpack.c.bf16 %v2935, %v2935
    %v2954 = vperm.slane %v2952, 0
    %v2971 = vunpack.c.l.b16 %v2936
    %v2972 = vunpack.c.l.b16 %v2937
    %v2973 = vunpack.c.l.b16 %v2938
    %v2974 = vunpack.c.l.b16 %v2939
    %v2975 = vunpack.c.l.b16 %v2940
    %v2976 = vunpack.c.l.b16 %v2941
    %v2977 = vunpack.c.l.b16 %v2942
    %v2978 = vunpack.c.l.b16 %v2943
    %v2979 = vunpack.c.l.b16 %v2944
    %v2980 = vunpack.c.l.b16 %v2945
    %v2981 = vunpack.c.l.b16 %v2946
    %v2982 = vunpack.c.l.b16 %v2947
    %v2983 = vunpack.c.l.b16 %v2948
    %v2984 = vunpack.c.l.b16 %v2949
    %v2985 = vunpack.c.l.b16 %v2950
    %v2986 = vunpack.c.l.b16 %v2951
    %v2987 = vpack.c.b16 %v2972, %v2971
    %v2988 = vpack.c.b16 %v2974, %v2973
    %v2989 = vpack.c.b16 %v2976, %v2975
    %v2990 = vpack.c.b16 %v2978, %v2977
    %v2991 = vpack.c.b16 %v2980, %v2979
    %v2992 = vpack.c.b16 %v2982, %v2981
    %v2993 = vpack.c.b16 %v2984, %v2983
    %v2994 = vpack.c.b16 %v2986, %v2985
    %3003 = vmatpush.bf16.msra.mxu0 %v2994
    %3004 = vmatpush.bf16.msra.mxu0 %v2993
    %3005 = vmatpush.bf16.msra.mxu0 %v2992
    %3006 = vmatpush.bf16.msra.mxu0 %v2991
    %3007 = vmatpush.bf16.msra.mxu0 %v2990
    %3008 = vmatpush.bf16.msra.mxu0 %v2989
    %3009 = vmatpush.bf16.msra.mxu0 %v2988
    %3010 = vmatpush.bf16.msra.mxu0 %v2987
    %3011 = vmatmul.bf16.gmra.mxu0 %v2953
    %v3012 = vpop.f32.mrf.mxu0
    %v3013 = vadd.f32 %v2954, %v3012
    %v3014 = vpop.f32.mrf.mxu0
    %3015 = vdwg.mxu0
    %v3016 = vmax.f32 %v3013, 0.0
    %v3017 = vld [vmem:[#allocation5 + $0x440] sm:$0xf]
    %v3018 = vld [vmem:[#allocation5 + $0x444] sm:$0xf]
    %v3019 = vld [vmem:[#allocation5 + $0x448] sm:$0xf]
    %v3020 = vld [vmem:[#allocation5 + $0x44c] sm:$0xf]
    %v3021 = vld [vmem:[#allocation5 + $0x450] sm:$0xf]
    %v3022 = vld [vmem:[#allocation5 + $0x454] sm:$0xf]
    %v3023 = vld [vmem:[#allocation5 + $0x458] sm:$0xf]
    %v3024 = vld [vmem:[#allocation5 + $0x45c] sm:$0xf]
    %v3025 = vld [vmem:[#allocation5 + $0x460] sm:$0xf]
    %v3026 = vld [vmem:[#allocation5 + $0x464] sm:$0xf]
    %v3027 = vld [vmem:[#allocation5 + $0x468] sm:$0xf]
    %v3028 = vld [vmem:[#allocation5 + $0x46c] sm:$0xf]
    %v3029 = vld [vmem:[#allocation5 + $0x470] sm:$0xf]
    %v3030 = vld [vmem:[#allocation5 + $0x474] sm:$0xf]
    %v3031 = vld [vmem:[#allocation5 + $0x478] sm:$0xf]
    %v3032 = vld [vmem:[#allocation5 + $0x47c] sm:$0xf]
    %v3033 = vld [vmem:[#allocation10 + $0xf] sm:$0x1]
    %v3034 = vpack.c.bf16 %v3016, %v3016
    %v3035 = vperm.slane %v3033, 0
    %v3052 = vunpack.c.l.b16 %v3017
    %v3053 = vunpack.c.l.b16 %v3018
    %v3054 = vunpack.c.l.b16 %v3019
    %v3055 = vunpack.c.l.b16 %v3020
    %v3056 = vunpack.c.l.b16 %v3021
    %v3057 = vunpack.c.l.b16 %v3022
    %v3058 = vunpack.c.l.b16 %v3023
    %v3059 = vunpack.c.l.b16 %v3024
    %v3060 = vunpack.c.l.b16 %v3025
    %v3061 = vunpack.c.l.b16 %v3026
    %v3062 = vunpack.c.l.b16 %v3027
    %v3063 = vunpack.c.l.b16 %v3028
    %v3064 = vunpack.c.l.b16 %v3029
    %v3065 = vunpack.c.l.b16 %v3030
    %v3066 = vunpack.c.l.b16 %v3031
    %v3067 = vunpack.c.l.b16 %v3032
    %v3068 = vpack.c.b16 %v3053, %v3052
    %v3069 = vpack.c.b16 %v3055, %v3054
    %v3070 = vpack.c.b16 %v3057, %v3056
    %v3071 = vpack.c.b16 %v3059, %v3058
    %v3072 = vpack.c.b16 %v3061, %v3060
    %v3073 = vpack.c.b16 %v3063, %v3062
    %v3074 = vpack.c.b16 %v3065, %v3064
    %v3075 = vpack.c.b16 %v3067, %v3066
    %3084 = vmatpush.bf16.msra.mxu0 %v3075
    %3085 = vmatpush.bf16.msra.mxu0 %v3074
    %3086 = vmatpush.bf16.msra.mxu0 %v3073
    %3087 = vmatpush.bf16.msra.mxu0 %v3072
    %3088 = vmatpush.bf16.msra.mxu0 %v3071
    %3089 = vmatpush.bf16.msra.mxu0 %v3070
    %3090 = vmatpush.bf16.msra.mxu0 %v3069
    %3091 = vmatpush.bf16.msra.mxu0 %v3068
    %3092 = vmatmul.bf16.gmra.mxu0 %v3034
    %v3093 = vpop.f32.mrf.mxu0
    %v3094 = vadd.f32 %v3035, %v3093
    %v3095 = vpop.f32.mrf.mxu0
    %3096 = vdwg.mxu0
    %v3097 = vmax.f32 %v3094, 0.0
    %v3098 = vld [vmem:[#allocation8] sm:$0xff]
    %v3099 = vld [vmem:[#allocation8 + $0x8] sm:$0xff]
    %v3100 = vld [vmem:[#allocation8 + $0x10] sm:$0xff]
    %v3101 = vld [vmem:[#allocation8 + $0x18] sm:$0xf]
    %v3102 = vld [vmem:[#allocation8 + $0x1c] sm:$0xff]
    %v3103 = vld [vmem:[#allocation8 + $0x24] sm:$0xff]
    %v3104 = vld [vmem:[#allocation8 + $0x2c] sm:$0xff]
    %v3105 = vld [vmem:[#allocation8 + $0x34] sm:$0xf]
    %v3106 = vld [vmem:[#allocation8 + $0x38] sm:$0xff]
    %v3107 = vld [vmem:[#allocation8 + $0x40] sm:$0xff]
    %v3108 = vld [vmem:[#allocation8 + $0x48] sm:$0xff]
    %v3109 = vld [vmem:[#allocation8 + $0x50] sm:$0xf]
    %v3110 = vld [vmem:[#allocation8 + $0x54] sm:$0xff]
    %v3111 = vld [vmem:[#allocation8 + $0x5c] sm:$0xff]
    %v3112 = vld [vmem:[#allocation8 + $0x64] sm:$0xff]
    %v3113 = vld [vmem:[#allocation8 + $0x6c] sm:$0xf]
    %v3114 = vld [vmem:[#allocation8 + $0x70] sm:$0xff]
    %v3115 = vld [vmem:[#allocation8 + $0x78] sm:$0xff]
    %v3116 = vld [vmem:[#allocation8 + $0x80] sm:$0xff]
    %v3117 = vld [vmem:[#allocation8 + $0x88] sm:$0xf]
    %v3118 = vld [vmem:[#allocation8 + $0x8c] sm:$0xff]
    %v3119 = vld [vmem:[#allocation8 + $0x94] sm:$0xff]
    %v3120 = vld [vmem:[#allocation8 + $0x9c] sm:$0xff]
    %v3121 = vld [vmem:[#allocation8 + $0xa4] sm:$0xf]
    %v3122 = vld [vmem:[#allocation8 + $0xa8] sm:$0xff]
    %v3123 = vld [vmem:[#allocation8 + $0xb0] sm:$0xff]
    %v3124 = vld [vmem:[#allocation8 + $0xb8] sm:$0xff]
    %v3125 = vld [vmem:[#allocation8 + $0xc0] sm:$0xf]
    %v3126 = vld [vmem:[#allocation8 + $0xc4] sm:$0xff]
    %v3127 = vld [vmem:[#allocation8 + $0xcc] sm:$0xff]
    %v3128 = vld [vmem:[#allocation8 + $0xd4] sm:$0xff]
    %v3129 = vld [vmem:[#allocation8 + $0xdc] sm:$0xf]
    %v3130 = vld [vmem:[#allocation8 + $0xe0] sm:$0xff]
    %v3131 = vld [vmem:[#allocation8 + $0xe8] sm:$0xff]
    %v3132 = vld [vmem:[#allocation8 + $0xf0] sm:$0xff]
    %v3133 = vld [vmem:[#allocation8 + $0xf8] sm:$0xf]
    %v3134 = vld [vmem:[#allocation8 + $0xfc] sm:$0xff]
    %v3135 = vld [vmem:[#allocation8 + $0x104] sm:$0xff]
    %v3136 = vld [vmem:[#allocation8 + $0x10c] sm:$0xff]
    %v3137 = vld [vmem:[#allocation8 + $0x114] sm:$0xf]
    %v3138 = vld [vmem:[#allocation8 + $0x118] sm:$0xff]
    %v3139 = vld [vmem:[#allocation8 + $0x120] sm:$0xff]
    %v3140 = vld [vmem:[#allocation8 + $0x128] sm:$0xff]
    %v3141 = vld [vmem:[#allocation8 + $0x130] sm:$0xf]
    %v3142 = vld [vmem:[#allocation8 + $0x134] sm:$0xff]
    %v3143 = vld [vmem:[#allocation8 + $0x13c] sm:$0xff]
    %v3144 = vld [vmem:[#allocation8 + $0x144] sm:$0xff]
    %v3145 = vld [vmem:[#allocation8 + $0x14c] sm:$0xf]
    %v3146 = vld [vmem:[#allocation8 + $0x150] sm:$0xff]
    %v3147 = vld [vmem:[#allocation8 + $0x158] sm:$0xff]
    %v3148 = vld [vmem:[#allocation8 + $0x160] sm:$0xff]
    %v3149 = vld [vmem:[#allocation8 + $0x168] sm:$0xf]
    %v3150 = vld [vmem:[#allocation8 + $0x16c] sm:$0xff]
    %v3151 = vld [vmem:[#allocation8 + $0x174] sm:$0xff]
    %v3152 = vld [vmem:[#allocation8 + $0x17c] sm:$0xff]
    %v3153 = vld [vmem:[#allocation8 + $0x184] sm:$0xf]
    %v3154 = vld [vmem:[#allocation8 + $0x188] sm:$0xff]
    %v3155 = vld [vmem:[#allocation8 + $0x190] sm:$0xff]
    %v3156 = vld [vmem:[#allocation8 + $0x198] sm:$0xff]
    %v3157 = vld [vmem:[#allocation8 + $0x1a0] sm:$0xf]
    %v3158 = vld [vmem:[#allocation8 + $0x1a4] sm:$0xff]
    %v3159 = vld [vmem:[#allocation8 + $0x1ac] sm:$0xff]
    %v3160 = vld [vmem:[#allocation8 + $0x1b4] sm:$0xff]
    %v3161 = vld [vmem:[#allocation8 + $0x1bc] sm:$0xf]
    %v3162 = vld [vmem:[#allocation13] ss:$8 sm:$0xf]
    %v3163 = vld [vmem:[#allocation13] ss:$8 sm:$0xf0]
    %v3164 = vor.u32 %v3162, %v3163
    %v3165 = vpack.c.bf16 %v3097, %v3097
    %v3167 = vperm.slane %v3164, 0
    %v3168 = vperm.slane %v3164, 1
    %v3169 = vperm.slane %v3164, 2
    %v3170 = vperm.slane %v3164, 3
    %v3171 = vperm.slane %v3164, 4
    %v3172 = vperm.slane %v3164, 5
    %v3173 = vperm.slane %v3164, 6
    %v3245 = vunpack.c.l.b16 %v3098
    %v3246 = vunpack.c.h.b16 %v3098
    %v3247 = vunpack.c.l.b16 %v3099
    %v3248 = vunpack.c.h.b16 %v3099
    %v3249 = vunpack.c.l.b16 %v3100
    %v3250 = vunpack.c.h.b16 %v3100
    %v3251 = vunpack.c.l.b16 %v3101
    %v3252 = vunpack.c.l.b16 %v3102
    %v3253 = vunpack.c.h.b16 %v3102
    %v3254 = vunpack.c.l.b16 %v3103
    %v3255 = vunpack.c.h.b16 %v3103
    %v3256 = vunpack.c.l.b16 %v3104
    %v3257 = vunpack.c.h.b16 %v3104
    %v3258 = vunpack.c.l.b16 %v3105
    %v3259 = vunpack.c.l.b16 %v3106
    %v3260 = vunpack.c.h.b16 %v3106
    %v3261 = vunpack.c.l.b16 %v3107
    %v3262 = vunpack.c.h.b16 %v3107
    %v3263 = vunpack.c.l.b16 %v3108
    %v3264 = vunpack.c.h.b16 %v3108
    %v3265 = vunpack.c.l.b16 %v3109
    %v3266 = vunpack.c.l.b16 %v3110
    %v3267 = vunpack.c.h.b16 %v3110
    %v3268 = vunpack.c.l.b16 %v3111
    %v3269 = vunpack.c.h.b16 %v3111
    %v3270 = vunpack.c.l.b16 %v3112
    %v3271 = vunpack.c.h.b16 %v3112
    %v3272 = vunpack.c.l.b16 %v3113
    %v3273 = vunpack.c.l.b16 %v3114
    %v3274 = vunpack.c.h.b16 %v3114
    %v3275 = vunpack.c.l.b16 %v3115
    %v3276 = vunpack.c.h.b16 %v3115
    %v3277 = vunpack.c.l.b16 %v3116
    %v3278 = vunpack.c.h.b16 %v3116
    %v3279 = vunpack.c.l.b16 %v3117
    %v3280 = vunpack.c.l.b16 %v3118
    %v3281 = vunpack.c.h.b16 %v3118
    %v3282 = vunpack.c.l.b16 %v3119
    %v3283 = vunpack.c.h.b16 %v3119
    %v3284 = vunpack.c.l.b16 %v3120
    %v3285 = vunpack.c.h.b16 %v3120
    %v3286 = vunpack.c.l.b16 %v3121
    %v3287 = vunpack.c.l.b16 %v3122
    %v3288 = vunpack.c.h.b16 %v3122
    %v3289 = vunpack.c.l.b16 %v3123
    %v3290 = vunpack.c.h.b16 %v3123
    %v3291 = vunpack.c.l.b16 %v3124
    %v3292 = vunpack.c.h.b16 %v3124
    %v3293 = vunpack.c.l.b16 %v3125
    %v3294 = vunpack.c.l.b16 %v3126
    %v3295 = vunpack.c.h.b16 %v3126
    %v3296 = vunpack.c.l.b16 %v3127
    %v3297 = vunpack.c.h.b16 %v3127
    %v3298 = vunpack.c.l.b16 %v3128
    %v3299 = vunpack.c.h.b16 %v3128
    %v3300 = vunpack.c.l.b16 %v3129
    %v3301 = vunpack.c.l.b16 %v3130
    %v3302 = vunpack.c.h.b16 %v3130
    %v3303 = vunpack.c.l.b16 %v3131
    %v3304 = vunpack.c.h.b16 %v3131
    %v3305 = vunpack.c.l.b16 %v3132
    %v3306 = vunpack.c.h.b16 %v3132
    %v3307 = vunpack.c.l.b16 %v3133
    %v3308 = vunpack.c.l.b16 %v3134
    %v3309 = vunpack.c.h.b16 %v3134
    %v3310 = vunpack.c.l.b16 %v3135
    %v3311 = vunpack.c.h.b16 %v3135
    %v3312 = vunpack.c.l.b16 %v3136
    %v3313 = vunpack.c.h.b16 %v3136
    %v3314 = vunpack.c.l.b16 %v3137
    %v3315 = vunpack.c.l.b16 %v3138
    %v3316 = vunpack.c.h.b16 %v3138
    %v3317 = vunpack.c.l.b16 %v3139
    %v3318 = vunpack.c.h.b16 %v3139
    %v3319 = vunpack.c.l.b16 %v3140
    %v3320 = vunpack.c.h.b16 %v3140
    %v3321 = vunpack.c.l.b16 %v3141
    %v3322 = vunpack.c.l.b16 %v3142
    %v3323 = vunpack.c.h.b16 %v3142
    %v3324 = vunpack.c.l.b16 %v3143
    %v3325 = vunpack.c.h.b16 %v3143
    %v3326 = vunpack.c.l.b16 %v3144
    %v3327 = vunpack.c.h.b16 %v3144
    %v3328 = vunpack.c.l.b16 %v3145
    %v3329 = vunpack.c.l.b16 %v3146
    %v3330 = vunpack.c.h.b16 %v3146
    %v3331 = vunpack.c.l.b16 %v3147
    %v3332 = vunpack.c.h.b16 %v3147
    %v3333 = vunpack.c.l.b16 %v3148
    %v3334 = vunpack.c.h.b16 %v3148
    %v3335 = vunpack.c.l.b16 %v3149
    %v3336 = vunpack.c.l.b16 %v3150
    %v3337 = vunpack.c.h.b16 %v3150
    %v3338 = vunpack.c.l.b16 %v3151
    %v3339 = vunpack.c.h.b16 %v3151
    %v3340 = vunpack.c.l.b16 %v3152
    %v3341 = vunpack.c.h.b16 %v3152
    %v3342 = vunpack.c.l.b16 %v3153
    %v3343 = vunpack.c.l.b16 %v3154
    %v3344 = vunpack.c.h.b16 %v3154
    %v3345 = vunpack.c.l.b16 %v3155
    %v3346 = vunpack.c.h.b16 %v3155
    %v3347 = vunpack.c.l.b16 %v3156
    %v3348 = vunpack.c.h.b16 %v3156
    %v3349 = vunpack.c.l.b16 %v3157
    %v3350 = vunpack.c.l.b16 %v3158
    %v3351 = vunpack.c.h.b16 %v3158
    %v3352 = vunpack.c.l.b16 %v3159
    %v3353 = vunpack.c.h.b16 %v3159
    %v3354 = vunpack.c.l.b16 %v3160
    %v3355 = vunpack.c.h.b16 %v3160
    %v3356 = vunpack.c.l.b16 %v3161
    %v3357 = vpack.c.b16 %v3252, %v3245
    %v3358 = vpack.c.b16 %v3253, %v3246
    %v3359 = vpack.c.b16 %v3254, %v3247
    %v3360 = vpack.c.b16 %v3255, %v3248
    %v3361 = vpack.c.b16 %v3256, %v3249
    %v3362 = vpack.c.b16 %v3257, %v3250
    %v3363 = vpack.c.b16 %v3258, %v3251
    %v3364 = vpack.c.b16 %v3266, %v3259
    %v3365 = vpack.c.b16 %v3267, %v3260
    %v3366 = vpack.c.b16 %v3268, %v3261
    %v3367 = vpack.c.b16 %v3269, %v3262
    %v3368 = vpack.c.b16 %v3270, %v3263
    %v3369 = vpack.c.b16 %v3271, %v3264
    %v3370 = vpack.c.b16 %v3272, %v3265
    %v3371 = vpack.c.b16 %v3280, %v3273
    %v3372 = vpack.c.b16 %v3281, %v3274
    %v3373 = vpack.c.b16 %v3282, %v3275
    %v3374 = vpack.c.b16 %v3283, %v3276
    %v3375 = vpack.c.b16 %v3284, %v3277
    %v3376 = vpack.c.b16 %v3285, %v3278
    %v3377 = vpack.c.b16 %v3286, %v3279
    %v3378 = vpack.c.b16 %v3294, %v3287
    %v3379 = vpack.c.b16 %v3295, %v3288
    %v3380 = vpack.c.b16 %v3296, %v3289
    %v3381 = vpack.c.b16 %v3297, %v3290
    %v3382 = vpack.c.b16 %v3298, %v3291
    %v3383 = vpack.c.b16 %v3299, %v3292
    %v3384 = vpack.c.b16 %v3300, %v3293
    %v3385 = vpack.c.b16 %v3308, %v3301
    %v3386 = vpack.c.b16 %v3309, %v3302
    %v3387 = vpack.c.b16 %v3310, %v3303
    %v3388 = vpack.c.b16 %v3311, %v3304
    %v3389 = vpack.c.b16 %v3312, %v3305
    %v3390 = vpack.c.b16 %v3313, %v3306
    %v3391 = vpack.c.b16 %v3314, %v3307
    %v3392 = vpack.c.b16 %v3322, %v3315
    %v3393 = vpack.c.b16 %v3323, %v3316
    %v3394 = vpack.c.b16 %v3324, %v3317
    %v3395 = vpack.c.b16 %v3325, %v3318
    %v3396 = vpack.c.b16 %v3326, %v3319
    %v3397 = vpack.c.b16 %v3327, %v3320
    %v3398 = vpack.c.b16 %v3328, %v3321
    %v3399 = vpack.c.b16 %v3336, %v3329
    %v3400 = vpack.c.b16 %v3337, %v3330
    %v3401 = vpack.c.b16 %v3338, %v3331
    %v3402 = vpack.c.b16 %v3339, %v3332
    %v3403 = vpack.c.b16 %v3340, %v3333
    %v3404 = vpack.c.b16 %v3341, %v3334
    %v3405 = vpack.c.b16 %v3342, %v3335
    %v3406 = vpack.c.b16 %v3350, %v3343
    %v3407 = vpack.c.b16 %v3351, %v3344
    %v3408 = vpack.c.b16 %v3352, %v3345
    %v3409 = vpack.c.b16 %v3353, %v3346
    %v3410 = vpack.c.b16 %v3354, %v3347
    %v3411 = vpack.c.b16 %v3355, %v3348
    %v3412 = vpack.c.b16 %v3356, %v3349
    %3469 = vmatpush.bf16.msra.mxu0 %v3406
    %3470 = vmatpush.bf16.msra.mxu0 %v3399
    %3471 = vmatpush.bf16.msra.mxu0 %v3392
    %3472 = vmatpush.bf16.msra.mxu0 %v3385
    %3473 = vmatpush.bf16.msra.mxu0 %v3378
    %3474 = vmatpush.bf16.msra.mxu0 %v3371
    %3475 = vmatpush.bf16.msra.mxu0 %v3364
    %3476 = vmatpush.bf16.msra.mxu0 %v3357
    %3477 = vmatmul.bf16.gmra.mxu0 %v3165
    %v3478 = vpop.f32.mrf.mxu0
    %v3479 = vadd.f32 %v3167, %v3478
    %v3480 = vpop.f32.mrf.mxu0
    %3481 = vdwg.mxu0
    %3482 = vmatpush.bf16.msra.mxu0 %v3407
    %3483 = vmatpush.bf16.msra.mxu0 %v3400
    %3484 = vmatpush.bf16.msra.mxu0 %v3393
    %3485 = vmatpush.bf16.msra.mxu0 %v3386
    %3486 = vmatpush.bf16.msra.mxu0 %v3379
    %3487 = vmatpush.bf16.msra.mxu0 %v3372
    %3488 = vmatpush.bf16.msra.mxu0 %v3365
    %3489 = vmatpush.bf16.msra.mxu0 %v3358
    %3490 = vmatmul.bf16.gmra.mxu0 %v3165
    %v3491 = vpop.f32.mrf.mxu0
    %v3492 = vadd.f32 %v3168, %v3491
    %v3493 = vpop.f32.mrf.mxu0
    %3494 = vdwg.mxu0
    %3495 = vmatpush.bf16.msra.mxu0 %v3408
    %3496 = vmatpush.bf16.msra.mxu0 %v3401
    %3497 = vmatpush.bf16.msra.mxu0 %v3394
    %3498 = vmatpush.bf16.msra.mxu0 %v3387
    %3499 = vmatpush.bf16.msra.mxu0 %v3380
    %3500 = vmatpush.bf16.msra.mxu0 %v3373
    %3501 = vmatpush.bf16.msra.mxu0 %v3366
    %3502 = vmatpush.bf16.msra.mxu0 %v3359
    %3503 = vmatmul.bf16.gmra.mxu0 %v3165
    %v3504 = vpop.f32.mrf.mxu0
    %v3505 = vadd.f32 %v3169, %v3504
    %v3506 = vpop.f32.mrf.mxu0
    %3507 = vdwg.mxu0
    %3508 = vmatpush.bf16.msra.mxu0 %v3409
    %3509 = vmatpush.bf16.msra.mxu0 %v3402
    %3510 = vmatpush.bf16.msra.mxu0 %v3395
    %3511 = vmatpush.bf16.msra.mxu0 %v3388
    %3512 = vmatpush.bf16.msra.mxu0 %v3381
    %3513 = vmatpush.bf16.msra.mxu0 %v3374
    %3514 = vmatpush.bf16.msra.mxu0 %v3367
    %3515 = vmatpush.bf16.msra.mxu0 %v3360
    %3516 = vmatmul.bf16.gmra.mxu0 %v3165
    %v3517 = vpop.f32.mrf.mxu0
    %v3518 = vadd.f32 %v3170, %v3517
    %v3519 = vpop.f32.mrf.mxu0
    %3520 = vdwg.mxu0
    %3521 = vmatpush.bf16.msra.mxu0 %v3410
    %3522 = vmatpush.bf16.msra.mxu0 %v3403
    %3523 = vmatpush.bf16.msra.mxu0 %v3396
    %3524 = vmatpush.bf16.msra.mxu0 %v3389
    %3525 = vmatpush.bf16.msra.mxu0 %v3382
    %3526 = vmatpush.bf16.msra.mxu0 %v3375
    %3527 = vmatpush.bf16.msra.mxu0 %v3368
    %3528 = vmatpush.bf16.msra.mxu0 %v3361
    %3529 = vmatmul.bf16.gmra.mxu0 %v3165
    %v3530 = vpop.f32.mrf.mxu0
    %v3531 = vadd.f32 %v3171, %v3530
    %v3532 = vpop.f32.mrf.mxu0
    %3533 = vdwg.mxu0
    %3534 = vmatpush.bf16.msra.mxu0 %v3411
    %3535 = vmatpush.bf16.msra.mxu0 %v3404
    %3536 = vmatpush.bf16.msra.mxu0 %v3397
    %3537 = vmatpush.bf16.msra.mxu0 %v3390
    %3538 = vmatpush.bf16.msra.mxu0 %v3383
    %3539 = vmatpush.bf16.msra.mxu0 %v3376
    %3540 = vmatpush.bf16.msra.mxu0 %v3369
    %3541 = vmatpush.bf16.msra.mxu0 %v3362
    %3542 = vmatmul.bf16.gmra.mxu0 %v3165
    %v3543 = vpop.f32.mrf.mxu0
    %v3544 = vadd.f32 %v3172, %v3543
    %v3545 = vpop.f32.mrf.mxu0
    %3546 = vdwg.mxu0
    %3547 = vmatpush.bf16.msra.mxu0 %v3412
    %3548 = vmatpush.bf16.msra.mxu0 %v3405
    %3549 = vmatpush.bf16.msra.mxu0 %v3398
    %3550 = vmatpush.bf16.msra.mxu0 %v3391
    %3551 = vmatpush.bf16.msra.mxu0 %v3384
    %3552 = vmatpush.bf16.msra.mxu0 %v3377
    %3553 = vmatpush.bf16.msra.mxu0 %v3370
    %3554 = vmatpush.bf16.msra.mxu0 %v3363
    %3555 = vmatmul.bf16.gmra.mxu0 %v3165
    %v3556 = vpop.f32.mrf.mxu0
    %v3557 = vadd.f32 %v3173, %v3556
    %v3558 = vpop.f32.mrf.mxu0
    %3559 = vdwg.mxu0
    %v3560 = vsub.f32 0.0, %v3479
    %v3561 = vsub.f32 0.0, %v3492
    %v3562 = vsub.f32 0.0, %v3505
    %v3563 = vsub.f32 0.0, %v3518
    %v3564 = vsub.f32 0.0, %v3531
    %v3565 = vsub.f32 0.0, %v3544
    %v3566 = vsub.f32 0.0, %v3557
    %v3567 = vmul.f32 %v3560, 1.442695
    %v3568 = vpow.pop %v3567
    %v3569 = vmul.f32 %v3561, 1.442695
    %v3570 = vpow.pop %v3569
    %v3571 = vmul.f32 %v3562, 1.442695
    %v3572 = vpow.pop %v3571
    %v3573 = vmul.f32 %v3563, 1.442695
    %v3574 = vpow.pop %v3573
    %v3575 = vmul.f32 %v3564, 1.442695
    %v3576 = vpow.pop %v3575
    %v3577 = vmul.f32 %v3565, 1.442695
    %v3578 = vpow.pop %v3577
    %v3579 = vmul.f32 %v3566, 1.442695
    %v3580 = vpow.pop %v3579
    %v3581 = vadd.f32 %v3568, 1.0
    %v3582 = vadd.f32 %v3570, 1.0
    %v3583 = vadd.f32 %v3572, 1.0
    %v3584 = vadd.f32 %v3574, 1.0
    %v3585 = vadd.f32 %v3576, 1.0
    %v3586 = vadd.f32 %v3578, 1.0
    %v3587 = vadd.f32 %v3580, 1.0
    %v3588 = vrcp.pop %v3581
    %v3589 = vrcp.pop %v3582
    %v3590 = vrcp.pop %v3583
    %v3591 = vrcp.pop %v3584
    %v3592 = vrcp.pop %v3585
    %v3593 = vrcp.pop %v3586
    %v3594 = vrcp.pop %v3587
    %v3595 = vpack.c.bf16 %v3589, %v3588
    %v3596 = vpack.c.bf16 %v3591, %v3590
    %v3597 = vpack.c.bf16 %v3593, %v3592
    %v3598 = vpack.c.bf16 %v3594, %v3594
    %3599 = vst [vmem:[#allocation14] sm:$0xff] %v3595
    %3600 = vst [vmem:[#allocation14 + $0x8] sm:$0xff] %v3596
    %3601 = vst [vmem:[#allocation14 + $0x10] sm:$0xff] %v3597
    %3602 = vst [vmem:[#allocation14 + $0x18] sm:$0xf] %v3598
    // Predicated region
    $region58: #{tpu_custom_call.1} parent=1 // pred_check
      _
    $region59: #{tpu_custom_call.1} parent=1 // pred_check_branch
      %3604 = sbr.rel (0) target = $region61
    $region60: #{tpu_custom_call.1} parent=1 // pred_region
      %3606 = vsyncadd [#allocation4], 0
      %s3608 = sshll.u32 [#allocation14], 4
      %s3609 = int_to_ptr.vmem [resolvable:$true] %s3608
      %s3610 = sshll.u32 %s7, 4
      %s3611 = int_to_ptr.hbm [resolvable:$true] %s3610
      %3613 = dma.vmem_to_hbm [thread:$0]  %s3609, 448, %s3611, [#allocation4]
    $region61: #{tpu_custom_call.1} parent=1 // pred_fallthru
      _
    // Predicated region
    $region62: #{tpu_custom_call.1} parent=1 // pred_check
      _
    $region63: #{tpu_custom_call.1} parent=1 // pred_check_branch
      %3615 = sbr.rel (0) target = $region65
    $region64: #{tpu_custom_call.1} parent=1 // pred_region
      %3617 = dma.done [#allocation4], 448
    $region65: #{tpu_custom_call.1} parent=1 // pred_fallthru
      _
    %3618 = vsyncpa [#allocation3], 1
    %3619 = vsyncpa [#allocation6], 1
    %3620 = vsyncpa [#allocation9], 1
    %3621 = vsyncpa [#allocation12], 1
    %3622 = vsyncpa [#allocation4], 1

// kernel: tpu_custom_call.1
$region0: #{tpu_custom_call.1}
  #allocation0 [shape = 'u32[]', space=smem, size = 0x4, offset = 0x4, fixed_abs, tag = 'smem constant byte address 0x4 - core index']
  #allocation1 [shape = 'u32[72,128]{1,0:T(1,128)}', space=vmem, size = 0x9000, scoped, tag = 'internal scratch']
  %s0 = inlined_call_operand.hbm [shape: bf16[8,896], index: 0, kind: input, shape index: {}]
  %s1 = inlined_call_operand.hbm [shape: bf16[2304,128], index: 1, kind: input, shape index: {}]
  %s2 = inlined_call_operand.hbm [shape: bf16[1536,256], index: 2, kind: input, shape index: {}]
  %s3 = inlined_call_operand.hbm [shape: bf16[128,896], index: 3, kind: input, shape index: {}]
  %s4 = inlined_call_operand.hbm [shape: f32[16,128], index: 4, kind: input, shape index: {}]
  %s5 = inlined_call_operand.hbm [shape: f32[8,256], index: 5, kind: input, shape index: {}]
  %s6 = inlined_call_operand.hbm [shape: f32[8,896], index: 6, kind: input, shape index: {}]
  %s7 = inlined_call_operand.hbm [shape: bf16[8,896], index: 7, kind: output, shape index: {}]
  %s8 = sld [smem:[#allocation0]]
  $region66: #{tpu_custom_call.1} parent=0
    _
  %s10 = ssub.s32 1, %s8
  %s11 = scalar_select 0, %s10, %s8
  $region1: #{tpu_custom_call.1} parent=0
    #allocation2 [shape = 'u8[14336]{0}', space=vmem, size = 0x3800, scoped, tag = 'input window, operand 0, single buffered']
    #allocation3 [shape = 's32[1]{0}', space=sflag, size = 0x4, scoped, tag = 'scoped memory for tpu_custom_call.1']
    #allocation4 [shape = 's32[1]{0}', space=sflag, size = 0x4, scoped, tag = 'scoped memory for tpu_custom_call.1']
    #allocation5 [shape = 'u8[589824]{0}', space=vmem, size = 0x90000, scoped, tag = 'input window, operand 1, single buffered']
    #allocation6 [shape = 's32[1]{0}', space=sflag, size = 0x4, scoped, tag = 'scoped memory for tpu_custom_call.1']
    #allocation7 [shape = 'u8[786432]{0}', space=vmem, size = 0xc0000, scoped, tag = 'input window, operand 2, single buffered']
    #allocation8 [shape = 'u8[229376]{0}', space=vmem, size = 0x38000, scoped, tag = 'input window, operand 3, single buffered']
    #allocation9 [shape = 's32[1]{0}', space=sflag, size = 0x4, scoped, tag = 'scoped memory for tpu_custom_call.1']
    #allocation10 [shape = 'u8[8192]{0}', space=vmem, size = 0x2000, scoped, tag = 'input window, operand 4, single buffered']
    #allocation11 [shape = 'u8[8192]{0}', space=vmem, size = 0x2000, scoped, tag = 'input window, operand 5, single buffered']
    #allocation12 [shape = 's32[1]{0}', space=sflag, size = 0x4, scoped, tag = 'scoped memory for tpu_custom_call.1']
    #allocation13 [shape = 'u8[28672]{0}', space=vmem, size = 0x7000, scoped, tag = 'input window, operand 6, single buffered']
    #allocation14 [shape = 'u8[14336]{0}', space=vmem, size = 0x3800, scoped, tag = 'output window, operand 0, single buffered']
    %12 = vsyncpa [#allocation3], 0
    %13 = vsyncpa [#allocation6], 0
    %14 = vsyncpa [#allocation9], 0
    %15 = vsyncpa [#allocation12], 0
    %16 = vsyncpa [#allocation4], 0
    // Predicated region
    $region2: #{tpu_custom_call.1} parent=1 // pred_check
      _
    $region3: #{tpu_custom_call.1} parent=1 // pred_check_branch
      %18 = sbr.rel (0) target = $region5
    $region4: #{tpu_custom_call.1} parent=1 // pred_region
      %20 = vsyncadd [#allocation3], 0
      %s22 = sshll.u32 %s0, 4
      %s23 = int_to_ptr.hbm [resolvable:$true] %s22
      %s24 = sshll.u32 [#allocation2], 4
      %s25 = int_to_ptr.vmem [resolvable:$true] %s24
      %27 = dma.hbm_to_vmem [thread:$0]  %s23, 448, %s25, [#allocation3]
    $region5: #{tpu_custom_call.1} parent=1 // pred_fallthru
      _
    // Predicated region
    $region6: #{tpu_custom_call.1} parent=1 // pred_check
      _
    $region7: #{tpu_custom_call.1} parent=1 // pred_check_branch
      %29 = sbr.rel (0) target = $region9
    $region8: #{tpu_custom_call.1} parent=1 // pred_region
      %31 = vsyncadd [#allocation6], 0
      %s32 = sshll.u32 %s1, 4
      %s33 = int_to_ptr.hbm [resolvable:$true] %s32
      %s34 = sshll.u32 [#allocation5], 4
      %s35 = int_to_ptr.vmem [resolvable:$true] %s34
      %40 = dma.hbm_to_vmem [thread:$0]  %s33, 18432, %s35, [#allocation6], 64, 64, 4
    $region9: #{tpu_custom_call.1} parent=1 // pred_fallthru
      _
    // Predicated region
    $region10: #{tpu_custom_call.1} parent=1 // pred_check
      _
    $region11: #{tpu_custom_call.1} parent=1 // pred_check_branch
      %42 = sbr.rel (0) target = $region13
    $region12: #{tpu_custom_call.1} parent=1 // pred_region
      %44 = vsyncadd [#allocation6], 0
      %s45 = sshll.u32 %s2, 4
      %s46 = int_to_ptr.hbm [resolvable:$true] %s45
      %s47 = sshll.u32 [#allocation7], 4
      %s48 = int_to_ptr.vmem [resolvable:$true] %s47
      %53 = dma.hbm_to_vmem [thread:$0]  %s46, 24576, %s48, [#allocation6], 128, 128, 8
    $region13: #{tpu_custom_call.1} parent=1 // pred_fallthru
      _
    // Predicated region
    $region14: #{tpu_custom_call.1} parent=1 // pred_check
      _
    $region15: #{tpu_custom_call.1} parent=1 // pred_check_branch
      %55 = sbr.rel (0) target = $region17
    $region16: #{tpu_custom_call.1} parent=1 // pred_region
      %57 = vsyncadd [#allocation9], 0
      %s58 = sshll.u32 %s3, 4
      %s59 = int_to_ptr.hbm [resolvable:$true] %s58
      %s60 = sshll.u32 [#allocation8], 4
      %s61 = int_to_ptr.vmem [resolvable:$true] %s60
      %66 = dma.hbm_to_vmem [thread:$0]  %s59, 7168, %s61, [#allocation9], 448, 448, 28
    $region17: #{tpu_custom_call.1} parent=1 // pred_fallthru
      _
    // Predicated region
    $region18: #{tpu_custom_call.1} parent=1 // pred_check
      _
    $region19: #{tpu_custom_call.1} parent=1 // pred_check_branch
      %68 = sbr.rel (0) target = $region21
    $region20: #{tpu_custom_call.1} parent=1 // pred_region
      %70 = vsyncadd [#allocation9], 0
      %s71 = sshll.u32 %s4, 4
      %s72 = int_to_ptr.hbm [resolvable:$true] %s71
      %s73 = sshll.u32 [#allocation10], 4
      %s74 = int_to_ptr.vmem [resolvable:$true] %s73
      %79 = dma.hbm_to_vmem [thread:$0]  %s72, 256, %s74, [#allocation9], 128, 128, 8
    $region21: #{tpu_custom_call.1} parent=1 // pred_fallthru
      _
    // Predicated region
    $region22: #{tpu_custom_call.1} parent=1 // pred_check
      _
    $region23: #{tpu_custom_call.1} parent=1 // pred_check_branch
      %81 = sbr.rel (0) target = $region25
    $region24: #{tpu_custom_call.1} parent=1 // pred_region
      %83 = vsyncadd [#allocation12], 0
      %s85 = sshll.u32 %s5, 4
      %s86 = int_to_ptr.hbm [resolvable:$true] %s85
      %s87 = sshll.u32 [#allocation11], 4
      %s88 = int_to_ptr.vmem [resolvable:$true] %s87
      %90 = dma.hbm_to_vmem [thread:$0]  %s86, 256, %s88, [#allocation12]
    $region25: #{tpu_custom_call.1} parent=1 // pred_fallthru
      _
    // Predicated region
    $region26: #{tpu_custom_call.1} parent=1 // pred_check
      _
    $region27: #{tpu_custom_call.1} parent=1 // pred_check_branch
      %92 = sbr.rel (0) target = $region29
    $region28: #{tpu_custom_call.1} parent=1 // pred_region
      %94 = vsyncadd [#allocation12], 0
      %s96 = sshll.u32 %s6, 4
      %s97 = int_to_ptr.hbm [resolvable:$true] %s96
      %s98 = sshll.u32 [#allocation13], 4
      %s99 = int_to_ptr.vmem [resolvable:$true] %s98
      %101 = dma.hbm_to_vmem [thread:$0]  %s97, 896, %s99, [#allocation12]
    $region29: #{tpu_custom_call.1} parent=1 // pred_fallthru
      _
    // Predicated region
    $region30: #{tpu_custom_call.1} parent=1 // pred_check
      _
    $region31: #{tpu_custom_call.1} parent=1 // pred_check_branch
      %103 = sbr.rel (0) target = $region33
    $region32: #{tpu_custom_call.1} parent=1 // pred_region
      %105 = dma.done [#allocation3], 448
    $region33: #{tpu_custom_call.1} parent=1 // pred_fallthru
      _
    // Predicated region
    $region34: #{tpu_custom_call.1} parent=1 // pred_check
      _
    $region35: #{tpu_custom_call.1} parent=1 // pred_check_branch
      %107 = sbr.rel (0) target = $region37
    $region36: #{tpu_custom_call.1} parent=1 // pred_region
      %109 = dma.done [#allocation6], 18432
    $region37: #{tpu_custom_call.1} parent=1 // pred_fallthru
      _
    // Predicated region
    $region38: #{tpu_custom_call.1} parent=1 // pred_check
      _
    $region39: #{tpu_custom_call.1} parent=1 // pred_check_branch
      %111 = sbr.rel (0) target = $region41
    $region40: #{tpu_custom_call.1} parent=1 // pred_region
      %113 = dma.done [#allocation6], 24576
    $region41: #{tpu_custom_call.1} parent=1 // pred_fallthru
      _
    // Predicated region
    $region42: #{tpu_custom_call.1} parent=1 // pred_check
      _
    $region43: #{tpu_custom_call.1} parent=1 // pred_check_branch
      %115 = sbr.rel (0) target = $region45
    $region44: #{tpu_custom_call.1} parent=1 // pred_region
      %117 = dma.done [#allocation9], 7168
    $region45: #{tpu_custom_call.1} parent=1 // pred_fallthru
      _
    // Predicated region
    $region46: #{tpu_custom_call.1} parent=1 // pred_check
      _
    $region47: #{tpu_custom_call.1} parent=1 // pred_check_branch
      %119 = sbr.rel (0) target = $region49
    $region48: #{tpu_custom_call.1} parent=1 // pred_region
      %121 = dma.done [#allocation9], 256
    $region49: #{tpu_custom_call.1} parent=1 // pred_fallthru
      _
    // Predicated region
    $region50: #{tpu_custom_call.1} parent=1 // pred_check
      _
    $region51: #{tpu_custom_call.1} parent=1 // pred_check_branch
      %123 = sbr.rel (0) target = $region53
    $region52: #{tpu_custom_call.1} parent=1 // pred_region
      %125 = dma.done [#allocation12], 256
    $region53: #{tpu_custom_call.1} parent=1 // pred_fallthru
      _
    // Predicated region
    $region54: #{tpu_custom_call.1} parent=1 // pred_check
      _
    $region55: #{tpu_custom_call.1} parent=1 // pred_check_branch
      %127 = sbr.rel (0) target = $region57
    $region56: #{tpu_custom_call.1} parent=1 // pred_region
      %129 = dma.done [#allocation12], 896
    $region57: #{tpu_custom_call.1} parent=1 // pred_fallthru
      _
    %v130 = vld [vmem:[#allocation2] sm:$0xff]
    %v131 = vld [vmem:[#allocation2 + $0x8] sm:$0xff]
    %v132 = vld [vmem:[#allocation2 + $0x10] sm:$0xff]
    %v133 = vld [vmem:[#allocation2 + $0x18] sm:$0xf]
    %v134 = vld [vmem:[#allocation7] sm:$0xff]
    %v135 = vld [vmem:[#allocation7 + $0x8] sm:$0xff]
    %v136 = vld [vmem:[#allocation7 + $0x10] sm:$0xff]
    %v137 = vld [vmem:[#allocation7 + $0x18] sm:$0xff]
    %v138 = vld [vmem:[#allocation7 + $0x20] sm:$0xff]
    %v139 = vld [vmem:[#allocation7 + $0x28] sm:$0xff]
    %v140 = vld [vmem:[#allocation7 + $0x30] sm:$0xff]
    %v141 = vld [vmem:[#allocation7 + $0x38] sm:$0xff]
    %v142 = vld [vmem:[#allocation7 + $0x40] sm:$0xff]
    %v143 = vld [vmem:[#allocation7 + $0x48] sm:$0xff]
    %v144 = vld [vmem:[#allocation7 + $0x50] sm:$0xff]
    %v145 = vld [vmem:[#allocation7 + $0x58] sm:$0xff]
    %v146 = vld [vmem:[#allocation7 + $0x60] sm:$0xff]
    %v147 = vld [vmem:[#allocation7 + $0x68] sm:$0xff]
    %v148 = vld [vmem:[#allocation7 + $0x70] sm:$0xff]
    %v149 = vld [vmem:[#allocation7 + $0x78] sm:$0xff]
    %v150 = vld [vmem:[#allocation7 + $0x80] sm:$0xff]
    %v151 = vld [vmem:[#allocation7 + $0x88] sm:$0xff]
    %v152 = vld [vmem:[#allocation7 + $0x90] sm:$0xff]
    %v153 = vld [vmem:[#allocation7 + $0x98] sm:$0xff]
    %v154 = vld [vmem:[#allocation7 + $0xa0] sm:$0xff]
    %v155 = vld [vmem:[#allocation7 + $0xa8] sm:$0xff]
    %v156 = vld [vmem:[#allocation7 + $0xb0] sm:$0xff]
    %v157 = vld [vmem:[#allocation7 + $0xb8] sm:$0xff]
    %v158 = vld [vmem:[#allocation7 + $0xc0] sm:$0xff]
    %v159 = vld [vmem:[#allocation7 + $0xc8] sm:$0xff]
    %v160 = vld [vmem:[#allocation7 + $0xd0] sm:$0xff]
    %v161 = vld [vmem:[#allocation7 + $0xd8] sm:$0xff]
    %v162 = vld [vmem:[#allocation7 + $0xe0] sm:$0xff]
    %v163 = vld [vmem:[#allocation7 + $0xe8] sm:$0xff]
    %v164 = vld [vmem:[#allocation7 + $0xf0] sm:$0xff]
    %v165 = vld [vmem:[#allocation7 + $0xf8] sm:$0xff]
    %v166 = vld [vmem:[#allocation7 + $0x100] sm:$0xff]
    %v167 = vld [vmem:[#allocation7 + $0x108] sm:$0xff]
    %v168 = vld [vmem:[#allocation7 + $0x110] sm:$0xff]
    %v169 = vld [vmem:[#allocation7 + $0x118] sm:$0xff]
    %v170 = vld [vmem:[#allocation7 + $0x120] sm:$0xff]
    %v171 = vld [vmem:[#allocation7 + $0x128] sm:$0xff]
    %v172 = vld [vmem:[#allocation7 + $0x130] sm:$0xff]
    %v173 = vld [vmem:[#allocation7 + $0x138] sm:$0xff]
    %v174 = vld [vmem:[#allocation7 + $0x140] sm:$0xff]
    %v175 = vld [vmem:[#allocation7 + $0x148] sm:$0xff]
    %v176 = vld [vmem:[#allocation7 + $0x150] sm:$0xff]
    %v177 = vld [vmem:[#allocation7 + $0x158] sm:$0xff]
    %v178 = vld [vmem:[#allocation7 + $0x160] sm:$0xff]
    %v179 = vld [vmem:[#allocation7 + $0x168] sm:$0xff]
    %v180 = vld [vmem:[#allocation7 + $0x170] sm:$0xff]
    %v181 = vld [vmem:[#allocation7 + $0x178] sm:$0xff]
    %v182 = vld [vmem:[#allocation7 + $0x180] sm:$0xff]
    %v183 = vld [vmem:[#allocation7 + $0x188] sm:$0xff]
    %v184 = vld [vmem:[#allocation7 + $0x190] sm:$0xff]
    %v185 = vld [vmem:[#allocation7 + $0x198] sm:$0xff]
    %v186 = vld [vmem:[#allocation7 + $0x1a0] sm:$0xff]
    %v187 = vld [vmem:[#allocation7 + $0x1a8] sm:$0xff]
    %v188 = vld [vmem:[#allocation7 + $0x1b0] sm:$0xff]
    %v189 = vld [vmem:[#allocation7 + $0x1b8] sm:$0xff]
    %v190 = vld [vmem:[#allocation7 + $0x1c0] sm:$0xff]
    %v191 = vld [vmem:[#allocation7 + $0x1c8] sm:$0xff]
    %v192 = vld [vmem:[#allocation7 + $0x1d0] sm:$0xff]
    %v193 = vld [vmem:[#allocation7 + $0x1d8] sm:$0xff]
    %v194 = vld [vmem:[#allocation7 + $0x1e0] sm:$0xff]
    %v195 = vld [vmem:[#allocation7 + $0x1e8] sm:$0xff]
    %v196 = vld [vmem:[#allocation7 + $0x1f0] sm:$0xff]
    %v197 = vld [vmem:[#allocation7 + $0x1f8] sm:$0xff]
    %v198 = vld [vmem:[#allocation7 + $0x200] sm:$0xff]
    %v199 = vld [vmem:[#allocation7 + $0x208] sm:$0xff]
    %v200 = vld [vmem:[#allocation7 + $0x210] sm:$0xff]
    %v201 = vld [vmem:[#allocation7 + $0x218] sm:$0xff]
    %v202 = vld [vmem:[#allocation7 + $0x220] sm:$0xff]
    %v203 = vld [vmem:[#allocation7 + $0x228] sm:$0xff]
    %v204 = vld [vmem:[#allocation7 + $0x230] sm:$0xff]
    %v205 = vld [vmem:[#allocation7 + $0x238] sm:$0xff]
    %v206 = vld [vmem:[#allocation7 + $0x240] sm:$0xff]
    %v207 = vld [vmem:[#allocation7 + $0x248] sm:$0xff]
    %v208 = vld [vmem:[#allocation7 + $0x250] sm:$0xff]
    %v209 = vld [vmem:[#allocation7 + $0x258] sm:$0xff]
    %v210 = vld [vmem:[#allocation7 + $0x260] sm:$0xff]
    %v211 = vld [vmem:[#allocation7 + $0x268] sm:$0xff]
    %v212 = vld [vmem:[#allocation7 + $0x270] sm:$0xff]
    %v213 = vld [vmem:[#allocation7 + $0x278] sm:$0xff]
    %v214 = vld [vmem:[#allocation7 + $0x280] sm:$0xff]
    %v215 = vld [vmem:[#allocation7 + $0x288] sm:$0xff]
    %v216 = vld [vmem:[#allocation7 + $0x290] sm:$0xff]
    %v217 = vld [vmem:[#allocation7 + $0x298] sm:$0xff]
    %v218 = vld [vmem:[#allocation7 + $0x2a0] sm:$0xff]
    %v219 = vld [vmem:[#allocation7 + $0x2a8] sm:$0xff]
    %v220 = vld [vmem:[#allocation7 + $0x2b0] sm:$0xff]
    %v221 = vld [vmem:[#allocation7 + $0x2b8] sm:$0xff]
    %v222 = vld [vmem:[#allocation7 + $0x2c0] sm:$0xff]
    %v223 = vld [vmem:[#allocation7 + $0x2c8] sm:$0xff]
    %v224 = vld [vmem:[#allocation7 + $0x2d0] sm:$0xff]
    %v225 = vld [vmem:[#allocation7 + $0x2d8] sm:$0xff]
    %v226 = vld [vmem:[#allocation7 + $0x2e0] sm:$0xff]
    %v227 = vld [vmem:[#allocation7 + $0x2e8] sm:$0xff]
    %v228 = vld [vmem:[#allocation7 + $0x2f0] sm:$0xff]
    %v229 = vld [vmem:[#allocation7 + $0x2f8] sm:$0xff]
    %v230 = vld [vmem:[#allocation7 + $0x300] sm:$0xff]
    %v231 = vld [vmem:[#allocation7 + $0x308] sm:$0xff]
    %v232 = vld [vmem:[#allocation7 + $0x310] sm:$0xff]
    %v233 = vld [vmem:[#allocation7 + $0x318] sm:$0xff]
    %v234 = vld [vmem:[#allocation7 + $0x320] sm:$0xff]
    %v235 = vld [vmem:[#allocation7 + $0x328] sm:$0xff]
    %v236 = vld [vmem:[#allocation7 + $0x330] sm:$0xff]
    %v237 = vld [vmem:[#allocation7 + $0x338] sm:$0xff]
    %v238 = vld [vmem:[#allocation7 + $0x340] sm:$0xff]
    %v239 = vld [vmem:[#allocation7 + $0x348] sm:$0xff]
    %v240 = vld [vmem:[#allocation7 + $0x350] sm:$0xff]
    %v241 = vld [vmem:[#allocation7 + $0x358] sm:$0xff]
    %v242 = vld [vmem:[#allocation7 + $0x360] sm:$0xff]
    %v243 = vld [vmem:[#allocation7 + $0x368] sm:$0xff]
    %v244 = vld [vmem:[#allocation7 + $0x370] sm:$0xff]
    %v245 = vld [vmem:[#allocation7 + $0x378] sm:$0xff]
    %v246 = vld [vmem:[#allocation11] ss:$8 sm:$0x3]
    %v248 = vperm.slane %v246, 0
    %v249 = vperm.slane %v246, 1
    %v256 = vunpack.c.l.b16 %v130
    %v257 = vunpack.c.h.b16 %v130
    %v258 = vunpack.c.l.b16 %v131
    %v259 = vunpack.c.h.b16 %v131
    %v260 = vunpack.c.l.b16 %v132
    %v261 = vunpack.c.h.b16 %v132
    %v262 = vunpack.c.l.b16 %v133
    %v263 = vpack.c.b16 %v256, %v256
    %v264 = vpack.c.b16 %v257, %v257
    %v265 = vpack.c.b16 %v258, %v258
    %v266 = vpack.c.b16 %v259, %v259
    %v267 = vpack.c.b16 %v260, %v260
    %v268 = vpack.c.b16 %v261, %v261
    %v269 = vpack.c.b16 %v262, %v262
    %v389 = vunpack.c.l.b16 %v134
    %v390 = vunpack.c.h.b16 %v134
    %v391 = vunpack.c.l.b16 %v135
    %v392 = vunpack.c.h.b16 %v135
    %v393 = vunpack.c.l.b16 %v136
    %v394 = vunpack.c.h.b16 %v136
    %v395 = vunpack.c.l.b16 %v137
    %v396 = vunpack.c.h.b16 %v137
    %v397 = vunpack.c.l.b16 %v138
    %v398 = vunpack.c.h.b16 %v138
    %v399 = vunpack.c.l.b16 %v139
    %v400 = vunpack.c.h.b16 %v139
    %v401 = vunpack.c.l.b16 %v140
    %v402 = vunpack.c.h.b16 %v140
    %v403 = vunpack.c.l.b16 %v141
    %v404 = vunpack.c.h.b16 %v141
    %v405 = vunpack.c.l.b16 %v142
    %v406 = vunpack.c.h.b16 %v142
    %v407 = vunpack.c.l.b16 %v143
    %v408 = vunpack.c.h.b16 %v143
    %v409 = vunpack.c.l.b16 %v144
    %v410 = vunpack.c.h.b16 %v144
    %v411 = vunpack.c.l.b16 %v145
    %v412 = vunpack.c.h.b16 %v145
    %v413 = vunpack.c.l.b16 %v146
    %v414 = vunpack.c.h.b16 %v146
    %v415 = vunpack.c.l.b16 %v147
    %v416 = vunpack.c.h.b16 %v147
    %v417 = vunpack.c.l.b16 %v148
    %v418 = vunpack.c.h.b16 %v148
    %v419 = vunpack.c.l.b16 %v149
    %v420 = vunpack.c.h.b16 %v149
    %v421 = vunpack.c.l.b16 %v150
    %v422 = vunpack.c.h.b16 %v150
    %v423 = vunpack.c.l.b16 %v151
    %v424 = vunpack.c.h.b16 %v151
    %v425 = vunpack.c.l.b16 %v152
    %v426 = vunpack.c.h.b16 %v152
    %v427 = vunpack.c.l.b16 %v153
    %v428 = vunpack.c.h.b16 %v153
    %v429 = vunpack.c.l.b16 %v154
    %v430 = vunpack.c.h.b16 %v154
    %v431 = vunpack.c.l.b16 %v155
    %v432 = vunpack.c.h.b16 %v155
    %v433 = vunpack.c.l.b16 %v156
    %v434 = vunpack.c.h.b16 %v156
    %v435 = vunpack.c.l.b16 %v157
    %v436 = vunpack.c.h.b16 %v157
    %v437 = vunpack.c.l.b16 %v158
    %v438 = vunpack.c.h.b16 %v158
    %v439 = vunpack.c.l.b16 %v159
    %v440 = vunpack.c.h.b16 %v159
    %v441 = vunpack.c.l.b16 %v160
    %v442 = vunpack.c.h.b16 %v160
    %v443 = vunpack.c.l.b16 %v161
    %v444 = vunpack.c.h.b16 %v161
    %v445 = vunpack.c.l.b16 %v162
    %v446 = vunpack.c.h.b16 %v162
    %v447 = vunpack.c.l.b16 %v163
    %v448 = vunpack.c.h.b16 %v163
    %v449 = vunpack.c.l.b16 %v164
    %v450 = vunpack.c.h.b16 %v164
    %v451 = vunpack.c.l.b16 %v165
    %v452 = vunpack.c.h.b16 %v165
    %v453 = vunpack.c.l.b16 %v166
    %v454 = vunpack.c.h.b16 %v166
    %v455 = vunpack.c.l.b16 %v167
    %v456 = vunpack.c.h.b16 %v167
    %v457 = vunpack.c.l.b16 %v168
    %v458 = vunpack.c.h.b16 %v168
    %v459 = vunpack.c.l.b16 %v169
    %v460 = vunpack.c.h.b16 %v169
    %v461 = vunpack.c.l.b16 %v170
    %v462 = vunpack.c.h.b16 %v170
    %v463 = vunpack.c.l.b16 %v171
    %v464 = vunpack.c.h.b16 %v171
    %v465 = vunpack.c.l.b16 %v172
    %v466 = vunpack.c.h.b16 %v172
    %v467 = vunpack.c.l.b16 %v173
    %v468 = vunpack.c.h.b16 %v173
    %v469 = vunpack.c.l.b16 %v174
    %v470 = vunpack.c.h.b16 %v174
    %v471 = vunpack.c.l.b16 %v175
    %v472 = vunpack.c.h.b16 %v175
    %v473 = vunpack.c.l.b16 %v176
    %v474 = vunpack.c.h.b16 %v176
    %v475 = vunpack.c.l.b16 %v177
    %v476 = vunpack.c.h.b16 %v177
    %v477 = vunpack.c.l.b16 %v178
    %v478 = vunpack.c.h.b16 %v178
    %v479 = vunpack.c.l.b16 %v179
    %v480 = vunpack.c.h.b16 %v179
    %v481 = vunpack.c.l.b16 %v180
    %v482 = vunpack.c.h.b16 %v180
    %v483 = vunpack.c.l.b16 %v181
    %v484 = vunpack.c.h.b16 %v181
    %v485 = vunpack.c.l.b16 %v182
    %v486 = vunpack.c.h.b16 %v182
    %v487 = vunpack.c.l.b16 %v183
    %v488 = vunpack.c.h.b16 %v183
    %v489 = vunpack.c.l.b16 %v184
    %v490 = vunpack.c.h.b16 %v184
    %v491 = vunpack.c.l.b16 %v185
    %v492 = vunpack.c.h.b16 %v185
    %v493 = vunpack.c.l.b16 %v186
    %v494 = vunpack.c.h.b16 %v186
    %v495 = vunpack.c.l.b16 %v187
    %v496 = vunpack.c.h.b16 %v187
    %v497 = vunpack.c.l.b16 %v188
    %v498 = vunpack.c.h.b16 %v188
    %v499 = vunpack.c.l.b16 %v189
    %v500 = vunpack.c.h.b16 %v189
    %v501 = vunpack.c.l.b16 %v190
    %v502 = vunpack.c.h.b16 %v190
    %v503 = vunpack.c.l.b16 %v191
    %v504 = vunpack.c.h.b16 %v191
    %v505 = vunpack.c.l.b16 %v192
    %v506 = vunpack.c.h.b16 %v192
    %v507 = vunpack.c.l.b16 %v193
    %v508 = vunpack.c.h.b16 %v193
    %v509 = vunpack.c.l.b16 %v194
    %v510 = vunpack.c.h.b16 %v194
    %v511 = vunpack.c.l.b16 %v195
    %v512 = vunpack.c.h.b16 %v195
    %v513 = vunpack.c.l.b16 %v196
    %v514 = vunpack.c.h.b16 %v196
    %v515 = vunpack.c.l.b16 %v197
    %v516 = vunpack.c.h.b16 %v197
    %v517 = vunpack.c.l.b16 %v198
    %v518 = vunpack.c.h.b16 %v198
    %v519 = vunpack.c.l.b16 %v199
    %v520 = vunpack.c.h.b16 %v199
    %v521 = vunpack.c.l.b16 %v200
    %v522 = vunpack.c.h.b16 %v200
    %v523 = vunpack.c.l.b16 %v201
    %v524 = vunpack.c.h.b16 %v201
    %v525 = vunpack.c.l.b16 %v202
    %v526 = vunpack.c.h.b16 %v202
    %v527 = vunpack.c.l.b16 %v203
    %v528 = vunpack.c.h.b16 %v203
    %v529 = vunpack.c.l.b16 %v204
    %v530 = vunpack.c.h.b16 %v204
    %v531 = vunpack.c.l.b16 %v205
    %v532 = vunpack.c.h.b16 %v205
    %v533 = vunpack.c.l.b16 %v206
    %v534 = vunpack.c.h.b16 %v206
    %v535 = vunpack.c.l.b16 %v207
    %v536 = vunpack.c.h.b16 %v207
    %v537 = vunpack.c.l.b16 %v208
    %v538 = vunpack.c.h.b16 %v208
    %v539 = vunpack.c.l.b16 %v209
    %v540 = vunpack.c.h.b16 %v209
    %v541 = vunpack.c.l.b16 %v210
    %v542 = vunpack.c.h.b16 %v210
    %v543 = vunpack.c.l.b16 %v211
    %v544 = vunpack.c.h.b16 %v211
    %v545 = vunpack.c.l.b16 %v212
    %v546 = vunpack.c.h.b16 %v212
    %v547 = vunpack.c.l.b16 %v213
    %v548 = vunpack.c.h.b16 %v213
    %v549 = vunpack.c.l.b16 %v214
    %v550 = vunpack.c.h.b16 %v214
    %v551 = vunpack.c.l.b16 %v215
    %v552 = vunpack.c.h.b16 %v215
    %v553 = vunpack.c.l.b16 %v216
    %v554 = vunpack.c.h.b16 %v216
    %v555 = vunpack.c.l.b16 %v217
    %v556 = vunpack.c.h.b16 %v217
    %v557 = vunpack.c.l.b16 %v218
    %v558 = vunpack.c.h.b16 %v218
    %v559 = vunpack.c.l.b16 %v219
    %v560 = vunpack.c.h.b16 %v219
    %v561 = vunpack.c.l.b16 %v220
    %v562 = vunpack.c.h.b16 %v220
    %v563 = vunpack.c.l.b16 %v221
    %v564 = vunpack.c.h.b16 %v221
    %v565 = vunpack.c.l.b16 %v222
    %v566 = vunpack.c.h.b16 %v222
    %v567 = vunpack.c.l.b16 %v223
    %v568 = vunpack.c.h.b16 %v223
    %v569 = vunpack.c.l.b16 %v224
    %v570 = vunpack.c.h.b16 %v224
    %v571 = vunpack.c.l.b16 %v225
    %v572 = vunpack.c.h.b16 %v225
    %v573 = vunpack.c.l.b16 %v226
    %v574 = vunpack.c.h.b16 %v226
    %v575 = vunpack.c.l.b16 %v227
    %v576 = vunpack.c.h.b16 %v227
    %v577 = vunpack.c.l.b16 %v228
    %v578 = vunpack.c.h.b16 %v228
    %v579 = vunpack.c.l.b16 %v229
    %v580 = vunpack.c.h.b16 %v229
    %v581 = vunpack.c.l.b16 %v230
    %v582 = vunpack.c.h.b16 %v230
    %v583 = vunpack.c.l.b16 %v231
    %v584 = vunpack.c.h.b16 %v231
    %v585 = vunpack.c.l.b16 %v232
    %v586 = vunpack.c.h.b16 %v232
    %v587 = vunpack.c.l.b16 %v233
    %v588 = vunpack.c.h.b16 %v233
    %v589 = vunpack.c.l.b16 %v234
    %v590 = vunpack.c.h.b16 %v234
    %v591 = vunpack.c.l.b16 %v235
    %v592 = vunpack.c.h.b16 %v235
    %v593 = vunpack.c.l.b16 %v236
    %v594 = vunpack.c.h.b16 %v236
    %v595 = vunpack.c.l.b16 %v237
    %v596 = vunpack.c.h.b16 %v237
    %v597 = vunpack.c.l.b16 %v238
    %v598 = vunpack.c.h.b16 %v238
    %v599 = vunpack.c.l.b16 %v239
    %v600 = vunpack.c.h.b16 %v239
    %v601 = vunpack.c.l.b16 %v240
    %v602 = vunpack.c.h.b16 %v240
    %v603 = vunpack.c.l.b16 %v241
    %v604 = vunpack.c.h.b16 %v241
    %v605 = vunpack.c.l.b16 %v242
    %v606 = vunpack.c.h.b16 %v242
    %v607 = vunpack.c.l.b16 %v243
    %v608 = vunpack.c.h.b16 %v243
    %v609 = vunpack.c.l.b16 %v244
    %v610 = vunpack.c.h.b16 %v244
    %v611 = vunpack.c.l.b16 %v245
    %v612 = vunpack.c.h.b16 %v245
    %v613 = vpack.c.b16 %v391, %v389
    %v614 = vpack.c.b16 %v392, %v390
    %v615 = vpack.c.b16 %v395, %v393
    %v616 = vpack.c.b16 %v396, %v394
    %v617 = vpack.c.b16 %v399, %v397
    %v618 = vpack.c.b16 %v400, %v398
    %v619 = vpack.c.b16 %v403, %v401
    %v620 = vpack.c.b16 %v404, %v402
    %v621 = vpack.c.b16 %v407, %v405
    %v622 = vpack.c.b16 %v408, %v406
    %v623 = vpack.c.b16 %v411, %v409
    %v624 = vpack.c.b16 %v412, %v410
    %v625 = vpack.c.b16 %v415, %v413
    %v626 = vpack.c.b16 %v416, %v414
    %v627 = vpack.c.b16 %v419, %v417
    %v628 = vpack.c.b16 %v420, %v418
    %v629 = vpack.c.b16 %v423, %v421
    %v630 = vpack.c.b16 %v424, %v422
    %v631 = vpack.c.b16 %v427, %v425
    %v632 = vpack.c.b16 %v428, %v426
    %v633 = vpack.c.b16 %v431, %v429
    %v634 = vpack.c.b16 %v432, %v430
    %v635 = vpack.c.b16 %v435, %v433
    %v636 = vpack.c.b16 %v436, %v434
    %v637 = vpack.c.b16 %v439, %v437
    %v638 = vpack.c.b16 %v440, %v438
    %v639 = vpack.c.b16 %v443, %v441
    %v640 = vpack.c.b16 %v444, %v442
    %v641 = vpack.c.b16 %v447, %v445
    %v642 = vpack.c.b16 %v448, %v446
    %v643 = vpack.c.b16 %v451, %v449
    %v644 = vpack.c.b16 %v452, %v450
    %v645 = vpack.c.b16 %v455, %v453
    %v646 = vpack.c.b16 %v456, %v454
    %v647 = vpack.c.b16 %v459, %v457
    %v648 = vpack.c.b16 %v460, %v458
    %v649 = vpack.c.b16 %v463, %v461
    %v650 = vpack.c.b16 %v464, %v462
    %v651 = vpack.c.b16 %v467, %v465
    %v652 = vpack.c.b16 %v468, %v466
    %v653 = vpack.c.b16 %v471, %v469
    %v654 = vpack.c.b16 %v472, %v470
    %v655 = vpack.c.b16 %v475, %v473
    %v656 = vpack.c.b16 %v476, %v474
    %v657 = vpack.c.b16 %v479, %v477
    %v658 = vpack.c.b16 %v480, %v478
    %v659 = vpack.c.b16 %v483, %v481
    %v660 = vpack.c.b16 %v484, %v482
    %v661 = vpack.c.b16 %v487, %v485
    %v662 = vpack.c.b16 %v488, %v486
    %v663 = vpack.c.b16 %v491, %v489
    %v664 = vpack.c.b16 %v492, %v490
    %v665 = vpack.c.b16 %v495, %v493
    %v666 = vpack.c.b16 %v496, %v494
    %v667 = vpack.c.b16 %v499, %v497
    %v668 = vpack.c.b16 %v500, %v498
    %v669 = vpack.c.b16 %v503, %v501
    %v670 = vpack.c.b16 %v504, %v502
    %v671 = vpack.c.b16 %v507, %v505
    %v672 = vpack.c.b16 %v508, %v506
    %v673 = vpack.c.b16 %v511, %v509
    %v674 = vpack.c.b16 %v512, %v510
    %v675 = vpack.c.b16 %v515, %v513
    %v676 = vpack.c.b16 %v516, %v514
    %v677 = vpack.c.b16 %v519, %v517
    %v678 = vpack.c.b16 %v520, %v518
    %v679 = vpack.c.b16 %v523, %v521
    %v680 = vpack.c.b16 %v524, %v522
    %v681 = vpack.c.b16 %v527, %v525
    %v682 = vpack.c.b16 %v528, %v526
    %v683 = vpack.c.b16 %v531, %v529
    %v684 = vpack.c.b16 %v532, %v530
    %v685 = vpack.c.b16 %v535, %v533
    %v686 = vpack.c.b16 %v536, %v534
    %v687 = vpack.c.b16 %v539, %v537
    %v688 = vpack.c.b16 %v540, %v538
    %v689 = vpack.c.b16 %v543, %v541
    %v690 = vpack.c.b16 %v544, %v542
    %v691 = vpack.c.b16 %v547, %v545
    %v692 = vpack.c.b16 %v548, %v546
    %v693 = vpack.c.b16 %v551, %v549
    %v694 = vpack.c.b16 %v552, %v550
    %v695 = vpack.c.b16 %v555, %v553
    %v696 = vpack.c.b16 %v556, %v554
    %v697 = vpack.c.b16 %v559, %v557
    %v698 = vpack.c.b16 %v560, %v558
    %v699 = vpack.c.b16 %v563, %v561
    %v700 = vpack.c.b16 %v564, %v562
    %v701 = vpack.c.b16 %v567, %v565
    %v702 = vpack.c.b16 %v568, %v566
    %v703 = vpack.c.b16 %v571, %v569
    %v704 = vpack.c.b16 %v572, %v570
    %v705 = vpack.c.b16 %v575, %v573
    %v706 = vpack.c.b16 %v576, %v574
    %v707 = vpack.c.b16 %v579, %v577
    %v708 = vpack.c.b16 %v580, %v578
    %v709 = vpack.c.b16 %v583, %v581
    %v710 = vpack.c.b16 %v584, %v582
    %v711 = vpack.c.b16 %v587, %v585
    %v712 = vpack.c.b16 %v588, %v586
    %v713 = vpack.c.b16 %v591, %v589
    %v714 = vpack.c.b16 %v592, %v590
    %v715 = vpack.c.b16 %v595, %v593
    %v716 = vpack.c.b16 %v596, %v594
    %v717 = vpack.c.b16 %v599, %v597
    %v718 = vpack.c.b16 %v600, %v598
    %v719 = vpack.c.b16 %v603, %v601
    %v720 = vpack.c.b16 %v604, %v602
    %v721 = vpack.c.b16 %v607, %v605
    %v722 = vpack.c.b16 %v608, %v606
    %v723 = vpack.c.b16 %v611, %v609
    %v724 = vpack.c.b16 %v612, %v610
    %837 = vmatpush.bf16.msra.mxu0 %v627
    %838 = vmatpush.bf16.msra.mxu0 %v625
    %839 = vmatpush.bf16.msra.mxu0 %v623
    %840 = vmatpush.bf16.msra.mxu0 %v621
    %841 = vmatpush.bf16.msra.mxu0 %v619
    %842 = vmatpush.bf16.msra.mxu0 %v617
    %843 = vmatpush.bf16.msra.mxu0 %v615
    %844 = vmatpush.bf16.msra.mxu0 %v613
    %845 = vmatmul.bf16.gmra.mxu0 %v263
    %v846 = vpop.f32.mrf.mxu0
    %v847 = vadd.f32 %v248, %v846
    %v848 = vpop.f32.mrf.mxu0
    %849 = vdwg.mxu0
    %850 = vmatpush.bf16.msra.mxu0 %v643
    %851 = vmatpush.bf16.msra.mxu0 %v641
    %852 = vmatpush.bf16.msra.mxu0 %v639
    %853 = vmatpush.bf16.msra.mxu0 %v637
    %854 = vmatpush.bf16.msra.mxu0 %v635
    %855 = vmatpush.bf16.msra.mxu0 %v633
    %856 = vmatpush.bf16.msra.mxu0 %v631
    %857 = vmatpush.bf16.msra.mxu0 %v629
    %858 = vmatmul.bf16.gmra.mxu0 %v264
    %v859 = vpop.f32.mrf.mxu0
    %v860 = vadd.f32 %v847, %v859
    %v861 = vpop.f32.mrf.mxu0
    %862 = vdwg.mxu0
    %863 = vmatpush.bf16.msra.mxu0 %v659
    %864 = vmatpush.bf16.msra.mxu0 %v657
    %865 = vmatpush.bf16.msra.mxu0 %v655
    %866 = vmatpush.bf16.msra.mxu0 %v653
    %867 = vmatpush.bf16.msra.mxu0 %v651
    %868 = vmatpush.bf16.msra.mxu0 %v649
    %869 = vmatpush.bf16.msra.mxu0 %v647
    %870 = vmatpush.bf16.msra.mxu0 %v645
    %871 = vmatmul.bf16.gmra.mxu0 %v265
    %v872 = vpop.f32.mrf.mxu0
    %v873 = vadd.f32 %v860, %v872
    %v874 = vpop.f32.mrf.mxu0
    %875 = vdwg.mxu0
    %876 = vmatpush.bf16.msra.mxu0 %v675
    %877 = vmatpush.bf16.msra.mxu0 %v673
    %878 = vmatpush.bf16.msra.mxu0 %v671
    %879 = vmatpush.bf16.msra.mxu0 %v669
    %880 = vmatpush.bf16.msra.mxu0 %v667
    %881 = vmatpush.bf16.msra.mxu0 %v665
    %882 = vmatpush.bf16.msra.mxu0 %v663
    %883 = vmatpush.bf16.msra.mxu0 %v661
    %884 = vmatmul.bf16.gmra.mxu0 %v266
    %v885 = vpop.f32.mrf.mxu0
    %v886 = vadd.f32 %v873, %v885
    %v887 = vpop.f32.mrf.mxu0
    %888 = vdwg.mxu0
    %889 = vmatpush.bf16.msra.mxu0 %v691
    %890 = vmatpush.bf16.msra.mxu0 %v689
    %891 = vmatpush.bf16.msra.mxu0 %v687
    %892 = vmatpush.bf16.msra.mxu0 %v685
    %893 = vmatpush.bf16.msra.mxu0 %v683
    %894 = vmatpush.bf16.msra.mxu0 %v681
    %895 = vmatpush.bf16.msra.mxu0 %v679
    %896 = vmatpush.bf16.msra.mxu0 %v677
    %897 = vmatmul.bf16.gmra.mxu0 %v267
    %v898 = vpop.f32.mrf.mxu0
    %v899 = vadd.f32 %v886, %v898
    %v900 = vpop.f32.mrf.mxu0
    %901 = vdwg.mxu0
    %902 = vmatpush.bf16.msra.mxu0 %v707
    %903 = vmatpush.bf16.msra.mxu0 %v705
    %904 = vmatpush.bf16.msra.mxu0 %v703
    %905 = vmatpush.bf16.msra.mxu0 %v701
    %906 = vmatpush.bf16.msra.mxu0 %v699
    %907 = vmatpush.bf16.msra.mxu0 %v697
    %908 = vmatpush.bf16.msra.mxu0 %v695
    %909 = vmatpush.bf16.msra.mxu0 %v693
    %910 = vmatmul.bf16.gmra.mxu0 %v268
    %v911 = vpop.f32.mrf.mxu0
    %v912 = vadd.f32 %v899, %v911
    %v913 = vpop.f32.mrf.mxu0
    %914 = vdwg.mxu0
    %915 = vmatpush.bf16.msra.mxu0 %v723
    %916 = vmatpush.bf16.msra.mxu0 %v721
    %917 = vmatpush.bf16.msra.mxu0 %v719
    %918 = vmatpush.bf16.msra.mxu0 %v717
    %919 = vmatpush.bf16.msra.mxu0 %v715
    %920 = vmatpush.bf16.msra.mxu0 %v713
    %921 = vmatpush.bf16.msra.mxu0 %v711
    %922 = vmatpush.bf16.msra.mxu0 %v709
    %923 = vmatmul.bf16.gmra.mxu0 %v269
    %v924 = vpop.f32.mrf.mxu0
    %v925 = vadd.f32 %v912, %v924
    %v926 = vpop.f32.mrf.mxu0
    %927 = vdwg.mxu0
    %928 = vmatpush.bf16.msra.mxu0 %v628
    %929 = vmatpush.bf16.msra.mxu0 %v626
    %930 = vmatpush.bf16.msra.mxu0 %v624
    %931 = vmatpush.bf16.msra.mxu0 %v622
    %932 = vmatpush.bf16.msra.mxu0 %v620
    %933 = vmatpush.bf16.msra.mxu0 %v618
    %934 = vmatpush.bf16.msra.mxu0 %v616
    %935 = vmatpush.bf16.msra.mxu0 %v614
    %936 = vmatmul.bf16.gmra.mxu0 %v263
    %v937 = vpop.f32.mrf.mxu0
    %v938 = vadd.f32 %v249, %v937
    %v939 = vpop.f32.mrf.mxu0
    %940 = vdwg.mxu0
    %941 = vmatpush.bf16.msra.mxu0 %v644
    %942 = vmatpush.bf16.msra.mxu0 %v642
    %943 = vmatpush.bf16.msra.mxu0 %v640
    %944 = vmatpush.bf16.msra.mxu0 %v638
    %945 = vmatpush.bf16.msra.mxu0 %v636
    %946 = vmatpush.bf16.msra.mxu0 %v634
    %947 = vmatpush.bf16.msra.mxu0 %v632
    %948 = vmatpush.bf16.msra.mxu0 %v630
    %949 = vmatmul.bf16.gmra.mxu0 %v264
    %v950 = vpop.f32.mrf.mxu0
    %v951 = vadd.f32 %v938, %v950
    %v952 = vpop.f32.mrf.mxu0
    %953 = vdwg.mxu0
    %954 = vmatpush.bf16.msra.mxu0 %v660
    %955 = vmatpush.bf16.msra.mxu0 %v658
    %956 = vmatpush.bf16.msra.mxu0 %v656
    %957 = vmatpush.bf16.msra.mxu0 %v654
    %958 = vmatpush.bf16.msra.mxu0 %v652
    %959 = vmatpush.bf16.msra.mxu0 %v650
    %960 = vmatpush.bf16.msra.mxu0 %v648
    %961 = vmatpush.bf16.msra.mxu0 %v646
    %962 = vmatmul.bf16.gmra.mxu0 %v265
    %v963 = vpop.f32.mrf.mxu0
    %v964 = vadd.f32 %v951, %v963
    %v965 = vpop.f32.mrf.mxu0
    %966 = vdwg.mxu0
    %967 = vmatpush.bf16.msra.mxu0 %v676
    %968 = vmatpush.bf16.msra.mxu0 %v674
    %969 = vmatpush.bf16.msra.mxu0 %v672
    %970 = vmatpush.bf16.msra.mxu0 %v670
    %971 = vmatpush.bf16.msra.mxu0 %v668
    %972 = vmatpush.bf16.msra.mxu0 %v666
    %973 = vmatpush.bf16.msra.mxu0 %v664
    %974 = vmatpush.bf16.msra.mxu0 %v662
    %975 = vmatmul.bf16.gmra.mxu0 %v266
    %v976 = vpop.f32.mrf.mxu0
    %v977 = vadd.f32 %v964, %v976
    %v978 = vpop.f32.mrf.mxu0
    %979 = vdwg.mxu0
    %980 = vmatpush.bf16.msra.mxu0 %v692
    %981 = vmatpush.bf16.msra.mxu0 %v690
    %982 = vmatpush.bf16.msra.mxu0 %v688
    %983 = vmatpush.bf16.msra.mxu0 %v686
    %984 = vmatpush.bf16.msra.mxu0 %v684
    %985 = vmatpush.bf16.msra.mxu0 %v682
    %986 = vmatpush.bf16.msra.mxu0 %v680
    %987 = vmatpush.bf16.msra.mxu0 %v678
    %988 = vmatmul.bf16.gmra.mxu0 %v267
    %v989 = vpop.f32.mrf.mxu0
    %v990 = vadd.f32 %v977, %v989
    %v991 = vpop.f32.mrf.mxu0
    %992 = vdwg.mxu0
    %993 = vmatpush.bf16.msra.mxu0 %v708
    %994 = vmatpush.bf16.msra.mxu0 %v706
    %995 = vmatpush.bf16.msra.mxu0 %v704
    %996 = vmatpush.bf16.msra.mxu0 %v702
    %997 = vmatpush.bf16.msra.mxu0 %v700
    %998 = vmatpush.bf16.msra.mxu0 %v698
    %999 = vmatpush.bf16.msra.mxu0 %v696
    %1000 = vmatpush.bf16.msra.mxu0 %v694
    %1001 = vmatmul.bf16.gmra.mxu0 %v268
    %v1002 = vpop.f32.mrf.mxu0
    %v1003 = vadd.f32 %v990, %v1002
    %v1004 = vpop.f32.mrf.mxu0
    %1005 = vdwg.mxu0
    %1006 = vmatpush.bf16.msra.mxu0 %v724
    %1007 = vmatpush.bf16.msra.mxu0 %v722
    %1008 = vmatpush.bf16.msra.mxu0 %v720
    %1009 = vmatpush.bf16.msra.mxu0 %v718
    %1010 = vmatpush.bf16.msra.mxu0 %v716
    %1011 = vmatpush.bf16.msra.mxu0 %v714
    %1012 = vmatpush.bf16.msra.mxu0 %v712
    %1013 = vmatpush.bf16.msra.mxu0 %v710
    %1014 = vmatmul.bf16.gmra.mxu0 %v269
    %v1015 = vpop.f32.mrf.mxu0
    %v1016 = vadd.f32 %v1003, %v1015
    %v1017 = vpop.f32.mrf.mxu0
    %1018 = vdwg.mxu0
    %v1019 = vld [vmem:[#allocation5] sm:$0xf]
    %v1020 = vld [vmem:[#allocation5 + $0x4] sm:$0xf]
    %v1021 = vld [vmem:[#allocation5 + $0x8] sm:$0xf]
    %v1022 = vld [vmem:[#allocation5 + $0xc] sm:$0xf]
    %v1023 = vld [vmem:[#allocation5 + $0x10] sm:$0xf]
    %v1024 = vld [vmem:[#allocation5 + $0x14] sm:$0xf]
    %v1025 = vld [vmem:[#allocation5 + $0x18] sm:$0xf]
    %v1026 = vld [vmem:[#allocation5 + $0x1c] sm:$0xf]
    %v1027 = vld [vmem:[#allocation5 + $0x20] sm:$0xf]
    %v1028 = vld [vmem:[#allocation5 + $0x24] sm:$0xf]
    %v1029 = vld [vmem:[#allocation5 + $0x28] sm:$0xf]
    %v1030 = vld [vmem:[#allocation5 + $0x2c] sm:$0xf]
    %v1031 = vld [vmem:[#allocation5 + $0x30] sm:$0xf]
    %v1032 = vld [vmem:[#allocation5 + $0x34] sm:$0xf]
    %v1033 = vld [vmem:[#allocation5 + $0x38] sm:$0xf]
    %v1034 = vld [vmem:[#allocation5 + $0x3c] sm:$0xf]
    %v1035 = vld [vmem:[#allocation5 + $0x40] sm:$0xf]
    %v1036 = vld [vmem:[#allocation5 + $0x44] sm:$0xf]
    %v1037 = vld [vmem:[#allocation5 + $0x48] sm:$0xf]
    %v1038 = vld [vmem:[#allocation5 + $0x4c] sm:$0xf]
    %v1039 = vld [vmem:[#allocation5 + $0x50] sm:$0xf]
    %v1040 = vld [vmem:[#allocation5 + $0x54] sm:$0xf]
    %v1041 = vld [vmem:[#allocation5 + $0x58] sm:$0xf]
    %v1042 = vld [vmem:[#allocation5 + $0x5c] sm:$0xf]
    %v1043 = vld [vmem:[#allocation5 + $0x60] sm:$0xf]
    %v1044 = vld [vmem:[#allocation5 + $0x64] sm:$0xf]
    %v1045 = vld [vmem:[#allocation5 + $0x68] sm:$0xf]
    %v1046 = vld [vmem:[#allocation5 + $0x6c] sm:$0xf]
    %v1047 = vld [vmem:[#allocation5 + $0x70] sm:$0xf]
    %v1048 = vld [vmem:[#allocation5 + $0x74] sm:$0xf]
    %v1049 = vld [vmem:[#allocation5 + $0x78] sm:$0xf]
    %v1050 = vld [vmem:[#allocation5 + $0x7c] sm:$0xf]
    %v1051 = vld [vmem:[#allocation10] sm:$0x1]
    %v1052 = vpack.c.bf16 %v925, %v925
    %v1053 = vpack.c.bf16 %v1016, %v1016
    %v1054 = vperm.slane %v1051, 0
    %v1087 = vunpack.c.l.b16 %v1019
    %v1088 = vunpack.c.l.b16 %v1020
    %v1089 = vunpack.c.l.b16 %v1021
    %v1090 = vunpack.c.l.b16 %v1022
    %v1091 = vunpack.c.l.b16 %v1023
    %v1092 = vunpack.c.l.b16 %v1024
    %v1093 = vunpack.c.l.b16 %v1025
    %v1094 = vunpack.c.l.b16 %v1026
    %v1095 = vunpack.c.l.b16 %v1027
    %v1096 = vunpack.c.l.b16 %v1028
    %v1097 = vunpack.c.l.b16 %v1029
    %v1098 = vunpack.c.l.b16 %v1030
    %v1099 = vunpack.c.l.b16 %v1031
    %v1100 = vunpack.c.l.b16 %v1032
    %v1101 = vunpack.c.l.b16 %v1033
    %v1102 = vunpack.c.l.b16 %v1034
    %v1103 = vunpack.c.l.b16 %v1035
    %v1104 = vunpack.c.l.b16 %v1036
    %v1105 = vunpack.c.l.b16 %v1037
    %v1106 = vunpack.c.l.b16 %v1038
    %v1107 = vunpack.c.l.b16 %v1039
    %v1108 = vunpack.c.l.b16 %v1040
    %v1109 = vunpack.c.l.b16 %v1041
    %v1110 = vunpack.c.l.b16 %v1042
    %v1111 = vunpack.c.l.b16 %v1043
    %v1112 = vunpack.c.l.b16 %v1044
    %v1113 = vunpack.c.l.b16 %v1045
    %v1114 = vunpack.c.l.b16 %v1046
    %v1115 = vunpack.c.l.b16 %v1047
    %v1116 = vunpack.c.l.b16 %v1048
    %v1117 = vunpack.c.l.b16 %v1049
    %v1118 = vunpack.c.l.b16 %v1050
    %v1119 = vpack.c.b16 %v1088, %v1087
    %v1120 = vpack.c.b16 %v1090, %v1089
    %v1121 = vpack.c.b16 %v1092, %v1091
    %v1122 = vpack.c.b16 %v1094, %v1093
    %v1123 = vpack.c.b16 %v1096, %v1095
    %v1124 = vpack.c.b16 %v1098, %v1097
    %v1125 = vpack.c.b16 %v1100, %v1099
    %v1126 = vpack.c.b16 %v1102, %v1101
    %v1127 = vpack.c.b16 %v1104, %v1103
    %v1128 = vpack.c.b16 %v1106, %v1105
    %v1129 = vpack.c.b16 %v1108, %v1107
    %v1130 = vpack.c.b16 %v1110, %v1109
    %v1131 = vpack.c.b16 %v1112, %v1111
    %v1132 = vpack.c.b16 %v1114, %v1113
    %v1133 = vpack.c.b16 %v1116, %v1115
    %v1134 = vpack.c.b16 %v1118, %v1117
    %1151 = vmatpush.bf16.msra.mxu0 %v1126
    %1152 = vmatpush.bf16.msra.mxu0 %v1125
    %1153 = vmatpush.bf16.msra.mxu0 %v1124
    %1154 = vmatpush.bf16.msra.mxu0 %v1123
    %1155 = vmatpush.bf16.msra.mxu0 %v1122
    %1156 = vmatpush.bf16.msra.mxu0 %v1121
    %1157 = vmatpush.bf16.msra.mxu0 %v1120
    %1158 = vmatpush.bf16.msra.mxu0 %v1119
    %1159 = vmatmul.bf16.gmra.mxu0 %v1052
    %v1160 = vpop.f32.mrf.mxu0
    %v1161 = vadd.f32 %v1054, %v1160
    %v1162 = vpop.f32.mrf.mxu0
    %1163 = vdwg.mxu0
    %1164 = vmatpush.bf16.msra.mxu0 %v1134
    %1165 = vmatpush.bf16.msra.mxu0 %v1133
    %1166 = vmatpush.bf16.msra.mxu0 %v1132
    %1167 = vmatpush.bf16.msra.mxu0 %v1131
    %1168 = vmatpush.bf16.msra.mxu0 %v1130
    %1169 = vmatpush.bf16.msra.mxu0 %v1129
    %1170 = vmatpush.bf16.msra.mxu0 %v1128
    %1171 = vmatpush.bf16.msra.mxu0 %v1127
    %1172 = vmatmul.bf16.gmra.mxu0 %v1053
    %v1173 = vpop.f32.mrf.mxu0
    %v1174 = vadd.f32 %v1161, %v1173
    %v1175 = vpop.f32.mrf.mxu0
    %1176 = vdwg.mxu0
    %v1177 = vld [vmem:[#allocation5 + $0x80] sm:$0xf]
    %v1178 = vld [vmem:[#allocation5 + $0x84] sm:$0xf]
    %v1179 = vld [vmem:[#allocation5 + $0x88] sm:$0xf]
    %v1180 = vld [vmem:[#allocation5 + $0x8c] sm:$0xf]
    %v1181 = vld [vmem:[#allocation5 + $0x90] sm:$0xf]
    %v1182 = vld [vmem:[#allocation5 + $0x94] sm:$0xf]
    %v1183 = vld [vmem:[#allocation5 + $0x98] sm:$0xf]
    %v1184 = vld [vmem:[#allocation5 + $0x9c] sm:$0xf]
    %v1185 = vld [vmem:[#allocation5 + $0xa0] sm:$0xf]
    %v1186 = vld [vmem:[#allocation5 + $0xa4] sm:$0xf]
    %v1187 = vld [vmem:[#allocation5 + $0xa8] sm:$0xf]
    %v1188 = vld [vmem:[#allocation5 + $0xac] sm:$0xf]
    %v1189 = vld [vmem:[#allocation5 + $0xb0] sm:$0xf]
    %v1190 = vld [vmem:[#allocation5 + $0xb4] sm:$0xf]
    %v1191 = vld [vmem:[#allocation5 + $0xb8] sm:$0xf]
    %v1192 = vld [vmem:[#allocation5 + $0xbc] sm:$0xf]
    %v1193 = vld [vmem:[#allocation10 + $0x1] sm:$0x1]
    %v1194 = vpack.c.bf16 %v1174, %v1174
    %v1195 = vperm.slane %v1193, 0
    %v1212 = vunpack.c.l.b16 %v1177
    %v1213 = vunpack.c.l.b16 %v1178
    %v1214 = vunpack.c.l.b16 %v1179
    %v1215 = vunpack.c.l.b16 %v1180
    %v1216 = vunpack.c.l.b16 %v1181
    %v1217 = vunpack.c.l.b16 %v1182
    %v1218 = vunpack.c.l.b16 %v1183
    %v1219 = vunpack.c.l.b16 %v1184
    %v1220 = vunpack.c.l.b16 %v1185
    %v1221 = vunpack.c.l.b16 %v1186
    %v1222 = vunpack.c.l.b16 %v1187
    %v1223 = vunpack.c.l.b16 %v1188
    %v1224 = vunpack.c.l.b16 %v1189
    %v1225 = vunpack.c.l.b16 %v1190
    %v1226 = vunpack.c.l.b16 %v1191
    %v1227 = vunpack.c.l.b16 %v1192
    %v1228 = vpack.c.b16 %v1213, %v1212
    %v1229 = vpack.c.b16 %v1215, %v1214
    %v1230 = vpack.c.b16 %v1217, %v1216
    %v1231 = vpack.c.b16 %v1219, %v1218
    %v1232 = vpack.c.b16 %v1221, %v1220
    %v1233 = vpack.c.b16 %v1223, %v1222
    %v1234 = vpack.c.b16 %v1225, %v1224
    %v1235 = vpack.c.b16 %v1227, %v1226
    %1244 = vmatpush.bf16.msra.mxu0 %v1235
    %1245 = vmatpush.bf16.msra.mxu0 %v1234
    %1246 = vmatpush.bf16.msra.mxu0 %v1233
    %1247 = vmatpush.bf16.msra.mxu0 %v1232
    %1248 = vmatpush.bf16.msra.mxu0 %v1231
    %1249 = vmatpush.bf16.msra.mxu0 %v1230
    %1250 = vmatpush.bf16.msra.mxu0 %v1229
    %1251 = vmatpush.bf16.msra.mxu0 %v1228
    %1252 = vmatmul.bf16.gmra.mxu0 %v1194
    %v1253 = vpop.f32.mrf.mxu0
    %v1254 = vadd.f32 %v1195, %v1253
    %v1255 = vpop.f32.mrf.mxu0
    %1256 = vdwg.mxu0
    %v1257 = vld [vmem:[#allocation5 + $0xc0] sm:$0xf]
    %v1258 = vld [vmem:[#allocation5 + $0xc4] sm:$0xf]
    %v1259 = vld [vmem:[#allocation5 + $0xc8] sm:$0xf]
    %v1260 = vld [vmem:[#allocation5 + $0xcc] sm:$0xf]
    %v1261 = vld [vmem:[#allocation5 + $0xd0] sm:$0xf]
    %v1262 = vld [vmem:[#allocation5 + $0xd4] sm:$0xf]
    %v1263 = vld [vmem:[#allocation5 + $0xd8] sm:$0xf]
    %v1264 = vld [vmem:[#allocation5 + $0xdc] sm:$0xf]
    %v1265 = vld [vmem:[#allocation5 + $0xe0] sm:$0xf]
    %v1266 = vld [vmem:[#allocation5 + $0xe4] sm:$0xf]
    %v1267 = vld [vmem:[#allocation5 + $0xe8] sm:$0xf]
    %v1268 = vld [vmem:[#allocation5 + $0xec] sm:$0xf]
    %v1269 = vld [vmem:[#allocation5 + $0xf0] sm:$0xf]
    %v1270 = vld [vmem:[#allocation5 + $0xf4] sm:$0xf]
    %v1271 = vld [vmem:[#allocation5 + $0xf8] sm:$0xf]
    %v1272 = vld [vmem:[#allocation5 + $0xfc] sm:$0xf]
    %v1273 = vld [vmem:[#allocation10 + $0x2] sm:$0x1]
    %v1274 = vpack.c.bf16 %v1254, %v1254
    %v1275 = vperm.slane %v1273, 0
    %v1292 = vunpack.c.l.b16 %v1257
    %v1293 = vunpack.c.l.b16 %v1258
    %v1294 = vunpack.c.l.b16 %v1259
    %v1295 = vunpack.c.l.b16 %v1260
    %v1296 = vunpack.c.l.b16 %v1261
    %v1297 = vunpack.c.l.b16 %v1262
    %v1298 = vunpack.c.l.b16 %v1263
    %v1299 = vunpack.c.l.b16 %v1264
    %v1300 = vunpack.c.l.b16 %v1265
    %v1301 = vunpack.c.l.b16 %v1266
    %v1302 = vunpack.c.l.b16 %v1267
    %v1303 = vunpack.c.l.b16 %v1268
    %v1304 = vunpack.c.l.b16 %v1269
    %v1305 = vunpack.c.l.b16 %v1270
    %v1306 = vunpack.c.l.b16 %v1271
    %v1307 = vunpack.c.l.b16 %v1272
    %v1308 = vpack.c.b16 %v1293, %v1292
    %v1309 = vpack.c.b16 %v1295, %v1294
    %v1310 = vpack.c.b16 %v1297, %v1296
    %v1311 = vpack.c.b16 %v1299, %v1298
    %v1312 = vpack.c.b16 %v1301, %v1300
    %v1313 = vpack.c.b16 %v1303, %v1302
    %v1314 = vpack.c.b16 %v1305, %v1304
    %v1315 = vpack.c.b16 %v1307, %v1306
    %1324 = vmatpush.bf16.msra.mxu0 %v1315
    %1325 = vmatpush.bf16.msra.mxu0 %v1314
    %1326 = vmatpush.bf16.msra.mxu0 %v1313
    %1327 = vmatpush.bf16.msra.mxu0 %v1312
    %1328 = vmatpush.bf16.msra.mxu0 %v1311
    %1329 = vmatpush.bf16.msra.mxu0 %v1310
    %1330 = vmatpush.bf16.msra.mxu0 %v1309
    %1331 = vmatpush.bf16.msra.mxu0 %v1308
    %1332 = vmatmul.bf16.gmra.mxu0 %v1274
    %v1333 = vpop.f32.mrf.mxu0
    %v1334 = vadd.f32 %v1275, %v1333
    %v1335 = vpop.f32.mrf.mxu0
    %1336 = vdwg.mxu0
    %v1337 = vld [vmem:[#allocation7 + $0x380] sm:$0xff]
    %v1338 = vld [vmem:[#allocation7 + $0x388] sm:$0xff]
    %v1339 = vld [vmem:[#allocation7 + $0x390] sm:$0xff]
    %v1340 = vld [vmem:[#allocation7 + $0x398] sm:$0xff]
    %v1341 = vld [vmem:[#allocation7 + $0x3a0] sm:$0xff]
    %v1342 = vld [vmem:[#allocation7 + $0x3a8] sm:$0xff]
    %v1343 = vld [vmem:[#allocation7 + $0x3b0] sm:$0xff]
    %v1344 = vld [vmem:[#allocation7 + $0x3b8] sm:$0xff]
    %v1345 = vld [vmem:[#allocation7 + $0x3c0] sm:$0xff]
    %v1346 = vld [vmem:[#allocation7 + $0x3c8] sm:$0xff]
    %v1347 = vld [vmem:[#allocation7 + $0x3d0] sm:$0xff]
    %v1348 = vld [vmem:[#allocation7 + $0x3d8] sm:$0xff]
    %v1349 = vld [vmem:[#allocation7 + $0x3e0] sm:$0xff]
    %v1350 = vld [vmem:[#allocation7 + $0x3e8] sm:$0xff]
    %v1351 = vld [vmem:[#allocation7 + $0x3f0] sm:$0xff]
    %v1352 = vld [vmem:[#allocation7 + $0x3f8] sm:$0xff]
    %s1353 = scalar_lea.vmem [#allocation11], 1
    %v1354 = vld [vmem:[%s1353] ss:$8 sm:$0x3]
    %v1355 = vpack.c.bf16 %v1334, %v1334
    %v1357 = vperm.slane %v1354, 0
    %v1358 = vperm.slane %v1354, 1
    %v1377 = vunpack.c.l.b16 %v1337
    %v1378 = vunpack.c.h.b16 %v1337
    %v1379 = vunpack.c.l.b16 %v1338
    %v1380 = vunpack.c.h.b16 %v1338
    %v1381 = vunpack.c.l.b16 %v1339
    %v1382 = vunpack.c.h.b16 %v1339
    %v1383 = vunpack.c.l.b16 %v1340
    %v1384 = vunpack.c.h.b16 %v1340
    %v1385 = vunpack.c.l.b16 %v1341
    %v1386 = vunpack.c.h.b16 %v1341
    %v1387 = vunpack.c.l.b16 %v1342
    %v1388 = vunpack.c.h.b16 %v1342
    %v1389 = vunpack.c.l.b16 %v1343
    %v1390 = vunpack.c.h.b16 %v1343
    %v1391 = vunpack.c.l.b16 %v1344
    %v1392 = vunpack.c.h.b16 %v1344
    %v1393 = vunpack.c.l.b16 %v1345
    %v1394 = vunpack.c.h.b16 %v1345
    %v1395 = vunpack.c.l.b16 %v1346
    %v1396 = vunpack.c.h.b16 %v1346
    %v1397 = vunpack.c.l.b16 %v1347
    %v1398 = vunpack.c.h.b16 %v1347
    %v1399 = vunpack.c.l.b16 %v1348
    %v1400 = vunpack.c.h.b16 %v1348
    %v1401 = vunpack.c.l.b16 %v1349
    %v1402 = vunpack.c.h.b16 %v1349
    %v1403 = vunpack.c.l.b16 %v1350
    %v1404 = vunpack.c.h.b16 %v1350
    %v1405 = vunpack.c.l.b16 %v1351
    %v1406 = vunpack.c.h.b16 %v1351
    %v1407 = vunpack.c.l.b16 %v1352
    %v1408 = vunpack.c.h.b16 %v1352
    %v1409 = vpack.c.b16 %v1379, %v1377
    %v1410 = vpack.c.b16 %v1380, %v1378
    %v1411 = vpack.c.b16 %v1383, %v1381
    %v1412 = vpack.c.b16 %v1384, %v1382
    %v1413 = vpack.c.b16 %v1387, %v1385
    %v1414 = vpack.c.b16 %v1388, %v1386
    %v1415 = vpack.c.b16 %v1391, %v1389
    %v1416 = vpack.c.b16 %v1392, %v1390
    %v1417 = vpack.c.b16 %v1395, %v1393
    %v1418 = vpack.c.b16 %v1396, %v1394
    %v1419 = vpack.c.b16 %v1399, %v1397
    %v1420 = vpack.c.b16 %v1400, %v1398
    %v1421 = vpack.c.b16 %v1403, %v1401
    %v1422 = vpack.c.b16 %v1404, %v1402
    %v1423 = vpack.c.b16 %v1407, %v1405
    %v1424 = vpack.c.b16 %v1408, %v1406
    %1441 = vmatpush.bf16.msra.mxu0 %v1423
    %1442 = vmatpush.bf16.msra.mxu0 %v1421
    %1443 = vmatpush.bf16.msra.mxu0 %v1419
    %1444 = vmatpush.bf16.msra.mxu0 %v1417
    %1445 = vmatpush.bf16.msra.mxu0 %v1415
    %1446 = vmatpush.bf16.msra.mxu0 %v1413
    %1447 = vmatpush.bf16.msra.mxu0 %v1411
    %1448 = vmatpush.bf16.msra.mxu0 %v1409
    %1449 = vmatmul.bf16.gmra.mxu0 %v1355
    %v1450 = vpop.f32.mrf.mxu0
    %v1451 = vadd.f32 %v1357, %v1450
    %v1452 = vpop.f32.mrf.mxu0
    %1453 = vdwg.mxu0
    %1454 = vmatpush.bf16.msra.mxu0 %v1424
    %1455 = vmatpush.bf16.msra.mxu0 %v1422
    %1456 = vmatpush.bf16.msra.mxu0 %v1420
    %1457 = vmatpush.bf16.msra.mxu0 %v1418
    %1458 = vmatpush.bf16.msra.mxu0 %v1416
    %1459 = vmatpush.bf16.msra.mxu0 %v1414
    %1460 = vmatpush.bf16.msra.mxu0 %v1412
    %1461 = vmatpush.bf16.msra.mxu0 %v1410
    %1462 = vmatmul.bf16.gmra.mxu0 %v1355
    %v1463 = vpop.f32.mrf.mxu0
    %v1464 = vadd.f32 %v1358, %v1463
    %v1465 = vpop.f32.mrf.mxu0
    %1466 = vdwg.mxu0
    %v1467 = vadd.f32 %v925, %v1451
    %v1468 = vadd.f32 %v1016, %v1464
    %v1469 = vld [vmem:[#allocation7 + $0x400] sm:$0xff]
    %v1470 = vld [vmem:[#allocation7 + $0x408] sm:$0xff]
    %v1471 = vld [vmem:[#allocation7 + $0x410] sm:$0xff]
    %v1472 = vld [vmem:[#allocation7 + $0x418] sm:$0xff]
    %v1473 = vld [vmem:[#allocation7 + $0x420] sm:$0xff]
    %v1474 = vld [vmem:[#allocation7 + $0x428] sm:$0xff]
    %v1475 = vld [vmem:[#allocation7 + $0x430] sm:$0xff]
    %v1476 = vld [vmem:[#allocation7 + $0x438] sm:$0xff]
    %v1477 = vld [vmem:[#allocation7 + $0x440] sm:$0xff]
    %v1478 = vld [vmem:[#allocation7 + $0x448] sm:$0xff]
    %v1479 = vld [vmem:[#allocation7 + $0x450] sm:$0xff]
    %v1480 = vld [vmem:[#allocation7 + $0x458] sm:$0xff]
    %v1481 = vld [vmem:[#allocation7 + $0x460] sm:$0xff]
    %v1482 = vld [vmem:[#allocation7 + $0x468] sm:$0xff]
    %v1483 = vld [vmem:[#allocation7 + $0x470] sm:$0xff]
    %v1484 = vld [vmem:[#allocation7 + $0x478] sm:$0xff]
    %v1485 = vld [vmem:[#allocation7 + $0x480] sm:$0xff]
    %v1486 = vld [vmem:[#allocation7 + $0x488] sm:$0xff]
    %v1487 = vld [vmem:[#allocation7 + $0x490] sm:$0xff]
    %v1488 = vld [vmem:[#allocation7 + $0x498] sm:$0xff]
    %v1489 = vld [vmem:[#allocation7 + $0x4a0] sm:$0xff]
    %v1490 = vld [vmem:[#allocation7 + $0x4a8] sm:$0xff]
    %v1491 = vld [vmem:[#allocation7 + $0x4b0] sm:$0xff]
    %v1492 = vld [vmem:[#allocation7 + $0x4b8] sm:$0xff]
    %v1493 = vld [vmem:[#allocation7 + $0x4c0] sm:$0xff]
    %v1494 = vld [vmem:[#allocation7 + $0x4c8] sm:$0xff]
    %v1495 = vld [vmem:[#allocation7 + $0x4d0] sm:$0xff]
    %v1496 = vld [vmem:[#allocation7 + $0x4d8] sm:$0xff]
    %v1497 = vld [vmem:[#allocation7 + $0x4e0] sm:$0xff]
    %v1498 = vld [vmem:[#allocation7 + $0x4e8] sm:$0xff]
    %v1499 = vld [vmem:[#allocation7 + $0x4f0] sm:$0xff]
    %v1500 = vld [vmem:[#allocation7 + $0x4f8] sm:$0xff]
    %s1501 = scalar_lea.vmem [#allocation11], 2
    %v1502 = vld [vmem:[%s1501] ss:$8 sm:$0x3]
    %v1503 = vpack.c.bf16 %v1467, %v1467
    %v1504 = vpack.c.bf16 %v1468, %v1468
    %v1506 = vperm.slane %v1502, 0
    %v1507 = vperm.slane %v1502, 1
    %v1542 = vunpack.c.l.b16 %v1469
    %v1543 = vunpack.c.h.b16 %v1469
    %v1544 = vunpack.c.l.b16 %v1470
    %v1545 = vunpack.c.h.b16 %v1470
    %v1546 = vunpack.c.l.b16 %v1471
    %v1547 = vunpack.c.h.b16 %v1471
    %v1548 = vunpack.c.l.b16 %v1472
    %v1549 = vunpack.c.h.b16 %v1472
    %v1550 = vunpack.c.l.b16 %v1473
    %v1551 = vunpack.c.h.b16 %v1473
    %v1552 = vunpack.c.l.b16 %v1474
    %v1553 = vunpack.c.h.b16 %v1474
    %v1554 = vunpack.c.l.b16 %v1475
    %v1555 = vunpack.c.h.b16 %v1475
    %v1556 = vunpack.c.l.b16 %v1476
    %v1557 = vunpack.c.h.b16 %v1476
    %v1558 = vunpack.c.l.b16 %v1477
    %v1559 = vunpack.c.h.b16 %v1477
    %v1560 = vunpack.c.l.b16 %v1478
    %v1561 = vunpack.c.h.b16 %v1478
    %v1562 = vunpack.c.l.b16 %v1479
    %v1563 = vunpack.c.h.b16 %v1479
    %v1564 = vunpack.c.l.b16 %v1480
    %v1565 = vunpack.c.h.b16 %v1480
    %v1566 = vunpack.c.l.b16 %v1481
    %v1567 = vunpack.c.h.b16 %v1481
    %v1568 = vunpack.c.l.b16 %v1482
    %v1569 = vunpack.c.h.b16 %v1482
    %v1570 = vunpack.c.l.b16 %v1483
    %v1571 = vunpack.c.h.b16 %v1483
    %v1572 = vunpack.c.l.b16 %v1484
    %v1573 = vunpack.c.h.b16 %v1484
    %v1574 = vunpack.c.l.b16 %v1485
    %v1575 = vunpack.c.h.b16 %v1485
    %v1576 = vunpack.c.l.b16 %v1486
    %v1577 = vunpack.c.h.b16 %v1486
    %v1578 = vunpack.c.l.b16 %v1487
    %v1579 = vunpack.c.h.b16 %v1487
    %v1580 = vunpack.c.l.b16 %v1488
    %v1581 = vunpack.c.h.b16 %v1488
    %v1582 = vunpack.c.l.b16 %v1489
    %v1583 = vunpack.c.h.b16 %v1489
    %v1584 = vunpack.c.l.b16 %v1490
    %v1585 = vunpack.c.h.b16 %v1490
    %v1586 = vunpack.c.l.b16 %v1491
    %v1587 = vunpack.c.h.b16 %v1491
    %v1588 = vunpack.c.l.b16 %v1492
    %v1589 = vunpack.c.h.b16 %v1492
    %v1590 = vunpack.c.l.b16 %v1493
    %v1591 = vunpack.c.h.b16 %v1493
    %v1592 = vunpack.c.l.b16 %v1494
    %v1593 = vunpack.c.h.b16 %v1494
    %v1594 = vunpack.c.l.b16 %v1495
    %v1595 = vunpack.c.h.b16 %v1495
    %v1596 = vunpack.c.l.b16 %v1496
    %v1597 = vunpack.c.h.b16 %v1496
    %v1598 = vunpack.c.l.b16 %v1497
    %v1599 = vunpack.c.h.b16 %v1497
    %v1600 = vunpack.c.l.b16 %v1498
    %v1601 = vunpack.c.h.b16 %v1498
    %v1602 = vunpack.c.l.b16 %v1499
    %v1603 = vunpack.c.h.b16 %v1499
    %v1604 = vunpack.c.l.b16 %v1500
    %v1605 = vunpack.c.h.b16 %v1500
    %v1606 = vpack.c.b16 %v1544, %v1542
    %v1607 = vpack.c.b16 %v1545, %v1543
    %v1608 = vpack.c.b16 %v1548, %v1546
    %v1609 = vpack.c.b16 %v1549, %v1547
    %v1610 = vpack.c.b16 %v1552, %v1550
    %v1611 = vpack.c.b16 %v1553, %v1551
    %v1612 = vpack.c.b16 %v1556, %v1554
    %v1613 = vpack.c.b16 %v1557, %v1555
    %v1614 = vpack.c.b16 %v1560, %v1558
    %v1615 = vpack.c.b16 %v1561, %v1559
    %v1616 = vpack.c.b16 %v1564, %v1562
    %v1617 = vpack.c.b16 %v1565, %v1563
    %v1618 = vpack.c.b16 %v1568, %v1566
    %v1619 = vpack.c.b16 %v1569, %v1567
    %v1620 = vpack.c.b16 %v1572, %v1570
    %v1621 = vpack.c.b16 %v1573, %v1571
    %v1622 = vpack.c.b16 %v1576, %v1574
    %v1623 = vpack.c.b16 %v1577, %v1575
    %v1624 = vpack.c.b16 %v1580, %v1578
    %v1625 = vpack.c.b16 %v1581, %v1579
    %v1626 = vpack.c.b16 %v1584, %v1582
    %v1627 = vpack.c.b16 %v1585, %v1583
    %v1628 = vpack.c.b16 %v1588, %v1586
    %v1629 = vpack.c.b16 %v1589, %v1587
    %v1630 = vpack.c.b16 %v1592, %v1590
    %v1631 = vpack.c.b16 %v1593, %v1591
    %v1632 = vpack.c.b16 %v1596, %v1594
    %v1633 = vpack.c.b16 %v1597, %v1595
    %v1634 = vpack.c.b16 %v1600, %v1598
    %v1635 = vpack.c.b16 %v1601, %v1599
    %v1636 = vpack.c.b16 %v1604, %v1602
    %v1637 = vpack.c.b16 %v1605, %v1603
    %1670 = vmatpush.bf16.msra.mxu0 %v1620
    %1671 = vmatpush.bf16.msra.mxu0 %v1618
    %1672 = vmatpush.bf16.msra.mxu0 %v1616
    %1673 = vmatpush.bf16.msra.mxu0 %v1614
    %1674 = vmatpush.bf16.msra.mxu0 %v1612
    %1675 = vmatpush.bf16.msra.mxu0 %v1610
    %1676 = vmatpush.bf16.msra.mxu0 %v1608
    %1677 = vmatpush.bf16.msra.mxu0 %v1606
    %1678 = vmatmul.bf16.gmra.mxu0 %v1503
    %v1679 = vpop.f32.mrf.mxu0
    %v1680 = vadd.f32 %v1506, %v1679
    %v1681 = vpop.f32.mrf.mxu0
    %1682 = vdwg.mxu0
    %1683 = vmatpush.bf16.msra.mxu0 %v1636
    %1684 = vmatpush.bf16.msra.mxu0 %v1634
    %1685 = vmatpush.bf16.msra.mxu0 %v1632
    %1686 = vmatpush.bf16.msra.mxu0 %v1630
    %1687 = vmatpush.bf16.msra.mxu0 %v1628
    %1688 = vmatpush.bf16.msra.mxu0 %v1626
    %1689 = vmatpush.bf16.msra.mxu0 %v1624
    %1690 = vmatpush.bf16.msra.mxu0 %v1622
    %1691 = vmatmul.bf16.gmra.mxu0 %v1504
    %v1692 = vpop.f32.mrf.mxu0
    %v1693 = vadd.f32 %v1680, %v1692
    %v1694 = vpop.f32.mrf.mxu0
    %1695 = vdwg.mxu0
    %1696 = vmatpush.bf16.msra.mxu0 %v1621
    %1697 = vmatpush.bf16.msra.mxu0 %v1619
    %1698 = vmatpush.bf16.msra.mxu0 %v1617
    %1699 = vmatpush.bf16.msra.mxu0 %v1615
    %1700 = vmatpush.bf16.msra.mxu0 %v1613
    %1701 = vmatpush.bf16.msra.mxu0 %v1611
    %1702 = vmatpush.bf16.msra.mxu0 %v1609
    %1703 = vmatpush.bf16.msra.mxu0 %v1607
    %1704 = vmatmul.bf16.gmra.mxu0 %v1503
    %v1705 = vpop.f32.mrf.mxu0
    %v1706 = vadd.f32 %v1507, %v1705
    %v1707 = vpop.f32.mrf.mxu0
    %1708 = vdwg.mxu0
    %1709 = vmatpush.bf16.msra.mxu0 %v1637
    %1710 = vmatpush.bf16.msra.mxu0 %v1635
    %1711 = vmatpush.bf16.msra.mxu0 %v1633
    %1712 = vmatpush.bf16.msra.mxu0 %v1631
    %1713 = vmatpush.bf16.msra.mxu0 %v1629
    %1714 = vmatpush.bf16.msra.mxu0 %v1627
    %1715 = vmatpush.bf16.msra.mxu0 %v1625
    %1716 = vmatpush.bf16.msra.mxu0 %v1623
    %1717 = vmatmul.bf16.gmra.mxu0 %v1504
    %v1718 = vpop.f32.mrf.mxu0
    %v1719 = vadd.f32 %v1706, %v1718
    %v1720 = vpop.f32.mrf.mxu0
    %1721 = vdwg.mxu0
    %v1722 = vld [vmem:[#allocation7 + $0x500] sm:$0xff]
    %v1723 = vld [vmem:[#allocation7 + $0x508] sm:$0xff]
    %v1724 = vld [vmem:[#allocation7 + $0x510] sm:$0xff]
    %v1725 = vld [vmem:[#allocation7 + $0x518] sm:$0xff]
    %v1726 = vld [vmem:[#allocation7 + $0x520] sm:$0xff]
    %v1727 = vld [vmem:[#allocation7 + $0x528] sm:$0xff]
    %v1728 = vld [vmem:[#allocation7 + $0x530] sm:$0xff]
    %v1729 = vld [vmem:[#allocation7 + $0x538] sm:$0xff]
    %v1730 = vld [vmem:[#allocation7 + $0x540] sm:$0xff]
    %v1731 = vld [vmem:[#allocation7 + $0x548] sm:$0xff]
    %v1732 = vld [vmem:[#allocation7 + $0x550] sm:$0xff]
    %v1733 = vld [vmem:[#allocation7 + $0x558] sm:$0xff]
    %v1734 = vld [vmem:[#allocation7 + $0x560] sm:$0xff]
    %v1735 = vld [vmem:[#allocation7 + $0x568] sm:$0xff]
    %v1736 = vld [vmem:[#allocation7 + $0x570] sm:$0xff]
    %v1737 = vld [vmem:[#allocation7 + $0x578] sm:$0xff]
    %v1738 = vld [vmem:[#allocation7 + $0x580] sm:$0xff]
    %v1739 = vld [vmem:[#allocation7 + $0x588] sm:$0xff]
    %v1740 = vld [vmem:[#allocation7 + $0x590] sm:$0xff]
    %v1741 = vld [vmem:[#allocation7 + $0x598] sm:$0xff]
    %v1742 = vld [vmem:[#allocation7 + $0x5a0] sm:$0xff]
    %v1743 = vld [vmem:[#allocation7 + $0x5a8] sm:$0xff]
    %v1744 = vld [vmem:[#allocation7 + $0x5b0] sm:$0xff]
    %v1745 = vld [vmem:[#allocation7 + $0x5b8] sm:$0xff]
    %v1746 = vld [vmem:[#allocation7 + $0x5c0] sm:$0xff]
    %v1747 = vld [vmem:[#allocation7 + $0x5c8] sm:$0xff]
    %v1748 = vld [vmem:[#allocation7 + $0x5d0] sm:$0xff]
    %v1749 = vld [vmem:[#allocation7 + $0x5d8] sm:$0xff]
    %v1750 = vld [vmem:[#allocation7 + $0x5e0] sm:$0xff]
    %v1751 = vld [vmem:[#allocation7 + $0x5e8] sm:$0xff]
    %v1752 = vld [vmem:[#allocation7 + $0x5f0] sm:$0xff]
    %v1753 = vld [vmem:[#allocation7 + $0x5f8] sm:$0xff]
    %s1754 = scalar_lea.vmem [#allocation11], 3
    %v1755 = vld [vmem:[%s1754] ss:$8 sm:$0x3]
    %v1756 = vpack.c.bf16 %v1693, %v1693
    %v1757 = vpack.c.bf16 %v1719, %v1719
    %v1759 = vperm.slane %v1755, 0
    %v1760 = vperm.slane %v1755, 1
    %v1795 = vunpack.c.l.b16 %v1722
    %v1796 = vunpack.c.h.b16 %v1722
    %v1797 = vunpack.c.l.b16 %v1723
    %v1798 = vunpack.c.h.b16 %v1723
    %v1799 = vunpack.c.l.b16 %v1724
    %v1800 = vunpack.c.h.b16 %v1724
    %v1801 = vunpack.c.l.b16 %v1725
    %v1802 = vunpack.c.h.b16 %v1725
    %v1803 = vunpack.c.l.b16 %v1726
    %v1804 = vunpack.c.h.b16 %v1726
    %v1805 = vunpack.c.l.b16 %v1727
    %v1806 = vunpack.c.h.b16 %v1727
    %v1807 = vunpack.c.l.b16 %v1728
    %v1808 = vunpack.c.h.b16 %v1728
    %v1809 = vunpack.c.l.b16 %v1729
    %v1810 = vunpack.c.h.b16 %v1729
    %v1811 = vunpack.c.l.b16 %v1730
    %v1812 = vunpack.c.h.b16 %v1730
    %v1813 = vunpack.c.l.b16 %v1731
    %v1814 = vunpack.c.h.b16 %v1731
    %v1815 = vunpack.c.l.b16 %v1732
    %v1816 = vunpack.c.h.b16 %v1732
    %v1817 = vunpack.c.l.b16 %v1733
    %v1818 = vunpack.c.h.b16 %v1733
    %v1819 = vunpack.c.l.b16 %v1734
    %v1820 = vunpack.c.h.b16 %v1734
    %v1821 = vunpack.c.l.b16 %v1735
    %v1822 = vunpack.c.h.b16 %v1735
    %v1823 = vunpack.c.l.b16 %v1736
    %v1824 = vunpack.c.h.b16 %v1736
    %v1825 = vunpack.c.l.b16 %v1737
    %v1826 = vunpack.c.h.b16 %v1737
    %v1827 = vunpack.c.l.b16 %v1738
    %v1828 = vunpack.c.h.b16 %v1738
    %v1829 = vunpack.c.l.b16 %v1739
    %v1830 = vunpack.c.h.b16 %v1739
    %v1831 = vunpack.c.l.b16 %v1740
    %v1832 = vunpack.c.h.b16 %v1740
    %v1833 = vunpack.c.l.b16 %v1741
    %v1834 = vunpack.c.h.b16 %v1741
    %v1835 = vunpack.c.l.b16 %v1742
    %v1836 = vunpack.c.h.b16 %v1742
    %v1837 = vunpack.c.l.b16 %v1743
    %v1838 = vunpack.c.h.b16 %v1743
    %v1839 = vunpack.c.l.b16 %v1744
    %v1840 = vunpack.c.h.b16 %v1744
    %v1841 = vunpack.c.l.b16 %v1745
    %v1842 = vunpack.c.h.b16 %v1745
    %v1843 = vunpack.c.l.b16 %v1746
    %v1844 = vunpack.c.h.b16 %v1746
    %v1845 = vunpack.c.l.b16 %v1747
    %v1846 = vunpack.c.h.b16 %v1747
    %v1847 = vunpack.c.l.b16 %v1748
    %v1848 = vunpack.c.h.b16 %v1748
    %v1849 = vunpack.c.l.b16 %v1749
    %v1850 = vunpack.c.h.b16 %v1749
    %v1851 = vunpack.c.l.b16 %v1750
    %v1852 = vunpack.c.h.b16 %v1750
    %v1853 = vunpack.c.l.b16 %v1751
    %v1854 = vunpack.c.h.b16 %v1751
    %v1855 = vunpack.c.l.b16 %v1752
    %v1856 = vunpack.c.h.b16 %v1752
    %v1857 = vunpack.c.l.b16 %v1753
    %v1858 = vunpack.c.h.b16 %v1753
    %v1859 = vpack.c.b16 %v1797, %v1795
    %v1860 = vpack.c.b16 %v1798, %v1796
    %v1861 = vpack.c.b16 %v1801, %v1799
    %v1862 = vpack.c.b16 %v1802, %v1800
    %v1863 = vpack.c.b16 %v1805, %v1803
    %v1864 = vpack.c.b16 %v1806, %v1804
    %v1865 = vpack.c.b16 %v1809, %v1807
    %v1866 = vpack.c.b16 %v1810, %v1808
    %v1867 = vpack.c.b16 %v1813, %v1811
    %v1868 = vpack.c.b16 %v1814, %v1812
    %v1869 = vpack.c.b16 %v1817, %v1815
    %v1870 = vpack.c.b16 %v1818, %v1816
    %v1871 = vpack.c.b16 %v1821, %v1819
    %v1872 = vpack.c.b16 %v1822, %v1820
    %v1873 = vpack.c.b16 %v1825, %v1823
    %v1874 = vpack.c.b16 %v1826, %v1824
    %v1875 = vpack.c.b16 %v1829, %v1827
    %v1876 = vpack.c.b16 %v1830, %v1828
    %v1877 = vpack.c.b16 %v1833, %v1831
    %v1878 = vpack.c.b16 %v1834, %v1832
    %v1879 = vpack.c.b16 %v1837, %v1835
    %v1880 = vpack.c.b16 %v1838, %v1836
    %v1881 = vpack.c.b16 %v1841, %v1839
    %v1882 = vpack.c.b16 %v1842, %v1840
    %v1883 = vpack.c.b16 %v1845, %v1843
    %v1884 = vpack.c.b16 %v1846, %v1844
    %v1885 = vpack.c.b16 %v1849, %v1847
    %v1886 = vpack.c.b16 %v1850, %v1848
    %v1887 = vpack.c.b16 %v1853, %v1851
    %v1888 = vpack.c.b16 %v1854, %v1852
    %v1889 = vpack.c.b16 %v1857, %v1855
    %v1890 = vpack.c.b16 %v1858, %v1856
    %1923 = vmatpush.bf16.msra.mxu0 %v1873
    %1924 = vmatpush.bf16.msra.mxu0 %v1871
    %1925 = vmatpush.bf16.msra.mxu0 %v1869
    %1926 = vmatpush.bf16.msra.mxu0 %v1867
    %1927 = vmatpush.bf16.msra.mxu0 %v1865
    %1928 = vmatpush.bf16.msra.mxu0 %v1863
    %1929 = vmatpush.bf16.msra.mxu0 %v1861
    %1930 = vmatpush.bf16.msra.mxu0 %v1859
    %1931 = vmatmul.bf16.gmra.mxu0 %v1756
    %v1932 = vpop.f32.mrf.mxu0
    %v1933 = vadd.f32 %v1759, %v1932
    %v1934 = vpop.f32.mrf.mxu0
    %1935 = vdwg.mxu0
    %1936 = vmatpush.bf16.msra.mxu0 %v1889
    %1937 = vmatpush.bf16.msra.mxu0 %v1887
    %1938 = vmatpush.bf16.msra.mxu0 %v1885
    %1939 = vmatpush.bf16.msra.mxu0 %v1883
    %1940 = vmatpush.bf16.msra.mxu0 %v1881
    %1941 = vmatpush.bf16.msra.mxu0 %v1879
    %1942 = vmatpush.bf16.msra.mxu0 %v1877
    %1943 = vmatpush.bf16.msra.mxu0 %v1875
    %1944 = vmatmul.bf16.gmra.mxu0 %v1757
    %v1945 = vpop.f32.mrf.mxu0
    %v1946 = vadd.f32 %v1933, %v1945
    %v1947 = vpop.f32.mrf.mxu0
    %1948 = vdwg.mxu0
    %1949 = vmatpush.bf16.msra.mxu0 %v1874
    %1950 = vmatpush.bf16.msra.mxu0 %v1872
    %1951 = vmatpush.bf16.msra.mxu0 %v1870
    %1952 = vmatpush.bf16.msra.mxu0 %v1868
    %1953 = vmatpush.bf16.msra.mxu0 %v1866
    %1954 = vmatpush.bf16.msra.mxu0 %v1864
    %1955 = vmatpush.bf16.msra.mxu0 %v1862
    %1956 = vmatpush.bf16.msra.mxu0 %v1860
    %1957 = vmatmul.bf16.gmra.mxu0 %v1756
    %v1958 = vpop.f32.mrf.mxu0
    %v1959 = vadd.f32 %v1760, %v1958
    %v1960 = vpop.f32.mrf.mxu0
    %1961 = vdwg.mxu0
    %1962 = vmatpush.bf16.msra.mxu0 %v1890
    %1963 = vmatpush.bf16.msra.mxu0 %v1888
    %1964 = vmatpush.bf16.msra.mxu0 %v1886
    %1965 = vmatpush.bf16.msra.mxu0 %v1884
    %1966 = vmatpush.bf16.msra.mxu0 %v1882
    %1967 = vmatpush.bf16.msra.mxu0 %v1880
    %1968 = vmatpush.bf16.msra.mxu0 %v1878
    %1969 = vmatpush.bf16.msra.mxu0 %v1876
    %1970 = vmatmul.bf16.gmra.mxu0 %v1757
    %v1971 = vpop.f32.mrf.mxu0
    %v1972 = vadd.f32 %v1959, %v1971
    %v1973 = vpop.f32.mrf.mxu0
    %1974 = vdwg.mxu0
    %v1975 = vld [vmem:[#allocation5 + $0x100] sm:$0xf]
    %v1976 = vld [vmem:[#allocation5 + $0x104] sm:$0xf]
    %v1977 = vld [vmem:[#allocation5 + $0x108] sm:$0xf]
    %v1978 = vld [vmem:[#allocation5 + $0x10c] sm:$0xf]
    %v1979 = vld [vmem:[#allocation5 + $0x110] sm:$0xf]
    %v1980 = vld [vmem:[#allocation5 + $0x114] sm:$0xf]
    %v1981 = vld [vmem:[#allocation5 + $0x118] sm:$0xf]
    %v1982 = vld [vmem:[#allocation5 + $0x11c] sm:$0xf]
    %v1983 = vld [vmem:[#allocation5 + $0x120] sm:$0xf]
    %v1984 = vld [vmem:[#allocation5 + $0x124] sm:$0xf]
    %v1985 = vld [vmem:[#allocation5 + $0x128] sm:$0xf]
    %v1986 = vld [vmem:[#allocation5 + $0x12c] sm:$0xf]
    %v1987 = vld [vmem:[#allocation5 + $0x130] sm:$0xf]
    %v1988 = vld [vmem:[#allocation5 + $0x134] sm:$0xf]
    %v1989 = vld [vmem:[#allocation5 + $0x138] sm:$0xf]
    %v1990 = vld [vmem:[#allocation5 + $0x13c] sm:$0xf]
    %v1991 = vld [vmem:[#allocation5 + $0x140] sm:$0xf]
    %v1992 = vld [vmem:[#allocation5 + $0x144] sm:$0xf]
    %v1993 = vld [vmem:[#allocation5 + $0x148] sm:$0xf]
    %v1994 = vld [vmem:[#allocation5 + $0x14c] sm:$0xf]
    %v1995 = vld [vmem:[#allocation5 + $0x150] sm:$0xf]
    %v1996 = vld [vmem:[#allocation5 + $0x154] sm:$0xf]
    %v1997 = vld [vmem:[#allocation5 + $0x158] sm:$0xf]
    %v1998 = vld [vmem:[#allocation5 + $0x15c] sm:$0xf]
    %v1999 = vld [vmem:[#allocation5 + $0x160] sm:$0xf]
    %v2000 = vld [vmem:[#allocation5 + $0x164] sm:$0xf]
    %v2001 = vld [vmem:[#allocation5 + $0x168] sm:$0xf]
    %v2002 = vld [vmem:[#allocation5 + $0x16c] sm:$0xf]
    %v2003 = vld [vmem:[#allocation5 + $0x170] sm:$0xf]
    %v2004 = vld [vmem:[#allocation5 + $0x174] sm:$0xf]
    %v2005 = vld [vmem:[#allocation5 + $0x178] sm:$0xf]
    %v2006 = vld [vmem:[#allocation5 + $0x17c] sm:$0xf]
    %v2007 = vld [vmem:[#allocation10 + $0x3] sm:$0x1]
    %v2008 = vpack.c.bf16 %v1946, %v1946
    %v2009 = vpack.c.bf16 %v1972, %v1972
    %v2010 = vperm.slane %v2007, 0
    %v2043 = vunpack.c.l.b16 %v1975
    %v2044 = vunpack.c.l.b16 %v1976
    %v2045 = vunpack.c.l.b16 %v1977
    %v2046 = vunpack.c.l.b16 %v1978
    %v2047 = vunpack.c.l.b16 %v1979
    %v2048 = vunpack.c.l.b16 %v1980
    %v2049 = vunpack.c.l.b16 %v1981
    %v2050 = vunpack.c.l.b16 %v1982
    %v2051 = vunpack.c.l.b16 %v1983
    %v2052 = vunpack.c.l.b16 %v1984
    %v2053 = vunpack.c.l.b16 %v1985
    %v2054 = vunpack.c.l.b16 %v1986
    %v2055 = vunpack.c.l.b16 %v1987
    %v2056 = vunpack.c.l.b16 %v1988
    %v2057 = vunpack.c.l.b16 %v1989
    %v2058 = vunpack.c.l.b16 %v1990
    %v2059 = vunpack.c.l.b16 %v1991
    %v2060 = vunpack.c.l.b16 %v1992
    %v2061 = vunpack.c.l.b16 %v1993
    %v2062 = vunpack.c.l.b16 %v1994
    %v2063 = vunpack.c.l.b16 %v1995
    %v2064 = vunpack.c.l.b16 %v1996
    %v2065 = vunpack.c.l.b16 %v1997
    %v2066 = vunpack.c.l.b16 %v1998
    %v2067 = vunpack.c.l.b16 %v1999
    %v2068 = vunpack.c.l.b16 %v2000
    %v2069 = vunpack.c.l.b16 %v2001
    %v2070 = vunpack.c.l.b16 %v2002
    %v2071 = vunpack.c.l.b16 %v2003
    %v2072 = vunpack.c.l.b16 %v2004
    %v2073 = vunpack.c.l.b16 %v2005
    %v2074 = vunpack.c.l.b16 %v2006
    %v2075 = vpack.c.b16 %v2044, %v2043
    %v2076 = vpack.c.b16 %v2046, %v2045
    %v2077 = vpack.c.b16 %v2048, %v2047
    %v2078 = vpack.c.b16 %v2050, %v2049
    %v2079 = vpack.c.b16 %v2052, %v2051
    %v2080 = vpack.c.b16 %v2054, %v2053
    %v2081 = vpack.c.b16 %v2056, %v2055
    %v2082 = vpack.c.b16 %v2058, %v2057
    %v2083 = vpack.c.b16 %v2060, %v2059
    %v2084 = vpack.c.b16 %v2062, %v2061
    %v2085 = vpack.c.b16 %v2064, %v2063
    %v2086 = vpack.c.b16 %v2066, %v2065
    %v2087 = vpack.c.b16 %v2068, %v2067
    %v2088 = vpack.c.b16 %v2070, %v2069
    %v2089 = vpack.c.b16 %v2072, %v2071
    %v2090 = vpack.c.b16 %v2074, %v2073
    %2107 = vmatpush.bf16.msra.mxu0 %v2082
    %2108 = vmatpush.bf16.msra.mxu0 %v2081
    %2109 = vmatpush.bf16.msra.mxu0 %v2080
    %2110 = vmatpush.bf16.msra.mxu0 %v2079
    %2111 = vmatpush.bf16.msra.mxu0 %v2078
    %2112 = vmatpush.bf16.msra.mxu0 %v2077
    %2113 = vmatpush.bf16.msra.mxu0 %v2076
    %2114 = vmatpush.bf16.msra.mxu0 %v2075
    %2115 = vmatmul.bf16.gmra.mxu0 %v2008
    %v2116 = vpop.f32.mrf.mxu0
    %v2117 = vadd.f32 %v2010, %v2116
    %v2118 = vpop.f32.mrf.mxu0
    %2119 = vdwg.mxu0
    %2120 = vmatpush.bf16.msra.mxu0 %v2090
    %2121 = vmatpush.bf16.msra.mxu0 %v2089
    %2122 = vmatpush.bf16.msra.mxu0 %v2088
    %2123 = vmatpush.bf16.msra.mxu0 %v2087
    %2124 = vmatpush.bf16.msra.mxu0 %v2086
    %2125 = vmatpush.bf16.msra.mxu0 %v2085
    %2126 = vmatpush.bf16.msra.mxu0 %v2084
    %2127 = vmatpush.bf16.msra.mxu0 %v2083
    %2128 = vmatmul.bf16.gmra.mxu0 %v2009
    %v2129 = vpop.f32.mrf.mxu0
    %v2130 = vadd.f32 %v2117, %v2129
    %v2131 = vpop.f32.mrf.mxu0
    %2132 = vdwg.mxu0
    %v2133 = vld [vmem:[#allocation5 + $0x180] sm:$0xf]
    %v2134 = vld [vmem:[#allocation5 + $0x184] sm:$0xf]
    %v2135 = vld [vmem:[#allocation5 + $0x188] sm:$0xf]
    %v2136 = vld [vmem:[#allocation5 + $0x18c] sm:$0xf]
    %v2137 = vld [vmem:[#allocation5 + $0x190] sm:$0xf]
    %v2138 = vld [vmem:[#allocation5 + $0x194] sm:$0xf]
    %v2139 = vld [vmem:[#allocation5 + $0x198] sm:$0xf]
    %v2140 = vld [vmem:[#allocation5 + $0x19c] sm:$0xf]
    %v2141 = vld [vmem:[#allocation5 + $0x1a0] sm:$0xf]
    %v2142 = vld [vmem:[#allocation5 + $0x1a4] sm:$0xf]
    %v2143 = vld [vmem:[#allocation5 + $0x1a8] sm:$0xf]
    %v2144 = vld [vmem:[#allocation5 + $0x1ac] sm:$0xf]
    %v2145 = vld [vmem:[#allocation5 + $0x1b0] sm:$0xf]
    %v2146 = vld [vmem:[#allocation5 + $0x1b4] sm:$0xf]
    %v2147 = vld [vmem:[#allocation5 + $0x1b8] sm:$0xf]
    %v2148 = vld [vmem:[#allocation5 + $0x1bc] sm:$0xf]
    %v2149 = vld [vmem:[#allocation10 + $0x4] sm:$0x1]
    %v2150 = vpack.c.bf16 %v2130, %v2130
    %v2151 = vperm.slane %v2149, 0
    %v2168 = vunpack.c.l.b16 %v2133
    %v2169 = vunpack.c.l.b16 %v2134
    %v2170 = vunpack.c.l.b16 %v2135
    %v2171 = vunpack.c.l.b16 %v2136
    %v2172 = vunpack.c.l.b16 %v2137
    %v2173 = vunpack.c.l.b16 %v2138
    %v2174 = vunpack.c.l.b16 %v2139
    %v2175 = vunpack.c.l.b16 %v2140
    %v2176 = vunpack.c.l.b16 %v2141
    %v2177 = vunpack.c.l.b16 %v2142
    %v2178 = vunpack.c.l.b16 %v2143
    %v2179 = vunpack.c.l.b16 %v2144
    %v2180 = vunpack.c.l.b16 %v2145
    %v2181 = vunpack.c.l.b16 %v2146
    %v2182 = vunpack.c.l.b16 %v2147
    %v2183 = vunpack.c.l.b16 %v2148
    %v2184 = vpack.c.b16 %v2169, %v2168
    %v2185 = vpack.c.b16 %v2171, %v2170
    %v2186 = vpack.c.b16 %v2173, %v2172
    %v2187 = vpack.c.b16 %v2175, %v2174
    %v2188 = vpack.c.b16 %v2177, %v2176
    %v2189 = vpack.c.b16 %v2179, %v2178
    %v2190 = vpack.c.b16 %v2181, %v2180
    %v2191 = vpack.c.b16 %v2183, %v2182
    %2200 = vmatpush.bf16.msra.mxu0 %v2191
    %2201 = vmatpush.bf16.msra.mxu0 %v2190
    %2202 = vmatpush.bf16.msra.mxu0 %v2189
    %2203 = vmatpush.bf16.msra.mxu0 %v2188
    %2204 = vmatpush.bf16.msra.mxu0 %v2187
    %2205 = vmatpush.bf16.msra.mxu0 %v2186
    %2206 = vmatpush.bf16.msra.mxu0 %v2185
    %2207 = vmatpush.bf16.msra.mxu0 %v2184
    %2208 = vmatmul.bf16.gmra.mxu0 %v2150
    %v2209 = vpop.f32.mrf.mxu0
    %v2210 = vadd.f32 %v2151, %v2209
    %v2211 = vpop.f32.mrf.mxu0
    %2212 = vdwg.mxu0
    %v2213 = vld [vmem:[#allocation5 + $0x1c0] sm:$0xf]
    %v2214 = vld [vmem:[#allocation5 + $0x1c4] sm:$0xf]
    %v2215 = vld [vmem:[#allocation5 + $0x1c8] sm:$0xf]
    %v2216 = vld [vmem:[#allocation5 + $0x1cc] sm:$0xf]
    %v2217 = vld [vmem:[#allocation5 + $0x1d0] sm:$0xf]
    %v2218 = vld [vmem:[#allocation5 + $0x1d4] sm:$0xf]
    %v2219 = vld [vmem:[#allocation5 + $0x1d8] sm:$0xf]
    %v2220 = vld [vmem:[#allocation5 + $0x1dc] sm:$0xf]
    %v2221 = vld [vmem:[#allocation5 + $0x1e0] sm:$0xf]
    %v2222 = vld [vmem:[#allocation5 + $0x1e4] sm:$0xf]
    %v2223 = vld [vmem:[#allocation5 + $0x1e8] sm:$0xf]
    %v2224 = vld [vmem:[#allocation5 + $0x1ec] sm:$0xf]
    %v2225 = vld [vmem:[#allocation5 + $0x1f0] sm:$0xf]
    %v2226 = vld [vmem:[#allocation5 + $0x1f4] sm:$0xf]
    %v2227 = vld [vmem:[#allocation5 + $0x1f8] sm:$0xf]
    %v2228 = vld [vmem:[#allocation5 + $0x1fc] sm:$0xf]
    %v2229 = vld [vmem:[#allocation10 + $0x5] sm:$0x1]
    %v2230 = vpack.c.bf16 %v2210, %v2210
    %v2231 = vperm.slane %v2229, 0
    %v2248 = vunpack.c.l.b16 %v2213
    %v2249 = vunpack.c.l.b16 %v2214
    %v2250 = vunpack.c.l.b16 %v2215
    %v2251 = vunpack.c.l.b16 %v2216
    %v2252 = vunpack.c.l.b16 %v2217
    %v2253 = vunpack.c.l.b16 %v2218
    %v2254 = vunpack.c.l.b16 %v2219
    %v2255 = vunpack.c.l.b16 %v2220
    %v2256 = vunpack.c.l.b16 %v2221
    %v2257 = vunpack.c.l.b16 %v2222
    %v2258 = vunpack.c.l.b16 %v2223
    %v2259 = vunpack.c.l.b16 %v2224
    %v2260 = vunpack.c.l.b16 %v2225
    %v2261 = vunpack.c.l.b16 %v2226
    %v2262 = vunpack.c.l.b16 %v2227
    %v2263 = vunpack.c.l.b16 %v2228
    %v2264 = vpack.c.b16 %v2249, %v2248
    %v2265 = vpack.c.b16 %v2251, %v2250
    %v2266 = vpack.c.b16 %v2253, %v2252
    %v2267 = vpack.c.b16 %v2255, %v2254
    %v2268 = vpack.c.b16 %v2257, %v2256
    %v2269 = vpack.c.b16 %v2259, %v2258
    %v2270 = vpack.c.b16 %v2261, %v2260
    %v2271 = vpack.c.b16 %v2263, %v2262
    %2280 = vmatpush.bf16.msra.mxu0 %v2271
    %2281 = vmatpush.bf16.msra.mxu0 %v2270
    %2282 = vmatpush.bf16.msra.mxu0 %v2269
    %2283 = vmatpush.bf16.msra.mxu0 %v2268
    %2284 = vmatpush.bf16.msra.mxu0 %v2267
    %2285 = vmatpush.bf16.msra.mxu0 %v2266
    %2286 = vmatpush.bf16.msra.mxu0 %v2265
    %2287 = vmatpush.bf16.msra.mxu0 %v2264
    %2288 = vmatmul.bf16.gmra.mxu0 %v2230
    %v2289 = vpop.f32.mrf.mxu0
    %v2290 = vadd.f32 %v2231, %v2289
    %v2291 = vpop.f32.mrf.mxu0
    %2292 = vdwg.mxu0
    %v2293 = vld [vmem:[#allocation5 + $0x200] sm:$0xf]
    %v2294 = vld [vmem:[#allocation5 + $0x204] sm:$0xf]
    %v2295 = vld [vmem:[#allocation5 + $0x208] sm:$0xf]
    %v2296 = vld [vmem:[#allocation5 + $0x20c] sm:$0xf]
    %v2297 = vld [vmem:[#allocation5 + $0x210] sm:$0xf]
    %v2298 = vld [vmem:[#allocation5 + $0x214] sm:$0xf]
    %v2299 = vld [vmem:[#allocation5 + $0x218] sm:$0xf]
    %v2300 = vld [vmem:[#allocation5 + $0x21c] sm:$0xf]
    %v2301 = vld [vmem:[#allocation5 + $0x220] sm:$0xf]
    %v2302 = vld [vmem:[#allocation5 + $0x224] sm:$0xf]
    %v2303 = vld [vmem:[#allocation5 + $0x228] sm:$0xf]
    %v2304 = vld [vmem:[#allocation5 + $0x22c] sm:$0xf]
    %v2305 = vld [vmem:[#allocation5 + $0x230] sm:$0xf]
    %v2306 = vld [vmem:[#allocation5 + $0x234] sm:$0xf]
    %v2307 = vld [vmem:[#allocation5 + $0x238] sm:$0xf]
    %v2308 = vld [vmem:[#allocation5 + $0x23c] sm:$0xf]
    %v2309 = vld [vmem:[#allocation10 + $0x6] sm:$0x1]
    %v2310 = vpack.c.bf16 %v2290, %v2290
    %v2311 = vperm.slane %v2309, 0
    %v2328 = vunpack.c.l.b16 %v2293
    %v2329 = vunpack.c.l.b16 %v2294
    %v2330 = vunpack.c.l.b16 %v2295
    %v2331 = vunpack.c.l.b16 %v2296
    %v2332 = vunpack.c.l.b16 %v2297
    %v2333 = vunpack.c.l.b16 %v2298
    %v2334 = vunpack.c.l.b16 %v2299
    %v2335 = vunpack.c.l.b16 %v2300
    %v2336 = vunpack.c.l.b16 %v2301
    %v2337 = vunpack.c.l.b16 %v2302
    %v2338 = vunpack.c.l.b16 %v2303
    %v2339 = vunpack.c.l.b16 %v2304
    %v2340 = vunpack.c.l.b16 %v2305
    %v2341 = vunpack.c.l.b16 %v2306
    %v2342 = vunpack.c.l.b16 %v2307
    %v2343 = vunpack.c.l.b16 %v2308
    %v2344 = vpack.c.b16 %v2329, %v2328
    %v2345 = vpack.c.b16 %v2331, %v2330
    %v2346 = vpack.c.b16 %v2333, %v2332
    %v2347 = vpack.c.b16 %v2335, %v2334
    %v2348 = vpack.c.b16 %v2337, %v2336
    %v2349 = vpack.c.b16 %v2339, %v2338
    %v2350 = vpack.c.b16 %v2341, %v2340
    %v2351 = vpack.c.b16 %v2343, %v2342
    %2360 = vmatpush.bf16.msra.mxu0 %v2351
    %2361 = vmatpush.bf16.msra.mxu0 %v2350
    %2362 = vmatpush.bf16.msra.mxu0 %v2349
    %2363 = vmatpush.bf16.msra.mxu0 %v2348
    %2364 = vmatpush.bf16.msra.mxu0 %v2347
    %2365 = vmatpush.bf16.msra.mxu0 %v2346
    %2366 = vmatpush.bf16.msra.mxu0 %v2345
    %2367 = vmatpush.bf16.msra.mxu0 %v2344
    %2368 = vmatmul.bf16.gmra.mxu0 %v2310
    %v2369 = vpop.f32.mrf.mxu0
    %v2370 = vadd.f32 %v2311, %v2369
    %v2371 = vpop.f32.mrf.mxu0
    %2372 = vdwg.mxu0
    %v2373 = vld [vmem:[#allocation5 + $0x240] sm:$0xf]
    %v2374 = vld [vmem:[#allocation5 + $0x244] sm:$0xf]
    %v2375 = vld [vmem:[#allocation5 + $0x248] sm:$0xf]
    %v2376 = vld [vmem:[#allocation5 + $0x24c] sm:$0xf]
    %v2377 = vld [vmem:[#allocation5 + $0x250] sm:$0xf]
    %v2378 = vld [vmem:[#allocation5 + $0x254] sm:$0xf]
    %v2379 = vld [vmem:[#allocation5 + $0x258] sm:$0xf]
    %v2380 = vld [vmem:[#allocation5 + $0x25c] sm:$0xf]
    %v2381 = vld [vmem:[#allocation5 + $0x260] sm:$0xf]
    %v2382 = vld [vmem:[#allocation5 + $0x264] sm:$0xf]
    %v2383 = vld [vmem:[#allocation5 + $0x268] sm:$0xf]
    %v2384 = vld [vmem:[#allocation5 + $0x26c] sm:$0xf]
    %v2385 = vld [vmem:[#allocation5 + $0x270] sm:$0xf]
    %v2386 = vld [vmem:[#allocation5 + $0x274] sm:$0xf]
    %v2387 = vld [vmem:[#allocation5 + $0x278] sm:$0xf]
    %v2388 = vld [vmem:[#allocation5 + $0x27c] sm:$0xf]
    %v2389 = vld [vmem:[#allocation10 + $0x7] sm:$0x1]
    %v2390 = vpack.c.bf16 %v2370, %v2370
    %v2391 = vperm.slane %v2389, 0
    %v2408 = vunpack.c.l.b16 %v2373
    %v2409 = vunpack.c.l.b16 %v2374
    %v2410 = vunpack.c.l.b16 %v2375
    %v2411 = vunpack.c.l.b16 %v2376
    %v2412 = vunpack.c.l.b16 %v2377
    %v2413 = vunpack.c.l.b16 %v2378
    %v2414 = vunpack.c.l.b16 %v2379
    %v2415 = vunpack.c.l.b16 %v2380
    %v2416 = vunpack.c.l.b16 %v2381
    %v2417 = vunpack.c.l.b16 %v2382
    %v2418 = vunpack.c.l.b16 %v2383
    %v2419 = vunpack.c.l.b16 %v2384
    %v2420 = vunpack.c.l.b16 %v2385
    %v2421 = vunpack.c.l.b16 %v2386
    %v2422 = vunpack.c.l.b16 %v2387
    %v2423 = vunpack.c.l.b16 %v2388
    %v2424 = vpack.c.b16 %v2409, %v2408
    %v2425 = vpack.c.b16 %v2411, %v2410
    %v2426 = vpack.c.b16 %v2413, %v2412
    %v2427 = vpack.c.b16 %v2415, %v2414
    %v2428 = vpack.c.b16 %v2417, %v2416
    %v2429 = vpack.c.b16 %v2419, %v2418
    %v2430 = vpack.c.b16 %v2421, %v2420
    %v2431 = vpack.c.b16 %v2423, %v2422
    %2440 = vmatpush.bf16.msra.mxu0 %v2431
    %2441 = vmatpush.bf16.msra.mxu0 %v2430
    %2442 = vmatpush.bf16.msra.mxu0 %v2429
    %2443 = vmatpush.bf16.msra.mxu0 %v2428
    %2444 = vmatpush.bf16.msra.mxu0 %v2427
    %2445 = vmatpush.bf16.msra.mxu0 %v2426
    %2446 = vmatpush.bf16.msra.mxu0 %v2425
    %2447 = vmatpush.bf16.msra.mxu0 %v2424
    %2448 = vmatmul.bf16.gmra.mxu0 %v2390
    %v2449 = vpop.f32.mrf.mxu0
    %v2450 = vadd.f32 %v2391, %v2449
    %v2451 = vpop.f32.mrf.mxu0
    %2452 = vdwg.mxu0
    %v2453 = vadd.f32 %v2130, %v2450
    %v2454 = vld [vmem:[#allocation5 + $0x280] sm:$0xf]
    %v2455 = vld [vmem:[#allocation5 + $0x284] sm:$0xf]
    %v2456 = vld [vmem:[#allocation5 + $0x288] sm:$0xf]
    %v2457 = vld [vmem:[#allocation5 + $0x28c] sm:$0xf]
    %v2458 = vld [vmem:[#allocation5 + $0x290] sm:$0xf]
    %v2459 = vld [vmem:[#allocation5 + $0x294] sm:$0xf]
    %v2460 = vld [vmem:[#allocation5 + $0x298] sm:$0xf]
    %v2461 = vld [vmem:[#allocation5 + $0x29c] sm:$0xf]
    %v2462 = vld [vmem:[#allocation5 + $0x2a0] sm:$0xf]
    %v2463 = vld [vmem:[#allocation5 + $0x2a4] sm:$0xf]
    %v2464 = vld [vmem:[#allocation5 + $0x2a8] sm:$0xf]
    %v2465 = vld [vmem:[#allocation5 + $0x2ac] sm:$0xf]
    %v2466 = vld [vmem:[#allocation5 + $0x2b0] sm:$0xf]
    %v2467 = vld [vmem:[#allocation5 + $0x2b4] sm:$0xf]
    %v2468 = vld [vmem:[#allocation5 + $0x2b8] sm:$0xf]
    %v2469 = vld [vmem:[#allocation5 + $0x2bc] sm:$0xf]
    %v2470 = vld [vmem:[#allocation10 + $0x8] sm:$0x1]
    %v2471 = vpack.c.bf16 %v2453, %v2453
    %v2472 = vperm.slane %v2470, 0
    %v2489 = vunpack.c.l.b16 %v2454
    %v2490 = vunpack.c.l.b16 %v2455
    %v2491 = vunpack.c.l.b16 %v2456
    %v2492 = vunpack.c.l.b16 %v2457
    %v2493 = vunpack.c.l.b16 %v2458
    %v2494 = vunpack.c.l.b16 %v2459
    %v2495 = vunpack.c.l.b16 %v2460
    %v2496 = vunpack.c.l.b16 %v2461
    %v2497 = vunpack.c.l.b16 %v2462
    %v2498 = vunpack.c.l.b16 %v2463
    %v2499 = vunpack.c.l.b16 %v2464
    %v2500 = vunpack.c.l.b16 %v2465
    %v2501 = vunpack.c.l.b16 %v2466
    %v2502 = vunpack.c.l.b16 %v2467
    %v2503 = vunpack.c.l.b16 %v2468
    %v2504 = vunpack.c.l.b16 %v2469
    %v2505 = vpack.c.b16 %v2490, %v2489
    %v2506 = vpack.c.b16 %v2492, %v2491
    %v2507 = vpack.c.b16 %v2494, %v2493
    %v2508 = vpack.c.b16 %v2496, %v2495
    %v2509 = vpack.c.b16 %v2498, %v2497
    %v2510 = vpack.c.b16 %v2500, %v2499
    %v2511 = vpack.c.b16 %v2502, %v2501
    %v2512 = vpack.c.b16 %v2504, %v2503
    %2521 = vmatpush.bf16.msra.mxu0 %v2512
    %2522 = vmatpush.bf16.msra.mxu0 %v2511
    %2523 = vmatpush.bf16.msra.mxu0 %v2510
    %2524 = vmatpush.bf16.msra.mxu0 %v2509
    %2525 = vmatpush.bf16.msra.mxu0 %v2508
    %2526 = vmatpush.bf16.msra.mxu0 %v2507
    %2527 = vmatpush.bf16.msra.mxu0 %v2506
    %2528 = vmatpush.bf16.msra.mxu0 %v2505
    %2529 = vmatmul.bf16.gmra.mxu0 %v2471
    %v2530 = vpop.f32.mrf.mxu0
    %v2531 = vadd.f32 %v2472, %v2530
    %v2532 = vpop.f32.mrf.mxu0
    %2533 = vdwg.mxu0
    %v2534 = vld [vmem:[#allocation5 + $0x2c0] sm:$0xf]
    %v2535 = vld [vmem:[#allocation5 + $0x2c4] sm:$0xf]
    %v2536 = vld [vmem:[#allocation5 + $0x2c8] sm:$0xf]
    %v2537 = vld [vmem:[#allocation5 + $0x2cc] sm:$0xf]
    %v2538 = vld [vmem:[#allocation5 + $0x2d0] sm:$0xf]
    %v2539 = vld [vmem:[#allocation5 + $0x2d4] sm:$0xf]
    %v2540 = vld [vmem:[#allocation5 + $0x2d8] sm:$0xf]
    %v2541 = vld [vmem:[#allocation5 + $0x2dc] sm:$0xf]
    %v2542 = vld [vmem:[#allocation5 + $0x2e0] sm:$0xf]
    %v2543 = vld [vmem:[#allocation5 + $0x2e4] sm:$0xf]
    %v2544 = vld [vmem:[#allocation5 + $0x2e8] sm:$0xf]
    %v2545 = vld [vmem:[#allocation5 + $0x2ec] sm:$0xf]
    %v2546 = vld [vmem:[#allocation5 + $0x2f0] sm:$0xf]
    %v2547 = vld [vmem:[#allocation5 + $0x2f4] sm:$0xf]
    %v2548 = vld [vmem:[#allocation5 + $0x2f8] sm:$0xf]
    %v2549 = vld [vmem:[#allocation5 + $0x2fc] sm:$0xf]
    %v2550 = vld [vmem:[#allocation10 + $0x9] sm:$0x1]
    %v2551 = vpack.c.bf16 %v2531, %v2531
    %v2552 = vperm.slane %v2550, 0
    %v2569 = vunpack.c.l.b16 %v2534
    %v2570 = vunpack.c.l.b16 %v2535
    %v2571 = vunpack.c.l.b16 %v2536
    %v2572 = vunpack.c.l.b16 %v2537
    %v2573 = vunpack.c.l.b16 %v2538
    %v2574 = vunpack.c.l.b16 %v2539
    %v2575 = vunpack.c.l.b16 %v2540
    %v2576 = vunpack.c.l.b16 %v2541
    %v2577 = vunpack.c.l.b16 %v2542
    %v2578 = vunpack.c.l.b16 %v2543
    %v2579 = vunpack.c.l.b16 %v2544
    %v2580 = vunpack.c.l.b16 %v2545
    %v2581 = vunpack.c.l.b16 %v2546
    %v2582 = vunpack.c.l.b16 %v2547
    %v2583 = vunpack.c.l.b16 %v2548
    %v2584 = vunpack.c.l.b16 %v2549
    %v2585 = vpack.c.b16 %v2570, %v2569
    %v2586 = vpack.c.b16 %v2572, %v2571
    %v2587 = vpack.c.b16 %v2574, %v2573
    %v2588 = vpack.c.b16 %v2576, %v2575
    %v2589 = vpack.c.b16 %v2578, %v2577
    %v2590 = vpack.c.b16 %v2580, %v2579
    %v2591 = vpack.c.b16 %v2582, %v2581
    %v2592 = vpack.c.b16 %v2584, %v2583
    %2601 = vmatpush.bf16.msra.mxu0 %v2592
    %2602 = vmatpush.bf16.msra.mxu0 %v2591
    %2603 = vmatpush.bf16.msra.mxu0 %v2590
    %2604 = vmatpush.bf16.msra.mxu0 %v2589
    %2605 = vmatpush.bf16.msra.mxu0 %v2588
    %2606 = vmatpush.bf16.msra.mxu0 %v2587
    %2607 = vmatpush.bf16.msra.mxu0 %v2586
    %2608 = vmatpush.bf16.msra.mxu0 %v2585
    %2609 = vmatmul.bf16.gmra.mxu0 %v2551
    %v2610 = vpop.f32.mrf.mxu0
    %v2611 = vadd.f32 %v2552, %v2610
    %v2612 = vpop.f32.mrf.mxu0
    %2613 = vdwg.mxu0
    %v2614 = vld [vmem:[#allocation5 + $0x300] sm:$0xf]
    %v2615 = vld [vmem:[#allocation5 + $0x304] sm:$0xf]
    %v2616 = vld [vmem:[#allocation5 + $0x308] sm:$0xf]
    %v2617 = vld [vmem:[#allocation5 + $0x30c] sm:$0xf]
    %v2618 = vld [vmem:[#allocation5 + $0x310] sm:$0xf]
    %v2619 = vld [vmem:[#allocation5 + $0x314] sm:$0xf]
    %v2620 = vld [vmem:[#allocation5 + $0x318] sm:$0xf]
    %v2621 = vld [vmem:[#allocation5 + $0x31c] sm:$0xf]
    %v2622 = vld [vmem:[#allocation5 + $0x320] sm:$0xf]
    %v2623 = vld [vmem:[#allocation5 + $0x324] sm:$0xf]
    %v2624 = vld [vmem:[#allocation5 + $0x328] sm:$0xf]
    %v2625 = vld [vmem:[#allocation5 + $0x32c] sm:$0xf]
    %v2626 = vld [vmem:[#allocation5 + $0x330] sm:$0xf]
    %v2627 = vld [vmem:[#allocation5 + $0x334] sm:$0xf]
    %v2628 = vld [vmem:[#allocation5 + $0x338] sm:$0xf]
    %v2629 = vld [vmem:[#allocation5 + $0x33c] sm:$0xf]
    %v2630 = vld [vmem:[#allocation10 + $0xa] sm:$0x1]
    %v2631 = vpack.c.bf16 %v2611, %v2611
    %v2632 = vperm.slane %v2630, 0
    %v2649 = vunpack.c.l.b16 %v2614
    %v2650 = vunpack.c.l.b16 %v2615
    %v2651 = vunpack.c.l.b16 %v2616
    %v2652 = vunpack.c.l.b16 %v2617
    %v2653 = vunpack.c.l.b16 %v2618
    %v2654 = vunpack.c.l.b16 %v2619
    %v2655 = vunpack.c.l.b16 %v2620
    %v2656 = vunpack.c.l.b16 %v2621
    %v2657 = vunpack.c.l.b16 %v2622
    %v2658 = vunpack.c.l.b16 %v2623
    %v2659 = vunpack.c.l.b16 %v2624
    %v2660 = vunpack.c.l.b16 %v2625
    %v2661 = vunpack.c.l.b16 %v2626
    %v2662 = vunpack.c.l.b16 %v2627
    %v2663 = vunpack.c.l.b16 %v2628
    %v2664 = vunpack.c.l.b16 %v2629
    %v2665 = vpack.c.b16 %v2650, %v2649
    %v2666 = vpack.c.b16 %v2652, %v2651
    %v2667 = vpack.c.b16 %v2654, %v2653
    %v2668 = vpack.c.b16 %v2656, %v2655
    %v2669 = vpack.c.b16 %v2658, %v2657
    %v2670 = vpack.c.b16 %v2660, %v2659
    %v2671 = vpack.c.b16 %v2662, %v2661
    %v2672 = vpack.c.b16 %v2664, %v2663
    %2681 = vmatpush.bf16.msra.mxu0 %v2672
    %2682 = vmatpush.bf16.msra.mxu0 %v2671
    %2683 = vmatpush.bf16.msra.mxu0 %v2670
    %2684 = vmatpush.bf16.msra.mxu0 %v2669
    %2685 = vmatpush.bf16.msra.mxu0 %v2668
    %2686 = vmatpush.bf16.msra.mxu0 %v2667
    %2687 = vmatpush.bf16.msra.mxu0 %v2666
    %2688 = vmatpush.bf16.msra.mxu0 %v2665
    %2689 = vmatmul.bf16.gmra.mxu0 %v2631
    %v2690 = vpop.f32.mrf.mxu0
    %v2691 = vadd.f32 %v2632, %v2690
    %v2692 = vpop.f32.mrf.mxu0
    %2693 = vdwg.mxu0
    %v2694 = vld [vmem:[#allocation5 + $0x340] sm:$0xf]
    %v2695 = vld [vmem:[#allocation5 + $0x344] sm:$0xf]
    %v2696 = vld [vmem:[#allocation5 + $0x348] sm:$0xf]
    %v2697 = vld [vmem:[#allocation5 + $0x34c] sm:$0xf]
    %v2698 = vld [vmem:[#allocation5 + $0x350] sm:$0xf]
    %v2699 = vld [vmem:[#allocation5 + $0x354] sm:$0xf]
    %v2700 = vld [vmem:[#allocation5 + $0x358] sm:$0xf]
    %v2701 = vld [vmem:[#allocation5 + $0x35c] sm:$0xf]
    %v2702 = vld [vmem:[#allocation5 + $0x360] sm:$0xf]
    %v2703 = vld [vmem:[#allocation5 + $0x364] sm:$0xf]
    %v2704 = vld [vmem:[#allocation5 + $0x368] sm:$0xf]
    %v2705 = vld [vmem:[#allocation5 + $0x36c] sm:$0xf]
    %v2706 = vld [vmem:[#allocation5 + $0x370] sm:$0xf]
    %v2707 = vld [vmem:[#allocation5 + $0x374] sm:$0xf]
    %v2708 = vld [vmem:[#allocation5 + $0x378] sm:$0xf]
    %v2709 = vld [vmem:[#allocation5 + $0x37c] sm:$0xf]
    %v2710 = vld [vmem:[#allocation10 + $0xb] sm:$0x1]
    %v2711 = vpack.c.bf16 %v2691, %v2691
    %v2712 = vperm.slane %v2710, 0
    %v2729 = vunpack.c.l.b16 %v2694
    %v2730 = vunpack.c.l.b16 %v2695
    %v2731 = vunpack.c.l.b16 %v2696
    %v2732 = vunpack.c.l.b16 %v2697
    %v2733 = vunpack.c.l.b16 %v2698
    %v2734 = vunpack.c.l.b16 %v2699
    %v2735 = vunpack.c.l.b16 %v2700
    %v2736 = vunpack.c.l.b16 %v2701
    %v2737 = vunpack.c.l.b16 %v2702
    %v2738 = vunpack.c.l.b16 %v2703
    %v2739 = vunpack.c.l.b16 %v2704
    %v2740 = vunpack.c.l.b16 %v2705
    %v2741 = vunpack.c.l.b16 %v2706
    %v2742 = vunpack.c.l.b16 %v2707
    %v2743 = vunpack.c.l.b16 %v2708
    %v2744 = vunpack.c.l.b16 %v2709
    %v2745 = vpack.c.b16 %v2730, %v2729
    %v2746 = vpack.c.b16 %v2732, %v2731
    %v2747 = vpack.c.b16 %v2734, %v2733
    %v2748 = vpack.c.b16 %v2736, %v2735
    %v2749 = vpack.c.b16 %v2738, %v2737
    %v2750 = vpack.c.b16 %v2740, %v2739
    %v2751 = vpack.c.b16 %v2742, %v2741
    %v2752 = vpack.c.b16 %v2744, %v2743
    %2761 = vmatpush.bf16.msra.mxu0 %v2752
    %2762 = vmatpush.bf16.msra.mxu0 %v2751
    %2763 = vmatpush.bf16.msra.mxu0 %v2750
    %2764 = vmatpush.bf16.msra.mxu0 %v2749
    %2765 = vmatpush.bf16.msra.mxu0 %v2748
    %2766 = vmatpush.bf16.msra.mxu0 %v2747
    %2767 = vmatpush.bf16.msra.mxu0 %v2746
    %2768 = vmatpush.bf16.msra.mxu0 %v2745
    %2769 = vmatmul.bf16.gmra.mxu0 %v2711
    %v2770 = vpop.f32.mrf.mxu0
    %v2771 = vadd.f32 %v2712, %v2770
    %v2772 = vpop.f32.mrf.mxu0
    %2773 = vdwg.mxu0
    %v2774 = vld [vmem:[#allocation5 + $0x380] sm:$0xf]
    %v2775 = vld [vmem:[#allocation5 + $0x384] sm:$0xf]
    %v2776 = vld [vmem:[#allocation5 + $0x388] sm:$0xf]
    %v2777 = vld [vmem:[#allocation5 + $0x38c] sm:$0xf]
    %v2778 = vld [vmem:[#allocation5 + $0x390] sm:$0xf]
    %v2779 = vld [vmem:[#allocation5 + $0x394] sm:$0xf]
    %v2780 = vld [vmem:[#allocation5 + $0x398] sm:$0xf]
    %v2781 = vld [vmem:[#allocation5 + $0x39c] sm:$0xf]
    %v2782 = vld [vmem:[#allocation5 + $0x3a0] sm:$0xf]
    %v2783 = vld [vmem:[#allocation5 + $0x3a4] sm:$0xf]
    %v2784 = vld [vmem:[#allocation5 + $0x3a8] sm:$0xf]
    %v2785 = vld [vmem:[#allocation5 + $0x3ac] sm:$0xf]
    %v2786 = vld [vmem:[#allocation5 + $0x3b0] sm:$0xf]
    %v2787 = vld [vmem:[#allocation5 + $0x3b4] sm:$0xf]
    %v2788 = vld [vmem:[#allocation5 + $0x3b8] sm:$0xf]
    %v2789 = vld [vmem:[#allocation5 + $0x3bc] sm:$0xf]
    %v2790 = vld [vmem:[#allocation10 + $0xc] sm:$0x1]
    %v2791 = vpack.c.bf16 %v2771, %v2771
    %v2792 = vperm.slane %v2790, 0
    %v2809 = vunpack.c.l.b16 %v2774
    %v2810 = vunpack.c.l.b16 %v2775
    %v2811 = vunpack.c.l.b16 %v2776
    %v2812 = vunpack.c.l.b16 %v2777
    %v2813 = vunpack.c.l.b16 %v2778
    %v2814 = vunpack.c.l.b16 %v2779
    %v2815 = vunpack.c.l.b16 %v2780
    %v2816 = vunpack.c.l.b16 %v2781
    %v2817 = vunpack.c.l.b16 %v2782
    %v2818 = vunpack.c.l.b16 %v2783
    %v2819 = vunpack.c.l.b16 %v2784
    %v2820 = vunpack.c.l.b16 %v2785
    %v2821 = vunpack.c.l.b16 %v2786
    %v2822 = vunpack.c.l.b16 %v2787
    %v2823 = vunpack.c.l.b16 %v2788
    %v2824 = vunpack.c.l.b16 %v2789
    %v2825 = vpack.c.b16 %v2810, %v2809
    %v2826 = vpack.c.b16 %v2812, %v2811
    %v2827 = vpack.c.b16 %v2814, %v2813
    %v2828 = vpack.c.b16 %v2816, %v2815
    %v2829 = vpack.c.b16 %v2818, %v2817
    %v2830 = vpack.c.b16 %v2820, %v2819
    %v2831 = vpack.c.b16 %v2822, %v2821
    %v2832 = vpack.c.b16 %v2824, %v2823
    %2841 = vmatpush.bf16.msra.mxu0 %v2832
    %2842 = vmatpush.bf16.msra.mxu0 %v2831
    %2843 = vmatpush.bf16.msra.mxu0 %v2830
    %2844 = vmatpush.bf16.msra.mxu0 %v2829
    %2845 = vmatpush.bf16.msra.mxu0 %v2828
    %2846 = vmatpush.bf16.msra.mxu0 %v2827
    %2847 = vmatpush.bf16.msra.mxu0 %v2826
    %2848 = vmatpush.bf16.msra.mxu0 %v2825
    %2849 = vmatmul.bf16.gmra.mxu0 %v2791
    %v2850 = vpop.f32.mrf.mxu0
    %v2851 = vadd.f32 %v2792, %v2850
    %v2852 = vpop.f32.mrf.mxu0
    %2853 = vdwg.mxu0
    %v2854 = vmax.f32 %v2851, 0.0
    %v2855 = vld [vmem:[#allocation5 + $0x3c0] sm:$0xf]
    %v2856 = vld [vmem:[#allocation5 + $0x3c4] sm:$0xf]
    %v2857 = vld [vmem:[#allocation5 + $0x3c8] sm:$0xf]
    %v2858 = vld [vmem:[#allocation5 + $0x3cc] sm:$0xf]
    %v2859 = vld [vmem:[#allocation5 + $0x3d0] sm:$0xf]
    %v2860 = vld [vmem:[#allocation5 + $0x3d4] sm:$0xf]
    %v2861 = vld [vmem:[#allocation5 + $0x3d8] sm:$0xf]
    %v2862 = vld [vmem:[#allocation5 + $0x3dc] sm:$0xf]
    %v2863 = vld [vmem:[#allocation5 + $0x3e0] sm:$0xf]
    %v2864 = vld [vmem:[#allocation5 + $0x3e4] sm:$0xf]
    %v2865 = vld [vmem:[#allocation5 + $0x3e8] sm:$0xf]
    %v2866 = vld [vmem:[#allocation5 + $0x3ec] sm:$0xf]
    %v2867 = vld [vmem:[#allocation5 + $0x3f0] sm:$0xf]
    %v2868 = vld [vmem:[#allocation5 + $0x3f4] sm:$0xf]
    %v2869 = vld [vmem:[#allocation5 + $0x3f8] sm:$0xf]
    %v2870 = vld [vmem:[#allocation5 + $0x3fc] sm:$0xf]
    %v2871 = vld [vmem:[#allocation10 + $0xd] sm:$0x1]
    %v2872 = vpack.c.bf16 %v2854, %v2854
    %v2873 = vperm.slane %v2871, 0
    %v2890 = vunpack.c.l.b16 %v2855
    %v2891 = vunpack.c.l.b16 %v2856
    %v2892 = vunpack.c.l.b16 %v2857
    %v2893 = vunpack.c.l.b16 %v2858
    %v2894 = vunpack.c.l.b16 %v2859
    %v2895 = vunpack.c.l.b16 %v2860
    %v2896 = vunpack.c.l.b16 %v2861
    %v2897 = vunpack.c.l.b16 %v2862
    %v2898 = vunpack.c.l.b16 %v2863
    %v2899 = vunpack.c.l.b16 %v2864
    %v2900 = vunpack.c.l.b16 %v2865
    %v2901 = vunpack.c.l.b16 %v2866
    %v2902 = vunpack.c.l.b16 %v2867
    %v2903 = vunpack.c.l.b16 %v2868
    %v2904 = vunpack.c.l.b16 %v2869
    %v2905 = vunpack.c.l.b16 %v2870
    %v2906 = vpack.c.b16 %v2891, %v2890
    %v2907 = vpack.c.b16 %v2893, %v2892
    %v2908 = vpack.c.b16 %v2895, %v2894
    %v2909 = vpack.c.b16 %v2897, %v2896
    %v2910 = vpack.c.b16 %v2899, %v2898
    %v2911 = vpack.c.b16 %v2901, %v2900
    %v2912 = vpack.c.b16 %v2903, %v2902
    %v2913 = vpack.c.b16 %v2905, %v2904
    %2922 = vmatpush.bf16.msra.mxu0 %v2913
    %2923 = vmatpush.bf16.msra.mxu0 %v2912
    %2924 = vmatpush.bf16.msra.mxu0 %v2911
    %2925 = vmatpush.bf16.msra.mxu0 %v2910
    %2926 = vmatpush.bf16.msra.mxu0 %v2909
    %2927 = vmatpush.bf16.msra.mxu0 %v2908
    %2928 = vmatpush.bf16.msra.mxu0 %v2907
    %2929 = vmatpush.bf16.msra.mxu0 %v2906
    %2930 = vmatmul.bf16.gmra.mxu0 %v2872
    %v2931 = vpop.f32.mrf.mxu0
    %v2932 = vadd.f32 %v2873, %v2931
    %v2933 = vpop.f32.mrf.mxu0
    %2934 = vdwg.mxu0
    %v2935 = vmax.f32 %v2932, 0.0
    %v2936 = vld [vmem:[#allocation5 + $0x400] sm:$0xf]
    %v2937 = vld [vmem:[#allocation5 + $0x404] sm:$0xf]
    %v2938 = vld [vmem:[#allocation5 + $0x408] sm:$0xf]
    %v2939 = vld [vmem:[#allocation5 + $0x40c] sm:$0xf]
    %v2940 = vld [vmem:[#allocation5 + $0x410] sm:$0xf]
    %v2941 = vld [vmem:[#allocation5 + $0x414] sm:$0xf]
    %v2942 = vld [vmem:[#allocation5 + $0x418] sm:$0xf]
    %v2943 = vld [vmem:[#allocation5 + $0x41c] sm:$0xf]
    %v2944 = vld [vmem:[#allocation5 + $0x420] sm:$0xf]
    %v2945 = vld [vmem:[#allocation5 + $0x424] sm:$0xf]
    %v2946 = vld [vmem:[#allocation5 + $0x428] sm:$0xf]
    %v2947 = vld [vmem:[#allocation5 + $0x42c] sm:$0xf]
    %v2948 = vld [vmem:[#allocation5 + $0x430] sm:$0xf]
    %v2949 = vld [vmem:[#allocation5 + $0x434] sm:$0xf]
    %v2950 = vld [vmem:[#allocation5 + $0x438] sm:$0xf]
    %v2951 = vld [vmem:[#allocation5 + $0x43c] sm:$0xf]
    %v2952 = vld [vmem:[#allocation10 + $0xe] sm:$0x1]
    %v2953 = vpack.c.bf16 %v2935, %v2935
    %v2954 = vperm.slane %v2952, 0
    %v2971 = vunpack.c.l.b16 %v2936
    %v2972 = vunpack.c.l.b16 %v2937
    %v2973 = vunpack.c.l.b16 %v2938
    %v2974 = vunpack.c.l.b16 %v2939
    %v2975 = vunpack.c.l.b16 %v2940
    %v2976 = vunpack.c.l.b16 %v2941
    %v2977 = vunpack.c.l.b16 %v2942
    %v2978 = vunpack.c.l.b16 %v2943
    %v2979 = vunpack.c.l.b16 %v2944
    %v2980 = vunpack.c.l.b16 %v2945
    %v2981 = vunpack.c.l.b16 %v2946
    %v2982 = vunpack.c.l.b16 %v2947
    %v2983 = vunpack.c.l.b16 %v2948
    %v2984 = vunpack.c.l.b16 %v2949
    %v2985 = vunpack.c.l.b16 %v2950
    %v2986 = vunpack.c.l.b16 %v2951
    %v2987 = vpack.c.b16 %v2972, %v2971
    %v2988 = vpack.c.b16 %v2974, %v2973
    %v2989 = vpack.c.b16 %v2976, %v2975
    %v2990 = vpack.c.b16 %v2978, %v2977
    %v2991 = vpack.c.b16 %v2980, %v2979
    %v2992 = vpack.c.b16 %v2982, %v2981
    %v2993 = vpack.c.b16 %v2984, %v2983
    %v2994 = vpack.c.b16 %v2986, %v2985
    %3003 = vmatpush.bf16.msra.mxu0 %v2994
    %3004 = vmatpush.bf16.msra.mxu0 %v2993
    %3005 = vmatpush.bf16.msra.mxu0 %v2992
    %3006 = vmatpush.bf16.msra.mxu0 %v2991
    %3007 = vmatpush.bf16.msra.mxu0 %v2990
    %3008 = vmatpush.bf16.msra.mxu0 %v2989
    %3009 = vmatpush.bf16.msra.mxu0 %v2988
    %3010 = vmatpush.bf16.msra.mxu0 %v2987
    %3011 = vmatmul.bf16.gmra.mxu0 %v2953
    %v3012 = vpop.f32.mrf.mxu0
    %v3013 = vadd.f32 %v2954, %v3012
    %v3014 = vpop.f32.mrf.mxu0
    %3015 = vdwg.mxu0
    %v3016 = vmax.f32 %v3013, 0.0
    %v3017 = vld [vmem:[#allocation5 + $0x440] sm:$0xf]
    %v3018 = vld [vmem:[#allocation5 + $0x444] sm:$0xf]
    %v3019 = vld [vmem:[#allocation5 + $0x448] sm:$0xf]
    %v3020 = vld [vmem:[#allocation5 + $0x44c] sm:$0xf]
    %v3021 = vld [vmem:[#allocation5 + $0x450] sm:$0xf]
    %v3022 = vld [vmem:[#allocation5 + $0x454] sm:$0xf]
    %v3023 = vld [vmem:[#allocation5 + $0x458] sm:$0xf]
    %v3024 = vld [vmem:[#allocation5 + $0x45c] sm:$0xf]
    %v3025 = vld [vmem:[#allocation5 + $0x460] sm:$0xf]
    %v3026 = vld [vmem:[#allocation5 + $0x464] sm:$0xf]
    %v3027 = vld [vmem:[#allocation5 + $0x468] sm:$0xf]
    %v3028 = vld [vmem:[#allocation5 + $0x46c] sm:$0xf]
    %v3029 = vld [vmem:[#allocation5 + $0x470] sm:$0xf]
    %v3030 = vld [vmem:[#allocation5 + $0x474] sm:$0xf]
    %v3031 = vld [vmem:[#allocation5 + $0x478] sm:$0xf]
    %v3032 = vld [vmem:[#allocation5 + $0x47c] sm:$0xf]
    %v3033 = vld [vmem:[#allocation10 + $0xf] sm:$0x1]
    %v3034 = vpack.c.bf16 %v3016, %v3016
    %v3035 = vperm.slane %v3033, 0
    %v3052 = vunpack.c.l.b16 %v3017
    %v3053 = vunpack.c.l.b16 %v3018
    %v3054 = vunpack.c.l.b16 %v3019
    %v3055 = vunpack.c.l.b16 %v3020
    %v3056 = vunpack.c.l.b16 %v3021
    %v3057 = vunpack.c.l.b16 %v3022
    %v3058 = vunpack.c.l.b16 %v3023
    %v3059 = vunpack.c.l.b16 %v3024
    %v3060 = vunpack.c.l.b16 %v3025
    %v3061 = vunpack.c.l.b16 %v3026
    %v3062 = vunpack.c.l.b16 %v3027
    %v3063 = vunpack.c.l.b16 %v3028
    %v3064 = vunpack.c.l.b16 %v3029
    %v3065 = vunpack.c.l.b16 %v3030
    %v3066 = vunpack.c.l.b16 %v3031
    %v3067 = vunpack.c.l.b16 %v3032
    %v3068 = vpack.c.b16 %v3053, %v3052
    %v3069 = vpack.c.b16 %v3055, %v3054
    %v3070 = vpack.c.b16 %v3057, %v3056
    %v3071 = vpack.c.b16 %v3059, %v3058
    %v3072 = vpack.c.b16 %v3061, %v3060
    %v3073 = vpack.c.b16 %v3063, %v3062
    %v3074 = vpack.c.b16 %v3065, %v3064
    %v3075 = vpack.c.b16 %v3067, %v3066
    %3084 = vmatpush.bf16.msra.mxu0 %v3075
    %3085 = vmatpush.bf16.msra.mxu0 %v3074
    %3086 = vmatpush.bf16.msra.mxu0 %v3073
    %3087 = vmatpush.bf16.msra.mxu0 %v3072
    %3088 = vmatpush.bf16.msra.mxu0 %v3071
    %3089 = vmatpush.bf16.msra.mxu0 %v3070
    %3090 = vmatpush.bf16.msra.mxu0 %v3069
    %3091 = vmatpush.bf16.msra.mxu0 %v3068
    %3092 = vmatmul.bf16.gmra.mxu0 %v3034
    %v3093 = vpop.f32.mrf.mxu0
    %v3094 = vadd.f32 %v3035, %v3093
    %v3095 = vpop.f32.mrf.mxu0
    %3096 = vdwg.mxu0
    %v3097 = vmax.f32 %v3094, 0.0
    %v3098 = vld [vmem:[#allocation8] sm:$0xff]
    %v3099 = vld [vmem:[#allocation8 + $0x8] sm:$0xff]
    %v3100 = vld [vmem:[#allocation8 + $0x10] sm:$0xff]
    %v3101 = vld [vmem:[#allocation8 + $0x18] sm:$0xf]
    %v3102 = vld [vmem:[#allocation8 + $0x1c] sm:$0xff]
    %v3103 = vld [vmem:[#allocation8 + $0x24] sm:$0xff]
    %v3104 = vld [vmem:[#allocation8 + $0x2c] sm:$0xff]
    %v3105 = vld [vmem:[#allocation8 + $0x34] sm:$0xf]
    %v3106 = vld [vmem:[#allocation8 + $0x38] sm:$0xff]
    %v3107 = vld [vmem:[#allocation8 + $0x40] sm:$0xff]
    %v3108 = vld [vmem:[#allocation8 + $0x48] sm:$0xff]
    %v3109 = vld [vmem:[#allocation8 + $0x50] sm:$0xf]
    %v3110 = vld [vmem:[#allocation8 + $0x54] sm:$0xff]
    %v3111 = vld [vmem:[#allocation8 + $0x5c] sm:$0xff]
    %v3112 = vld [vmem:[#allocation8 + $0x64] sm:$0xff]
    %v3113 = vld [vmem:[#allocation8 + $0x6c] sm:$0xf]
    %v3114 = vld [vmem:[#allocation8 + $0x70] sm:$0xff]
    %v3115 = vld [vmem:[#allocation8 + $0x78] sm:$0xff]
    %v3116 = vld [vmem:[#allocation8 + $0x80] sm:$0xff]
    %v3117 = vld [vmem:[#allocation8 + $0x88] sm:$0xf]
    %v3118 = vld [vmem:[#allocation8 + $0x8c] sm:$0xff]
    %v3119 = vld [vmem:[#allocation8 + $0x94] sm:$0xff]
    %v3120 = vld [vmem:[#allocation8 + $0x9c] sm:$0xff]
    %v3121 = vld [vmem:[#allocation8 + $0xa4] sm:$0xf]
    %v3122 = vld [vmem:[#allocation8 + $0xa8] sm:$0xff]
    %v3123 = vld [vmem:[#allocation8 + $0xb0] sm:$0xff]
    %v3124 = vld [vmem:[#allocation8 + $0xb8] sm:$0xff]
    %v3125 = vld [vmem:[#allocation8 + $0xc0] sm:$0xf]
    %v3126 = vld [vmem:[#allocation8 + $0xc4] sm:$0xff]
    %v3127 = vld [vmem:[#allocation8 + $0xcc] sm:$0xff]
    %v3128 = vld [vmem:[#allocation8 + $0xd4] sm:$0xff]
    %v3129 = vld [vmem:[#allocation8 + $0xdc] sm:$0xf]
    %v3130 = vld [vmem:[#allocation8 + $0xe0] sm:$0xff]
    %v3131 = vld [vmem:[#allocation8 + $0xe8] sm:$0xff]
    %v3132 = vld [vmem:[#allocation8 + $0xf0] sm:$0xff]
    %v3133 = vld [vmem:[#allocation8 + $0xf8] sm:$0xf]
    %v3134 = vld [vmem:[#allocation8 + $0xfc] sm:$0xff]
    %v3135 = vld [vmem:[#allocation8 + $0x104] sm:$0xff]
    %v3136 = vld [vmem:[#allocation8 + $0x10c] sm:$0xff]
    %v3137 = vld [vmem:[#allocation8 + $0x114] sm:$0xf]
    %v3138 = vld [vmem:[#allocation8 + $0x118] sm:$0xff]
    %v3139 = vld [vmem:[#allocation8 + $0x120] sm:$0xff]
    %v3140 = vld [vmem:[#allocation8 + $0x128] sm:$0xff]
    %v3141 = vld [vmem:[#allocation8 + $0x130] sm:$0xf]
    %v3142 = vld [vmem:[#allocation8 + $0x134] sm:$0xff]
    %v3143 = vld [vmem:[#allocation8 + $0x13c] sm:$0xff]
    %v3144 = vld [vmem:[#allocation8 + $0x144] sm:$0xff]
    %v3145 = vld [vmem:[#allocation8 + $0x14c] sm:$0xf]
    %v3146 = vld [vmem:[#allocation8 + $0x150] sm:$0xff]
    %v3147 = vld [vmem:[#allocation8 + $0x158] sm:$0xff]
    %v3148 = vld [vmem:[#allocation8 + $0x160] sm:$0xff]
    %v3149 = vld [vmem:[#allocation8 + $0x168] sm:$0xf]
    %v3150 = vld [vmem:[#allocation8 + $0x16c] sm:$0xff]
    %v3151 = vld [vmem:[#allocation8 + $0x174] sm:$0xff]
    %v3152 = vld [vmem:[#allocation8 + $0x17c] sm:$0xff]
    %v3153 = vld [vmem:[#allocation8 + $0x184] sm:$0xf]
    %v3154 = vld [vmem:[#allocation8 + $0x188] sm:$0xff]
    %v3155 = vld [vmem:[#allocation8 + $0x190] sm:$0xff]
    %v3156 = vld [vmem:[#allocation8 + $0x198] sm:$0xff]
    %v3157 = vld [vmem:[#allocation8 + $0x1a0] sm:$0xf]
    %v3158 = vld [vmem:[#allocation8 + $0x1a4] sm:$0xff]
    %v3159 = vld [vmem:[#allocation8 + $0x1ac] sm:$0xff]
    %v3160 = vld [vmem:[#allocation8 + $0x1b4] sm:$0xff]
    %v3161 = vld [vmem:[#allocation8 + $0x1bc] sm:$0xf]
    %v3162 = vld [vmem:[#allocation13] ss:$8 sm:$0xf]
    %v3163 = vld [vmem:[#allocation13] ss:$8 sm:$0xf0]
    %v3164 = vor.u32 %v3162, %v3163
    %v3165 = vpack.c.bf16 %v3097, %v3097
    %v3167 = vperm.slane %v3164, 0
    %v3168 = vperm.slane %v3164, 1
    %v3169 = vperm.slane %v3164, 2
    %v3170 = vperm.slane %v3164, 3
    %v3171 = vperm.slane %v3164, 4
    %v3172 = vperm.slane %v3164, 5
    %v3173 = vperm.slane %v3164, 6
    %v3245 = vunpack.c.l.b16 %v3098
    %v3246 = vunpack.c.h.b16 %v3098
    %v3247 = vunpack.c.l.b16 %v3099
    %v3248 = vunpack.c.h.b16 %v3099
    %v3249 = vunpack.c.l.b16 %v3100
    %v3250 = vunpack.c.h.b16 %v3100
    %v3251 = vunpack.c.l.b16 %v3101
    %v3252 = vunpack.c.l.b16 %v3102
    %v3253 = vunpack.c.h.b16 %v3102
    %v3254 = vunpack.c.l.b16 %v3103
    %v3255 = vunpack.c.h.b16 %v3103
    %v3256 = vunpack.c.l.b16 %v3104
    %v3257 = vunpack.c.h.b16 %v3104
    %v3258 = vunpack.c.l.b16 %v3105
    %v3259 = vunpack.c.l.b16 %v3106
    %v3260 = vunpack.c.h.b16 %v3106
    %v3261 = vunpack.c.l.b16 %v3107
    %v3262 = vunpack.c.h.b16 %v3107
    %v3263 = vunpack.c.l.b16 %v3108
    %v3264 = vunpack.c.h.b16 %v3108
    %v3265 = vunpack.c.l.b16 %v3109
    %v3266 = vunpack.c.l.b16 %v3110
    %v3267 = vunpack.c.h.b16 %v3110
    %v3268 = vunpack.c.l.b16 %v3111
    %v3269 = vunpack.c.h.b16 %v3111
    %v3270 = vunpack.c.l.b16 %v3112
    %v3271 = vunpack.c.h.b16 %v3112
    %v3272 = vunpack.c.l.b16 %v3113
    %v3273 = vunpack.c.l.b16 %v3114
    %v3274 = vunpack.c.h.b16 %v3114
    %v3275 = vunpack.c.l.b16 %v3115
    %v3276 = vunpack.c.h.b16 %v3115
    %v3277 = vunpack.c.l.b16 %v3116
    %v3278 = vunpack.c.h.b16 %v3116
    %v3279 = vunpack.c.l.b16 %v3117
    %v3280 = vunpack.c.l.b16 %v3118
    %v3281 = vunpack.c.h.b16 %v3118
    %v3282 = vunpack.c.l.b16 %v3119
    %v3283 = vunpack.c.h.b16 %v3119
    %v3284 = vunpack.c.l.b16 %v3120
    %v3285 = vunpack.c.h.b16 %v3120
    %v3286 = vunpack.c.l.b16 %v3121
    %v3287 = vunpack.c.l.b16 %v3122
    %v3288 = vunpack.c.h.b16 %v3122
    %v3289 = vunpack.c.l.b16 %v3123
    %v3290 = vunpack.c.h.b16 %v3123
    %v3291 = vunpack.c.l.b16 %v3124
    %v3292 = vunpack.c.h.b16 %v3124
    %v3293 = vunpack.c.l.b16 %v3125
    %v3294 = vunpack.c.l.b16 %v3126
    %v3295 = vunpack.c.h.b16 %v3126
    %v3296 = vunpack.c.l.b16 %v3127
    %v3297 = vunpack.c.h.b16 %v3127
    %v3298 = vunpack.c.l.b16 %v3128
    %v3299 = vunpack.c.h.b16 %v3128
    %v3300 = vunpack.c.l.b16 %v3129
    %v3301 = vunpack.c.l.b16 %v3130
    %v3302 = vunpack.c.h.b16 %v3130
    %v3303 = vunpack.c.l.b16 %v3131
    %v3304 = vunpack.c.h.b16 %v3131
    %v3305 = vunpack.c.l.b16 %v3132
    %v3306 = vunpack.c.h.b16 %v3132
    %v3307 = vunpack.c.l.b16 %v3133
    %v3308 = vunpack.c.l.b16 %v3134
    %v3309 = vunpack.c.h.b16 %v3134
    %v3310 = vunpack.c.l.b16 %v3135
    %v3311 = vunpack.c.h.b16 %v3135
    %v3312 = vunpack.c.l.b16 %v3136
    %v3313 = vunpack.c.h.b16 %v3136
    %v3314 = vunpack.c.l.b16 %v3137
    %v3315 = vunpack.c.l.b16 %v3138
    %v3316 = vunpack.c.h.b16 %v3138
    %v3317 = vunpack.c.l.b16 %v3139
    %v3318 = vunpack.c.h.b16 %v3139
    %v3319 = vunpack.c.l.b16 %v3140
    %v3320 = vunpack.c.h.b16 %v3140
    %v3321 = vunpack.c.l.b16 %v3141
    %v3322 = vunpack.c.l.b16 %v3142
    %v3323 = vunpack.c.h.b16 %v3142
    %v3324 = vunpack.c.l.b16 %v3143
    %v3325 = vunpack.c.h.b16 %v3143
    %v3326 = vunpack.c.l.b16 %v3144
    %v3327 = vunpack.c.h.b16 %v3144
    %v3328 = vunpack.c.l.b16 %v3145
    %v3329 = vunpack.c.l.b16 %v3146
    %v3330 = vunpack.c.h.b16 %v3146
    %v3331 = vunpack.c.l.b16 %v3147
    %v3332 = vunpack.c.h.b16 %v3147
    %v3333 = vunpack.c.l.b16 %v3148
    %v3334 = vunpack.c.h.b16 %v3148
    %v3335 = vunpack.c.l.b16 %v3149
    %v3336 = vunpack.c.l.b16 %v3150
    %v3337 = vunpack.c.h.b16 %v3150
    %v3338 = vunpack.c.l.b16 %v3151
    %v3339 = vunpack.c.h.b16 %v3151
    %v3340 = vunpack.c.l.b16 %v3152
    %v3341 = vunpack.c.h.b16 %v3152
    %v3342 = vunpack.c.l.b16 %v3153
    %v3343 = vunpack.c.l.b16 %v3154
    %v3344 = vunpack.c.h.b16 %v3154
    %v3345 = vunpack.c.l.b16 %v3155
    %v3346 = vunpack.c.h.b16 %v3155
    %v3347 = vunpack.c.l.b16 %v3156
    %v3348 = vunpack.c.h.b16 %v3156
    %v3349 = vunpack.c.l.b16 %v3157
    %v3350 = vunpack.c.l.b16 %v3158
    %v3351 = vunpack.c.h.b16 %v3158
    %v3352 = vunpack.c.l.b16 %v3159
    %v3353 = vunpack.c.h.b16 %v3159
    %v3354 = vunpack.c.l.b16 %v3160
    %v3355 = vunpack.c.h.b16 %v3160
    %v3356 = vunpack.c.l.b16 %v3161
    %v3357 = vpack.c.b16 %v3252, %v3245
    %v3358 = vpack.c.b16 %v3253, %v3246
    %v3359 = vpack.c.b16 %v3254, %v3247
    %v3360 = vpack.c.b16 %v3255, %v3248
    %v3361 = vpack.c.b16 %v3256, %v3249
    %v3362 = vpack.c.b16 %v3257, %v3250
    %v3363 = vpack.c.b16 %v3258, %v3251
    %v3364 = vpack.c.b16 %v3266, %v3259
    %v3365 = vpack.c.b16 %v3267, %v3260
    %v3366 = vpack.c.b16 %v3268, %v3261
    %v3367 = vpack.c.b16 %v3269, %v3262
    %v3368 = vpack.c.b16 %v3270, %v3263
    %v3369 = vpack.c.b16 %v3271, %v3264
    %v3370 = vpack.c.b16 %v3272, %v3265
    %v3371 = vpack.c.b16 %v3280, %v3273
    %v3372 = vpack.c.b16 %v3281, %v3274
    %v3373 = vpack.c.b16 %v3282, %v3275
    %v3374 = vpack.c.b16 %v3283, %v3276
    %v3375 = vpack.c.b16 %v3284, %v3277
    %v3376 = vpack.c.b16 %v3285, %v3278
    %v3377 = vpack.c.b16 %v3286, %v3279
    %v3378 = vpack.c.b16 %v3294, %v3287
    %v3379 = vpack.c.b16 %v3295, %v3288
    %v3380 = vpack.c.b16 %v3296, %v3289
    %v3381 = vpack.c.b16 %v3297, %v3290
    %v3382 = vpack.c.b16 %v3298, %v3291
    %v3383 = vpack.c.b16 %v3299, %v3292
    %v3384 = vpack.c.b16 %v3300, %v3293
    %v3385 = vpack.c.b16 %v3308, %v3301
    %v3386 = vpack.c.b16 %v3309, %v3302
    %v3387 = vpack.c.b16 %v3310, %v3303
    %v3388 = vpack.c.b16 %v3311, %v3304
    %v3389 = vpack.c.b16 %v3312, %v3305
    %v3390 = vpack.c.b16 %v3313, %v3306
    %v3391 = vpack.c.b16 %v3314, %v3307
    %v3392 = vpack.c.b16 %v3322, %v3315
    %v3393 = vpack.c.b16 %v3323, %v3316
    %v3394 = vpack.c.b16 %v3324, %v3317
    %v3395 = vpack.c.b16 %v3325, %v3318
    %v3396 = vpack.c.b16 %v3326, %v3319
    %v3397 = vpack.c.b16 %v3327, %v3320
    %v3398 = vpack.c.b16 %v3328, %v3321
    %v3399 = vpack.c.b16 %v3336, %v3329
    %v3400 = vpack.c.b16 %v3337, %v3330
    %v3401 = vpack.c.b16 %v3338, %v3331
    %v3402 = vpack.c.b16 %v3339, %v3332
    %v3403 = vpack.c.b16 %v3340, %v3333
    %v3404 = vpack.c.b16 %v3341, %v3334
    %v3405 = vpack.c.b16 %v3342, %v3335
    %v3406 = vpack.c.b16 %v3350, %v3343
    %v3407 = vpack.c.b16 %v3351, %v3344
    %v3408 = vpack.c.b16 %v3352, %v3345
    %v3409 = vpack.c.b16 %v3353, %v3346
    %v3410 = vpack.c.b16 %v3354, %v3347
    %v3411 = vpack.c.b16 %v3355, %v3348
    %v3412 = vpack.c.b16 %v3356, %v3349
    %3469 = vmatpush.bf16.msra.mxu0 %v3406
    %3470 = vmatpush.bf16.msra.mxu0 %v3399
    %3471 = vmatpush.bf16.msra.mxu0 %v3392
    %3472 = vmatpush.bf16.msra.mxu0 %v3385
    %3473 = vmatpush.bf16.msra.mxu0 %v3378
    %3474 = vmatpush.bf16.msra.mxu0 %v3371
    %3475 = vmatpush.bf16.msra.mxu0 %v3364
    %3476 = vmatpush.bf16.msra.mxu0 %v3357
    %3477 = vmatmul.bf16.gmra.mxu0 %v3165
    %v3478 = vpop.f32.mrf.mxu0
    %v3479 = vadd.f32 %v3167, %v3478
    %v3480 = vpop.f32.mrf.mxu0
    %3481 = vdwg.mxu0
    %3482 = vmatpush.bf16.msra.mxu0 %v3407
    %3483 = vmatpush.bf16.msra.mxu0 %v3400
    %3484 = vmatpush.bf16.msra.mxu0 %v3393
    %3485 = vmatpush.bf16.msra.mxu0 %v3386
    %3486 = vmatpush.bf16.msra.mxu0 %v3379
    %3487 = vmatpush.bf16.msra.mxu0 %v3372
    %3488 = vmatpush.bf16.msra.mxu0 %v3365
    %3489 = vmatpush.bf16.msra.mxu0 %v3358
    %3490 = vmatmul.bf16.gmra.mxu0 %v3165
    %v3491 = vpop.f32.mrf.mxu0
    %v3492 = vadd.f32 %v3168, %v3491
    %v3493 = vpop.f32.mrf.mxu0
    %3494 = vdwg.mxu0
    %3495 = vmatpush.bf16.msra.mxu0 %v3408
    %3496 = vmatpush.bf16.msra.mxu0 %v3401
    %3497 = vmatpush.bf16.msra.mxu0 %v3394
    %3498 = vmatpush.bf16.msra.mxu0 %v3387
    %3499 = vmatpush.bf16.msra.mxu0 %v3380
    %3500 = vmatpush.bf16.msra.mxu0 %v3373
    %3501 = vmatpush.bf16.msra.mxu0 %v3366
    %3502 = vmatpush.bf16.msra.mxu0 %v3359
    %3503 = vmatmul.bf16.gmra.mxu0 %v3165
    %v3504 = vpop.f32.mrf.mxu0
    %v3505 = vadd.f32 %v3169, %v3504
    %v3506 = vpop.f32.mrf.mxu0
    %3507 = vdwg.mxu0
    %3508 = vmatpush.bf16.msra.mxu0 %v3409
    %3509 = vmatpush.bf16.msra.mxu0 %v3402
    %3510 = vmatpush.bf16.msra.mxu0 %v3395
    %3511 = vmatpush.bf16.msra.mxu0 %v3388
    %3512 = vmatpush.bf16.msra.mxu0 %v3381
    %3513 = vmatpush.bf16.msra.mxu0 %v3374
    %3514 = vmatpush.bf16.msra.mxu0 %v3367
    %3515 = vmatpush.bf16.msra.mxu0 %v3360
    %3516 = vmatmul.bf16.gmra.mxu0 %v3165
    %v3517 = vpop.f32.mrf.mxu0
    %v3518 = vadd.f32 %v3170, %v3517
    %v3519 = vpop.f32.mrf.mxu0
    %3520 = vdwg.mxu0
    %3521 = vmatpush.bf16.msra.mxu0 %v3410
    %3522 = vmatpush.bf16.msra.mxu0 %v3403
    %3523 = vmatpush.bf16.msra.mxu0 %v3396
    %3524 = vmatpush.bf16.msra.mxu0 %v3389
    %3525 = vmatpush.bf16.msra.mxu0 %v3382
    %3526 = vmatpush.bf16.msra.mxu0 %v3375
    %3527 = vmatpush.bf16.msra.mxu0 %v3368
    %3528 = vmatpush.bf16.msra.mxu0 %v3361
    %3529 = vmatmul.bf16.gmra.mxu0 %v3165
    %v3530 = vpop.f32.mrf.mxu0
    %v3531 = vadd.f32 %v3171, %v3530
    %v3532 = vpop.f32.mrf.mxu0
    %3533 = vdwg.mxu0
    %3534 = vmatpush.bf16.msra.mxu0 %v3411
    %3535 = vmatpush.bf16.msra.mxu0 %v3404
    %3536 = vmatpush.bf16.msra.mxu0 %v3397
    %3537 = vmatpush.bf16.msra.mxu0 %v3390
    %3538 = vmatpush.bf16.msra.mxu0 %v3383
    %3539 = vmatpush.bf16.msra.mxu0 %v3376
    %3540 = vmatpush.bf16.msra.mxu0 %v3369
    %3541 = vmatpush.bf16.msra.mxu0 %v3362
    %3542 = vmatmul.bf16.gmra.mxu0 %v3165
    %v3543 = vpop.f32.mrf.mxu0
    %v3544 = vadd.f32 %v3172, %v3543
    %v3545 = vpop.f32.mrf.mxu0
    %3546 = vdwg.mxu0
    %3547 = vmatpush.bf16.msra.mxu0 %v3412
    %3548 = vmatpush.bf16.msra.mxu0 %v3405
    %3549 = vmatpush.bf16.msra.mxu0 %v3398
    %3550 = vmatpush.bf16.msra.mxu0 %v3391
    %3551 = vmatpush.bf16.msra.mxu0 %v3384
    %3552 = vmatpush.bf16.msra.mxu0 %v3377
    %3553 = vmatpush.bf16.msra.mxu0 %v3370
    %3554 = vmatpush.bf16.msra.mxu0 %v3363
    %3555 = vmatmul.bf16.gmra.mxu0 %v3165
    %v3556 = vpop.f32.mrf.mxu0
    %v3557 = vadd.f32 %v3173, %v3556
    %v3558 = vpop.f32.mrf.mxu0
    %3559 = vdwg.mxu0
    %v3560 = vsub.f32 0.0, %v3479
    %v3561 = vsub.f32 0.0, %v3492
    %v3562 = vsub.f32 0.0, %v3505
    %v3563 = vsub.f32 0.0, %v3518
    %v3564 = vsub.f32 0.0, %v3531
    %v3565 = vsub.f32 0.0, %v3544
    %v3566 = vsub.f32 0.0, %v3557
    %v3567 = vmul.f32 %v3560, 1.442695
    %v3568 = vpow.pop %v3567
    %v3569 = vmul.f32 %v3561, 1.442695
    %v3570 = vpow.pop %v3569
    %v3571 = vmul.f32 %v3562, 1.442695
    %v3572 = vpow.pop %v3571
    %v3573 = vmul.f32 %v3563, 1.442695
    %v3574 = vpow.pop %v3573
    %v3575 = vmul.f32 %v3564, 1.442695
    %v3576 = vpow.pop %v3575
    %v3577 = vmul.f32 %v3565, 1.442695
    %v3578 = vpow.pop %v3577
    %v3579 = vmul.f32 %v3566, 1.442695
    %v3580 = vpow.pop %v3579
    %v3581 = vadd.f32 %v3568, 1.0
    %v3582 = vadd.f32 %v3570, 1.0
    %v3583 = vadd.f32 %v3572, 1.0
    %v3584 = vadd.f32 %v3574, 1.0
    %v3585 = vadd.f32 %v3576, 1.0
    %v3586 = vadd.f32 %v3578, 1.0
    %v3587 = vadd.f32 %v3580, 1.0
    %v3588 = vrcp.pop %v3581
    %v3589 = vrcp.pop %v3582
    %v3590 = vrcp.pop %v3583
    %v3591 = vrcp.pop %v3584
    %v3592 = vrcp.pop %v3585
    %v3593 = vrcp.pop %v3586
    %v3594 = vrcp.pop %v3587
    %v3595 = vpack.c.bf16 %v3589, %v3588
    %v3596 = vpack.c.bf16 %v3591, %v3590
    %v3597 = vpack.c.bf16 %v3593, %v3592
    %v3598 = vpack.c.bf16 %v3594, %v3594
    %3599 = vst [vmem:[#allocation14] sm:$0xff] %v3595
    %3600 = vst [vmem:[#allocation14 + $0x8] sm:$0xff] %v3596
    %3601 = vst [vmem:[#allocation14 + $0x10] sm:$0xff] %v3597
    %3602 = vst [vmem:[#allocation14 + $0x18] sm:$0xf] %v3598
    // Predicated region
    $region58: #{tpu_custom_call.1} parent=1 // pred_check
      _
    $region59: #{tpu_custom_call.1} parent=1 // pred_check_branch
      %3604 = sbr.rel (0) target = $region61
    $region60: #{tpu_custom_call.1} parent=1 // pred_region
      %3606 = vsyncadd [#allocation4], 0
      %s3608 = sshll.u32 [#allocation14], 4
      %s3609 = int_to_ptr.vmem [resolvable:$true] %s3608
      %s3610 = sshll.u32 %s7, 4
      %s3611 = int_to_ptr.hbm [resolvable:$true] %s3610
      %3613 = dma.vmem_to_hbm [thread:$0]  %s3609, 448, %s3611, [#allocation4]
    $region61: #{tpu_custom_call.1} parent=1 // pred_fallthru
      _
    // Predicated region
    $region62: #{tpu_custom_call.1} parent=1 // pred_check
      _
    $region63: #{tpu_custom_call.1} parent=1 // pred_check_branch
      %3615 = sbr.rel (0) target = $region65
    $region64: #{tpu_custom_call.1} parent=1 // pred_region
      %3617 = dma.done [#allocation4], 448
    $region65: #{tpu_custom_call.1} parent=1 // pred_fallthru
      _
    %3618 = vsyncpa [#allocation3], 1
    %3619 = vsyncpa [#allocation6], 1
    %3620 = vsyncpa [#allocation9], 1
    %3621 = vsyncpa [#allocation12], 1
    %3622 = vsyncpa [#allocation4], 1

</llo_original>
